<compile_context>
chip_gen: v7x
topology: tpu7x:2x2x1
jax: 0.10.0
libtpu: 0.0.40
codegen_flags: <defaults>
</compile_context>

<pallas_src>
import jax
import jax.numpy as jnp
from jax import lax
from jax.experimental import pallas as pl
from jax.experimental.pallas import tpu as pltpu

# Static network geometry (ImprovedCNN: k=2, matrix_size=82).
H = 2
W1, WO1 = 82, 41            # conv1 width, pooled width
W2, WP2, WO2 = 41, 43, 20   # conv2 width, padded pitch in scratch, pooled width
W3, WP3, WO3 = 20, 22, 10   # conv3
C1, C2, C3 = 32, 64, 128
FC1, FC2 = 256, 128
KCOL = 8                    # conv1 im2col K (6 real taps + 2 zero lanes)
TB_MAX = 128                # max samples per grid step


# ----------------------------------------------------------------------------
# Fused Pallas kernel (built per batch-tile size `tb`)
# ----------------------------------------------------------------------------
def _build_kernel(tb):
    m2 = W2 * tb
    m3 = W3 * tb

    def kernel(xcol_ref, w1_ref, b1_ref, w2_ref, b2_ref, w3_ref, b3_ref,
               f1w_ref, f1b_ref, f2w_ref, f2b_ref, f3w_ref, f3b_ref,
               out_ref,
               c1o, c2i, c2o, c3i, c3o, fstage):
        # ---- conv1: single bf16 MXU dot per half-width chunk (K=8, N=64).
        # Output lanes are [h=0 channels | h=1 channels]; bias + ReLU fused.
        half = (W1 // 2) * tb
        for c in range(2):
            r0 = c * half
            a = jnp.dot(xcol_ref[pl.ds(r0, half), :], w1_ref[...],
                        preferred_element_type=jnp.float32)
            c1o[pl.ds(r0, half), :] = jnp.maximum(a + b1_ref[...], 0.0)

        # ---- re-zero only the pad width-blocks of the conv2/conv3 input
        # scratches.  In w-major layout these are 2 contiguous aligned (tb, C)
        # blocks per buffer; doing it every step keeps the kernel correct under
        # megacore "parallel" sharding (a program_id()==0 one-time init would not).
        zc2 = jnp.zeros((tb, 2 * C1), jnp.bfloat16)
        c2i[pl.ds(0, tb), :] = zc2
        c2i[pl.ds((WP2 - 1) * tb, tb), :] = zc2
        zc3 = jnp.zeros((tb, 2 * C2), jnp.bfloat16)
        c3i[pl.ds(0, tb), :] = zc3
        c3i[pl.ds((WP3 - 1) * tb, tb), :] = zc3

        # ---- maxpool (1,2): conv1 out (82) -> conv2 in (41), f32 max, bf16 store.
        for j in range(WO1):
            e = c1o[pl.ds((2 * j) * tb, tb), :]
            o = c1o[pl.ds((2 * j + 1) * tb, tb), :]
            c2i[pl.ds((1 + j) * tb, tb), :] = jnp.maximum(e, o).astype(jnp.bfloat16)

        # ---- conv2: 3 shifted dots, K=2*32, N=2*64 (both height planes in N).
        acc = jnp.dot(c2i[pl.ds(0, m2), :], w2_ref[pl.ds(0, 2 * C1), :],
                      preferred_element_type=jnp.float32)
        for kw in (1, 2):
            acc = acc + jnp.dot(c2i[pl.ds(kw * tb, m2), :],
                                w2_ref[pl.ds(kw * 2 * C1, 2 * C1), :],
                                preferred_element_type=jnp.float32)
        c2o[...] = jnp.maximum(acc + b2_ref[...], 0.0)

        # ---- maxpool (1,2): 41 -> 20 (floor drops the last column).
        for j in range(WO2):
            e = c2o[pl.ds((2 * j) * tb, tb), :]
            o = c2o[pl.ds((2 * j + 1) * tb, tb), :]
            c3i[pl.ds((1 + j) * tb, tb), :] = jnp.maximum(e, o).astype(jnp.bfloat16)

        # ---- conv3: 3 shifted dots, K=2*64=128, N=2*128=256 (fills 256-wide MXU).
        acc = jnp.dot(c3i[pl.ds(0, m3), :], w3_ref[pl.ds(0, 2 * C2), :],
                      preferred_element_type=jnp.float32)
        for kw in (1, 2):
            acc = acc + jnp.dot(c3i[pl.ds(kw * tb, m3), :],
                                w3_ref[pl.ds(kw * 2 * C2, 2 * C2), :],
                                preferred_element_type=jnp.float32)
        c3o[...] = jnp.maximum(acc + b3_ref[...], 0.0)

        # ---- maxpool (1,2): 20 -> 10, staged lane-dense (128-aligned lane offsets)
        # into a (tb, 2560) bf16 buffer so fc1 is one long-K matmul.
        for w in range(WO3):
            e = c3o[pl.ds((2 * w) * tb, tb), :]
            o = c3o[pl.ds((2 * w + 1) * tb, tb), :]
            fstage[:, pl.ds(w * 2 * C3, 2 * C3)] = jnp.maximum(e, o).astype(jnp.bfloat16)

        # ---- fc1 (single (tb,2560)@(2560,256) matmul) + ReLU, fc2 + ReLU,
        # fc3 (N=1) + sigmoid.
        # TODO(synk): nn.Dropout(0.5) is identity in eval mode; training mask omitted.
        h1 = jnp.dot(fstage[...], f1w_ref[...], preferred_element_type=jnp.float32)
        h1 = jnp.maximum(h1 + f1b_ref[...], 0.0)
        h2 = jnp.dot(h1.astype(jnp.bfloat16), f2w_ref[...],
                     preferred_element_type=jnp.float32)
        h2 = jnp.maximum(h2 + f2b_ref[...], 0.0)
        # Contract fc3 against h2's feature dim so the result is lane-dense (1, tb)
        # and the output store is an unmasked full-lane store.
        logit = lax.dot_general(f3w_ref[...], h2, (((1,), (1,)), ((), ())),
                                preferred_element_type=jnp.float32) + f3b_ref[...]
        out_ref[...] = jax.nn.sigmoid(logit)

    return kernel


# ----------------------------------------------------------------------------
# Host-side glue
# ----------------------------------------------------------------------------
def prepare_params(params):
    """One-time host-side repack of weights into the kernel's fused layouts."""
    f32, bf16 = jnp.float32, jnp.bfloat16

    def conv_mat(w):
        # torch OIHW (co, ci, 3, 3) -> (3*2*ci, 2*co):
        #   row = kw*(2*ci) + p*ci + i   (p = input height plane, i = in channel)
        #   col = q*co + o               (q = output height plane), kh = p + 1 - q.
        co, ci = w.shape[0], w.shape[1]
        out = jnp.zeros((3 * 2 * ci, 2 * co), f32)
        for kw in range(3):
            for p in range(2):
                for q in range(2):
                    blk = jnp.transpose(w[:, :, p + 1 - q, kw])            # (ci, co)
                    out = out.at[kw * 2 * ci + p * ci: kw * 2 * ci + (p + 1) * ci,
                                 q * co:(q + 1) * co].set(blk)
        return out

    def conv_bias(b):
        return jnp.concatenate([b, b]).reshape(1, -1).astype(f32)

    # conv1 weight (K=6 taps) padded to KCOL=8 rows.
    w1 = jnp.pad(conv_mat(params["conv1_w"]), ((0, KCOL - 3 * H), (0, 0)))

    # fc1 rows are in torch flatten order c*20 + h*10 + w; re-order to the staged
    # layout w*(2*C3) + h*C3 + c so pooled activations feed fc1 directly.
    f1 = params["fc1_w"].reshape(C3, H, WO3, FC1)
    f1 = jnp.transpose(f1, (2, 1, 0, 3)).reshape(WO3 * H * C3, FC1)

    return {
        "w1": w1.astype(bf16),                                # (8, 64)
        "b1": conv_bias(params["conv1_b"]),                   # (1, 64)
        "w2": conv_mat(params["conv2_w"]).astype(bf16),       # (192, 128)
        "b2": conv_bias(params["conv2_b"]),                   # (1, 128)
        "w3": conv_mat(params["conv3_w"]).astype(bf16),       # (384, 256)
        "b3": conv_bias(params["conv3_b"]),                   # (1, 256)
        "f1w": f1.astype(bf16),                               # (2560, 256)
        "f1b": params["fc1_b"].reshape(1, FC1).astype(f32),
        "f2w": params["fc2_w"].astype(bf16),                  # (256, 128)
        "f2b": params["fc2_b"].reshape(1, FC2).astype(f32),
        "f3w": params["fc3_w"].reshape(1, FC2).astype(f32),   # (1, 128)
        "f3b": params["fc3_b"].reshape(1, 1).astype(f32),
    }


def _tiling(batch):
    """Largest batch tile (<=TB_MAX, multiple of 8) that still leaves a grid of
    >= 2 steps when the batch allows (so a v7x megacore can shard the axis)."""
    b8 = ((batch + 7) // 8) * 8
    tb = min(TB_MAX, b8)
    if b8 > 8 and -(-b8 // tb) < 2:
        tb = max(8, ((b8 // 2 + 7) // 8) * 8)
    nsteps = -(-batch // tb)
    return tb, nsteps


def improved_cnn_forward(x, kp):
    batch = x.shape[0]
    tb, nsteps = _tiling(batch)
    bp = nsteps * tb

    # Host-side prep: pad batch/width and build the 6-tap conv1 im2col in the
    # kernel's w-major layout: xcol[step, w*tb + b, kw*2 + h] = x[b, h, w + kw - 1].
    xr = x.reshape(batch, H, W1).astype(jnp.float32)
    xr = jnp.pad(xr, ((0, bp - batch), (0, 0), (1, 1)))
    taps = [xr[:, hh, kw:kw + W1] for kw in range(3) for hh in range(H)]
    xcol = jnp.stack(taps, axis=-1)                                    # (bp, 82, 6)
    xcol = jnp.pad(xcol, ((0, 0), (0, 0), (0, KCOL - 3 * H)))          # (bp, 82, 8)
    xcol = xcol.reshape(nsteps, tb, W1, KCOL)
    xcol = jnp.transpose(xcol, (0, 2, 1, 3)).reshape(nsteps, W1 * tb, KCOL)
    xcol = xcol.astype(jnp.bfloat16)

    weight_keys = ("w1", "b1", "w2", "b2", "w3", "b3",
                   "f1w", "f1b", "f2w", "f2b", "f3w", "f3b")
    in_specs = [pl.BlockSpec((None, W1 * tb, KCOL), lambda i: (i, 0, 0))]
    in_specs += [pl.BlockSpec(kp[k].shape, lambda i: (0, 0)) for k in weight_keys]

    scratch = [
        pltpu.VMEM((W1 * tb, 2 * C1), jnp.float32),    # conv1 out    (w-major)
        pltpu.VMEM((WP2 * tb, 2 * C1), jnp.bfloat16),  # conv2 in     (padded)
        pltpu.VMEM((W2 * tb, 2 * C2), jnp.float32),    # conv2 out
        pltpu.VMEM((WP3 * tb, 2 * C2), jnp.bfloat16),  # conv3 in     (padded)
        pltpu.VMEM((W3 * tb, 2 * C3), jnp.float32),    # conv3 out
        pltpu.VMEM((tb, H * WO3 * C3), jnp.bfloat16),  # staged fc1 input (tb, 2560)
    ]

    out = pl.pallas_call(
        _build_kernel(tb),
        out_shape=jax.ShapeDtypeStruct((nsteps, 1, tb), jnp.float32),
        grid_spec=pltpu.PrefetchScalarGridSpec(
            num_scalar_prefetch=0,
            grid=(nsteps,),
            in_specs=in_specs,
            out_specs=pl.BlockSpec((None, 1, tb), lambda i: (i, 0, 0)),
            scratch_shapes=scratch,
        ),
        compiler_params=pltpu.CompilerParams(
            dimension_semantics=("parallel",),
            vmem_limit_bytes=48 * 1024 * 1024,
        ),
    )(xcol, *[kp[k] for k in weight_keys])
    return out.reshape(bp, 1)[:batch]


# ----------------------------------------------------------------------------
# Pure-JAX reference (f32) matching the PyTorch module
# ----------------------------------------------------------------------------
def _reference_forward(x, params):
    batch = x.shape[0]
    h = x.reshape(batch, H, W1, 1)                          # NHWC

    def conv(a, w, b):
        y = jax.lax.conv_general_dilated(
            a, jnp.transpose(w, (2, 3, 1, 0)), (1, 1), "SAME",
            dimension_numbers=("NHWC", "HWIO", "NHWC"))
        return jax.nn.relu(y + b)

    def pool(a):
        wo = a.shape[2] // 2
        return jnp.maximum(a[:, :, 0:2 * wo:2, :], a[:, :, 1:2 * wo:2, :])

    h = pool(conv(h, params["conv1_w"], params["conv1_b"]))
    h = pool(conv(h, params["conv2_w"], params["conv2_b"]))
    h = pool(conv(h, params["conv3_w"], params["conv3_b"]))
    h = jnp.transpose(h, (0, 3, 1, 2)).reshape(batch, -1)   # torch view(B, -1) on NCHW
    h = jax.nn.relu(h @ params["fc1_w"] + params["fc1_b"])
    h = jax.nn.relu(h @ params["fc2_w"] + params["fc2_b"])
    return jax.nn.sigmoid(h @ params["fc3_w"] + params["fc3_b"])


# ----------------------------------------------------------------------------
# Deterministic parameter init (synthetic -- shapes from ImprovedCNN.__init__)
# ----------------------------------------------------------------------------
def init_params(key):
    def dense(key, fan_in, shape):
        return (jax.random.normal(key, shape, jnp.float32) / jnp.sqrt(fan_in)).astype(
            jnp.float32)

    ks = jax.random.split(key, 12)
    return {
        "conv1_w": dense(ks[0], 1 * 9, (32, 1, 3, 3)),        # OIHW
        "conv1_b": dense(ks[1], 1 * 9, (32,)),
        "conv2_w": dense(ks[2], 32 * 9, (64, 32, 3, 3)),
        "conv2_b": dense(ks[3], 32 * 9, (64,)),
        "conv3_w": dense(ks[4], 64 * 9, (128, 64, 3, 3)),
        "conv3_b": dense(ks[5], 64 * 9, (128,)),
        "fc1_w": dense(ks[6], 2560, (2560, 256)),             # (K, N), K in torch flatten order
        "fc1_b": dense(ks[7], 2560, (256,)),
        "fc2_w": dense(ks[8], 256, (256, 128)),
        "fc2_b": dense(ks[9], 256, (128,)),
        "fc3_w": dense(ks[10], 128, (128, 1)),
        "fc3_b": dense(ks[11], 128, (1,)),
    }


if __name__ == "__main__":
    key = jax.random.PRNGKey(0)
    k_params, k_x = jax.random.split(key)

    params = init_params(k_params)
    kp = prepare_params(params)                 # one-time weight repack (host side)

    batch = 12                                  # small; exercises a 2-step grid + batch pad
    x = jax.random.normal(k_x, (batch, 164), jnp.float32)    # input_dim = 2 * 82 = 164

    fwd = jax.jit(improved_cnn_forward)
    out = jax.block_until_ready(fwd(x, kp))

    assert out.shape == (batch, 1), out.shape
    assert bool(jnp.all(jnp.isfinite(out)))
    assert bool(jnp.all((out >= 0.0) & (out <= 1.0)))        # sigmoid output range

    ref = _reference_forward(x, params)
    assert bool(jnp.allclose(out, ref, atol=3e-2, rtol=0.0)), (out, ref)
    print("KERNEL_OK")
</pallas_src>

<mosaic_0001>
module attributes {stable_mosaic.version = 11 : i64} {
  func.func @kernel(%arg0: i32, %arg1: memref<1x656x8xbf16, #tpu.memory_space<vmem>>, %arg2: memref<8x64xbf16, #tpu.memory_space<vmem>>, %arg3: memref<1x64xf32, #tpu.memory_space<vmem>>, %arg4: memref<192x128xbf16, #tpu.memory_space<vmem>>, %arg5: memref<1x128xf32, #tpu.memory_space<vmem>>, %arg6: memref<384x256xbf16, #tpu.memory_space<vmem>>, %arg7: memref<1x256xf32, #tpu.memory_space<vmem>>, %arg8: memref<2560x256xbf16, #tpu.memory_space<vmem>>, %arg9: memref<1x256xf32, #tpu.memory_space<vmem>>, %arg10: memref<256x128xbf16, #tpu.memory_space<vmem>>, %arg11: memref<1x128xf32, #tpu.memory_space<vmem>>, %arg12: memref<1x128xf32, #tpu.memory_space<vmem>>, %arg13: memref<1x1xf32, #tpu.memory_space<vmem>>, %arg14: memref<1x1x8xf32, #tpu.memory_space<vmem>>, %arg15: memref<656x64xf32, #tpu.memory_space<vmem>>, %arg16: memref<344x64xbf16, #tpu.memory_space<vmem>>, %arg17: memref<328x128xf32, #tpu.memory_space<vmem>>, %arg18: memref<176x128xbf16, #tpu.memory_space<vmem>>, %arg19: memref<160x256xf32, #tpu.memory_space<vmem>>, %arg20: memref<8x2560xbf16, #tpu.memory_space<vmem>>) attributes {dimension_semantics = [#tpu.dimension_semantics<parallel>], iteration_bounds = array<i64: 2>, scalar_prefetch = 0 : i64, scratch_operands = 6 : i64, tpu.core_type = #tpu.core_type<tc>, window_params = [{transform_indices = @transform_0, window_bounds = array<i64: 1, 656, 8>}, {pipeline_mode = #tpu.pipeline_mode<synchronous>, transform_indices = @transform_1, window_bounds = array<i64: 8, 64>}, {pipeline_mode = #tpu.pipeline_mode<synchronous>, transform_indices = @transform_2, window_bounds = array<i64: 1, 64>}, {pipeline_mode = #tpu.pipeline_mode<synchronous>, transform_indices = @transform_3, window_bounds = array<i64: 192, 128>}, {pipeline_mode = #tpu.pipeline_mode<synchronous>, transform_indices = @transform_4, window_bounds = array<i64: 1, 128>}, {pipeline_mode = #tpu.pipeline_mode<synchronous>, transform_indices = @transform_5, window_bounds = array<i64: 384, 256>}, {pipeline_mode = #tpu.pipeline_mode<synchronous>, transform_indices = @transform_6, window_bounds = array<i64: 1, 256>}, {pipeline_mode = #tpu.pipeline_mode<synchronous>, transform_indices = @transform_7, window_bounds = array<i64: 2560, 256>}, {pipeline_mode = #tpu.pipeline_mode<synchronous>, transform_indices = @transform_8, window_bounds = array<i64: 1, 256>}, {pipeline_mode = #tpu.pipeline_mode<synchronous>, transform_indices = @transform_9, window_bounds = array<i64: 256, 128>}, {pipeline_mode = #tpu.pipeline_mode<synchronous>, transform_indices = @transform_10, window_bounds = array<i64: 1, 128>}, {pipeline_mode = #tpu.pipeline_mode<synchronous>, transform_indices = @transform_11, window_bounds = array<i64: 1, 128>}, {pipeline_mode = #tpu.pipeline_mode<synchronous>, transform_indices = @transform_12, window_bounds = array<i64: 1, 1>}, {transform_indices = @transform_13, window_bounds = array<i64: 1, 1, 8>}]} {
    %c0 = arith.constant 0 : index
    %c0_0 = arith.constant 0 : index
    %c0_1 = arith.constant 0 : index
    %0 = vector.load %arg1[%c0, %c0_0, %c0_1] : memref<1x656x8xbf16, #tpu.memory_space<vmem>>, vector<1x328x8xbf16>
    %1 = vector.shape_cast %0 : vector<1x328x8xbf16> to vector<328x8xbf16>
    %c0_2 = arith.constant 0 : index
    %c0_3 = arith.constant 0 : index
    %2 = vector.load %arg2[%c0_2, %c0_3] : memref<8x64xbf16, #tpu.memory_space<vmem>>, vector<8x64xbf16>
    %cst = arith.constant dense<0.000000e+00> : vector<328x64xf32>
    %3 = tpu.matmul %1, %2, %cst {dimension_numbers = #tpu.dot_dimension_numbers<[1], [0], [0], [1], [0, 0, 1, 1], [], []>} : vector<328x8xbf16>, vector<8x64xbf16>, vector<328x64xf32> -> vector<328x64xf32>
    %c0_4 = arith.constant 0 : index
    %c0_5 = arith.constant 0 : index
    %4 = vector.load %arg3[%c0_4, %c0_5] : memref<1x64xf32, #tpu.memory_space<vmem>>, vector<1x64xf32>
    %5 = vector.broadcast %4 : vector<1x64xf32> to vector<328x64xf32>
    %6 = arith.addf %3, %5 : vector<328x64xf32>
    %cst_6 = arith.constant 0.000000e+00 : f32
    %7 = vector.broadcast %cst_6 : f32 to vector<328x64xf32>
    %8 = arith.maximumf %6, %7 : vector<328x64xf32>
    %c0_7 = arith.constant 0 : index
    %c0_8 = arith.constant 0 : index
    %9 = vector.load %arg15[%c0_7, %c0_8] : memref<656x64xf32, #tpu.memory_space<vmem>>, vector<328x64xf32>
    tpu.vector_store %arg15[%c0_7, %c0_8], %8 {strides = array<i32>} : memref<656x64xf32, #tpu.memory_space<vmem>>, vector<328x64xf32>,
    %c0_9 = arith.constant 0 : index
    %c328 = arith.constant 328 : index
    %c0_10 = arith.constant 0 : index
    %10 = vector.load %arg1[%c0_9, %c328, %c0_10] : memref<1x656x8xbf16, #tpu.memory_space<vmem>>, vector<1x328x8xbf16>
    %11 = vector.shape_cast %10 : vector<1x328x8xbf16> to vector<328x8xbf16>
    %c0_11 = arith.constant 0 : index
    %c0_12 = arith.constant 0 : index
    %12 = vector.load %arg2[%c0_11, %c0_12] : memref<8x64xbf16, #tpu.memory_space<vmem>>, vector<8x64xbf16>
    %cst_13 = arith.constant dense<0.000000e+00> : vector<328x64xf32>
    %13 = tpu.matmul %11, %12, %cst_13 {dimension_numbers = #tpu.dot_dimension_numbers<[1], [0], [0], [1], [0, 0, 1, 1], [], []>} : vector<328x8xbf16>, vector<8x64xbf16>, vector<328x64xf32> -> vector<328x64xf32>
    %c0_14 = arith.constant 0 : index
    %c0_15 = arith.constant 0 : index
    %14 = vector.load %arg3[%c0_14, %c0_15] : memref<1x64xf32, #tpu.memory_space<vmem>>, vector<1x64xf32>
    %15 = vector.broadcast %14 : vector<1x64xf32> to vector<328x64xf32>
    %16 = arith.addf %13, %15 : vector<328x64xf32>
    %cst_16 = arith.constant 0.000000e+00 : f32
    %17 = vector.broadcast %cst_16 : f32 to vector<328x64xf32>
    %18 = arith.maximumf %16, %17 : vector<328x64xf32>
    %c328_17 = arith.constant 328 : index
    %c0_18 = arith.constant 0 : index
    %19 = vector.load %arg15[%c328_17, %c0_18] : memref<656x64xf32, #tpu.memory_space<vmem>>, vector<328x64xf32>
    tpu.vector_store %arg15[%c328_17, %c0_18], %18 {strides = array<i32>} : memref<656x64xf32, #tpu.memory_space<vmem>>, vector<328x64xf32>,
    %cst_19 = arith.constant 0.000000e+00 : bf16
    %20 = vector.broadcast %cst_19 : bf16 to vector<8x64xbf16>
    %c0_20 = arith.constant 0 : index
    %c0_21 = arith.constant 0 : index
    %21 = vector.load %arg16[%c0_20, %c0_21] : memref<344x64xbf16, #tpu.memory_space<vmem>>, vector<8x64xbf16>
    tpu.vector_store %arg16[%c0_20, %c0_21], %20 {strides = array<i32>} : memref<344x64xbf16, #tpu.memory_space<vmem>>, vector<8x64xbf16>,
    %c336 = arith.constant 336 : index
    %c0_22 = arith.constant 0 : index
    %22 = vector.load %arg16[%c336, %c0_22] : memref<344x64xbf16, #tpu.memory_space<vmem>>, vector<8x64xbf16>
    tpu.vector_store %arg16[%c336, %c0_22], %20 {strides = array<i32>} : memref<344x64xbf16, #tpu.memory_space<vmem>>, vector<8x64xbf16>,
    %cst_23 = arith.constant 0.000000e+00 : bf16
    %23 = vector.broadcast %cst_23 : bf16 to vector<8x128xbf16>
    %c0_24 = arith.constant 0 : index
    %c0_25 = arith.constant 0 : index
    %24 = vector.load %arg18[%c0_24, %c0_25] : memref<176x128xbf16, #tpu.memory_space<vmem>>, vector<8x128xbf16>
    tpu.vector_store %arg18[%c0_24, %c0_25], %23 {strides = array<i32>} : memref<176x128xbf16, #tpu.memory_space<vmem>>, vector<8x128xbf16>,
    %c168 = arith.constant 168 : index
    %c0_26 = arith.constant 0 : index
    %25 = vector.load %arg18[%c168, %c0_26] : memref<176x128xbf16, #tpu.memory_space<vmem>>, vector<8x128xbf16>
    tpu.vector_store %arg18[%c168, %c0_26], %23 {strides = array<i32>} : memref<176x128xbf16, #tpu.memory_space<vmem>>, vector<8x128xbf16>,
    %c0_27 = arith.constant 0 : index
    %c0_28 = arith.constant 0 : index
    %26 = vector.load %arg15[%c0_27, %c0_28] : memref<656x64xf32, #tpu.memory_space<vmem>>, vector<8x64xf32>
    %c8 = arith.constant 8 : index
    %c0_29 = arith.constant 0 : index
    %27 = vector.load %arg15[%c8, %c0_29] : memref<656x64xf32, #tpu.memory_space<vmem>>, vector<8x64xf32>
    %28 = arith.maximumf %26, %27 : vector<8x64xf32>
    %29 = arith.truncf %28 : vector<8x64xf32> to vector<8x64xbf16>
    %c8_30 = arith.constant 8 : index
    %c0_31 = arith.constant 0 : index
    %30 = vector.load %arg16[%c8_30, %c0_31] : memref<344x64xbf16, #tpu.memory_space<vmem>>, vector<8x64xbf16>
    tpu.vector_store %arg16[%c8_30, %c0_31], %29 {strides = array<i32>} : memref<344x64xbf16, #tpu.memory_space<vmem>>, vector<8x64xbf16>,
    %c16 = arith.constant 16 : index
    %c0_32 = arith.constant 0 : index
    %31 = vector.load %arg15[%c16, %c0_32] : memref<656x64xf32, #tpu.memory_space<vmem>>, vector<8x64xf32>
    %c24 = arith.constant 24 : index
    %c0_33 = arith.constant 0 : index
    %32 = vector.load %arg15[%c24, %c0_33] : memref<656x64xf32, #tpu.memory_space<vmem>>, vector<8x64xf32>
    %33 = arith.maximumf %31, %32 : vector<8x64xf32>
    %34 = arith.truncf %33 : vector<8x64xf32> to vector<8x64xbf16>
    %c16_34 = arith.constant 16 : index
    %c0_35 = arith.constant 0 : index
    %35 = vector.load %arg16[%c16_34, %c0_35] : memref<344x64xbf16, #tpu.memory_space<vmem>>, vector<8x64xbf16>
    tpu.vector_store %arg16[%c16_34, %c0_35], %34 {strides = array<i32>} : memref<344x64xbf16, #tpu.memory_space<vmem>>, vector<8x64xbf16>,
    %c32 = arith.constant 32 : index
    %c0_36 = arith.constant 0 : index
    %36 = vector.load %arg15[%c32, %c0_36] : memref<656x64xf32, #tpu.memory_space<vmem>>, vector<8x64xf32>
    %c40 = arith.constant 40 : index
    %c0_37 = arith.constant 0 : index
    %37 = vector.load %arg15[%c40, %c0_37] : memref<656x64xf32, #tpu.memory_space<vmem>>, vector<8x64xf32>
    %38 = arith.maximumf %36, %37 : vector<8x64xf32>
    %39 = arith.truncf %38 : vector<8x64xf32> to vector<8x64xbf16>
    %c24_38 = arith.constant 24 : index
    %c0_39 = arith.constant 0 : index
    %40 = vector.load %arg16[%c24_38, %c0_39] : memref<344x64xbf16, #tpu.memory_space<vmem>>, vector<8x64xbf16>
    tpu.vector_store %arg16[%c24_38, %c0_39], %39 {strides = array<i32>} : memref<344x64xbf16, #tpu.memory_space<vmem>>, vector<8x64xbf16>,
    %c48 = arith.constant 48 : index
    %c0_40 = arith.constant 0 : index
    %41 = vector.load %arg15[%c48, %c0_40] : memref<656x64xf32, #tpu.memory_space<vmem>>, vector<8x64xf32>
    %c56 = arith.constant 56 : index
    %c0_41 = arith.constant 0 : index
    %42 = vector.load %arg15[%c56, %c0_41] : memref<656x64xf32, #tpu.memory_space<vmem>>, vector<8x64xf32>
    %43 = arith.maximumf %41, %42 : vector<8x64xf32>
    %44 = arith.truncf %43 : vector<8x64xf32> to vector<8x64xbf16>
    %c32_42 = arith.constant 32 : index
    %c0_43 = arith.constant 0 : index
    %45 = vector.load %arg16[%c32_42, %c0_43] : memref<344x64xbf16, #tpu.memory_space<vmem>>, vector<8x64xbf16>
    tpu.vector_store %arg16[%c32_42, %c0_43], %44 {strides = array<i32>} : memref<344x64xbf16, #tpu.memory_space<vmem>>, vector<8x64xbf16>,
    %c64 = arith.constant 64 : index
    %c0_44 = arith.constant 0 : index
    %46 = vector.load %arg15[%c64, %c0_44] : memref<656x64xf32, #tpu.memory_space<vmem>>, vector<8x64xf32>
    %c72 = arith.constant 72 : index
    %c0_45 = arith.constant 0 : index
    %47 = vector.load %arg15[%c72, %c0_45] : memref<656x64xf32, #tpu.memory_space<vmem>>, vector<8x64xf32>
    %48 = arith.maximumf %46, %47 : vector<8x64xf32>
    %49 = arith.truncf %48 : vector<8x64xf32> to vector<8x64xbf16>
    %c40_46 = arith.constant 40 : index
    %c0_47 = arith.constant 0 : index
    %50 = vector.load %arg16[%c40_46, %c0_47] : memref<344x64xbf16, #tpu.memory_space<vmem>>, vector<8x64xbf16>
    tpu.vector_store %arg16[%c40_46, %c0_47], %49 {strides = array<i32>} : memref<344x64xbf16, #tpu.memory_space<vmem>>, vector<8x64xbf16>,
    %c80 = arith.constant 80 : index
    %c0_48 = arith.constant 0 : index
    %51 = vector.load %arg15[%c80, %c0_48] : memref<656x64xf32, #tpu.memory_space<vmem>>, vector<8x64xf32>
    %c88 = arith.constant 88 : index
    %c0_49 = arith.constant 0 : index
    %52 = vector.load %arg15[%c88, %c0_49] : memref<656x64xf32, #tpu.memory_space<vmem>>, vector<8x64xf32>
    %53 = arith.maximumf %51, %52 : vector<8x64xf32>
    %54 = arith.truncf %53 : vector<8x64xf32> to vector<8x64xbf16>
    %c48_50 = arith.constant 48 : index
    %c0_51 = arith.constant 0 : index
    %55 = vector.load %arg16[%c48_50, %c0_51] : memref<344x64xbf16, #tpu.memory_space<vmem>>, vector<8x64xbf16>
    tpu.vector_store %arg16[%c48_50, %c0_51], %54 {strides = array<i32>} : memref<344x64xbf16, #tpu.memory_space<vmem>>, vector<8x64xbf16>,
    %c96 = arith.constant 96 : index
    %c0_52 = arith.constant 0 : index
    %56 = vector.load %arg15[%c96, %c0_52] : memref<656x64xf32, #tpu.memory_space<vmem>>, vector<8x64xf32>
    %c104 = arith.constant 104 : index
    %c0_53 = arith.constant 0 : index
    %57 = vector.load %arg15[%c104, %c0_53] : memref<656x64xf32, #tpu.memory_space<vmem>>, vector<8x64xf32>
    %58 = arith.maximumf %56, %57 : vector<8x64xf32>
    %59 = arith.truncf %58 : vector<8x64xf32> to vector<8x64xbf16>
    %c56_54 = arith.constant 56 : index
    %c0_55 = arith.constant 0 : index
    %60 = vector.load %arg16[%c56_54, %c0_55] : memref<344x64xbf16, #tpu.memory_space<vmem>>, vector<8x64xbf16>
    tpu.vector_store %arg16[%c56_54, %c0_55], %59 {strides = array<i32>} : memref<344x64xbf16, #tpu.memory_space<vmem>>, vector<8x64xbf16>,
    %c112 = arith.constant 112 : index
    %c0_56 = arith.constant 0 : index
    %61 = vector.load %arg15[%c112, %c0_56] : memref<656x64xf32, #tpu.memory_space<vmem>>, vector<8x64xf32>
    %c120 = arith.constant 120 : index
    %c0_57 = arith.constant 0 : index
    %62 = vector.load %arg15[%c120, %c0_57] : memref<656x64xf32, #tpu.memory_space<vmem>>, vector<8x64xf32>
    %63 = arith.maximumf %61, %62 : vector<8x64xf32>
    %64 = arith.truncf %63 : vector<8x64xf32> to vector<8x64xbf16>
    %c64_58 = arith.constant 64 : index
    %c0_59 = arith.constant 0 : index
    %65 = vector.load %arg16[%c64_58, %c0_59] : memref<344x64xbf16, #tpu.memory_space<vmem>>, vector<8x64xbf16>
    tpu.vector_store %arg16[%c64_58, %c0_59], %64 {strides = array<i32>} : memref<344x64xbf16, #tpu.memory_space<vmem>>, vector<8x64xbf16>,
    %c128 = arith.constant 128 : index
    %c0_60 = arith.constant 0 : index
    %66 = vector.load %arg15[%c128, %c0_60] : memref<656x64xf32, #tpu.memory_space<vmem>>, vector<8x64xf32>
    %c136 = arith.constant 136 : index
    %c0_61 = arith.constant 0 : index
    %67 = vector.load %arg15[%c136, %c0_61] : memref<656x64xf32, #tpu.memory_space<vmem>>, vector<8x64xf32>
    %68 = arith.maximumf %66, %67 : vector<8x64xf32>
    %69 = arith.truncf %68 : vector<8x64xf32> to vector<8x64xbf16>
    %c72_62 = arith.constant 72 : index
    %c0_63 = arith.constant 0 : index
    %70 = vector.load %arg16[%c72_62, %c0_63] : memref<344x64xbf16, #tpu.memory_space<vmem>>, vector<8x64xbf16>
    tpu.vector_store %arg16[%c72_62, %c0_63], %69 {strides = array<i32>} : memref<344x64xbf16, #tpu.memory_space<vmem>>, vector<8x64xbf16>,
    %c144 = arith.constant 144 : index
    %c0_64 = arith.constant 0 : index
    %71 = vector.load %arg15[%c144, %c0_64] : memref<656x64xf32, #tpu.memory_space<vmem>>, vector<8x64xf32>
    %c152 = arith.constant 152 : index
    %c0_65 = arith.constant 0 : index
    %72 = vector.load %arg15[%c152, %c0_65] : memref<656x64xf32, #tpu.memory_space<vmem>>, vector<8x64xf32>
    %73 = arith.maximumf %71, %72 : vector<8x64xf32>
    %74 = arith.truncf %73 : vector<8x64xf32> to vector<8x64xbf16>
    %c80_66 = arith.constant 80 : index
    %c0_67 = arith.constant 0 : index
    %75 = vector.load %arg16[%c80_66, %c0_67] : memref<344x64xbf16, #tpu.memory_space<vmem>>, vector<8x64xbf16>
    tpu.vector_store %arg16[%c80_66, %c0_67], %74 {strides = array<i32>} : memref<344x64xbf16, #tpu.memory_space<vmem>>, vector<8x64xbf16>,
    %c160 = arith.constant 160 : index
    %c0_68 = arith.constant 0 : index
    %76 = vector.load %arg15[%c160, %c0_68] : memref<656x64xf32, #tpu.memory_space<vmem>>, vector<8x64xf32>
    %c168_69 = arith.constant 168 : index
    %c0_70 = arith.constant 0 : index
    %77 = vector.load %arg15[%c168_69, %c0_70] : memref<656x64xf32, #tpu.memory_space<vmem>>, vector<8x64xf32>
    %78 = arith.maximumf %76, %77 : vector<8x64xf32>
    %79 = arith.truncf %78 : vector<8x64xf32> to vector<8x64xbf16>
    %c88_71 = arith.constant 88 : index
    %c0_72 = arith.constant 0 : index
    %80 = vector.load %arg16[%c88_71, %c0_72] : memref<344x64xbf16, #tpu.memory_space<vmem>>, vector<8x64xbf16>
    tpu.vector_store %arg16[%c88_71, %c0_72], %79 {strides = array<i32>} : memref<344x64xbf16, #tpu.memory_space<vmem>>, vector<8x64xbf16>,
    %c176 = arith.constant 176 : index
    %c0_73 = arith.constant 0 : index
    %81 = vector.load %arg15[%c176, %c0_73] : memref<656x64xf32, #tpu.memory_space<vmem>>, vector<8x64xf32>
    %c184 = arith.constant 184 : index
    %c0_74 = arith.constant 0 : index
    %82 = vector.load %arg15[%c184, %c0_74] : memref<656x64xf32, #tpu.memory_space<vmem>>, vector<8x64xf32>
    %83 = arith.maximumf %81, %82 : vector<8x64xf32>
    %84 = arith.truncf %83 : vector<8x64xf32> to vector<8x64xbf16>
    %c96_75 = arith.constant 96 : index
    %c0_76 = arith.constant 0 : index
    %85 = vector.load %arg16[%c96_75, %c0_76] : memref<344x64xbf16, #tpu.memory_space<vmem>>, vector<8x64xbf16>
    tpu.vector_store %arg16[%c96_75, %c0_76], %84 {strides = array<i32>} : memref<344x64xbf16, #tpu.memory_space<vmem>>, vector<8x64xbf16>,
    %c192 = arith.constant 192 : index
    %c0_77 = arith.constant 0 : index
    %86 = vector.load %arg15[%c192, %c0_77] : memref<656x64xf32, #tpu.memory_space<vmem>>, vector<8x64xf32>
    %c200 = arith.constant 200 : index
    %c0_78 = arith.constant 0 : index
    %87 = vector.load %arg15[%c200, %c0_78] : memref<656x64xf32, #tpu.memory_space<vmem>>, vector<8x64xf32>
    %88 = arith.maximumf %86, %87 : vector<8x64xf32>
    %89 = arith.truncf %88 : vector<8x64xf32> to vector<8x64xbf16>
    %c104_79 = arith.constant 104 : index
    %c0_80 = arith.constant 0 : index
    %90 = vector.load %arg16[%c104_79, %c0_80] : memref<344x64xbf16, #tpu.memory_space<vmem>>, vector<8x64xbf16>
    tpu.vector_store %arg16[%c104_79, %c0_80], %89 {strides = array<i32>} : memref<344x64xbf16, #tpu.memory_space<vmem>>, vector<8x64xbf16>,
    %c208 = arith.constant 208 : index
    %c0_81 = arith.constant 0 : index
    %91 = vector.load %arg15[%c208, %c0_81] : memref<656x64xf32, #tpu.memory_space<vmem>>, vector<8x64xf32>
    %c216 = arith.constant 216 : index
    %c0_82 = arith.constant 0 : index
    %92 = vector.load %arg15[%c216, %c0_82] : memref<656x64xf32, #tpu.memory_space<vmem>>, vector<8x64xf32>
    %93 = arith.maximumf %91, %92 : vector<8x64xf32>
    %94 = arith.truncf %93 : vector<8x64xf32> to vector<8x64xbf16>
    %c112_83 = arith.constant 112 : index
    %c0_84 = arith.constant 0 : index
    %95 = vector.load %arg16[%c112_83, %c0_84] : memref<344x64xbf16, #tpu.memory_space<vmem>>, vector<8x64xbf16>
    tpu.vector_store %arg16[%c112_83, %c0_84], %94 {strides = array<i32>} : memref<344x64xbf16, #tpu.memory_space<vmem>>, vector<8x64xbf16>,
    %c224 = arith.constant 224 : index
    %c0_85 = arith.constant 0 : index
    %96 = vector.load %arg15[%c224, %c0_85] : memref<656x64xf32, #tpu.memory_space<vmem>>, vector<8x64xf32>
    %c232 = arith.constant 232 : index
    %c0_86 = arith.constant 0 : index
    %97 = vector.load %arg15[%c232, %c0_86] : memref<656x64xf32, #tpu.memory_space<vmem>>, vector<8x64xf32>
    %98 = arith.maximumf %96, %97 : vector<8x64xf32>
    %99 = arith.truncf %98 : vector<8x64xf32> to vector<8x64xbf16>
    %c120_87 = arith.constant 120 : index
    %c0_88 = arith.constant 0 : index
    %100 = vector.load %arg16[%c120_87, %c0_88] : memref<344x64xbf16, #tpu.memory_space<vmem>>, vector<8x64xbf16>
    tpu.vector_store %arg16[%c120_87, %c0_88], %99 {strides = array<i32>} : memref<344x64xbf16, #tpu.memory_space<vmem>>, vector<8x64xbf16>,
    %c240 = arith.constant 240 : index
    %c0_89 = arith.constant 0 : index
    %101 = vector.load %arg15[%c240, %c0_89] : memref<656x64xf32, #tpu.memory_space<vmem>>, vector<8x64xf32>
    %c248 = arith.constant 248 : index
    %c0_90 = arith.constant 0 : index
    %102 = vector.load %arg15[%c248, %c0_90] : memref<656x64xf32, #tpu.memory_space<vmem>>, vector<8x64xf32>
    %103 = arith.maximumf %101, %102 : vector<8x64xf32>
    %104 = arith.truncf %103 : vector<8x64xf32> to vector<8x64xbf16>
    %c128_91 = arith.constant 128 : index
    %c0_92 = arith.constant 0 : index
    %105 = vector.load %arg16[%c128_91, %c0_92] : memref<344x64xbf16, #tpu.memory_space<vmem>>, vector<8x64xbf16>
    tpu.vector_store %arg16[%c128_91, %c0_92], %104 {strides = array<i32>} : memref<344x64xbf16, #tpu.memory_space<vmem>>, vector<8x64xbf16>,
    %c256 = arith.constant 256 : index
    %c0_93 = arith.constant 0 : index
    %106 = vector.load %arg15[%c256, %c0_93] : memref<656x64xf32, #tpu.memory_space<vmem>>, vector<8x64xf32>
    %c264 = arith.constant 264 : index
    %c0_94 = arith.constant 0 : index
    %107 = vector.load %arg15[%c264, %c0_94] : memref<656x64xf32, #tpu.memory_space<vmem>>, vector<8x64xf32>
    %108 = arith.maximumf %106, %107 : vector<8x64xf32>
    %109 = arith.truncf %108 : vector<8x64xf32> to vector<8x64xbf16>
    %c136_95 = arith.constant 136 : index
    %c0_96 = arith.constant 0 : index
    %110 = vector.load %arg16[%c136_95, %c0_96] : memref<344x64xbf16, #tpu.memory_space<vmem>>, vector<8x64xbf16>
    tpu.vector_store %arg16[%c136_95, %c0_96], %109 {strides = array<i32>} : memref<344x64xbf16, #tpu.memory_space<vmem>>, vector<8x64xbf16>,
    %c272 = arith.constant 272 : index
    %c0_97 = arith.constant 0 : index
    %111 = vector.load %arg15[%c272, %c0_97] : memref<656x64xf32, #tpu.memory_space<vmem>>, vector<8x64xf32>
    %c280 = arith.constant 280 : index
    %c0_98 = arith.constant 0 : index
    %112 = vector.load %arg15[%c280, %c0_98] : memref<656x64xf32, #tpu.memory_space<vmem>>, vector<8x64xf32>
    %113 = arith.maximumf %111, %112 : vector<8x64xf32>
    %114 = arith.truncf %113 : vector<8x64xf32> to vector<8x64xbf16>
    %c144_99 = arith.constant 144 : index
    %c0_100 = arith.constant 0 : index
    %115 = vector.load %arg16[%c144_99, %c0_100] : memref<344x64xbf16, #tpu.memory_space<vmem>>, vector<8x64xbf16>
    tpu.vector_store %arg16[%c144_99, %c0_100], %114 {strides = array<i32>} : memref<344x64xbf16, #tpu.memory_space<vmem>>, vector<8x64xbf16>,
    %c288 = arith.constant 288 : index
    %c0_101 = arith.constant 0 : index
    %116 = vector.load %arg15[%c288, %c0_101] : memref<656x64xf32, #tpu.memory_space<vmem>>, vector<8x64xf32>
    %c296 = arith.constant 296 : index
    %c0_102 = arith.constant 0 : index
    %117 = vector.load %arg15[%c296, %c0_102] : memref<656x64xf32, #tpu.memory_space<vmem>>, vector<8x64xf32>
    %118 = arith.maximumf %116, %117 : vector<8x64xf32>
    %119 = arith.truncf %118 : vector<8x64xf32> to vector<8x64xbf16>
    %c152_103 = arith.constant 152 : index
    %c0_104 = arith.constant 0 : index
    %120 = vector.load %arg16[%c152_103, %c0_104] : memref<344x64xbf16, #tpu.memory_space<vmem>>, vector<8x64xbf16>
    tpu.vector_store %arg16[%c152_103, %c0_104], %119 {strides = array<i32>} : memref<344x64xbf16, #tpu.memory_space<vmem>>, vector<8x64xbf16>,
    %c304 = arith.constant 304 : index
    %c0_105 = arith.constant 0 : index
    %121 = vector.load %arg15[%c304, %c0_105] : memref<656x64xf32, #tpu.memory_space<vmem>>, vector<8x64xf32>
    %c312 = arith.constant 312 : index
    %c0_106 = arith.constant 0 : index
    %122 = vector.load %arg15[%c312, %c0_106] : memref<656x64xf32, #tpu.memory_space<vmem>>, vector<8x64xf32>
    %123 = arith.maximumf %121, %122 : vector<8x64xf32>
    %124 = arith.truncf %123 : vector<8x64xf32> to vector<8x64xbf16>
    %c160_107 = arith.constant 160 : index
    %c0_108 = arith.constant 0 : index
    %125 = vector.load %arg16[%c160_107, %c0_108] : memref<344x64xbf16, #tpu.memory_space<vmem>>, vector<8x64xbf16>
    tpu.vector_store %arg16[%c160_107, %c0_108], %124 {strides = array<i32>} : memref<344x64xbf16, #tpu.memory_space<vmem>>, vector<8x64xbf16>,
    %c320 = arith.constant 320 : index
    %c0_109 = arith.constant 0 : index
    %126 = vector.load %arg15[%c320, %c0_109] : memref<656x64xf32, #tpu.memory_space<vmem>>, vector<8x64xf32>
    %c328_110 = arith.constant 328 : index
    %c0_111 = arith.constant 0 : index
    %127 = vector.load %arg15[%c328_110, %c0_111] : memref<656x64xf32, #tpu.memory_space<vmem>>, vector<8x64xf32>
    %128 = arith.maximumf %126, %127 : vector<8x64xf32>
    %129 = arith.truncf %128 : vector<8x64xf32> to vector<8x64xbf16>
    %c168_112 = arith.constant 168 : index
    %c0_113 = arith.constant 0 : index
    %130 = vector.load %arg16[%c168_112, %c0_113] : memref<344x64xbf16, #tpu.memory_space<vmem>>, vector<8x64xbf16>
    tpu.vector_store %arg16[%c168_112, %c0_113], %129 {strides = array<i32>} : memref<344x64xbf16, #tpu.memory_space<vmem>>, vector<8x64xbf16>,
    %c336_114 = arith.constant 336 : index
    %c0_115 = arith.constant 0 : index
    %131 = vector.load %arg15[%c336_114, %c0_115] : memref<656x64xf32, #tpu.memory_space<vmem>>, vector<8x64xf32>
    %c344 = arith.constant 344 : index
    %c0_116 = arith.constant 0 : index
    %132 = vector.load %arg15[%c344, %c0_116] : memref<656x64xf32, #tpu.memory_space<vmem>>, vector<8x64xf32>
    %133 = arith.maximumf %131, %132 : vector<8x64xf32>
    %134 = arith.truncf %133 : vector<8x64xf32> to vector<8x64xbf16>
    %c176_117 = arith.constant 176 : index
    %c0_118 = arith.constant 0 : index
    %135 = vector.load %arg16[%c176_117, %c0_118] : memref<344x64xbf16, #tpu.memory_space<vmem>>, vector<8x64xbf16>
    tpu.vector_store %arg16[%c176_117, %c0_118], %134 {strides = array<i32>} : memref<344x64xbf16, #tpu.memory_space<vmem>>, vector<8x64xbf16>,
    %c352 = arith.constant 352 : index
    %c0_119 = arith.constant 0 : index
    %136 = vector.load %arg15[%c352, %c0_119] : memref<656x64xf32, #tpu.memory_space<vmem>>, vector<8x64xf32>
    %c360 = arith.constant 360 : index
    %c0_120 = arith.constant 0 : index
    %137 = vector.load %arg15[%c360, %c0_120] : memref<656x64xf32, #tpu.memory_space<vmem>>, vector<8x64xf32>
    %138 = arith.maximumf %136, %137 : vector<8x64xf32>
    %139 = arith.truncf %138 : vector<8x64xf32> to vector<8x64xbf16>
    %c184_121 = arith.constant 184 : index
    %c0_122 = arith.constant 0 : index
    %140 = vector.load %arg16[%c184_121, %c0_122] : memref<344x64xbf16, #tpu.memory_space<vmem>>, vector<8x64xbf16>
    tpu.vector_store %arg16[%c184_121, %c0_122], %139 {strides = array<i32>} : memref<344x64xbf16, #tpu.memory_space<vmem>>, vector<8x64xbf16>,
    %c368 = arith.constant 368 : index
    %c0_123 = arith.constant 0 : index
    %141 = vector.load %arg15[%c368, %c0_123] : memref<656x64xf32, #tpu.memory_space<vmem>>, vector<8x64xf32>
    %c376 = arith.constant 376 : index
    %c0_124 = arith.constant 0 : index
    %142 = vector.load %arg15[%c376, %c0_124] : memref<656x64xf32, #tpu.memory_space<vmem>>, vector<8x64xf32>
    %143 = arith.maximumf %141, %142 : vector<8x64xf32>
    %144 = arith.truncf %143 : vector<8x64xf32> to vector<8x64xbf16>
    %c192_125 = arith.constant 192 : index
    %c0_126 = arith.constant 0 : index
    %145 = vector.load %arg16[%c192_125, %c0_126] : memref<344x64xbf16, #tpu.memory_space<vmem>>, vector<8x64xbf16>
    tpu.vector_store %arg16[%c192_125, %c0_126], %144 {strides = array<i32>} : memref<344x64xbf16, #tpu.memory_space<vmem>>, vector<8x64xbf16>,
    %c384 = arith.constant 384 : index
    %c0_127 = arith.constant 0 : index
    %146 = vector.load %arg15[%c384, %c0_127] : memref<656x64xf32, #tpu.memory_space<vmem>>, vector<8x64xf32>
    %c392 = arith.constant 392 : index
    %c0_128 = arith.constant 0 : index
    %147 = vector.load %arg15[%c392, %c0_128] : memref<656x64xf32, #tpu.memory_space<vmem>>, vector<8x64xf32>
    %148 = arith.maximumf %146, %147 : vector<8x64xf32>
    %149 = arith.truncf %148 : vector<8x64xf32> to vector<8x64xbf16>
    %c200_129 = arith.constant 200 : index
    %c0_130 = arith.constant 0 : index
    %150 = vector.load %arg16[%c200_129, %c0_130] : memref<344x64xbf16, #tpu.memory_space<vmem>>, vector<8x64xbf16>
    tpu.vector_store %arg16[%c200_129, %c0_130], %149 {strides = array<i32>} : memref<344x64xbf16, #tpu.memory_space<vmem>>, vector<8x64xbf16>,
    %c400 = arith.constant 400 : index
    %c0_131 = arith.constant 0 : index
    %151 = vector.load %arg15[%c400, %c0_131] : memref<656x64xf32, #tpu.memory_space<vmem>>, vector<8x64xf32>
    %c408 = arith.constant 408 : index
    %c0_132 = arith.constant 0 : index
    %152 = vector.load %arg15[%c408, %c0_132] : memref<656x64xf32, #tpu.memory_space<vmem>>, vector<8x64xf32>
    %153 = arith.maximumf %151, %152 : vector<8x64xf32>
    %154 = arith.truncf %153 : vector<8x64xf32> to vector<8x64xbf16>
    %c208_133 = arith.constant 208 : index
    %c0_134 = arith.constant 0 : index
    %155 = vector.load %arg16[%c208_133, %c0_134] : memref<344x64xbf16, #tpu.memory_space<vmem>>, vector<8x64xbf16>
    tpu.vector_store %arg16[%c208_133, %c0_134], %154 {strides = array<i32>} : memref<344x64xbf16, #tpu.memory_space<vmem>>, vector<8x64xbf16>,
    %c416 = arith.constant 416 : index
    %c0_135 = arith.constant 0 : index
    %156 = vector.load %arg15[%c416, %c0_135] : memref<656x64xf32, #tpu.memory_space<vmem>>, vector<8x64xf32>
    %c424 = arith.constant 424 : index
    %c0_136 = arith.constant 0 : index
    %157 = vector.load %arg15[%c424, %c0_136] : memref<656x64xf32, #tpu.memory_space<vmem>>, vector<8x64xf32>
    %158 = arith.maximumf %156, %157 : vector<8x64xf32>
    %159 = arith.truncf %158 : vector<8x64xf32> to vector<8x64xbf16>
    %c216_137 = arith.constant 216 : index
    %c0_138 = arith.constant 0 : index
    %160 = vector.load %arg16[%c216_137, %c0_138] : memref<344x64xbf16, #tpu.memory_space<vmem>>, vector<8x64xbf16>
    tpu.vector_store %arg16[%c216_137, %c0_138], %159 {strides = array<i32>} : memref<344x64xbf16, #tpu.memory_space<vmem>>, vector<8x64xbf16>,
    %c432 = arith.constant 432 : index
    %c0_139 = arith.constant 0 : index
    %161 = vector.load %arg15[%c432, %c0_139] : memref<656x64xf32, #tpu.memory_space<vmem>>, vector<8x64xf32>
    %c440 = arith.constant 440 : index
    %c0_140 = arith.constant 0 : index
    %162 = vector.load %arg15[%c440, %c0_140] : memref<656x64xf32, #tpu.memory_space<vmem>>, vector<8x64xf32>
    %163 = arith.maximumf %161, %162 : vector<8x64xf32>
    %164 = arith.truncf %163 : vector<8x64xf32> to vector<8x64xbf16>
    %c224_141 = arith.constant 224 : index
    %c0_142 = arith.constant 0 : index
    %165 = vector.load %arg16[%c224_141, %c0_142] : memref<344x64xbf16, #tpu.memory_space<vmem>>, vector<8x64xbf16>
    tpu.vector_store %arg16[%c224_141, %c0_142], %164 {strides = array<i32>} : memref<344x64xbf16, #tpu.memory_space<vmem>>, vector<8x64xbf16>,
    %c448 = arith.constant 448 : index
    %c0_143 = arith.constant 0 : index
    %166 = vector.load %arg15[%c448, %c0_143] : memref<656x64xf32, #tpu.memory_space<vmem>>, vector<8x64xf32>
    %c456 = arith.constant 456 : index
    %c0_144 = arith.constant 0 : index
    %167 = vector.load %arg15[%c456, %c0_144] : memref<656x64xf32, #tpu.memory_space<vmem>>, vector<8x64xf32>
    %168 = arith.maximumf %166, %167 : vector<8x64xf32>
    %169 = arith.truncf %168 : vector<8x64xf32> to vector<8x64xbf16>
    %c232_145 = arith.constant 232 : index
    %c0_146 = arith.constant 0 : index
    %170 = vector.load %arg16[%c232_145, %c0_146] : memref<344x64xbf16, #tpu.memory_space<vmem>>, vector<8x64xbf16>
    tpu.vector_store %arg16[%c232_145, %c0_146], %169 {strides = array<i32>} : memref<344x64xbf16, #tpu.memory_space<vmem>>, vector<8x64xbf16>,
    %c464 = arith.constant 464 : index
    %c0_147 = arith.constant 0 : index
    %171 = vector.load %arg15[%c464, %c0_147] : memref<656x64xf32, #tpu.memory_space<vmem>>, vector<8x64xf32>
    %c472 = arith.constant 472 : index
    %c0_148 = arith.constant 0 : index
    %172 = vector.load %arg15[%c472, %c0_148] : memref<656x64xf32, #tpu.memory_space<vmem>>, vector<8x64xf32>
    %173 = arith.maximumf %171, %172 : vector<8x64xf32>
    %174 = arith.truncf %173 : vector<8x64xf32> to vector<8x64xbf16>
    %c240_149 = arith.constant 240 : index
    %c0_150 = arith.constant 0 : index
    %175 = vector.load %arg16[%c240_149, %c0_150] : memref<344x64xbf16, #tpu.memory_space<vmem>>, vector<8x64xbf16>
    tpu.vector_store %arg16[%c240_149, %c0_150], %174 {strides = array<i32>} : memref<344x64xbf16, #tpu.memory_space<vmem>>, vector<8x64xbf16>,
    %c480 = arith.constant 480 : index
    %c0_151 = arith.constant 0 : index
    %176 = vector.load %arg15[%c480, %c0_151] : memref<656x64xf32, #tpu.memory_space<vmem>>, vector<8x64xf32>
    %c488 = arith.constant 488 : index
    %c0_152 = arith.constant 0 : index
    %177 = vector.load %arg15[%c488, %c0_152] : memref<656x64xf32, #tpu.memory_space<vmem>>, vector<8x64xf32>
    %178 = arith.maximumf %176, %177 : vector<8x64xf32>
    %179 = arith.truncf %178 : vector<8x64xf32> to vector<8x64xbf16>
    %c248_153 = arith.constant 248 : index
    %c0_154 = arith.constant 0 : index
    %180 = vector.load %arg16[%c248_153, %c0_154] : memref<344x64xbf16, #tpu.memory_space<vmem>>, vector<8x64xbf16>
    tpu.vector_store %arg16[%c248_153, %c0_154], %179 {strides = array<i32>} : memref<344x64xbf16, #tpu.memory_space<vmem>>, vector<8x64xbf16>,
    %c496 = arith.constant 496 : index
    %c0_155 = arith.constant 0 : index
    %181 = vector.load %arg15[%c496, %c0_155] : memref<656x64xf32, #tpu.memory_space<vmem>>, vector<8x64xf32>
    %c504 = arith.constant 504 : index
    %c0_156 = arith.constant 0 : index
    %182 = vector.load %arg15[%c504, %c0_156] : memref<656x64xf32, #tpu.memory_space<vmem>>, vector<8x64xf32>
    %183 = arith.maximumf %181, %182 : vector<8x64xf32>
    %184 = arith.truncf %183 : vector<8x64xf32> to vector<8x64xbf16>
    %c256_157 = arith.constant 256 : index
    %c0_158 = arith.constant 0 : index
    %185 = vector.load %arg16[%c256_157, %c0_158] : memref<344x64xbf16, #tpu.memory_space<vmem>>, vector<8x64xbf16>
    tpu.vector_store %arg16[%c256_157, %c0_158], %184 {strides = array<i32>} : memref<344x64xbf16, #tpu.memory_space<vmem>>, vector<8x64xbf16>,
    %c512 = arith.constant 512 : index
    %c0_159 = arith.constant 0 : index
    %186 = vector.load %arg15[%c512, %c0_159] : memref<656x64xf32, #tpu.memory_space<vmem>>, vector<8x64xf32>
    %c520 = arith.constant 520 : index
    %c0_160 = arith.constant 0 : index
    %187 = vector.load %arg15[%c520, %c0_160] : memref<656x64xf32, #tpu.memory_space<vmem>>, vector<8x64xf32>
    %188 = arith.maximumf %186, %187 : vector<8x64xf32>
    %189 = arith.truncf %188 : vector<8x64xf32> to vector<8x64xbf16>
    %c264_161 = arith.constant 264 : index
    %c0_162 = arith.constant 0 : index
    %190 = vector.load %arg16[%c264_161, %c0_162] : memref<344x64xbf16, #tpu.memory_space<vmem>>, vector<8x64xbf16>
    tpu.vector_store %arg16[%c264_161, %c0_162], %189 {strides = array<i32>} : memref<344x64xbf16, #tpu.memory_space<vmem>>, vector<8x64xbf16>,
    %c528 = arith.constant 528 : index
    %c0_163 = arith.constant 0 : index
    %191 = vector.load %arg15[%c528, %c0_163] : memref<656x64xf32, #tpu.memory_space<vmem>>, vector<8x64xf32>
    %c536 = arith.constant 536 : index
    %c0_164 = arith.constant 0 : index
    %192 = vector.load %arg15[%c536, %c0_164] : memref<656x64xf32, #tpu.memory_space<vmem>>, vector<8x64xf32>
    %193 = arith.maximumf %191, %192 : vector<8x64xf32>
    %194 = arith.truncf %193 : vector<8x64xf32> to vector<8x64xbf16>
    %c272_165 = arith.constant 272 : index
    %c0_166 = arith.constant 0 : index
    %195 = vector.load %arg16[%c272_165, %c0_166] : memref<344x64xbf16, #tpu.memory_space<vmem>>, vector<8x64xbf16>
    tpu.vector_store %arg16[%c272_165, %c0_166], %194 {strides = array<i32>} : memref<344x64xbf16, #tpu.memory_space<vmem>>, vector<8x64xbf16>,
    %c544 = arith.constant 544 : index
    %c0_167 = arith.constant 0 : index
    %196 = vector.load %arg15[%c544, %c0_167] : memref<656x64xf32, #tpu.memory_space<vmem>>, vector<8x64xf32>
    %c552 = arith.constant 552 : index
    %c0_168 = arith.constant 0 : index
    %197 = vector.load %arg15[%c552, %c0_168] : memref<656x64xf32, #tpu.memory_space<vmem>>, vector<8x64xf32>
    %198 = arith.maximumf %196, %197 : vector<8x64xf32>
    %199 = arith.truncf %198 : vector<8x64xf32> to vector<8x64xbf16>
    %c280_169 = arith.constant 280 : index
    %c0_170 = arith.constant 0 : index
    %200 = vector.load %arg16[%c280_169, %c0_170] : memref<344x64xbf16, #tpu.memory_space<vmem>>, vector<8x64xbf16>
    tpu.vector_store %arg16[%c280_169, %c0_170], %199 {strides = array<i32>} : memref<344x64xbf16, #tpu.memory_space<vmem>>, vector<8x64xbf16>,
    %c560 = arith.constant 560 : index
    %c0_171 = arith.constant 0 : index
    %201 = vector.load %arg15[%c560, %c0_171] : memref<656x64xf32, #tpu.memory_space<vmem>>, vector<8x64xf32>
    %c568 = arith.constant 568 : index
    %c0_172 = arith.constant 0 : index
    %202 = vector.load %arg15[%c568, %c0_172] : memref<656x64xf32, #tpu.memory_space<vmem>>, vector<8x64xf32>
    %203 = arith.maximumf %201, %202 : vector<8x64xf32>
    %204 = arith.truncf %203 : vector<8x64xf32> to vector<8x64xbf16>
    %c288_173 = arith.constant 288 : index
    %c0_174 = arith.constant 0 : index
    %205 = vector.load %arg16[%c288_173, %c0_174] : memref<344x64xbf16, #tpu.memory_space<vmem>>, vector<8x64xbf16>
    tpu.vector_store %arg16[%c288_173, %c0_174], %204 {strides = array<i32>} : memref<344x64xbf16, #tpu.memory_space<vmem>>, vector<8x64xbf16>,
    %c576 = arith.constant 576 : index
    %c0_175 = arith.constant 0 : index
    %206 = vector.load %arg15[%c576, %c0_175] : memref<656x64xf32, #tpu.memory_space<vmem>>, vector<8x64xf32>
    %c584 = arith.constant 584 : index
    %c0_176 = arith.constant 0 : index
    %207 = vector.load %arg15[%c584, %c0_176] : memref<656x64xf32, #tpu.memory_space<vmem>>, vector<8x64xf32>
    %208 = arith.maximumf %206, %207 : vector<8x64xf32>
    %209 = arith.truncf %208 : vector<8x64xf32> to vector<8x64xbf16>
    %c296_177 = arith.constant 296 : index
    %c0_178 = arith.constant 0 : index
    %210 = vector.load %arg16[%c296_177, %c0_178] : memref<344x64xbf16, #tpu.memory_space<vmem>>, vector<8x64xbf16>
    tpu.vector_store %arg16[%c296_177, %c0_178], %209 {strides = array<i32>} : memref<344x64xbf16, #tpu.memory_space<vmem>>, vector<8x64xbf16>,
    %c592 = arith.constant 592 : index
    %c0_179 = arith.constant 0 : index
    %211 = vector.load %arg15[%c592, %c0_179] : memref<656x64xf32, #tpu.memory_space<vmem>>, vector<8x64xf32>
    %c600 = arith.constant 600 : index
    %c0_180 = arith.constant 0 : index
    %212 = vector.load %arg15[%c600, %c0_180] : memref<656x64xf32, #tpu.memory_space<vmem>>, vector<8x64xf32>
    %213 = arith.maximumf %211, %212 : vector<8x64xf32>
    %214 = arith.truncf %213 : vector<8x64xf32> to vector<8x64xbf16>
    %c304_181 = arith.constant 304 : index
    %c0_182 = arith.constant 0 : index
    %215 = vector.load %arg16[%c304_181, %c0_182] : memref<344x64xbf16, #tpu.memory_space<vmem>>, vector<8x64xbf16>
    tpu.vector_store %arg16[%c304_181, %c0_182], %214 {strides = array<i32>} : memref<344x64xbf16, #tpu.memory_space<vmem>>, vector<8x64xbf16>,
    %c608 = arith.constant 608 : index
    %c0_183 = arith.constant 0 : index
    %216 = vector.load %arg15[%c608, %c0_183] : memref<656x64xf32, #tpu.memory_space<vmem>>, vector<8x64xf32>
    %c616 = arith.constant 616 : index
    %c0_184 = arith.constant 0 : index
    %217 = vector.load %arg15[%c616, %c0_184] : memref<656x64xf32, #tpu.memory_space<vmem>>, vector<8x64xf32>
    %218 = arith.maximumf %216, %217 : vector<8x64xf32>
    %219 = arith.truncf %218 : vector<8x64xf32> to vector<8x64xbf16>
    %c312_185 = arith.constant 312 : index
    %c0_186 = arith.constant 0 : index
    %220 = vector.load %arg16[%c312_185, %c0_186] : memref<344x64xbf16, #tpu.memory_space<vmem>>, vector<8x64xbf16>
    tpu.vector_store %arg16[%c312_185, %c0_186], %219 {strides = array<i32>} : memref<344x64xbf16, #tpu.memory_space<vmem>>, vector<8x64xbf16>,
    %c624 = arith.constant 624 : index
    %c0_187 = arith.constant 0 : index
    %221 = vector.load %arg15[%c624, %c0_187] : memref<656x64xf32, #tpu.memory_space<vmem>>, vector<8x64xf32>
    %c632 = arith.constant 632 : index
    %c0_188 = arith.constant 0 : index
    %222 = vector.load %arg15[%c632, %c0_188] : memref<656x64xf32, #tpu.memory_space<vmem>>, vector<8x64xf32>
    %223 = arith.maximumf %221, %222 : vector<8x64xf32>
    %224 = arith.truncf %223 : vector<8x64xf32> to vector<8x64xbf16>
    %c320_189 = arith.constant 320 : index
    %c0_190 = arith.constant 0 : index
    %225 = vector.load %arg16[%c320_189, %c0_190] : memref<344x64xbf16, #tpu.memory_space<vmem>>, vector<8x64xbf16>
    tpu.vector_store %arg16[%c320_189, %c0_190], %224 {strides = array<i32>} : memref<344x64xbf16, #tpu.memory_space<vmem>>, vector<8x64xbf16>,
    %c640 = arith.constant 640 : index
    %c0_191 = arith.constant 0 : index
    %226 = vector.load %arg15[%c640, %c0_191] : memref<656x64xf32, #tpu.memory_space<vmem>>, vector<8x64xf32>
    %c648 = arith.constant 648 : index
    %c0_192 = arith.constant 0 : index
    %227 = vector.load %arg15[%c648, %c0_192] : memref<656x64xf32, #tpu.memory_space<vmem>>, vector<8x64xf32>
    %228 = arith.maximumf %226, %227 : vector<8x64xf32>
    %229 = arith.truncf %228 : vector<8x64xf32> to vector<8x64xbf16>
    %c328_193 = arith.constant 328 : index
    %c0_194 = arith.constant 0 : index
    %230 = vector.load %arg16[%c328_193, %c0_194] : memref<344x64xbf16, #tpu.memory_space<vmem>>, vector<8x64xbf16>
    tpu.vector_store %arg16[%c328_193, %c0_194], %229 {strides = array<i32>} : memref<344x64xbf16, #tpu.memory_space<vmem>>, vector<8x64xbf16>,
    %c0_195 = arith.constant 0 : index
    %c0_196 = arith.constant 0 : index
    %231 = vector.load %arg16[%c0_195, %c0_196] : memref<344x64xbf16, #tpu.memory_space<vmem>>, vector<328x64xbf16>
    %c0_197 = arith.constant 0 : index
    %c0_198 = arith.constant 0 : index
    %232 = vector.load %arg4[%c0_197, %c0_198] : memref<192x128xbf16, #tpu.memory_space<vmem>>, vector<64x128xbf16>
    %cst_199 = arith.constant dense<0.000000e+00> : vector<328x128xf32>
    %233 = tpu.matmul %231, %232, %cst_199 {dimension_numbers = #tpu.dot_dimension_numbers<[1], [0], [0], [1], [0, 0, 1, 1], [], []>} : vector<328x64xbf16>, vector<64x128xbf16>, vector<328x128xf32> -> vector<328x128xf32>
    %c8_200 = arith.constant 8 : index
    %c0_201 = arith.constant 0 : index
    %234 = vector.load %arg16[%c8_200, %c0_201] : memref<344x64xbf16, #tpu.memory_space<vmem>>, vector<328x64xbf16>
    %c64_202 = arith.constant 64 : index
    %c0_203 = arith.constant 0 : index
    %235 = vector.load %arg4[%c64_202, %c0_203] : memref<192x128xbf16, #tpu.memory_space<vmem>>, vector<64x128xbf16>
    %cst_204 = arith.constant dense<0.000000e+00> : vector<328x128xf32>
    %236 = tpu.matmul %234, %235, %cst_204 {dimension_numbers = #tpu.dot_dimension_numbers<[1], [0], [0], [1], [0, 0, 1, 1], [], []>} : vector<328x64xbf16>, vector<64x128xbf16>, vector<328x128xf32> -> vector<328x128xf32>
    %237 = arith.addf %233, %236 : vector<328x128xf32>
    %c16_205 = arith.constant 16 : index
    %c0_206 = arith.constant 0 : index
    %238 = vector.load %arg16[%c16_205, %c0_206] : memref<344x64xbf16, #tpu.memory_space<vmem>>, vector<328x64xbf16>
    %c128_207 = arith.constant 128 : index
    %c0_208 = arith.constant 0 : index
    %239 = vector.load %arg4[%c128_207, %c0_208] : memref<192x128xbf16, #tpu.memory_space<vmem>>, vector<64x128xbf16>
    %cst_209 = arith.constant dense<0.000000e+00> : vector<328x128xf32>
    %240 = tpu.matmul %238, %239, %cst_209 {dimension_numbers = #tpu.dot_dimension_numbers<[1], [0], [0], [1], [0, 0, 1, 1], [], []>} : vector<328x64xbf16>, vector<64x128xbf16>, vector<328x128xf32> -> vector<328x128xf32>
    %241 = arith.addf %237, %240 : vector<328x128xf32>
    %c0_210 = arith.constant 0 : index
    %c0_211 = arith.constant 0 : index
    %242 = vector.load %arg5[%c0_210, %c0_211] : memref<1x128xf32, #tpu.memory_space<vmem>>, vector<1x128xf32>
    %243 = vector.broadcast %242 : vector<1x128xf32> to vector<328x128xf32>
    %244 = arith.addf %241, %243 : vector<328x128xf32>
    %cst_212 = arith.constant 0.000000e+00 : f32
    %245 = vector.broadcast %cst_212 : f32 to vector<328x128xf32>
    %246 = arith.maximumf %244, %245 : vector<328x128xf32>
    %c0_213 = arith.constant 0 : index
    %c0_214 = arith.constant 0 : index
    %247 = vector.load %arg17[%c0_213, %c0_214] : memref<328x128xf32, #tpu.memory_space<vmem>>, vector<328x128xf32>
    tpu.vector_store %arg17[%c0_213, %c0_214], %246 {strides = array<i32>} : memref<328x128xf32, #tpu.memory_space<vmem>>, vector<328x128xf32>,
    %c0_215 = arith.constant 0 : index
    %c0_216 = arith.constant 0 : index
    %248 = vector.load %arg17[%c0_215, %c0_216] : memref<328x128xf32, #tpu.memory_space<vmem>>, vector<8x128xf32>
    %c8_217 = arith.constant 8 : index
    %c0_218 = arith.constant 0 : index
    %249 = vector.load %arg17[%c8_217, %c0_218] : memref<328x128xf32, #tpu.memory_space<vmem>>, vector<8x128xf32>
    %250 = arith.maximumf %248, %249 : vector<8x128xf32>
    %251 = arith.truncf %250 : vector<8x128xf32> to vector<8x128xbf16>
    %c8_219 = arith.constant 8 : index
    %c0_220 = arith.constant 0 : index
    %252 = vector.load %arg18[%c8_219, %c0_220] : memref<176x128xbf16, #tpu.memory_space<vmem>>, vector<8x128xbf16>
    tpu.vector_store %arg18[%c8_219, %c0_220], %251 {strides = array<i32>} : memref<176x128xbf16, #tpu.memory_space<vmem>>, vector<8x128xbf16>,
    %c16_221 = arith.constant 16 : index
    %c0_222 = arith.constant 0 : index
    %253 = vector.load %arg17[%c16_221, %c0_222] : memref<328x128xf32, #tpu.memory_space<vmem>>, vector<8x128xf32>
    %c24_223 = arith.constant 24 : index
    %c0_224 = arith.constant 0 : index
    %254 = vector.load %arg17[%c24_223, %c0_224] : memref<328x128xf32, #tpu.memory_space<vmem>>, vector<8x128xf32>
    %255 = arith.maximumf %253, %254 : vector<8x128xf32>
    %256 = arith.truncf %255 : vector<8x128xf32> to vector<8x128xbf16>
    %c16_225 = arith.constant 16 : index
    %c0_226 = arith.constant 0 : index
    %257 = vector.load %arg18[%c16_225, %c0_226] : memref<176x128xbf16, #tpu.memory_space<vmem>>, vector<8x128xbf16>
    tpu.vector_store %arg18[%c16_225, %c0_226], %256 {strides = array<i32>} : memref<176x128xbf16, #tpu.memory_space<vmem>>, vector<8x128xbf16>,
    %c32_227 = arith.constant 32 : index
    %c0_228 = arith.constant 0 : index
    %258 = vector.load %arg17[%c32_227, %c0_228] : memref<328x128xf32, #tpu.memory_space<vmem>>, vector<8x128xf32>
    %c40_229 = arith.constant 40 : index
    %c0_230 = arith.constant 0 : index
    %259 = vector.load %arg17[%c40_229, %c0_230] : memref<328x128xf32, #tpu.memory_space<vmem>>, vector<8x128xf32>
    %260 = arith.maximumf %258, %259 : vector<8x128xf32>
    %261 = arith.truncf %260 : vector<8x128xf32> to vector<8x128xbf16>
    %c24_231 = arith.constant 24 : index
    %c0_232 = arith.constant 0 : index
    %262 = vector.load %arg18[%c24_231, %c0_232] : memref<176x128xbf16, #tpu.memory_space<vmem>>, vector<8x128xbf16>
    tpu.vector_store %arg18[%c24_231, %c0_232], %261 {strides = array<i32>} : memref<176x128xbf16, #tpu.memory_space<vmem>>, vector<8x128xbf16>,
    %c48_233 = arith.constant 48 : index
    %c0_234 = arith.constant 0 : index
    %263 = vector.load %arg17[%c48_233, %c0_234] : memref<328x128xf32, #tpu.memory_space<vmem>>, vector<8x128xf32>
    %c56_235 = arith.constant 56 : index
    %c0_236 = arith.constant 0 : index
    %264 = vector.load %arg17[%c56_235, %c0_236] : memref<328x128xf32, #tpu.memory_space<vmem>>, vector<8x128xf32>
    %265 = arith.maximumf %263, %264 : vector<8x128xf32>
    %266 = arith.truncf %265 : vector<8x128xf32> to vector<8x128xbf16>
    %c32_237 = arith.constant 32 : index
    %c0_238 = arith.constant 0 : index
    %267 = vector.load %arg18[%c32_237, %c0_238] : memref<176x128xbf16, #tpu.memory_space<vmem>>, vector<8x128xbf16>
    tpu.vector_store %arg18[%c32_237, %c0_238], %266 {strides = array<i32>} : memref<176x128xbf16, #tpu.memory_space<vmem>>, vector<8x128xbf16>,
    %c64_239 = arith.constant 64 : index
    %c0_240 = arith.constant 0 : index
    %268 = vector.load %arg17[%c64_239, %c0_240] : memref<328x128xf32, #tpu.memory_space<vmem>>, vector<8x128xf32>
    %c72_241 = arith.constant 72 : index
    %c0_242 = arith.constant 0 : index
    %269 = vector.load %arg17[%c72_241, %c0_242] : memref<328x128xf32, #tpu.memory_space<vmem>>, vector<8x128xf32>
    %270 = arith.maximumf %268, %269 : vector<8x128xf32>
    %271 = arith.truncf %270 : vector<8x128xf32> to vector<8x128xbf16>
    %c40_243 = arith.constant 40 : index
    %c0_244 = arith.constant 0 : index
    %272 = vector.load %arg18[%c40_243, %c0_244] : memref<176x128xbf16, #tpu.memory_space<vmem>>, vector<8x128xbf16>
    tpu.vector_store %arg18[%c40_243, %c0_244], %271 {strides = array<i32>} : memref<176x128xbf16, #tpu.memory_space<vmem>>, vector<8x128xbf16>,
    %c80_245 = arith.constant 80 : index
    %c0_246 = arith.constant 0 : index
    %273 = vector.load %arg17[%c80_245, %c0_246] : memref<328x128xf32, #tpu.memory_space<vmem>>, vector<8x128xf32>
    %c88_247 = arith.constant 88 : index
    %c0_248 = arith.constant 0 : index
    %274 = vector.load %arg17[%c88_247, %c0_248] : memref<328x128xf32, #tpu.memory_space<vmem>>, vector<8x128xf32>
    %275 = arith.maximumf %273, %274 : vector<8x128xf32>
    %276 = arith.truncf %275 : vector<8x128xf32> to vector<8x128xbf16>
    %c48_249 = arith.constant 48 : index
    %c0_250 = arith.constant 0 : index
    %277 = vector.load %arg18[%c48_249, %c0_250] : memref<176x128xbf16, #tpu.memory_space<vmem>>, vector<8x128xbf16>
    tpu.vector_store %arg18[%c48_249, %c0_250], %276 {strides = array<i32>} : memref<176x128xbf16, #tpu.memory_space<vmem>>, vector<8x128xbf16>,
    %c96_251 = arith.constant 96 : index
    %c0_252 = arith.constant 0 : index
    %278 = vector.load %arg17[%c96_251, %c0_252] : memref<328x128xf32, #tpu.memory_space<vmem>>, vector<8x128xf32>
    %c104_253 = arith.constant 104 : index
    %c0_254 = arith.constant 0 : index
    %279 = vector.load %arg17[%c104_253, %c0_254] : memref<328x128xf32, #tpu.memory_space<vmem>>, vector<8x128xf32>
    %280 = arith.maximumf %278, %279 : vector<8x128xf32>
    %281 = arith.truncf %280 : vector<8x128xf32> to vector<8x128xbf16>
    %c56_255 = arith.constant 56 : index
    %c0_256 = arith.constant 0 : index
    %282 = vector.load %arg18[%c56_255, %c0_256] : memref<176x128xbf16, #tpu.memory_space<vmem>>, vector<8x128xbf16>
    tpu.vector_store %arg18[%c56_255, %c0_256], %281 {strides = array<i32>} : memref<176x128xbf16, #tpu.memory_space<vmem>>, vector<8x128xbf16>,
    %c112_257 = arith.constant 112 : index
    %c0_258 = arith.constant 0 : index
    %283 = vector.load %arg17[%c112_257, %c0_258] : memref<328x128xf32, #tpu.memory_space<vmem>>, vector<8x128xf32>
    %c120_259 = arith.constant 120 : index
    %c0_260 = arith.constant 0 : index
    %284 = vector.load %arg17[%c120_259, %c0_260] : memref<328x128xf32, #tpu.memory_space<vmem>>, vector<8x128xf32>
    %285 = arith.maximumf %283, %284 : vector<8x128xf32>
    %286 = arith.truncf %285 : vector<8x128xf32> to vector<8x128xbf16>
    %c64_261 = arith.constant 64 : index
    %c0_262 = arith.constant 0 : index
    %287 = vector.load %arg18[%c64_261, %c0_262] : memref<176x128xbf16, #tpu.memory_space<vmem>>, vector<8x128xbf16>
    tpu.vector_store %arg18[%c64_261, %c0_262], %286 {strides = array<i32>} : memref<176x128xbf16, #tpu.memory_space<vmem>>, vector<8x128xbf16>,
    %c128_263 = arith.constant 128 : index
    %c0_264 = arith.constant 0 : index
    %288 = vector.load %arg17[%c128_263, %c0_264] : memref<328x128xf32, #tpu.memory_space<vmem>>, vector<8x128xf32>
    %c136_265 = arith.constant 136 : index
    %c0_266 = arith.constant 0 : index
    %289 = vector.load %arg17[%c136_265, %c0_266] : memref<328x128xf32, #tpu.memory_space<vmem>>, vector<8x128xf32>
    %290 = arith.maximumf %288, %289 : vector<8x128xf32>
    %291 = arith.truncf %290 : vector<8x128xf32> to vector<8x128xbf16>
    %c72_267 = arith.constant 72 : index
    %c0_268 = arith.constant 0 : index
    %292 = vector.load %arg18[%c72_267, %c0_268] : memref<176x128xbf16, #tpu.memory_space<vmem>>, vector<8x128xbf16>
    tpu.vector_store %arg18[%c72_267, %c0_268], %291 {strides = array<i32>} : memref<176x128xbf16, #tpu.memory_space<vmem>>, vector<8x128xbf16>,
    %c144_269 = arith.constant 144 : index
    %c0_270 = arith.constant 0 : index
    %293 = vector.load %arg17[%c144_269, %c0_270] : memref<328x128xf32, #tpu.memory_space<vmem>>, vector<8x128xf32>
    %c152_271 = arith.constant 152 : index
    %c0_272 = arith.constant 0 : index
    %294 = vector.load %arg17[%c152_271, %c0_272] : memref<328x128xf32, #tpu.memory_space<vmem>>, vector<8x128xf32>
    %295 = arith.maximumf %293, %294 : vector<8x128xf32>
    %296 = arith.truncf %295 : vector<8x128xf32> to vector<8x128xbf16>
    %c80_273 = arith.constant 80 : index
    %c0_274 = arith.constant 0 : index
    %297 = vector.load %arg18[%c80_273, %c0_274] : memref<176x128xbf16, #tpu.memory_space<vmem>>, vector<8x128xbf16>
    tpu.vector_store %arg18[%c80_273, %c0_274], %296 {strides = array<i32>} : memref<176x128xbf16, #tpu.memory_space<vmem>>, vector<8x128xbf16>,
    %c160_275 = arith.constant 160 : index
    %c0_276 = arith.constant 0 : index
    %298 = vector.load %arg17[%c160_275, %c0_276] : memref<328x128xf32, #tpu.memory_space<vmem>>, vector<8x128xf32>
    %c168_277 = arith.constant 168 : index
    %c0_278 = arith.constant 0 : index
    %299 = vector.load %arg17[%c168_277, %c0_278] : memref<328x128xf32, #tpu.memory_space<vmem>>, vector<8x128xf32>
    %300 = arith.maximumf %298, %299 : vector<8x128xf32>
    %301 = arith.truncf %300 : vector<8x128xf32> to vector<8x128xbf16>
    %c88_279 = arith.constant 88 : index
    %c0_280 = arith.constant 0 : index
    %302 = vector.load %arg18[%c88_279, %c0_280] : memref<176x128xbf16, #tpu.memory_space<vmem>>, vector<8x128xbf16>
    tpu.vector_store %arg18[%c88_279, %c0_280], %301 {strides = array<i32>} : memref<176x128xbf16, #tpu.memory_space<vmem>>, vector<8x128xbf16>,
    %c176_281 = arith.constant 176 : index
    %c0_282 = arith.constant 0 : index
    %303 = vector.load %arg17[%c176_281, %c0_282] : memref<328x128xf32, #tpu.memory_space<vmem>>, vector<8x128xf32>
    %c184_283 = arith.constant 184 : index
    %c0_284 = arith.constant 0 : index
    %304 = vector.load %arg17[%c184_283, %c0_284] : memref<328x128xf32, #tpu.memory_space<vmem>>, vector<8x128xf32>
    %305 = arith.maximumf %303, %304 : vector<8x128xf32>
    %306 = arith.truncf %305 : vector<8x128xf32> to vector<8x128xbf16>
    %c96_285 = arith.constant 96 : index
    %c0_286 = arith.constant 0 : index
    %307 = vector.load %arg18[%c96_285, %c0_286] : memref<176x128xbf16, #tpu.memory_space<vmem>>, vector<8x128xbf16>
    tpu.vector_store %arg18[%c96_285, %c0_286], %306 {strides = array<i32>} : memref<176x128xbf16, #tpu.memory_space<vmem>>, vector<8x128xbf16>,
    %c192_287 = arith.constant 192 : index
    %c0_288 = arith.constant 0 : index
    %308 = vector.load %arg17[%c192_287, %c0_288] : memref<328x128xf32, #tpu.memory_space<vmem>>, vector<8x128xf32>
    %c200_289 = arith.constant 200 : index
    %c0_290 = arith.constant 0 : index
    %309 = vector.load %arg17[%c200_289, %c0_290] : memref<328x128xf32, #tpu.memory_space<vmem>>, vector<8x128xf32>
    %310 = arith.maximumf %308, %309 : vector<8x128xf32>
    %311 = arith.truncf %310 : vector<8x128xf32> to vector<8x128xbf16>
    %c104_291 = arith.constant 104 : index
    %c0_292 = arith.constant 0 : index
    %312 = vector.load %arg18[%c104_291, %c0_292] : memref<176x128xbf16, #tpu.memory_space<vmem>>, vector<8x128xbf16>
    tpu.vector_store %arg18[%c104_291, %c0_292], %311 {strides = array<i32>} : memref<176x128xbf16, #tpu.memory_space<vmem>>, vector<8x128xbf16>,
    %c208_293 = arith.constant 208 : index
    %c0_294 = arith.constant 0 : index
    %313 = vector.load %arg17[%c208_293, %c0_294] : memref<328x128xf32, #tpu.memory_space<vmem>>, vector<8x128xf32>
    %c216_295 = arith.constant 216 : index
    %c0_296 = arith.constant 0 : index
    %314 = vector.load %arg17[%c216_295, %c0_296] : memref<328x128xf32, #tpu.memory_space<vmem>>, vector<8x128xf32>
    %315 = arith.maximumf %313, %314 : vector<8x128xf32>
    %316 = arith.truncf %315 : vector<8x128xf32> to vector<8x128xbf16>
    %c112_297 = arith.constant 112 : index
    %c0_298 = arith.constant 0 : index
    %317 = vector.load %arg18[%c112_297, %c0_298] : memref<176x128xbf16, #tpu.memory_space<vmem>>, vector<8x128xbf16>
    tpu.vector_store %arg18[%c112_297, %c0_298], %316 {strides = array<i32>} : memref<176x128xbf16, #tpu.memory_space<vmem>>, vector<8x128xbf16>,
    %c224_299 = arith.constant 224 : index
    %c0_300 = arith.constant 0 : index
    %318 = vector.load %arg17[%c224_299, %c0_300] : memref<328x128xf32, #tpu.memory_space<vmem>>, vector<8x128xf32>
    %c232_301 = arith.constant 232 : index
    %c0_302 = arith.constant 0 : index
    %319 = vector.load %arg17[%c232_301, %c0_302] : memref<328x128xf32, #tpu.memory_space<vmem>>, vector<8x128xf32>
    %320 = arith.maximumf %318, %319 : vector<8x128xf32>
    %321 = arith.truncf %320 : vector<8x128xf32> to vector<8x128xbf16>
    %c120_303 = arith.constant 120 : index
    %c0_304 = arith.constant 0 : index
    %322 = vector.load %arg18[%c120_303, %c0_304] : memref<176x128xbf16, #tpu.memory_space<vmem>>, vector<8x128xbf16>
    tpu.vector_store %arg18[%c120_303, %c0_304], %321 {strides = array<i32>} : memref<176x128xbf16, #tpu.memory_space<vmem>>, vector<8x128xbf16>,
    %c240_305 = arith.constant 240 : index
    %c0_306 = arith.constant 0 : index
    %323 = vector.load %arg17[%c240_305, %c0_306] : memref<328x128xf32, #tpu.memory_space<vmem>>, vector<8x128xf32>
    %c248_307 = arith.constant 248 : index
    %c0_308 = arith.constant 0 : index
    %324 = vector.load %arg17[%c248_307, %c0_308] : memref<328x128xf32, #tpu.memory_space<vmem>>, vector<8x128xf32>
    %325 = arith.maximumf %323, %324 : vector<8x128xf32>
    %326 = arith.truncf %325 : vector<8x128xf32> to vector<8x128xbf16>
    %c128_309 = arith.constant 128 : index
    %c0_310 = arith.constant 0 : index
    %327 = vector.load %arg18[%c128_309, %c0_310] : memref<176x128xbf16, #tpu.memory_space<vmem>>, vector<8x128xbf16>
    tpu.vector_store %arg18[%c128_309, %c0_310], %326 {strides = array<i32>} : memref<176x128xbf16, #tpu.memory_space<vmem>>, vector<8x128xbf16>,
    %c256_311 = arith.constant 256 : index
    %c0_312 = arith.constant 0 : index
    %328 = vector.load %arg17[%c256_311, %c0_312] : memref<328x128xf32, #tpu.memory_space<vmem>>, vector<8x128xf32>
    %c264_313 = arith.constant 264 : index
    %c0_314 = arith.constant 0 : index
    %329 = vector.load %arg17[%c264_313, %c0_314] : memref<328x128xf32, #tpu.memory_space<vmem>>, vector<8x128xf32>
    %330 = arith.maximumf %328, %329 : vector<8x128xf32>
    %331 = arith.truncf %330 : vector<8x128xf32> to vector<8x128xbf16>
    %c136_315 = arith.constant 136 : index
    %c0_316 = arith.constant 0 : index
    %332 = vector.load %arg18[%c136_315, %c0_316] : memref<176x128xbf16, #tpu.memory_space<vmem>>, vector<8x128xbf16>
    tpu.vector_store %arg18[%c136_315, %c0_316], %331 {strides = array<i32>} : memref<176x128xbf16, #tpu.memory_space<vmem>>, vector<8x128xbf16>,
    %c272_317 = arith.constant 272 : index
    %c0_318 = arith.constant 0 : index
    %333 = vector.load %arg17[%c272_317, %c0_318] : memref<328x128xf32, #tpu.memory_space<vmem>>, vector<8x128xf32>
    %c280_319 = arith.constant 280 : index
    %c0_320 = arith.constant 0 : index
    %334 = vector.load %arg17[%c280_319, %c0_320] : memref<328x128xf32, #tpu.memory_space<vmem>>, vector<8x128xf32>
    %335 = arith.maximumf %333, %334 : vector<8x128xf32>
    %336 = arith.truncf %335 : vector<8x128xf32> to vector<8x128xbf16>
    %c144_321 = arith.constant 144 : index
    %c0_322 = arith.constant 0 : index
    %337 = vector.load %arg18[%c144_321, %c0_322] : memref<176x128xbf16, #tpu.memory_space<vmem>>, vector<8x128xbf16>
    tpu.vector_store %arg18[%c144_321, %c0_322], %336 {strides = array<i32>} : memref<176x128xbf16, #tpu.memory_space<vmem>>, vector<8x128xbf16>,
    %c288_323 = arith.constant 288 : index
    %c0_324 = arith.constant 0 : index
    %338 = vector.load %arg17[%c288_323, %c0_324] : memref<328x128xf32, #tpu.memory_space<vmem>>, vector<8x128xf32>
    %c296_325 = arith.constant 296 : index
    %c0_326 = arith.constant 0 : index
    %339 = vector.load %arg17[%c296_325, %c0_326] : memref<328x128xf32, #tpu.memory_space<vmem>>, vector<8x128xf32>
    %340 = arith.maximumf %338, %339 : vector<8x128xf32>
    %341 = arith.truncf %340 : vector<8x128xf32> to vector<8x128xbf16>
    %c152_327 = arith.constant 152 : index
    %c0_328 = arith.constant 0 : index
    %342 = vector.load %arg18[%c152_327, %c0_328] : memref<176x128xbf16, #tpu.memory_space<vmem>>, vector<8x128xbf16>
    tpu.vector_store %arg18[%c152_327, %c0_328], %341 {strides = array<i32>} : memref<176x128xbf16, #tpu.memory_space<vmem>>, vector<8x128xbf16>,
    %c304_329 = arith.constant 304 : index
    %c0_330 = arith.constant 0 : index
    %343 = vector.load %arg17[%c304_329, %c0_330] : memref<328x128xf32, #tpu.memory_space<vmem>>, vector<8x128xf32>
    %c312_331 = arith.constant 312 : index
    %c0_332 = arith.constant 0 : index
    %344 = vector.load %arg17[%c312_331, %c0_332] : memref<328x128xf32, #tpu.memory_space<vmem>>, vector<8x128xf32>
    %345 = arith.maximumf %343, %344 : vector<8x128xf32>
    %346 = arith.truncf %345 : vector<8x128xf32> to vector<8x128xbf16>
    %c160_333 = arith.constant 160 : index
    %c0_334 = arith.constant 0 : index
    %347 = vector.load %arg18[%c160_333, %c0_334] : memref<176x128xbf16, #tpu.memory_space<vmem>>, vector<8x128xbf16>
    tpu.vector_store %arg18[%c160_333, %c0_334], %346 {strides = array<i32>} : memref<176x128xbf16, #tpu.memory_space<vmem>>, vector<8x128xbf16>,
    %c0_335 = arith.constant 0 : index
    %c0_336 = arith.constant 0 : index
    %348 = vector.load %arg18[%c0_335, %c0_336] : memref<176x128xbf16, #tpu.memory_space<vmem>>, vector<160x128xbf16>
    %c0_337 = arith.constant 0 : index
    %c0_338 = arith.constant 0 : index
    %349 = vector.load %arg6[%c0_337, %c0_338] : memref<384x256xbf16, #tpu.memory_space<vmem>>, vector<128x256xbf16>
    %cst_339 = arith.constant dense<0.000000e+00> : vector<160x256xf32>
    %350 = tpu.matmul %348, %349, %cst_339 {dimension_numbers = #tpu.dot_dimension_numbers<[1], [0], [0], [1], [0, 0, 1, 1], [], []>} : vector<160x128xbf16>, vector<128x256xbf16>, vector<160x256xf32> -> vector<160x256xf32>
    %c8_340 = arith.constant 8 : index
    %c0_341 = arith.constant 0 : index
    %351 = vector.load %arg18[%c8_340, %c0_341] : memref<176x128xbf16, #tpu.memory_space<vmem>>, vector<160x128xbf16>
    %c128_342 = arith.constant 128 : index
    %c0_343 = arith.constant 0 : index
    %352 = vector.load %arg6[%c128_342, %c0_343] : memref<384x256xbf16, #tpu.memory_space<vmem>>, vector<128x256xbf16>
    %cst_344 = arith.constant dense<0.000000e+00> : vector<160x256xf32>
    %353 = tpu.matmul %351, %352, %cst_344 {dimension_numbers = #tpu.dot_dimension_numbers<[1], [0], [0], [1], [0, 0, 1, 1], [], []>} : vector<160x128xbf16>, vector<128x256xbf16>, vector<160x256xf32> -> vector<160x256xf32>
    %354 = arith.addf %350, %353 : vector<160x256xf32>
    %c16_345 = arith.constant 16 : index
    %c0_346 = arith.constant 0 : index
    %355 = vector.load %arg18[%c16_345, %c0_346] : memref<176x128xbf16, #tpu.memory_space<vmem>>, vector<160x128xbf16>
    %c256_347 = arith.constant 256 : index
    %c0_348 = arith.constant 0 : index
    %356 = vector.load %arg6[%c256_347, %c0_348] : memref<384x256xbf16, #tpu.memory_space<vmem>>, vector<128x256xbf16>
    %cst_349 = arith.constant dense<0.000000e+00> : vector<160x256xf32>
    %357 = tpu.matmul %355, %356, %cst_349 {dimension_numbers = #tpu.dot_dimension_numbers<[1], [0], [0], [1], [0, 0, 1, 1], [], []>} : vector<160x128xbf16>, vector<128x256xbf16>, vector<160x256xf32> -> vector<160x256xf32>
    %358 = arith.addf %354, %357 : vector<160x256xf32>
    %c0_350 = arith.constant 0 : index
    %c0_351 = arith.constant 0 : index
    %359 = vector.load %arg7[%c0_350, %c0_351] : memref<1x256xf32, #tpu.memory_space<vmem>>, vector<1x256xf32>
    %360 = vector.broadcast %359 : vector<1x256xf32> to vector<160x256xf32>
    %361 = arith.addf %358, %360 : vector<160x256xf32>
    %cst_352 = arith.constant 0.000000e+00 : f32
    %362 = vector.broadcast %cst_352 : f32 to vector<160x256xf32>
    %363 = arith.maximumf %361, %362 : vector<160x256xf32>
    %c0_353 = arith.constant 0 : index
    %c0_354 = arith.constant 0 : index
    %364 = vector.load %arg19[%c0_353, %c0_354] : memref<160x256xf32, #tpu.memory_space<vmem>>, vector<160x256xf32>
    tpu.vector_store %arg19[%c0_353, %c0_354], %363 {strides = array<i32>} : memref<160x256xf32, #tpu.memory_space<vmem>>, vector<160x256xf32>,
    %c0_355 = arith.constant 0 : index
    %c0_356 = arith.constant 0 : index
    %365 = vector.load %arg19[%c0_355, %c0_356] : memref<160x256xf32, #tpu.memory_space<vmem>>, vector<8x256xf32>
    %c8_357 = arith.constant 8 : index
    %c0_358 = arith.constant 0 : index
    %366 = vector.load %arg19[%c8_357, %c0_358] : memref<160x256xf32, #tpu.memory_space<vmem>>, vector<8x256xf32>
    %367 = arith.maximumf %365, %366 : vector<8x256xf32>
    %368 = arith.truncf %367 : vector<8x256xf32> to vector<8x256xbf16>
    %c0_359 = arith.constant 0 : index
    %c0_360 = arith.constant 0 : index
    %369 = vector.load %arg20[%c0_359, %c0_360] : memref<8x2560xbf16, #tpu.memory_space<vmem>>, vector<8x256xbf16>
    tpu.vector_store %arg20[%c0_359, %c0_360], %368 {strides = array<i32>} : memref<8x2560xbf16, #tpu.memory_space<vmem>>, vector<8x256xbf16>,
    %c16_361 = arith.constant 16 : index
    %c0_362 = arith.constant 0 : index
    %370 = vector.load %arg19[%c16_361, %c0_362] : memref<160x256xf32, #tpu.memory_space<vmem>>, vector<8x256xf32>
    %c24_363 = arith.constant 24 : index
    %c0_364 = arith.constant 0 : index
    %371 = vector.load %arg19[%c24_363, %c0_364] : memref<160x256xf32, #tpu.memory_space<vmem>>, vector<8x256xf32>
    %372 = arith.maximumf %370, %371 : vector<8x256xf32>
    %373 = arith.truncf %372 : vector<8x256xf32> to vector<8x256xbf16>
    %c0_365 = arith.constant 0 : index
    %c256_366 = arith.constant 256 : index
    %374 = vector.load %arg20[%c0_365, %c256_366] : memref<8x2560xbf16, #tpu.memory_space<vmem>>, vector<8x256xbf16>
    tpu.vector_store %arg20[%c0_365, %c256_366], %373 {strides = array<i32>} : memref<8x2560xbf16, #tpu.memory_space<vmem>>, vector<8x256xbf16>,
    %c32_367 = arith.constant 32 : index
    %c0_368 = arith.constant 0 : index
    %375 = vector.load %arg19[%c32_367, %c0_368] : memref<160x256xf32, #tpu.memory_space<vmem>>, vector<8x256xf32>
    %c40_369 = arith.constant 40 : index
    %c0_370 = arith.constant 0 : index
    %376 = vector.load %arg19[%c40_369, %c0_370] : memref<160x256xf32, #tpu.memory_space<vmem>>, vector<8x256xf32>
    %377 = arith.maximumf %375, %376 : vector<8x256xf32>
    %378 = arith.truncf %377 : vector<8x256xf32> to vector<8x256xbf16>
    %c0_371 = arith.constant 0 : index
    %c512_372 = arith.constant 512 : index
    %379 = vector.load %arg20[%c0_371, %c512_372] : memref<8x2560xbf16, #tpu.memory_space<vmem>>, vector<8x256xbf16>
    tpu.vector_store %arg20[%c0_371, %c512_372], %378 {strides = array<i32>} : memref<8x2560xbf16, #tpu.memory_space<vmem>>, vector<8x256xbf16>,
    %c48_373 = arith.constant 48 : index
    %c0_374 = arith.constant 0 : index
    %380 = vector.load %arg19[%c48_373, %c0_374] : memref<160x256xf32, #tpu.memory_space<vmem>>, vector<8x256xf32>
    %c56_375 = arith.constant 56 : index
    %c0_376 = arith.constant 0 : index
    %381 = vector.load %arg19[%c56_375, %c0_376] : memref<160x256xf32, #tpu.memory_space<vmem>>, vector<8x256xf32>
    %382 = arith.maximumf %380, %381 : vector<8x256xf32>
    %383 = arith.truncf %382 : vector<8x256xf32> to vector<8x256xbf16>
    %c0_377 = arith.constant 0 : index
    %c768 = arith.constant 768 : index
    %384 = vector.load %arg20[%c0_377, %c768] : memref<8x2560xbf16, #tpu.memory_space<vmem>>, vector<8x256xbf16>
    tpu.vector_store %arg20[%c0_377, %c768], %383 {strides = array<i32>} : memref<8x2560xbf16, #tpu.memory_space<vmem>>, vector<8x256xbf16>,
    %c64_378 = arith.constant 64 : index
    %c0_379 = arith.constant 0 : index
    %385 = vector.load %arg19[%c64_378, %c0_379] : memref<160x256xf32, #tpu.memory_space<vmem>>, vector<8x256xf32>
    %c72_380 = arith.constant 72 : index
    %c0_381 = arith.constant 0 : index
    %386 = vector.load %arg19[%c72_380, %c0_381] : memref<160x256xf32, #tpu.memory_space<vmem>>, vector<8x256xf32>
    %387 = arith.maximumf %385, %386 : vector<8x256xf32>
    %388 = arith.truncf %387 : vector<8x256xf32> to vector<8x256xbf16>
    %c0_382 = arith.constant 0 : index
    %c1024 = arith.constant 1024 : index
    %389 = vector.load %arg20[%c0_382, %c1024] : memref<8x2560xbf16, #tpu.memory_space<vmem>>, vector<8x256xbf16>
    tpu.vector_store %arg20[%c0_382, %c1024], %388 {strides = array<i32>} : memref<8x2560xbf16, #tpu.memory_space<vmem>>, vector<8x256xbf16>,
    %c80_383 = arith.constant 80 : index
    %c0_384 = arith.constant 0 : index
    %390 = vector.load %arg19[%c80_383, %c0_384] : memref<160x256xf32, #tpu.memory_space<vmem>>, vector<8x256xf32>
    %c88_385 = arith.constant 88 : index
    %c0_386 = arith.constant 0 : index
    %391 = vector.load %arg19[%c88_385, %c0_386] : memref<160x256xf32, #tpu.memory_space<vmem>>, vector<8x256xf32>
    %392 = arith.maximumf %390, %391 : vector<8x256xf32>
    %393 = arith.truncf %392 : vector<8x256xf32> to vector<8x256xbf16>
    %c0_387 = arith.constant 0 : index
    %c1280 = arith.constant 1280 : index
    %394 = vector.load %arg20[%c0_387, %c1280] : memref<8x2560xbf16, #tpu.memory_space<vmem>>, vector<8x256xbf16>
    tpu.vector_store %arg20[%c0_387, %c1280], %393 {strides = array<i32>} : memref<8x2560xbf16, #tpu.memory_space<vmem>>, vector<8x256xbf16>,
    %c96_388 = arith.constant 96 : index
    %c0_389 = arith.constant 0 : index
    %395 = vector.load %arg19[%c96_388, %c0_389] : memref<160x256xf32, #tpu.memory_space<vmem>>, vector<8x256xf32>
    %c104_390 = arith.constant 104 : index
    %c0_391 = arith.constant 0 : index
    %396 = vector.load %arg19[%c104_390, %c0_391] : memref<160x256xf32, #tpu.memory_space<vmem>>, vector<8x256xf32>
    %397 = arith.maximumf %395, %396 : vector<8x256xf32>
    %398 = arith.truncf %397 : vector<8x256xf32> to vector<8x256xbf16>
    %c0_392 = arith.constant 0 : index
    %c1536 = arith.constant 1536 : index
    %399 = vector.load %arg20[%c0_392, %c1536] : memref<8x2560xbf16, #tpu.memory_space<vmem>>, vector<8x256xbf16>
    tpu.vector_store %arg20[%c0_392, %c1536], %398 {strides = array<i32>} : memref<8x2560xbf16, #tpu.memory_space<vmem>>, vector<8x256xbf16>,
    %c112_393 = arith.constant 112 : index
    %c0_394 = arith.constant 0 : index
    %400 = vector.load %arg19[%c112_393, %c0_394] : memref<160x256xf32, #tpu.memory_space<vmem>>, vector<8x256xf32>
    %c120_395 = arith.constant 120 : index
    %c0_396 = arith.constant 0 : index
    %401 = vector.load %arg19[%c120_395, %c0_396] : memref<160x256xf32, #tpu.memory_space<vmem>>, vector<8x256xf32>
    %402 = arith.maximumf %400, %401 : vector<8x256xf32>
    %403 = arith.truncf %402 : vector<8x256xf32> to vector<8x256xbf16>
    %c0_397 = arith.constant 0 : index
    %c1792 = arith.constant 1792 : index
    %404 = vector.load %arg20[%c0_397, %c1792] : memref<8x2560xbf16, #tpu.memory_space<vmem>>, vector<8x256xbf16>
    tpu.vector_store %arg20[%c0_397, %c1792], %403 {strides = array<i32>} : memref<8x2560xbf16, #tpu.memory_space<vmem>>, vector<8x256xbf16>,
    %c128_398 = arith.constant 128 : index
    %c0_399 = arith.constant 0 : index
    %405 = vector.load %arg19[%c128_398, %c0_399] : memref<160x256xf32, #tpu.memory_space<vmem>>, vector<8x256xf32>
    %c136_400 = arith.constant 136 : index
    %c0_401 = arith.constant 0 : index
    %406 = vector.load %arg19[%c136_400, %c0_401] : memref<160x256xf32, #tpu.memory_space<vmem>>, vector<8x256xf32>
    %407 = arith.maximumf %405, %406 : vector<8x256xf32>
    %408 = arith.truncf %407 : vector<8x256xf32> to vector<8x256xbf16>
    %c0_402 = arith.constant 0 : index
    %c2048 = arith.constant 2048 : index
    %409 = vector.load %arg20[%c0_402, %c2048] : memref<8x2560xbf16, #tpu.memory_space<vmem>>, vector<8x256xbf16>
    tpu.vector_store %arg20[%c0_402, %c2048], %408 {strides = array<i32>} : memref<8x2560xbf16, #tpu.memory_space<vmem>>, vector<8x256xbf16>,
    %c144_403 = arith.constant 144 : index
    %c0_404 = arith.constant 0 : index
    %410 = vector.load %arg19[%c144_403, %c0_404] : memref<160x256xf32, #tpu.memory_space<vmem>>, vector<8x256xf32>
    %c152_405 = arith.constant 152 : index
    %c0_406 = arith.constant 0 : index
    %411 = vector.load %arg19[%c152_405, %c0_406] : memref<160x256xf32, #tpu.memory_space<vmem>>, vector<8x256xf32>
    %412 = arith.maximumf %410, %411 : vector<8x256xf32>
    %413 = arith.truncf %412 : vector<8x256xf32> to vector<8x256xbf16>
    %c0_407 = arith.constant 0 : index
    %c2304 = arith.constant 2304 : index
    %414 = vector.load %arg20[%c0_407, %c2304] : memref<8x2560xbf16, #tpu.memory_space<vmem>>, vector<8x256xbf16>
    tpu.vector_store %arg20[%c0_407, %c2304], %413 {strides = array<i32>} : memref<8x2560xbf16, #tpu.memory_space<vmem>>, vector<8x256xbf16>,
    %c0_408 = arith.constant 0 : index
    %c0_409 = arith.constant 0 : index
    %415 = vector.load %arg20[%c0_408, %c0_409] : memref<8x2560xbf16, #tpu.memory_space<vmem>>, vector<8x2560xbf16>
    %c0_410 = arith.constant 0 : index
    %c0_411 = arith.constant 0 : index
    %416 = vector.load %arg8[%c0_410, %c0_411] : memref<2560x256xbf16, #tpu.memory_space<vmem>>, vector<2560x256xbf16>
    %cst_412 = arith.constant dense<0.000000e+00> : vector<8x256xf32>
    %417 = tpu.matmul %415, %416, %cst_412 {dimension_numbers = #tpu.dot_dimension_numbers<[1], [0], [0], [1], [0, 0, 1, 1], [], []>} : vector<8x2560xbf16>, vector<2560x256xbf16>, vector<8x256xf32> -> vector<8x256xf32>
    %c0_413 = arith.constant 0 : index
    %c0_414 = arith.constant 0 : index
    %418 = vector.load %arg9[%c0_413, %c0_414] : memref<1x256xf32, #tpu.memory_space<vmem>>, vector<1x256xf32>
    %419 = vector.broadcast %418 : vector<1x256xf32> to vector<8x256xf32>
    %420 = arith.addf %417, %419 : vector<8x256xf32>
    %cst_415 = arith.constant 0.000000e+00 : f32
    %421 = vector.broadcast %cst_415 : f32 to vector<8x256xf32>
    %422 = arith.maximumf %420, %421 : vector<8x256xf32>
    %423 = arith.truncf %422 : vector<8x256xf32> to vector<8x256xbf16>
    %c0_416 = arith.constant 0 : index
    %c0_417 = arith.constant 0 : index
    %424 = vector.load %arg10[%c0_416, %c0_417] : memref<256x128xbf16, #tpu.memory_space<vmem>>, vector<256x128xbf16>
    %cst_418 = arith.constant dense<0.000000e+00> : vector<8x128xf32>
    %425 = tpu.matmul %423, %424, %cst_418 {dimension_numbers = #tpu.dot_dimension_numbers<[1], [0], [0], [1], [0, 0, 1, 1], [], []>} : vector<8x256xbf16>, vector<256x128xbf16>, vector<8x128xf32> -> vector<8x128xf32>
    %c0_419 = arith.constant 0 : index
    %c0_420 = arith.constant 0 : index
    %426 = vector.load %arg11[%c0_419, %c0_420] : memref<1x128xf32, #tpu.memory_space<vmem>>, vector<1x128xf32>
    %427 = vector.broadcast %426 : vector<1x128xf32> to vector<8x128xf32>
    %428 = arith.addf %425, %427 : vector<8x128xf32>
    %cst_421 = arith.constant 0.000000e+00 : f32
    %429 = vector.broadcast %cst_421 : f32 to vector<8x128xf32>
    %430 = arith.maximumf %428, %429 : vector<8x128xf32>
    %c0_422 = arith.constant 0 : index
    %c0_423 = arith.constant 0 : index
    %431 = vector.load %arg12[%c0_422, %c0_423] : memref<1x128xf32, #tpu.memory_space<vmem>>, vector<1x128xf32>
    %cst_424 = arith.constant dense<0.000000e+00> : vector<1x8xf32>
    %432 = tpu.matmul %431, %430, %cst_424 {dimension_numbers = #tpu.dot_dimension_numbers<[1], [1], [0], [0], [0, 0, 1, 0], [], []>} : vector<1x128xf32>, vector<8x128xf32>, vector<1x8xf32> -> vector<1x8xf32>
    %c0_425 = arith.constant 0 : index
    %c0_426 = arith.constant 0 : index
    %433 = vector.load %arg13[%c0_425, %c0_426] : memref<1x1xf32, #tpu.memory_space<vmem>>, vector<1x1xf32>
    %434 = vector.broadcast %433 : vector<1x1xf32> to vector<1x8xf32>
    %435 = arith.addf %432, %434 : vector<1x8xf32>
    %436 = arith.negf %435 : vector<1x8xf32>
    %437 = math.exp %436 : vector<1x8xf32>
    %cst_427 = arith.constant 1.000000e+00 : f32
    %438 = vector.broadcast %cst_427 : f32 to vector<1x8xf32>
    %439 = arith.addf %438, %437 : vector<1x8xf32>
    %440 = arith.divf %438, %439 : vector<1x8xf32>
    %c0_428 = arith.constant 0 : index
    %c0_429 = arith.constant 0 : index
    %c0_430 = arith.constant 0 : index
    %441 = vector.load %arg14[%c0_428, %c0_429, %c0_430] : memref<1x1x8xf32, #tpu.memory_space<vmem>>, vector<1x1x8xf32>
    %442 = vector.shape_cast %441 : vector<1x1x8xf32> to vector<1x8xf32>
    %443 = vector.shape_cast %440 : vector<1x8xf32> to vector<1x1x8xf32>
    tpu.vector_store %arg14[%c0_428, %c0_429, %c0_430], %443 {strides = array<i32>} : memref<1x1x8xf32, #tpu.memory_space<vmem>>, vector<1x1x8xf32>,
    return
  }
  func.func @transform_0(%arg0: i32) -> (i32, i32, i32) {
    %c0_i32 = arith.constant 0 : i32
    %c0_i32_0 = arith.constant 0 : i32
    %c0_i32_1 = arith.constant 0 : i32
    return %arg0, %c0_i32, %c0_i32_0 : i32, i32, i32
  }
  func.func @transform_1(%arg0: i32) -> (i32, i32) {
    %c0_i32 = arith.constant 0 : i32
    %c0_i32_0 = arith.constant 0 : i32
    %c0_i32_1 = arith.constant 0 : i32
    return %c0_i32, %c0_i32_0 : i32, i32
  }
  func.func @transform_2(%arg0: i32) -> (i32, i32) {
    %c0_i32 = arith.constant 0 : i32
    %c0_i32_0 = arith.constant 0 : i32
    %c0_i32_1 = arith.constant 0 : i32
    return %c0_i32, %c0_i32_0 : i32, i32
  }
  func.func @transform_3(%arg0: i32) -> (i32, i32) {
    %c0_i32 = arith.constant 0 : i32
    %c0_i32_0 = arith.constant 0 : i32
    %c0_i32_1 = arith.constant 0 : i32
    return %c0_i32, %c0_i32_0 : i32, i32
  }
  func.func @transform_4(%arg0: i32) -> (i32, i32) {
    %c0_i32 = arith.constant 0 : i32
    %c0_i32_0 = arith.constant 0 : i32
    %c0_i32_1 = arith.constant 0 : i32
    return %c0_i32, %c0_i32_0 : i32, i32
  }
  func.func @transform_5(%arg0: i32) -> (i32, i32) {
    %c0_i32 = arith.constant 0 : i32
    %c0_i32_0 = arith.constant 0 : i32
    %c0_i32_1 = arith.constant 0 : i32
    return %c0_i32, %c0_i32_0 : i32, i32
  }
  func.func @transform_6(%arg0: i32) -> (i32, i32) {
    %c0_i32 = arith.constant 0 : i32
    %c0_i32_0 = arith.constant 0 : i32
    %c0_i32_1 = arith.constant 0 : i32
    return %c0_i32, %c0_i32_0 : i32, i32
  }
  func.func @transform_7(%arg0: i32) -> (i32, i32) {
    %c0_i32 = arith.constant 0 : i32
    %c0_i32_0 = arith.constant 0 : i32
    %c0_i32_1 = arith.constant 0 : i32
    return %c0_i32, %c0_i32_0 : i32, i32
  }
  func.func @transform_8(%arg0: i32) -> (i32, i32) {
    %c0_i32 = arith.constant 0 : i32
    %c0_i32_0 = arith.constant 0 : i32
    %c0_i32_1 = arith.constant 0 : i32
    return %c0_i32, %c0_i32_0 : i32, i32
  }
  func.func @transform_9(%arg0: i32) -> (i32, i32) {
    %c0_i32 = arith.constant 0 : i32
    %c0_i32_0 = arith.constant 0 : i32
    %c0_i32_1 = arith.constant 0 : i32
    return %c0_i32, %c0_i32_0 : i32, i32
  }
  func.func @transform_10(%arg0: i32) -> (i32, i32) {
    %c0_i32 = arith.constant 0 : i32
    %c0_i32_0 = arith.constant 0 : i32
    %c0_i32_1 = arith.constant 0 : i32
    return %c0_i32, %c0_i32_0 : i32, i32
  }
  func.func @transform_11(%arg0: i32) -> (i32, i32) {
    %c0_i32 = arith.constant 0 : i32
    %c0_i32_0 = arith.constant 0 : i32
    %c0_i32_1 = arith.constant 0 : i32
    return %c0_i32, %c0_i32_0 : i32, i32
  }
  func.func @transform_12(%arg0: i32) -> (i32, i32) {
    %c0_i32 = arith.constant 0 : i32
    %c0_i32_0 = arith.constant 0 : i32
    %c0_i32_1 = arith.constant 0 : i32
    return %c0_i32, %c0_i32_0 : i32, i32
  }
  func.func @transform_13(%arg0: i32) -> (i32, i32, i32) {
    %c0_i32 = arith.constant 0 : i32
    %c0_i32_0 = arith.constant 0 : i32
    %c0_i32_1 = arith.constant 0 : i32
    return %arg0, %c0_i32, %c0_i32_0 : i32, i32, i32
  }
}

</mosaic_0001>

<llo_original>
// kernel: improved_cnn_forward.1
$region0: #{improved_cnn_forward.1}
  #allocation0 [shape = 'u32[]', space=smem, size = 0x4, offset = 0x4, fixed_abs, tag = 'smem constant byte address 0x4 - core index']
  #allocation1 [shape = 'u32[144,128]{1,0:T(1,128)}', space=vmem, size = 0x12000, scoped, tag = 'internal scratch']
  #allocation2 [shape = 'f32[656,64]{1,0:T(8,128)}', space=vmem, size = 0x52000, scoped, tag = 'scratch operand']
  #allocation3 [shape = 'bf16[344,64]{1,0:T(8,128)(2,1)}', space=vmem, size = 0x15800, scoped, tag = 'scratch operand']
  #allocation4 [shape = 'f32[328,128]{1,0:T(8,128)}', space=vmem, size = 0x29000, scoped, tag = 'scratch operand']
  #allocation5 [shape = 'bf16[176,128]{1,0:T(16,128)(2,1)}', space=vmem, size = 0xb000, scoped, tag = 'scratch operand']
  #allocation6 [shape = 'f32[160,256]{1,0:T(8,128)}', space=vmem, size = 0x28000, scoped, tag = 'scratch operand']
  #allocation7 [shape = 'bf16[8,2560]{1,0:T(8,128)(2,1)}', space=vmem, size = 0xa000, scoped, tag = 'scratch operand']
  #allocation8 [shape = 'f32[1,1]{1,0:T(1,128)S(1)}', space=vmem, size = 0x200, scoped, tag = 'scoped memory for improved_cnn_forward.1']
  %s0 = inlined_call_operand.vmem [shape: bf16[2,656,8], index: 0, kind: input, shape index: {}]
  %s1 = inlined_call_operand.hbm [shape: bf16[8,64], index: 1, kind: input, shape index: {}]
  %s2 = inlined_call_operand.hbm [shape: f32[1,64], index: 2, kind: input, shape index: {}]
  %s3 = inlined_call_operand.hbm [shape: bf16[192,128], index: 3, kind: input, shape index: {}]
  %s4 = inlined_call_operand.hbm [shape: f32[1,128], index: 4, kind: input, shape index: {}]
  %s5 = inlined_call_operand.hbm [shape: bf16[384,256], index: 5, kind: input, shape index: {}]
  %s6 = inlined_call_operand.hbm [shape: f32[1,256], index: 6, kind: input, shape index: {}]
  %s7 = inlined_call_operand.hbm [shape: bf16[2560,256], index: 7, kind: input, shape index: {}]
  %s8 = inlined_call_operand.hbm [shape: f32[1,256], index: 8, kind: input, shape index: {}]
  %s9 = inlined_call_operand.hbm [shape: bf16[256,128], index: 9, kind: input, shape index: {}]
  %s10 = inlined_call_operand.hbm [shape: f32[1,128], index: 10, kind: input, shape index: {}]
  %s11 = inlined_call_operand.hbm [shape: f32[1,128], index: 11, kind: input, shape index: {}]
  %s12 = inlined_call_operand.<no memory space> [shape: f32[1,1], index: 12, kind: input, shape index: {}]
  %s13 = inlined_call_operand.vmem [shape: f32[2,1,8], index: 13, kind: output, shape index: {}]
  %s14 = sld [smem:[#allocation0]]
  $region129: #{improved_cnn_forward.1} parent=0
    _
  %s16 = ssub.s32 1, %s14
  %s17 = scalar_select 0, %s16, %s14
  %v18 = vstv %s12
  %19 = vst [vmem:[#allocation8] sm:$0x1] %v18
  $region1: #{improved_cnn_forward.1} parent=0
    #allocation9 [shape = 'u8[2048]{0}', space=vmem, size = 0x800, scoped, tag = 'input window, operand 1, single buffered']
    #allocation10 [shape = 's32[2]{0}', space=sflag, size = 0x8, scoped, tag = 'scoped memory for improved_cnn_forward.1']
    #allocation11 [shape = 'u8[512]{0}', space=vmem, size = 0x400, scoped, tag = 'input window, operand 2, single buffered']
    #allocation12 [shape = 's32[1]{0}', space=sflag, size = 0x4, scoped, tag = 'scoped memory for improved_cnn_forward.1']
    #allocation13 [shape = 'u8[49152]{0}', space=vmem, size = 0xc000, scoped, tag = 'input window, operand 3, single buffered']
    #allocation14 [shape = 'u8[512]{0}', space=vmem, size = 0x400, scoped, tag = 'input window, operand 4, single buffered']
    #allocation15 [shape = 's32[1]{0}', space=sflag, size = 0x4, scoped, tag = 'scoped memory for improved_cnn_forward.1']
    #allocation16 [shape = 'u8[196608]{0}', space=vmem, size = 0x30000, scoped, tag = 'input window, operand 5, single buffered']
    #allocation17 [shape = 'u8[1024]{0}', space=vmem, size = 0x400, scoped, tag = 'input window, operand 6, single buffered']
    #allocation18 [shape = 's32[1]{0}', space=sflag, size = 0x4, scoped, tag = 'scoped memory for improved_cnn_forward.1']
    #allocation19 [shape = 'u8[1310720]{0}', space=vmem, size = 0x140000, scoped, tag = 'input window, operand 7, single buffered']
    #allocation20 [shape = 'u8[1024]{0}', space=vmem, size = 0x400, scoped, tag = 'input window, operand 8, single buffered']
    #allocation21 [shape = 's32[1]{0}', space=sflag, size = 0x4, scoped, tag = 'scoped memory for improved_cnn_forward.1']
    #allocation22 [shape = 'u8[65536]{0}', space=vmem, size = 0x10000, scoped, tag = 'input window, operand 9, single buffered']
    #allocation23 [shape = 'u8[512]{0}', space=vmem, size = 0x400, scoped, tag = 'input window, operand 10, single buffered']
    #allocation24 [shape = 's32[1]{0}', space=sflag, size = 0x4, scoped, tag = 'scoped memory for improved_cnn_forward.1']
    #allocation25 [shape = 'u8[512]{0}', space=vmem, size = 0x400, scoped, tag = 'input window, operand 11, single buffered']
    %20 = vsyncpa [#allocation10], 0
    %21 = vsyncpa [#allocation12], 0
    %22 = vsyncpa [#allocation15], 0
    %23 = vsyncpa [#allocation18], 0
    %24 = vsyncpa [#allocation21], 0
    %25 = vsyncpa [#allocation24], 0
    loop: start=0, step=1, limit=4
    $region2: #{improved_cnn_forward.1} parent=1 // loop_pre_header
      _
    $region3: #{improved_cnn_forward.1} parent=1 // loop_header
      %s27 = sphi 0, %s31
      %p28 = scmp.ge.s32.totalorder %s27, 4
      %s37 = sphi 0, %s39
      %s40 = sphi 0, %s37
      %s41 = sphi 0, %s40
      %s57 = sphi 0, %s41
      %s61 = sphi 0, %s61
      %s63 = sphi 0, %s61
      %s64 = sphi 0, %s63
      %s78 = sphi 0, %s64
      %s82 = sphi 0, %s82
      %s84 = sphi 0, %s82
      %s85 = sphi 0, %s84
      %s99 = sphi 0, %s85
      %s103 = sphi 0, %s103
      %s105 = sphi 0, %s103
      %s106 = sphi 0, %s105
      %s120 = sphi 0, %s106
      %s124 = sphi 0, %s124
      %s126 = sphi 0, %s124
      %s127 = sphi 0, %s126
      %s141 = sphi 0, %s127
      %s145 = sphi 0, %s145
      %s147 = sphi 0, %s145
      %s148 = sphi 0, %s147
      %s162 = sphi 0, %s148
      %s166 = sphi 0, %s166
      %s168 = sphi 0, %s166
      %s169 = sphi 0, %s168
      %s183 = sphi 0, %s169
      %s187 = sphi 0, %s187
      %s189 = sphi 0, %s187
      %s190 = sphi 0, %s189
      %s204 = sphi 0, %s190
      %s208 = sphi 0, %s208
      %s210 = sphi 0, %s208
      %s211 = sphi 0, %s210
      %s225 = sphi 0, %s211
      %s229 = sphi 0, %s229
      %s231 = sphi 0, %s229
      %s232 = sphi 0, %s231
      %s246 = sphi 0, %s232
      %s250 = sphi 0, %s250
      %s252 = sphi 0, %s250
      %s253 = sphi 0, %s252
      %s267 = sphi 0, %s253
      %s271 = sphi 0, %s271
      %s273 = sphi 0, %s271
      %s274 = sphi 0, %s273
      %s288 = sphi 0, %s274
      %s292 = sphi 0, %s292
      %s294 = sphi 0, %s292
      %s295 = sphi 0, %s294
      %s309 = sphi 0, %s295
      %s315 = sphi 0, %s317
      %s318 = sphi 0, %s315
      %s319 = sphi 0, %s318
      %s335 = sphi 0, %s319
    $region4: #{improved_cnn_forward.1} parent=1 // loop_header_branch
      %30 = sbr.rel (%p28) target = $region8
    $region5: #{improved_cnn_forward.1} parent=1 // loop_body
      %s32 = ssub.s32 %s27, 1
      %s33 = ssub.s32 %s27, 2
      %s34 = sadd.s32 %s27, 1
      %s35 = ssub.s32 %s27, %s34
      %p36 = scmp.eq.s32.totalorder %s35, 0
      %s38 = sadd.s32 %s37, 1
      %s39 = scalar_select %p36, %s37, %s38
      %p42 = pneg %p36
      %p43 = scmp.eq.s32.totalorder %s27, 1
      %p44 = por %p42, %p43
      %p45 = scmp.ne.s32.totalorder %s37, %s40
      %p46 = scmp.eq.s32.totalorder %s27, 0
      %p47 = por %p45, %p46
      %p48 = scmp.ne.s32.totalorder %s37, %s40
      %p49 = scmp.eq.s32.totalorder %s32, 1
      %p50 = por %p48, %p49
      %p51 = scmp.ne.s32.totalorder %s40, %s41
      %p52 = scmp.eq.s32.totalorder %s32, 0
      %p53 = por %p51, %p52
      %p54 = scmp.ne.s32.totalorder %s40, %s41
      %p55 = scmp.eq.s32.totalorder %s33, 1
      %p56 = por %p54, %p55
      %p58 = scmp.ne.s32.totalorder %s41, %s57
      %p59 = scmp.eq.s32.totalorder %s33, 0
      %p60 = por %p58, %p59
      %s62 = sadd.s32 %s61, 1
      %p65 = scmp.eq.s32.totalorder %s27, 1
      %p66 = scmp.ne.s32.totalorder %s61, %s63
      %p67 = scmp.eq.s32.totalorder %s27, 0
      %p68 = por %p66, %p67
      %p69 = scmp.ne.s32.totalorder %s61, %s63
      %p70 = scmp.eq.s32.totalorder %s32, 1
      %p71 = por %p69, %p70
      %p72 = scmp.ne.s32.totalorder %s63, %s64
      %p73 = scmp.eq.s32.totalorder %s32, 0
      %p74 = por %p72, %p73
      %p75 = scmp.ne.s32.totalorder %s63, %s64
      %p76 = scmp.eq.s32.totalorder %s33, 1
      %p77 = por %p75, %p76
      %p79 = scmp.ne.s32.totalorder %s64, %s78
      %p80 = scmp.eq.s32.totalorder %s33, 0
      %p81 = por %p79, %p80
      %s83 = sadd.s32 %s82, 1
      %p86 = scmp.eq.s32.totalorder %s27, 1
      %p87 = scmp.ne.s32.totalorder %s82, %s84
      %p88 = scmp.eq.s32.totalorder %s27, 0
      %p89 = por %p87, %p88
      %p90 = scmp.ne.s32.totalorder %s82, %s84
      %p91 = scmp.eq.s32.totalorder %s32, 1
      %p92 = por %p90, %p91
      %p93 = scmp.ne.s32.totalorder %s84, %s85
      %p94 = scmp.eq.s32.totalorder %s32, 0
      %p95 = por %p93, %p94
      %p96 = scmp.ne.s32.totalorder %s84, %s85
      %p97 = scmp.eq.s32.totalorder %s33, 1
      %p98 = por %p96, %p97
      %p100 = scmp.ne.s32.totalorder %s85, %s99
      %p101 = scmp.eq.s32.totalorder %s33, 0
      %p102 = por %p100, %p101
      %s104 = sadd.s32 %s103, 1
      %p107 = scmp.eq.s32.totalorder %s27, 1
      %p108 = scmp.ne.s32.totalorder %s103, %s105
      %p109 = scmp.eq.s32.totalorder %s27, 0
      %p110 = por %p108, %p109
      %p111 = scmp.ne.s32.totalorder %s103, %s105
      %p112 = scmp.eq.s32.totalorder %s32, 1
      %p113 = por %p111, %p112
      %p114 = scmp.ne.s32.totalorder %s105, %s106
      %p115 = scmp.eq.s32.totalorder %s32, 0
      %p116 = por %p114, %p115
      %p117 = scmp.ne.s32.totalorder %s105, %s106
      %p118 = scmp.eq.s32.totalorder %s33, 1
      %p119 = por %p117, %p118
      %p121 = scmp.ne.s32.totalorder %s106, %s120
      %p122 = scmp.eq.s32.totalorder %s33, 0
      %p123 = por %p121, %p122
      %s125 = sadd.s32 %s124, 1
      %p128 = scmp.eq.s32.totalorder %s27, 1
      %p129 = scmp.ne.s32.totalorder %s124, %s126
      %p130 = scmp.eq.s32.totalorder %s27, 0
      %p131 = por %p129, %p130
      %p132 = scmp.ne.s32.totalorder %s124, %s126
      %p133 = scmp.eq.s32.totalorder %s32, 1
      %p134 = por %p132, %p133
      %p135 = scmp.ne.s32.totalorder %s126, %s127
      %p136 = scmp.eq.s32.totalorder %s32, 0
      %p137 = por %p135, %p136
      %p138 = scmp.ne.s32.totalorder %s126, %s127
      %p139 = scmp.eq.s32.totalorder %s33, 1
      %p140 = por %p138, %p139
      %p142 = scmp.ne.s32.totalorder %s127, %s141
      %p143 = scmp.eq.s32.totalorder %s33, 0
      %p144 = por %p142, %p143
      %s146 = sadd.s32 %s145, 1
      %p149 = scmp.eq.s32.totalorder %s27, 1
      %p150 = scmp.ne.s32.totalorder %s145, %s147
      %p151 = scmp.eq.s32.totalorder %s27, 0
      %p152 = por %p150, %p151
      %p153 = scmp.ne.s32.totalorder %s145, %s147
      %p154 = scmp.eq.s32.totalorder %s32, 1
      %p155 = por %p153, %p154
      %p156 = scmp.ne.s32.totalorder %s147, %s148
      %p157 = scmp.eq.s32.totalorder %s32, 0
      %p158 = por %p156, %p157
      %p159 = scmp.ne.s32.totalorder %s147, %s148
      %p160 = scmp.eq.s32.totalorder %s33, 1
      %p161 = por %p159, %p160
      %p163 = scmp.ne.s32.totalorder %s148, %s162
      %p164 = scmp.eq.s32.totalorder %s33, 0
      %p165 = por %p163, %p164
      %s167 = sadd.s32 %s166, 1
      %p170 = scmp.eq.s32.totalorder %s27, 1
      %p171 = scmp.ne.s32.totalorder %s166, %s168
      %p172 = scmp.eq.s32.totalorder %s27, 0
      %p173 = por %p171, %p172
      %p174 = scmp.ne.s32.totalorder %s166, %s168
      %p175 = scmp.eq.s32.totalorder %s32, 1
      %p176 = por %p174, %p175
      %p177 = scmp.ne.s32.totalorder %s168, %s169
      %p178 = scmp.eq.s32.totalorder %s32, 0
      %p179 = por %p177, %p178
      %p180 = scmp.ne.s32.totalorder %s168, %s169
      %p181 = scmp.eq.s32.totalorder %s33, 1
      %p182 = por %p180, %p181
      %p184 = scmp.ne.s32.totalorder %s169, %s183
      %p185 = scmp.eq.s32.totalorder %s33, 0
      %p186 = por %p184, %p185
      %s188 = sadd.s32 %s187, 1
      %p191 = scmp.eq.s32.totalorder %s27, 1
      %p192 = scmp.ne.s32.totalorder %s187, %s189
      %p193 = scmp.eq.s32.totalorder %s27, 0
      %p194 = por %p192, %p193
      %p195 = scmp.ne.s32.totalorder %s187, %s189
      %p196 = scmp.eq.s32.totalorder %s32, 1
      %p197 = por %p195, %p196
      %p198 = scmp.ne.s32.totalorder %s189, %s190
      %p199 = scmp.eq.s32.totalorder %s32, 0
      %p200 = por %p198, %p199
      %p201 = scmp.ne.s32.totalorder %s189, %s190
      %p202 = scmp.eq.s32.totalorder %s33, 1
      %p203 = por %p201, %p202
      %p205 = scmp.ne.s32.totalorder %s190, %s204
      %p206 = scmp.eq.s32.totalorder %s33, 0
      %p207 = por %p205, %p206
      %s209 = sadd.s32 %s208, 1
      %p212 = scmp.eq.s32.totalorder %s27, 1
      %p213 = scmp.ne.s32.totalorder %s208, %s210
      %p214 = scmp.eq.s32.totalorder %s27, 0
      %p215 = por %p213, %p214
      %p216 = scmp.ne.s32.totalorder %s208, %s210
      %p217 = scmp.eq.s32.totalorder %s32, 1
      %p218 = por %p216, %p217
      %p219 = scmp.ne.s32.totalorder %s210, %s211
      %p220 = scmp.eq.s32.totalorder %s32, 0
      %p221 = por %p219, %p220
      %p222 = scmp.ne.s32.totalorder %s210, %s211
      %p223 = scmp.eq.s32.totalorder %s33, 1
      %p224 = por %p222, %p223
      %p226 = scmp.ne.s32.totalorder %s211, %s225
      %p227 = scmp.eq.s32.totalorder %s33, 0
      %p228 = por %p226, %p227
      %s230 = sadd.s32 %s229, 1
      %p233 = scmp.eq.s32.totalorder %s27, 1
      %p234 = scmp.ne.s32.totalorder %s229, %s231
      %p235 = scmp.eq.s32.totalorder %s27, 0
      %p236 = por %p234, %p235
      %p237 = scmp.ne.s32.totalorder %s229, %s231
      %p238 = scmp.eq.s32.totalorder %s32, 1
      %p239 = por %p237, %p238
      %p240 = scmp.ne.s32.totalorder %s231, %s232
      %p241 = scmp.eq.s32.totalorder %s32, 0
      %p242 = por %p240, %p241
      %p243 = scmp.ne.s32.totalorder %s231, %s232
      %p244 = scmp.eq.s32.totalorder %s33, 1
      %p245 = por %p243, %p244
      %p247 = scmp.ne.s32.totalorder %s232, %s246
      %p248 = scmp.eq.s32.totalorder %s33, 0
      %p249 = por %p247, %p248
      %s251 = sadd.s32 %s250, 1
      %p254 = scmp.eq.s32.totalorder %s27, 1
      %p255 = scmp.ne.s32.totalorder %s250, %s252
      %p256 = scmp.eq.s32.totalorder %s27, 0
      %p257 = por %p255, %p256
      %p258 = scmp.ne.s32.totalorder %s250, %s252
      %p259 = scmp.eq.s32.totalorder %s32, 1
      %p260 = por %p258, %p259
      %p261 = scmp.ne.s32.totalorder %s252, %s253
      %p262 = scmp.eq.s32.totalorder %s32, 0
      %p263 = por %p261, %p262
      %p264 = scmp.ne.s32.totalorder %s252, %s253
      %p265 = scmp.eq.s32.totalorder %s33, 1
      %p266 = por %p264, %p265
      %p268 = scmp.ne.s32.totalorder %s253, %s267
      %p269 = scmp.eq.s32.totalorder %s33, 0
      %p270 = por %p268, %p269
      %s272 = sadd.s32 %s271, 1
      %p275 = scmp.eq.s32.totalorder %s27, 1
      %p276 = scmp.ne.s32.totalorder %s271, %s273
      %p277 = scmp.eq.s32.totalorder %s27, 0
      %p278 = por %p276, %p277
      %p279 = scmp.ne.s32.totalorder %s271, %s273
      %p280 = scmp.eq.s32.totalorder %s32, 1
      %p281 = por %p279, %p280
      %p282 = scmp.ne.s32.totalorder %s273, %s274
      %p283 = scmp.eq.s32.totalorder %s32, 0
      %p284 = por %p282, %p283
      %p285 = scmp.ne.s32.totalorder %s273, %s274
      %p286 = scmp.eq.s32.totalorder %s33, 1
      %p287 = por %p285, %p286
      %p289 = scmp.ne.s32.totalorder %s274, %s288
      %p290 = scmp.eq.s32.totalorder %s33, 0
      %p291 = por %p289, %p290
      %s293 = sadd.s32 %s292, 1
      %p296 = scmp.eq.s32.totalorder %s27, 1
      %p297 = scmp.ne.s32.totalorder %s292, %s294
      %p298 = scmp.eq.s32.totalorder %s27, 0
      %p299 = por %p297, %p298
      %p300 = scmp.ne.s32.totalorder %s292, %s294
      %p301 = scmp.eq.s32.totalorder %s32, 1
      %p302 = por %p300, %p301
      %p303 = scmp.ne.s32.totalorder %s294, %s295
      %p304 = scmp.eq.s32.totalorder %s32, 0
      %p305 = por %p303, %p304
      %p306 = scmp.ne.s32.totalorder %s294, %s295
      %p307 = scmp.eq.s32.totalorder %s33, 1
      %p308 = por %p306, %p307
      %p310 = scmp.ne.s32.totalorder %s295, %s309
      %p311 = scmp.eq.s32.totalorder %s33, 0
      %p312 = por %p310, %p311
      %s313 = ssub.s32 %s27, %s34
      %p314 = scmp.eq.s32.totalorder %s313, 0
      %s316 = sadd.s32 %s315, 1
      %s317 = scalar_select %p314, %s315, %s316
      %p320 = pneg %p314
      %p321 = scmp.eq.s32.totalorder %s27, 1
      %p322 = por %p320, %p321
      %p323 = scmp.ne.s32.totalorder %s315, %s318
      %p324 = scmp.eq.s32.totalorder %s27, 0
      %p325 = por %p323, %p324
      %p326 = scmp.ne.s32.totalorder %s315, %s318
      %p327 = scmp.eq.s32.totalorder %s32, 1
      %p328 = por %p326, %p327
      %p329 = scmp.ne.s32.totalorder %s318, %s319
      %p330 = scmp.eq.s32.totalorder %s32, 0
      %p331 = por %p329, %p330
      %p332 = scmp.ne.s32.totalorder %s318, %s319
      %p333 = scmp.eq.s32.totalorder %s33, 1
      %p334 = por %p332, %p333
      %p336 = scmp.ne.s32.totalorder %s319, %s335
      %p337 = scmp.eq.s32.totalorder %s33, 0
      %p338 = por %p336, %p337
      %p339 = scmp.le.s32.totalorder 1, %s27
      %p340 = scmp.lt.s32.totalorder %s27, 3
      %p341 = pnand %p339, %p340
      %p342 = pneg %p341
      // Predicated region
      $region9: #{improved_cnn_forward.1} parent=5 // pred_check
        _
      $region10: #{improved_cnn_forward.1} parent=5 // pred_check_branch
        %344 = sbr.rel (%p341) target = $region12
      $region11: #{improved_cnn_forward.1} parent=5 // pred_region
        %s345 = ssub.s32 %s27, 1
        // Predicated region
        $region13: #{improved_cnn_forward.1} parent=11 // pred_check
          %p346 = pneg %p74
        $region14: #{improved_cnn_forward.1} parent=11 // pred_check_branch
          %348 = sbr.rel (%p346) target = $region16
        $region15: #{improved_cnn_forward.1} parent=11 // pred_region
          %s350 = ssub.s32 64, 64
          %351 = vsyncadd [#allocation10], %s350
          %s353 = sshll.u32 [#allocation9], 4
          %s354 = int_to_ptr.vmem [resolvable:$true] %s353
          %356 = dma.hbm_to_vmem [thread:$0]  %s1, 64, %s354, [#allocation10]
        $region16: #{improved_cnn_forward.1} parent=11 // pred_fallthru
          _
        // Predicated region
        $region17: #{improved_cnn_forward.1} parent=11 // pred_check
          %p357 = pneg %p95
        $region18: #{improved_cnn_forward.1} parent=11 // pred_check_branch
          %359 = sbr.rel (%p357) target = $region20
        $region19: #{improved_cnn_forward.1} parent=11 // pred_region
          %s361 = ssub.s32 16, 16
          %362 = vsyncadd [#allocation12], %s361
          %s364 = sshll.u32 [#allocation11], 4
          %s365 = int_to_ptr.vmem [resolvable:$true] %s364
          %367 = dma.hbm_to_vmem [thread:$0]  %s2, 16, %s365, [#allocation12]
        $region20: #{improved_cnn_forward.1} parent=11 // pred_fallthru
          _
        // Predicated region
        $region21: #{improved_cnn_forward.1} parent=11 // pred_check
          %p368 = pneg %p116
        $region22: #{improved_cnn_forward.1} parent=11 // pred_check_branch
          %370 = sbr.rel (%p368) target = $region24
        $region23: #{improved_cnn_forward.1} parent=11 // pred_region
          %s372 = ssub.s32 1536, 1536
          %373 = vsyncadd [#allocation12], %s372
          %s374 = sshll.u32 [#allocation13], 4
          %s375 = int_to_ptr.vmem [resolvable:$true] %s374
          %380 = dma.hbm_to_vmem [thread:$0]  %s3, 1536, %s375, [#allocation12], 64, 64, 4
        $region24: #{improved_cnn_forward.1} parent=11 // pred_fallthru
          _
        // Predicated region
        $region25: #{improved_cnn_forward.1} parent=11 // pred_check
          %p381 = pneg %p137
        $region26: #{improved_cnn_forward.1} parent=11 // pred_check_branch
          %383 = sbr.rel (%p381) target = $region28
        $region27: #{improved_cnn_forward.1} parent=11 // pred_region
          %s385 = ssub.s32 16, 16
          %386 = vsyncadd [#allocation15], %s385
          %s388 = sshll.u32 [#allocation14], 4
          %s389 = int_to_ptr.vmem [resolvable:$true] %s388
          %391 = dma.hbm_to_vmem [thread:$0]  %s4, 16, %s389, [#allocation15]
        $region28: #{improved_cnn_forward.1} parent=11 // pred_fallthru
          _
        // Predicated region
        $region29: #{improved_cnn_forward.1} parent=11 // pred_check
          %p392 = pneg %p158
        $region30: #{improved_cnn_forward.1} parent=11 // pred_check_branch
          %394 = sbr.rel (%p392) target = $region32
        $region31: #{improved_cnn_forward.1} parent=11 // pred_region
          %s396 = ssub.s32 6144, 6144
          %397 = vsyncadd [#allocation15], %s396
          %s398 = sshll.u32 [#allocation16], 4
          %s399 = int_to_ptr.vmem [resolvable:$true] %s398
          %404 = dma.hbm_to_vmem [thread:$0]  %s5, 6144, %s399, [#allocation15], 128, 128, 8
        $region32: #{improved_cnn_forward.1} parent=11 // pred_fallthru
          _
        // Predicated region
        $region33: #{improved_cnn_forward.1} parent=11 // pred_check
          %p405 = pneg %p179
        $region34: #{improved_cnn_forward.1} parent=11 // pred_check_branch
          %407 = sbr.rel (%p405) target = $region36
        $region35: #{improved_cnn_forward.1} parent=11 // pred_region
          %s409 = ssub.s32 32, 32
          %410 = vsyncadd [#allocation18], %s409
          %s412 = sshll.u32 [#allocation17], 4
          %s413 = int_to_ptr.vmem [resolvable:$true] %s412
          %415 = dma.hbm_to_vmem [thread:$0]  %s6, 32, %s413, [#allocation18]
        $region36: #{improved_cnn_forward.1} parent=11 // pred_fallthru
          _
        // Predicated region
        $region37: #{improved_cnn_forward.1} parent=11 // pred_check
          %p416 = pneg %p200
        $region38: #{improved_cnn_forward.1} parent=11 // pred_check_branch
          %418 = sbr.rel (%p416) target = $region40
        $region39: #{improved_cnn_forward.1} parent=11 // pred_region
          %s420 = ssub.s32 40960, 40960
          %421 = vsyncadd [#allocation18], %s420
          %s422 = sshll.u32 [#allocation19], 4
          %s423 = int_to_ptr.vmem [resolvable:$true] %s422
          %428 = dma.hbm_to_vmem [thread:$0]  %s7, 40960, %s423, [#allocation18], 128, 128, 8
        $region40: #{improved_cnn_forward.1} parent=11 // pred_fallthru
          _
        // Predicated region
        $region41: #{improved_cnn_forward.1} parent=11 // pred_check
          %p429 = pneg %p221
        $region42: #{improved_cnn_forward.1} parent=11 // pred_check_branch
          %431 = sbr.rel (%p429) target = $region44
        $region43: #{improved_cnn_forward.1} parent=11 // pred_region
          %s433 = ssub.s32 32, 32
          %434 = vsyncadd [#allocation21], %s433
          %s436 = sshll.u32 [#allocation20], 4
          %s437 = int_to_ptr.vmem [resolvable:$true] %s436
          %439 = dma.hbm_to_vmem [thread:$0]  %s8, 32, %s437, [#allocation21]
        $region44: #{improved_cnn_forward.1} parent=11 // pred_fallthru
          _
        // Predicated region
        $region45: #{improved_cnn_forward.1} parent=11 // pred_check
          %p440 = pneg %p242
        $region46: #{improved_cnn_forward.1} parent=11 // pred_check_branch
          %442 = sbr.rel (%p440) target = $region48
        $region47: #{improved_cnn_forward.1} parent=11 // pred_region
          %s444 = ssub.s32 2048, 2048
          %445 = vsyncadd [#allocation21], %s444
          %s446 = sshll.u32 [#allocation22], 4
          %s447 = int_to_ptr.vmem [resolvable:$true] %s446
          %452 = dma.hbm_to_vmem [thread:$0]  %s9, 2048, %s447, [#allocation21], 64, 64, 4
        $region48: #{improved_cnn_forward.1} parent=11 // pred_fallthru
          _
        // Predicated region
        $region49: #{improved_cnn_forward.1} parent=11 // pred_check
          %p453 = pneg %p263
        $region50: #{improved_cnn_forward.1} parent=11 // pred_check_branch
          %455 = sbr.rel (%p453) target = $region52
        $region51: #{improved_cnn_forward.1} parent=11 // pred_region
          %s457 = ssub.s32 16, 16
          %458 = vsyncadd [#allocation24], %s457
          %s460 = sshll.u32 [#allocation23], 4
          %s461 = int_to_ptr.vmem [resolvable:$true] %s460
          %463 = dma.hbm_to_vmem [thread:$0]  %s10, 16, %s461, [#allocation24]
        $region52: #{improved_cnn_forward.1} parent=11 // pred_fallthru
          _
        // Predicated region
        $region53: #{improved_cnn_forward.1} parent=11 // pred_check
          %p464 = pneg %p284
        $region54: #{improved_cnn_forward.1} parent=11 // pred_check_branch
          %466 = sbr.rel (%p464) target = $region56
        $region55: #{improved_cnn_forward.1} parent=11 // pred_region
          %s468 = ssub.s32 16, 16
          %469 = vsyncadd [#allocation24], %s468
          %s471 = sshll.u32 [#allocation25], 4
          %s472 = int_to_ptr.vmem [resolvable:$true] %s471
          %474 = dma.hbm_to_vmem [thread:$0]  %s11, 16, %s472, [#allocation24]
        $region56: #{improved_cnn_forward.1} parent=11 // pred_fallthru
          _
        // Predicated region
        $region57: #{improved_cnn_forward.1} parent=11 // pred_check
          %p475 = pneg %p305
        $region58: #{improved_cnn_forward.1} parent=11 // pred_check_branch
          %477 = sbr.rel (%p475) target = $region60
        $region59: #{improved_cnn_forward.1} parent=11 // pred_region
          _
        $region60: #{improved_cnn_forward.1} parent=11 // pred_fallthru
          _
      $region12: #{improved_cnn_forward.1} parent=5 // pred_fallthru
        _
      %p478 = scmp.lt.s32.totalorder %s27, 2
      // Predicated region
      $region61: #{improved_cnn_forward.1} parent=5 // pred_check
        %p479 = pneg %p478
      $region62: #{improved_cnn_forward.1} parent=5 // pred_check_branch
        %481 = sbr.rel (%p479) target = $region64
      $region63: #{improved_cnn_forward.1} parent=5 // pred_region
        // Predicated region
        $region65: #{improved_cnn_forward.1} parent=63 // pred_check
          %p482 = pneg %p47
        $region66: #{improved_cnn_forward.1} parent=63 // pred_check_branch
          %484 = sbr.rel (%p482) target = $region68
        $region67: #{improved_cnn_forward.1} parent=63 // pred_region
          %p485 = scmp.lt.s32.totalorder %s27, 1
          %s486 = scalar_select %p485, %s27, 1
          %s487 = smul.addr %s486, 82
          %s488 = smul.addr %s487, 4
          %s489 = scalar_lea.vmem %s0, %s488
        $region68: #{improved_cnn_forward.1} parent=63 // pred_fallthru
          _
      $region64: #{improved_cnn_forward.1} parent=5 // pred_fallthru
        _
      %p490 = scmp.le.s32.totalorder 1, %s27
      %p491 = scmp.lt.s32.totalorder %s27, 3
      %p492 = pnand %p490, %p491
      %p493 = pneg %p492
      // Predicated region
      $region69: #{improved_cnn_forward.1} parent=5 // pred_check
        _
      $region70: #{improved_cnn_forward.1} parent=5 // pred_check_branch
        %495 = sbr.rel (%p492) target = $region72
      $region71: #{improved_cnn_forward.1} parent=5 // pred_region
        %s496 = ssub.s32 %s27, 1
        // Predicated region
        $region73: #{improved_cnn_forward.1} parent=71 // pred_check
          %p497 = pneg %p74
        $region74: #{improved_cnn_forward.1} parent=71 // pred_check_branch
          %499 = sbr.rel (%p497) target = $region76
        $region75: #{improved_cnn_forward.1} parent=71 // pred_region
          %500 = dma.done [#allocation10], 64
        $region76: #{improved_cnn_forward.1} parent=71 // pred_fallthru
          _
        // Predicated region
        $region77: #{improved_cnn_forward.1} parent=71 // pred_check
          %p501 = pneg %p95
        $region78: #{improved_cnn_forward.1} parent=71 // pred_check_branch
          %503 = sbr.rel (%p501) target = $region80
        $region79: #{improved_cnn_forward.1} parent=71 // pred_region
          %504 = dma.done [#allocation12], 16
        $region80: #{improved_cnn_forward.1} parent=71 // pred_fallthru
          _
        // Predicated region
        $region81: #{improved_cnn_forward.1} parent=71 // pred_check
          %p505 = pneg %p116
        $region82: #{improved_cnn_forward.1} parent=71 // pred_check_branch
          %507 = sbr.rel (%p505) target = $region84
        $region83: #{improved_cnn_forward.1} parent=71 // pred_region
          %508 = dma.done [#allocation12], 1536
        $region84: #{improved_cnn_forward.1} parent=71 // pred_fallthru
          _
        // Predicated region
        $region85: #{improved_cnn_forward.1} parent=71 // pred_check
          %p509 = pneg %p137
        $region86: #{improved_cnn_forward.1} parent=71 // pred_check_branch
          %511 = sbr.rel (%p509) target = $region88
        $region87: #{improved_cnn_forward.1} parent=71 // pred_region
          %512 = dma.done [#allocation15], 16
        $region88: #{improved_cnn_forward.1} parent=71 // pred_fallthru
          _
        // Predicated region
        $region89: #{improved_cnn_forward.1} parent=71 // pred_check
          %p513 = pneg %p158
        $region90: #{improved_cnn_forward.1} parent=71 // pred_check_branch
          %515 = sbr.rel (%p513) target = $region92
        $region91: #{improved_cnn_forward.1} parent=71 // pred_region
          %516 = dma.done [#allocation15], 6144
        $region92: #{improved_cnn_forward.1} parent=71 // pred_fallthru
          _
        // Predicated region
        $region93: #{improved_cnn_forward.1} parent=71 // pred_check
          %p517 = pneg %p179
        $region94: #{improved_cnn_forward.1} parent=71 // pred_check_branch
          %519 = sbr.rel (%p517) target = $region96
        $region95: #{improved_cnn_forward.1} parent=71 // pred_region
          %520 = dma.done [#allocation18], 32
        $region96: #{improved_cnn_forward.1} parent=71 // pred_fallthru
          _
        // Predicated region
        $region97: #{improved_cnn_forward.1} parent=71 // pred_check
          %p521 = pneg %p200
        $region98: #{improved_cnn_forward.1} parent=71 // pred_check_branch
          %523 = sbr.rel (%p521) target = $region100
        $region99: #{improved_cnn_forward.1} parent=71 // pred_region
          %524 = dma.done [#allocation18], 40960
        $region100: #{improved_cnn_forward.1} parent=71 // pred_fallthru
          _
        // Predicated region
        $region101: #{improved_cnn_forward.1} parent=71 // pred_check
          %p525 = pneg %p221
        $region102: #{improved_cnn_forward.1} parent=71 // pred_check_branch
          %527 = sbr.rel (%p525) target = $region104
        $region103: #{improved_cnn_forward.1} parent=71 // pred_region
          %528 = dma.done [#allocation21], 32
        $region104: #{improved_cnn_forward.1} parent=71 // pred_fallthru
          _
        // Predicated region
        $region105: #{improved_cnn_forward.1} parent=71 // pred_check
          %p529 = pneg %p242
        $region106: #{improved_cnn_forward.1} parent=71 // pred_check_branch
          %531 = sbr.rel (%p529) target = $region108
        $region107: #{improved_cnn_forward.1} parent=71 // pred_region
          %532 = dma.done [#allocation21], 2048
        $region108: #{improved_cnn_forward.1} parent=71 // pred_fallthru
          _
        // Predicated region
        $region109: #{improved_cnn_forward.1} parent=71 // pred_check
          %p533 = pneg %p263
        $region110: #{improved_cnn_forward.1} parent=71 // pred_check_branch
          %535 = sbr.rel (%p533) target = $region112
        $region111: #{improved_cnn_forward.1} parent=71 // pred_region
          %536 = dma.done [#allocation24], 16
        $region112: #{improved_cnn_forward.1} parent=71 // pred_fallthru
          _
        // Predicated region
        $region113: #{improved_cnn_forward.1} parent=71 // pred_check
          %p537 = pneg %p284
        $region114: #{improved_cnn_forward.1} parent=71 // pred_check_branch
          %539 = sbr.rel (%p537) target = $region116
        $region115: #{improved_cnn_forward.1} parent=71 // pred_region
          %540 = dma.done [#allocation24], 16
        $region116: #{improved_cnn_forward.1} parent=71 // pred_fallthru
          _
        %p541 = scmp.lt.s32.totalorder %s32, 1
        %s542 = scalar_select %p541, %s32, 1
        %s543 = smul.addr %s542, 82
        %s544 = smul.addr %s543, 4
        %s545 = scalar_lea.vmem %s0, %s544
        %p546 = pneg %p53
        %p547 = pneg %p50
        %p548 = pneg %p74
        %p549 = pneg %p71
        %p550 = pneg %p95
        %p551 = pneg %p92
        %p552 = pneg %p116
        %p553 = pneg %p113
        %p554 = pneg %p137
        %p555 = pneg %p134
        %p556 = pneg %p158
        %p557 = pneg %p155
        %p558 = pneg %p179
        %p559 = pneg %p176
        %p560 = pneg %p200
        %p561 = pneg %p197
        %p562 = pneg %p221
        %p563 = pneg %p218
        %p564 = pneg %p242
        %p565 = pneg %p239
        %p566 = pneg %p263
        %p567 = pneg %p260
        %p568 = pneg %p284
        %p569 = pneg %p281
        %p570 = pneg %p305
        %p571 = pneg %p302
        %p572 = pneg %p331
        %p573 = pneg %p328
        %p574 = scmp.lt.s32.totalorder %s32, 1
        %s575 = scalar_select %p574, %s32, 1
        %s576 = scalar_lea.vmem %s13, %s575
        %p577 = scmp.lt.s32.totalorder %s32, 1
        %s578 = scalar_select %p577, %s32, 1
        %s579 = smul.addr %s578, 82
        %s580 = smul.addr %s579, 4
        %s581 = scalar_lea.vmem %s0, %s580
        %p582 = scmp.lt.s32.totalorder %s32, 1
        %s583 = scalar_select %p582, %s32, 1
        %s584 = scalar_lea.vmem %s13, %s583
        %v586 = vld [vmem:[%s581] sm:$0xf]
        %v587 = vld [vmem:[%s581 + $0x4] sm:$0xf]
        %v588 = vld [vmem:[%s581 + $0x8] sm:$0xf]
        %v589 = vld [vmem:[%s581 + $0xc] sm:$0xf]
        %v590 = vld [vmem:[%s581 + $0x10] sm:$0xf]
        %v591 = vld [vmem:[%s581 + $0x14] sm:$0xf]
        %v592 = vld [vmem:[%s581 + $0x18] sm:$0xf]
        %v593 = vld [vmem:[%s581 + $0x1c] sm:$0xf]
        %v594 = vld [vmem:[%s581 + $0x20] sm:$0xf]
        %v595 = vld [vmem:[%s581 + $0x24] sm:$0xf]
        %v596 = vld [vmem:[%s581 + $0x28] sm:$0xf]
        %v597 = vld [vmem:[%s581 + $0x2c] sm:$0xf]
        %v598 = vld [vmem:[%s581 + $0x30] sm:$0xf]
        %v599 = vld [vmem:[%s581 + $0x34] sm:$0xf]
        %v600 = vld [vmem:[%s581 + $0x38] sm:$0xf]
        %v601 = vld [vmem:[%s581 + $0x3c] sm:$0xf]
        %v602 = vld [vmem:[%s581 + $0x40] sm:$0xf]
        %v603 = vld [vmem:[%s581 + $0x44] sm:$0xf]
        %v604 = vld [vmem:[%s581 + $0x48] sm:$0xf]
        %v605 = vld [vmem:[%s581 + $0x4c] sm:$0xf]
        %v606 = vld [vmem:[%s581 + $0x50] sm:$0xf]
        %v607 = vld [vmem:[%s581 + $0x54] sm:$0xf]
        %v608 = vld [vmem:[%s581 + $0x58] sm:$0xf]
        %v609 = vld [vmem:[%s581 + $0x5c] sm:$0xf]
        %v610 = vld [vmem:[%s581 + $0x60] sm:$0xf]
        %v611 = vld [vmem:[%s581 + $0x64] sm:$0xf]
        %v612 = vld [vmem:[%s581 + $0x68] sm:$0xf]
        %v613 = vld [vmem:[%s581 + $0x6c] sm:$0xf]
        %v614 = vld [vmem:[%s581 + $0x70] sm:$0xf]
        %v615 = vld [vmem:[%s581 + $0x74] sm:$0xf]
        %v616 = vld [vmem:[%s581 + $0x78] sm:$0xf]
        %v617 = vld [vmem:[%s581 + $0x7c] sm:$0xf]
        %v618 = vld [vmem:[%s581 + $0x80] sm:$0xf]
        %v619 = vld [vmem:[%s581 + $0x84] sm:$0xf]
        %v620 = vld [vmem:[%s581 + $0x88] sm:$0xf]
        %v621 = vld [vmem:[%s581 + $0x8c] sm:$0xf]
        %v622 = vld [vmem:[%s581 + $0x90] sm:$0xf]
        %v623 = vld [vmem:[%s581 + $0x94] sm:$0xf]
        %v624 = vld [vmem:[%s581 + $0x98] sm:$0xf]
        %v625 = vld [vmem:[%s581 + $0x9c] sm:$0xf]
        %v626 = vld [vmem:[%s581 + $0xa0] sm:$0xf]
        %v627 = vld [vmem:[#allocation9] sm:$0xf]
        %v628 = vld [vmem:[#allocation11] sm:$0x1]
        %v630 = vlaneseq
        %v631 = vshrl.u32 %v630, 7
        %v632 = vsub.s32 0, %v631
        %v633 = vrot.slane %v628, %v632
        %v676 = vunpack.c.l.b16 %v586
        %v677 = vunpack.c.l.b16 %v587
        %v678 = vunpack.c.l.b16 %v588
        %v679 = vunpack.c.l.b16 %v589
        %v680 = vunpack.c.l.b16 %v590
        %v681 = vunpack.c.l.b16 %v591
        %v682 = vunpack.c.l.b16 %v592
        %v683 = vunpack.c.l.b16 %v593
        %v684 = vunpack.c.l.b16 %v594
        %v685 = vunpack.c.l.b16 %v595
        %v686 = vunpack.c.l.b16 %v596
        %v687 = vunpack.c.l.b16 %v597
        %v688 = vunpack.c.l.b16 %v598
        %v689 = vunpack.c.l.b16 %v599
        %v690 = vunpack.c.l.b16 %v600
        %v691 = vunpack.c.l.b16 %v601
        %v692 = vunpack.c.l.b16 %v602
        %v693 = vunpack.c.l.b16 %v603
        %v694 = vunpack.c.l.b16 %v604
        %v695 = vunpack.c.l.b16 %v605
        %v696 = vunpack.c.l.b16 %v606
        %v697 = vunpack.c.l.b16 %v607
        %v698 = vunpack.c.l.b16 %v608
        %v699 = vunpack.c.l.b16 %v609
        %v700 = vunpack.c.l.b16 %v610
        %v701 = vunpack.c.l.b16 %v611
        %v702 = vunpack.c.l.b16 %v612
        %v703 = vunpack.c.l.b16 %v613
        %v704 = vunpack.c.l.b16 %v614
        %v705 = vunpack.c.l.b16 %v615
        %v706 = vunpack.c.l.b16 %v616
        %v707 = vunpack.c.l.b16 %v617
        %v708 = vunpack.c.l.b16 %v618
        %v709 = vunpack.c.l.b16 %v619
        %v710 = vunpack.c.l.b16 %v620
        %v711 = vunpack.c.l.b16 %v621
        %v712 = vunpack.c.l.b16 %v622
        %v713 = vunpack.c.l.b16 %v623
        %v714 = vunpack.c.l.b16 %v624
        %v715 = vunpack.c.l.b16 %v625
        %v716 = vunpack.c.l.b16 %v626
        %v717 = vpack.c.b16 %v677, %v676
        %v718 = vpack.c.b16 %v679, %v678
        %v719 = vpack.c.b16 %v681, %v680
        %v720 = vpack.c.b16 %v683, %v682
        %v721 = vpack.c.b16 %v685, %v684
        %v722 = vpack.c.b16 %v687, %v686
        %v723 = vpack.c.b16 %v689, %v688
        %v724 = vpack.c.b16 %v691, %v690
        %v725 = vpack.c.b16 %v693, %v692
        %v726 = vpack.c.b16 %v695, %v694
        %v727 = vpack.c.b16 %v697, %v696
        %v728 = vpack.c.b16 %v699, %v698
        %v729 = vpack.c.b16 %v701, %v700
        %v730 = vpack.c.b16 %v703, %v702
        %v731 = vpack.c.b16 %v705, %v704
        %v732 = vpack.c.b16 %v707, %v706
        %v733 = vpack.c.b16 %v709, %v708
        %v734 = vpack.c.b16 %v711, %v710
        %v735 = vpack.c.b16 %v713, %v712
        %v736 = vpack.c.b16 %v715, %v714
        %v737 = vpack.c.b16 %v716, %v716
        %vm738 = vcmask 64512
        %v740 = vsel %vm738, %v717, 0
        %v743 = vsel %vm738, %v718, 0
        %v746 = vsel %vm738, %v719, 0
        %v749 = vsel %vm738, %v720, 0
        %v752 = vsel %vm738, %v721, 0
        %v755 = vsel %vm738, %v722, 0
        %v758 = vsel %vm738, %v723, 0
        %v761 = vsel %vm738, %v724, 0
        %v764 = vsel %vm738, %v725, 0
        %v767 = vsel %vm738, %v726, 0
        %v770 = vsel %vm738, %v727, 0
        %v773 = vsel %vm738, %v728, 0
        %v776 = vsel %vm738, %v729, 0
        %v779 = vsel %vm738, %v730, 0
        %v782 = vsel %vm738, %v731, 0
        %v785 = vsel %vm738, %v732, 0
        %v788 = vsel %vm738, %v733, 0
        %v791 = vsel %vm738, %v734, 0
        %v794 = vsel %vm738, %v735, 0
        %v797 = vsel %vm738, %v736, 0
        %v800 = vsel %vm738, %v737, 0
        %vm802 = vcmask 1043456
        %v804 = vsel %vm802, %v627, 0
        %806 = vmatprep.subr.bf16.mxu0 0
        %807 = vmatpush1.bf16.msra.mxu0 %v804
        %808 = vmatprep.subr.bf16.mxu0 0
        %809 = vmatpush1.bf16.msra.mxu0 0
        %810 = vmatprep.subr.bf16.mxu0 0
        %811 = vmatpush1.bf16.msra.mxu0 0
        %812 = vmatprep.subr.bf16.mxu0 0
        %813 = vmatpush1.bf16.msra.mxu0 0
        %814 = vmatprep.subr.bf16.mxu0 0
        %815 = vmatpush1.bf16.msra.mxu0 0
        %816 = vmatprep.subr.bf16.mxu0 0
        %817 = vmatpush1.bf16.msra.mxu0 0
        %818 = vmatprep.subr.bf16.mxu0 0
        %819 = vmatpush1.bf16.msra.mxu0 0
        %820 = vmatprep.subr.bf16.mxu0 0
        %821 = vmatpush1.bf16.msra.mxu0 0
        %822 = vmatprep.subr.bf16.mxu0 0
        %823 = vmatpush1.bf16.msra.mxu0 0
        %824 = vmatprep.subr.bf16.mxu0 0
        %825 = vmatpush1.bf16.msra.mxu0 0
        %826 = vmatprep.subr.bf16.mxu0 0
        %827 = vmatpush1.bf16.msra.mxu0 0
        %828 = vmatprep.subr.bf16.mxu0 0
        %829 = vmatpush1.bf16.msra.mxu0 0
        %830 = vmatprep.subr.bf16.mxu0 0
        %831 = vmatpush1.bf16.msra.mxu0 0
        %832 = vmatprep.subr.bf16.mxu0 0
        %833 = vmatpush1.bf16.msra.mxu0 0
        %834 = vmatprep.subr.bf16.mxu0 0
        %835 = vmatpush1.bf16.msra.mxu0 0
        %836 = vmatprep.subr.bf16.mxu0 0
        %837 = vmatpush1.bf16.msra.mxu0 0
        %838 = vmatprep.mubr.bf16.mxu0 0
        %839 = vmatmul.mubr.bf16.gmra.mrb[0].mxu0 %v740
        %v840 = vpop.f32.mrb[0].mxu0
        %v841 = vadd.f32 %v633, %v840
        %v842 = vpop.f32.mrb[0].mxu0
        %v843 = vpop.f32.mrb[0].mxu0
        %v844 = vadd.f32 %v633, %v843
        %v845 = vpop.f32.mrb[0].mxu0
        %846 = vmatprep.mubr.bf16.mxu0 0
        %847 = vmatmul.mubr.bf16.gmra.mrb[0].mxu0 %v743
        %v848 = vpop.f32.mrb[0].mxu0
        %v849 = vadd.f32 %v633, %v848
        %v850 = vpop.f32.mrb[0].mxu0
        %v851 = vpop.f32.mrb[0].mxu0
        %v852 = vadd.f32 %v633, %v851
        %v853 = vpop.f32.mrb[0].mxu0
        %854 = vmatprep.mubr.bf16.mxu0 0
        %855 = vmatmul.mubr.bf16.gmra.mrb[0].mxu0 %v746
        %v856 = vpop.f32.mrb[0].mxu0
        %v857 = vadd.f32 %v633, %v856
        %v858 = vpop.f32.mrb[0].mxu0
        %v859 = vpop.f32.mrb[0].mxu0
        %v860 = vadd.f32 %v633, %v859
        %v861 = vpop.f32.mrb[0].mxu0
        %862 = vmatprep.mubr.bf16.mxu0 0
        %863 = vmatmul.mubr.bf16.gmra.mrb[0].mxu0 %v749
        %v864 = vpop.f32.mrb[0].mxu0
        %v865 = vadd.f32 %v633, %v864
        %v866 = vpop.f32.mrb[0].mxu0
        %v867 = vpop.f32.mrb[0].mxu0
        %v868 = vadd.f32 %v633, %v867
        %v869 = vpop.f32.mrb[0].mxu0
        %870 = vmatprep.mubr.bf16.mxu0 0
        %871 = vmatmul.mubr.bf16.gmra.mrb[0].mxu0 %v752
        %v872 = vpop.f32.mrb[0].mxu0
        %v873 = vadd.f32 %v633, %v872
        %v874 = vpop.f32.mrb[0].mxu0
        %v875 = vpop.f32.mrb[0].mxu0
        %v876 = vadd.f32 %v633, %v875
        %v877 = vpop.f32.mrb[0].mxu0
        %878 = vmatprep.mubr.bf16.mxu0 0
        %879 = vmatmul.mubr.bf16.gmra.mrb[0].mxu0 %v755
        %v880 = vpop.f32.mrb[0].mxu0
        %v881 = vadd.f32 %v633, %v880
        %v882 = vpop.f32.mrb[0].mxu0
        %v883 = vpop.f32.mrb[0].mxu0
        %v884 = vadd.f32 %v633, %v883
        %v885 = vpop.f32.mrb[0].mxu0
        %886 = vmatprep.mubr.bf16.mxu0 0
        %887 = vmatmul.mubr.bf16.gmra.mrb[0].mxu0 %v758
        %v888 = vpop.f32.mrb[0].mxu0
        %v889 = vadd.f32 %v633, %v888
        %v890 = vpop.f32.mrb[0].mxu0
        %v891 = vpop.f32.mrb[0].mxu0
        %v892 = vadd.f32 %v633, %v891
        %v893 = vpop.f32.mrb[0].mxu0
        %894 = vmatprep.mubr.bf16.mxu0 0
        %895 = vmatmul.mubr.bf16.gmra.mrb[0].mxu0 %v761
        %v896 = vpop.f32.mrb[0].mxu0
        %v897 = vadd.f32 %v633, %v896
        %v898 = vpop.f32.mrb[0].mxu0
        %v899 = vpop.f32.mrb[0].mxu0
        %v900 = vadd.f32 %v633, %v899
        %v901 = vpop.f32.mrb[0].mxu0
        %902 = vmatprep.mubr.bf16.mxu0 0
        %903 = vmatmul.mubr.bf16.gmra.mrb[0].mxu0 %v764
        %v904 = vpop.f32.mrb[0].mxu0
        %v905 = vadd.f32 %v633, %v904
        %v906 = vpop.f32.mrb[0].mxu0
        %v907 = vpop.f32.mrb[0].mxu0
        %v908 = vadd.f32 %v633, %v907
        %v909 = vpop.f32.mrb[0].mxu0
        %910 = vmatprep.mubr.bf16.mxu0 0
        %911 = vmatmul.mubr.bf16.gmra.mrb[0].mxu0 %v767
        %v912 = vpop.f32.mrb[0].mxu0
        %v913 = vadd.f32 %v633, %v912
        %v914 = vpop.f32.mrb[0].mxu0
        %v915 = vpop.f32.mrb[0].mxu0
        %v916 = vadd.f32 %v633, %v915
        %v917 = vpop.f32.mrb[0].mxu0
        %918 = vmatprep.mubr.bf16.mxu0 0
        %919 = vmatmul.mubr.bf16.gmra.mrb[0].mxu0 %v770
        %v920 = vpop.f32.mrb[0].mxu0
        %v921 = vadd.f32 %v633, %v920
        %v922 = vpop.f32.mrb[0].mxu0
        %v923 = vpop.f32.mrb[0].mxu0
        %v924 = vadd.f32 %v633, %v923
        %v925 = vpop.f32.mrb[0].mxu0
        %926 = vmatprep.mubr.bf16.mxu0 0
        %927 = vmatmul.mubr.bf16.gmra.mrb[0].mxu0 %v773
        %v928 = vpop.f32.mrb[0].mxu0
        %v929 = vadd.f32 %v633, %v928
        %v930 = vpop.f32.mrb[0].mxu0
        %v931 = vpop.f32.mrb[0].mxu0
        %v932 = vadd.f32 %v633, %v931
        %v933 = vpop.f32.mrb[0].mxu0
        %934 = vmatprep.mubr.bf16.mxu0 0
        %935 = vmatmul.mubr.bf16.gmra.mrb[0].mxu0 %v776
        %v936 = vpop.f32.mrb[0].mxu0
        %v937 = vadd.f32 %v633, %v936
        %v938 = vpop.f32.mrb[0].mxu0
        %v939 = vpop.f32.mrb[0].mxu0
        %v940 = vadd.f32 %v633, %v939
        %v941 = vpop.f32.mrb[0].mxu0
        %942 = vmatprep.mubr.bf16.mxu0 0
        %943 = vmatmul.mubr.bf16.gmra.mrb[0].mxu0 %v779
        %v944 = vpop.f32.mrb[0].mxu0
        %v945 = vadd.f32 %v633, %v944
        %v946 = vpop.f32.mrb[0].mxu0
        %v947 = vpop.f32.mrb[0].mxu0
        %v948 = vadd.f32 %v633, %v947
        %v949 = vpop.f32.mrb[0].mxu0
        %950 = vmatprep.mubr.bf16.mxu0 0
        %951 = vmatmul.mubr.bf16.gmra.mrb[0].mxu0 %v782
        %v952 = vpop.f32.mrb[0].mxu0
        %v953 = vadd.f32 %v633, %v952
        %v954 = vpop.f32.mrb[0].mxu0
        %v955 = vpop.f32.mrb[0].mxu0
        %v956 = vadd.f32 %v633, %v955
        %v957 = vpop.f32.mrb[0].mxu0
        %958 = vmatprep.mubr.bf16.mxu0 0
        %959 = vmatmul.mubr.bf16.gmra.mrb[0].mxu0 %v785
        %v960 = vpop.f32.mrb[0].mxu0
        %v961 = vadd.f32 %v633, %v960
        %v962 = vpop.f32.mrb[0].mxu0
        %v963 = vpop.f32.mrb[0].mxu0
        %v964 = vadd.f32 %v633, %v963
        %v965 = vpop.f32.mrb[0].mxu0
        %966 = vmatprep.mubr.bf16.mxu0 0
        %967 = vmatmul.mubr.bf16.gmra.mrb[0].mxu0 %v788
        %v968 = vpop.f32.mrb[0].mxu0
        %v969 = vadd.f32 %v633, %v968
        %v970 = vpop.f32.mrb[0].mxu0
        %v971 = vpop.f32.mrb[0].mxu0
        %v972 = vadd.f32 %v633, %v971
        %v973 = vpop.f32.mrb[0].mxu0
        %974 = vmatprep.mubr.bf16.mxu0 0
        %975 = vmatmul.mubr.bf16.gmra.mrb[0].mxu0 %v791
        %v976 = vpop.f32.mrb[0].mxu0
        %v977 = vadd.f32 %v633, %v976
        %v978 = vpop.f32.mrb[0].mxu0
        %v979 = vpop.f32.mrb[0].mxu0
        %v980 = vadd.f32 %v633, %v979
        %v981 = vpop.f32.mrb[0].mxu0
        %982 = vmatprep.mubr.bf16.mxu0 0
        %983 = vmatmul.mubr.bf16.gmra.mrb[0].mxu0 %v794
        %v984 = vpop.f32.mrb[0].mxu0
        %v985 = vadd.f32 %v633, %v984
        %v986 = vpop.f32.mrb[0].mxu0
        %v987 = vpop.f32.mrb[0].mxu0
        %v988 = vadd.f32 %v633, %v987
        %v989 = vpop.f32.mrb[0].mxu0
        %990 = vmatprep.mubr.bf16.mxu0 0
        %991 = vmatmul.mubr.bf16.gmra.mrb[0].mxu0 %v797
        %v992 = vpop.f32.mrb[0].mxu0
        %v993 = vadd.f32 %v633, %v992
        %v994 = vpop.f32.mrb[0].mxu0
        %v995 = vpop.f32.mrb[0].mxu0
        %v996 = vadd.f32 %v633, %v995
        %v997 = vpop.f32.mrb[0].mxu0
        %998 = vmatprep.mubr.bf16.mxu0 0
        %999 = vmatmul.mubr.bf16.gmra.mrb[0].mxu0 %v800
        %v1000 = vpop.f32.mrb[0].mxu0
        %v1001 = vadd.f32 %v633, %v1000
        %v1002 = vpop.f32.mrb[0].mxu0
        %v1003 = vpop.f32.mrb[0].mxu0
        %v1004 = vpop.f32.mrb[0].mxu0
        %1005 = vdwg.mxu0
        %v1006 = vmax.f32 %v841, 0.0
        %v1007 = vmax.f32 %v844, 0.0
        %v1008 = vmax.f32 %v849, 0.0
        %v1009 = vmax.f32 %v852, 0.0
        %v1010 = vmax.f32 %v857, 0.0
        %v1011 = vmax.f32 %v860, 0.0
        %v1012 = vmax.f32 %v865, 0.0
        %v1013 = vmax.f32 %v868, 0.0
        %v1014 = vmax.f32 %v873, 0.0
        %v1015 = vmax.f32 %v876, 0.0
        %v1016 = vmax.f32 %v881, 0.0
        %v1017 = vmax.f32 %v884, 0.0
        %v1018 = vmax.f32 %v889, 0.0
        %v1019 = vmax.f32 %v892, 0.0
        %v1020 = vmax.f32 %v897, 0.0
        %v1021 = vmax.f32 %v900, 0.0
        %v1022 = vmax.f32 %v905, 0.0
        %v1023 = vmax.f32 %v908, 0.0
        %v1024 = vmax.f32 %v913, 0.0
        %v1025 = vmax.f32 %v916, 0.0
        %v1026 = vmax.f32 %v921, 0.0
        %v1027 = vmax.f32 %v924, 0.0
        %v1028 = vmax.f32 %v929, 0.0
        %v1029 = vmax.f32 %v932, 0.0
        %v1030 = vmax.f32 %v937, 0.0
        %v1031 = vmax.f32 %v940, 0.0
        %v1032 = vmax.f32 %v945, 0.0
        %v1033 = vmax.f32 %v948, 0.0
        %v1034 = vmax.f32 %v953, 0.0
        %v1035 = vmax.f32 %v956, 0.0
        %v1036 = vmax.f32 %v961, 0.0
        %v1037 = vmax.f32 %v964, 0.0
        %v1038 = vmax.f32 %v969, 0.0
        %v1039 = vmax.f32 %v972, 0.0
        %v1040 = vmax.f32 %v977, 0.0
        %v1041 = vmax.f32 %v980, 0.0
        %v1042 = vmax.f32 %v985, 0.0
        %v1043 = vmax.f32 %v988, 0.0
        %v1044 = vmax.f32 %v993, 0.0
        %v1045 = vmax.f32 %v996, 0.0
        %v1046 = vmax.f32 %v1001, 0.0
        %vm1047 = vcmask 523264
        %1048 = vst.msk [vmem:[#allocation2] sm:$0xff] %vm1047, %v1006
        %1049 = vst.msk [vmem:[#allocation2 + $0x8] sm:$0xff] %vm1047, %v1007
        %1050 = vst.msk [vmem:[#allocation2 + $0x10] sm:$0xff] %vm1047, %v1008
        %1051 = vst.msk [vmem:[#allocation2 + $0x18] sm:$0xff] %vm1047, %v1009
        %1052 = vst.msk [vmem:[#allocation2 + $0x20] sm:$0xff] %vm1047, %v1010
        %1053 = vst.msk [vmem:[#allocation2 + $0x28] sm:$0xff] %vm1047, %v1011
        %1054 = vst.msk [vmem:[#allocation2 + $0x30] sm:$0xff] %vm1047, %v1012
        %1055 = vst.msk [vmem:[#allocation2 + $0x38] sm:$0xff] %vm1047, %v1013
        %1056 = vst.msk [vmem:[#allocation2 + $0x40] sm:$0xff] %vm1047, %v1014
        %1057 = vst.msk [vmem:[#allocation2 + $0x48] sm:$0xff] %vm1047, %v1015
        %1058 = vst.msk [vmem:[#allocation2 + $0x50] sm:$0xff] %vm1047, %v1016
        %1059 = vst.msk [vmem:[#allocation2 + $0x58] sm:$0xff] %vm1047, %v1017
        %1060 = vst.msk [vmem:[#allocation2 + $0x60] sm:$0xff] %vm1047, %v1018
        %1061 = vst.msk [vmem:[#allocation2 + $0x68] sm:$0xff] %vm1047, %v1019
        %1062 = vst.msk [vmem:[#allocation2 + $0x70] sm:$0xff] %vm1047, %v1020
        %1063 = vst.msk [vmem:[#allocation2 + $0x78] sm:$0xff] %vm1047, %v1021
        %1064 = vst.msk [vmem:[#allocation2 + $0x80] sm:$0xff] %vm1047, %v1022
        %1065 = vst.msk [vmem:[#allocation2 + $0x88] sm:$0xff] %vm1047, %v1023
        %1066 = vst.msk [vmem:[#allocation2 + $0x90] sm:$0xff] %vm1047, %v1024
        %1067 = vst.msk [vmem:[#allocation2 + $0x98] sm:$0xff] %vm1047, %v1025
        %1068 = vst.msk [vmem:[#allocation2 + $0xa0] sm:$0xff] %vm1047, %v1026
        %1069 = vst.msk [vmem:[#allocation2 + $0xa8] sm:$0xff] %vm1047, %v1027
        %1070 = vst.msk [vmem:[#allocation2 + $0xb0] sm:$0xff] %vm1047, %v1028
        %1071 = vst.msk [vmem:[#allocation2 + $0xb8] sm:$0xff] %vm1047, %v1029
        %1072 = vst.msk [vmem:[#allocation2 + $0xc0] sm:$0xff] %vm1047, %v1030
        %1073 = vst.msk [vmem:[#allocation2 + $0xc8] sm:$0xff] %vm1047, %v1031
        %1074 = vst.msk [vmem:[#allocation2 + $0xd0] sm:$0xff] %vm1047, %v1032
        %1075 = vst.msk [vmem:[#allocation2 + $0xd8] sm:$0xff] %vm1047, %v1033
        %1076 = vst.msk [vmem:[#allocation2 + $0xe0] sm:$0xff] %vm1047, %v1034
        %1077 = vst.msk [vmem:[#allocation2 + $0xe8] sm:$0xff] %vm1047, %v1035
        %1078 = vst.msk [vmem:[#allocation2 + $0xf0] sm:$0xff] %vm1047, %v1036
        %1079 = vst.msk [vmem:[#allocation2 + $0xf8] sm:$0xff] %vm1047, %v1037
        %1080 = vst.msk [vmem:[#allocation2 + $0x100] sm:$0xff] %vm1047, %v1038
        %1081 = vst.msk [vmem:[#allocation2 + $0x108] sm:$0xff] %vm1047, %v1039
        %1082 = vst.msk [vmem:[#allocation2 + $0x110] sm:$0xff] %vm1047, %v1040
        %1083 = vst.msk [vmem:[#allocation2 + $0x118] sm:$0xff] %vm1047, %v1041
        %1084 = vst.msk [vmem:[#allocation2 + $0x120] sm:$0xff] %vm1047, %v1042
        %1085 = vst.msk [vmem:[#allocation2 + $0x128] sm:$0xff] %vm1047, %v1043
        %1086 = vst.msk [vmem:[#allocation2 + $0x130] sm:$0xff] %vm1047, %v1044
        %1087 = vst.msk [vmem:[#allocation2 + $0x138] sm:$0xff] %vm1047, %v1045
        %1088 = vst.msk [vmem:[#allocation2 + $0x140] sm:$0xff] %vm1047, %v1046
        %v1089 = vld [vmem:[%s581 + $0xa4] sm:$0xf]
        %v1090 = vld [vmem:[%s581 + $0xa8] sm:$0xf]
        %v1091 = vld [vmem:[%s581 + $0xac] sm:$0xf]
        %v1092 = vld [vmem:[%s581 + $0xb0] sm:$0xf]
        %v1093 = vld [vmem:[%s581 + $0xb4] sm:$0xf]
        %v1094 = vld [vmem:[%s581 + $0xb8] sm:$0xf]
        %v1095 = vld [vmem:[%s581 + $0xbc] sm:$0xf]
        %v1096 = vld [vmem:[%s581 + $0xc0] sm:$0xf]
        %v1097 = vld [vmem:[%s581 + $0xc4] sm:$0xf]
        %v1098 = vld [vmem:[%s581 + $0xc8] sm:$0xf]
        %v1099 = vld [vmem:[%s581 + $0xcc] sm:$0xf]
        %v1100 = vld [vmem:[%s581 + $0xd0] sm:$0xf]
        %v1101 = vld [vmem:[%s581 + $0xd4] sm:$0xf]
        %v1102 = vld [vmem:[%s581 + $0xd8] sm:$0xf]
        %v1103 = vld [vmem:[%s581 + $0xdc] sm:$0xf]
        %v1104 = vld [vmem:[%s581 + $0xe0] sm:$0xf]
        %v1105 = vld [vmem:[%s581 + $0xe4] sm:$0xf]
        %v1106 = vld [vmem:[%s581 + $0xe8] sm:$0xf]
        %v1107 = vld [vmem:[%s581 + $0xec] sm:$0xf]
        %v1108 = vld [vmem:[%s581 + $0xf0] sm:$0xf]
        %v1109 = vld [vmem:[%s581 + $0xf4] sm:$0xf]
        %v1110 = vld [vmem:[%s581 + $0xf8] sm:$0xf]
        %v1111 = vld [vmem:[%s581 + $0xfc] sm:$0xf]
        %v1112 = vld [vmem:[%s581 + $0x100] sm:$0xf]
        %v1113 = vld [vmem:[%s581 + $0x104] sm:$0xf]
        %v1114 = vld [vmem:[%s581 + $0x108] sm:$0xf]
        %v1115 = vld [vmem:[%s581 + $0x10c] sm:$0xf]
        %v1116 = vld [vmem:[%s581 + $0x110] sm:$0xf]
        %v1117 = vld [vmem:[%s581 + $0x114] sm:$0xf]
        %v1118 = vld [vmem:[%s581 + $0x118] sm:$0xf]
        %v1119 = vld [vmem:[%s581 + $0x11c] sm:$0xf]
        %v1120 = vld [vmem:[%s581 + $0x120] sm:$0xf]
        %v1121 = vld [vmem:[%s581 + $0x124] sm:$0xf]
        %v1122 = vld [vmem:[%s581 + $0x128] sm:$0xf]
        %v1123 = vld [vmem:[%s581 + $0x12c] sm:$0xf]
        %v1124 = vld [vmem:[%s581 + $0x130] sm:$0xf]
        %v1125 = vld [vmem:[%s581 + $0x134] sm:$0xf]
        %v1126 = vld [vmem:[%s581 + $0x138] sm:$0xf]
        %v1127 = vld [vmem:[%s581 + $0x13c] sm:$0xf]
        %v1128 = vld [vmem:[%s581 + $0x140] sm:$0xf]
        %v1129 = vld [vmem:[%s581 + $0x144] sm:$0xf]
        %v1130 = vld [vmem:[#allocation9] sm:$0xf]
        %v1131 = vld [vmem:[#allocation11] sm:$0x1]
        %v1133 = vlaneseq
        %v1134 = vshrl.u32 %v1133, 7
        %v1135 = vsub.s32 0, %v1134
        %v1136 = vrot.slane %v1131, %v1135
        %v1179 = vunpack.c.l.b16 %v1089
        %v1180 = vunpack.c.l.b16 %v1090
        %v1181 = vunpack.c.l.b16 %v1091
        %v1182 = vunpack.c.l.b16 %v1092
        %v1183 = vunpack.c.l.b16 %v1093
        %v1184 = vunpack.c.l.b16 %v1094
        %v1185 = vunpack.c.l.b16 %v1095
        %v1186 = vunpack.c.l.b16 %v1096
        %v1187 = vunpack.c.l.b16 %v1097
        %v1188 = vunpack.c.l.b16 %v1098
        %v1189 = vunpack.c.l.b16 %v1099
        %v1190 = vunpack.c.l.b16 %v1100
        %v1191 = vunpack.c.l.b16 %v1101
        %v1192 = vunpack.c.l.b16 %v1102
        %v1193 = vunpack.c.l.b16 %v1103
        %v1194 = vunpack.c.l.b16 %v1104
        %v1195 = vunpack.c.l.b16 %v1105
        %v1196 = vunpack.c.l.b16 %v1106
        %v1197 = vunpack.c.l.b16 %v1107
        %v1198 = vunpack.c.l.b16 %v1108
        %v1199 = vunpack.c.l.b16 %v1109
        %v1200 = vunpack.c.l.b16 %v1110
        %v1201 = vunpack.c.l.b16 %v1111
        %v1202 = vunpack.c.l.b16 %v1112
        %v1203 = vunpack.c.l.b16 %v1113
        %v1204 = vunpack.c.l.b16 %v1114
        %v1205 = vunpack.c.l.b16 %v1115
        %v1206 = vunpack.c.l.b16 %v1116
        %v1207 = vunpack.c.l.b16 %v1117
        %v1208 = vunpack.c.l.b16 %v1118
        %v1209 = vunpack.c.l.b16 %v1119
        %v1210 = vunpack.c.l.b16 %v1120
        %v1211 = vunpack.c.l.b16 %v1121
        %v1212 = vunpack.c.l.b16 %v1122
        %v1213 = vunpack.c.l.b16 %v1123
        %v1214 = vunpack.c.l.b16 %v1124
        %v1215 = vunpack.c.l.b16 %v1125
        %v1216 = vunpack.c.l.b16 %v1126
        %v1217 = vunpack.c.l.b16 %v1127
        %v1218 = vunpack.c.l.b16 %v1128
        %v1219 = vunpack.c.l.b16 %v1129
        %v1220 = vpack.c.b16 %v1180, %v1179
        %v1221 = vpack.c.b16 %v1182, %v1181
        %v1222 = vpack.c.b16 %v1184, %v1183
        %v1223 = vpack.c.b16 %v1186, %v1185
        %v1224 = vpack.c.b16 %v1188, %v1187
        %v1225 = vpack.c.b16 %v1190, %v1189
        %v1226 = vpack.c.b16 %v1192, %v1191
        %v1227 = vpack.c.b16 %v1194, %v1193
        %v1228 = vpack.c.b16 %v1196, %v1195
        %v1229 = vpack.c.b16 %v1198, %v1197
        %v1230 = vpack.c.b16 %v1200, %v1199
        %v1231 = vpack.c.b16 %v1202, %v1201
        %v1232 = vpack.c.b16 %v1204, %v1203
        %v1233 = vpack.c.b16 %v1206, %v1205
        %v1234 = vpack.c.b16 %v1208, %v1207
        %v1235 = vpack.c.b16 %v1210, %v1209
        %v1236 = vpack.c.b16 %v1212, %v1211
        %v1237 = vpack.c.b16 %v1214, %v1213
        %v1238 = vpack.c.b16 %v1216, %v1215
        %v1239 = vpack.c.b16 %v1218, %v1217
        %v1240 = vpack.c.b16 %v1219, %v1219
        %v1242 = vsel %vm738, %v1220, 0
        %v1245 = vsel %vm738, %v1221, 0
        %v1248 = vsel %vm738, %v1222, 0
        %v1251 = vsel %vm738, %v1223, 0
        %v1254 = vsel %vm738, %v1224, 0
        %v1257 = vsel %vm738, %v1225, 0
        %v1260 = vsel %vm738, %v1226, 0
        %v1263 = vsel %vm738, %v1227, 0
        %v1266 = vsel %vm738, %v1228, 0
        %v1269 = vsel %vm738, %v1229, 0
        %v1272 = vsel %vm738, %v1230, 0
        %v1275 = vsel %vm738, %v1231, 0
        %v1278 = vsel %vm738, %v1232, 0
        %v1281 = vsel %vm738, %v1233, 0
        %v1284 = vsel %vm738, %v1234, 0
        %v1287 = vsel %vm738, %v1235, 0
        %v1290 = vsel %vm738, %v1236, 0
        %v1293 = vsel %vm738, %v1237, 0
        %v1296 = vsel %vm738, %v1238, 0
        %v1299 = vsel %vm738, %v1239, 0
        %v1302 = vsel %vm738, %v1240, 0
        %v1305 = vsel %vm802, %v1130, 0
        %1307 = vmatprep.subr.bf16.mxu0 0
        %1308 = vmatpush1.bf16.msra.mxu0 %v1305
        %1309 = vmatprep.subr.bf16.mxu0 0
        %1310 = vmatpush1.bf16.msra.mxu0 0
        %1311 = vmatprep.subr.bf16.mxu0 0
        %1312 = vmatpush1.bf16.msra.mxu0 0
        %1313 = vmatprep.subr.bf16.mxu0 0
        %1314 = vmatpush1.bf16.msra.mxu0 0
        %1315 = vmatprep.subr.bf16.mxu0 0
        %1316 = vmatpush1.bf16.msra.mxu0 0
        %1317 = vmatprep.subr.bf16.mxu0 0
        %1318 = vmatpush1.bf16.msra.mxu0 0
        %1319 = vmatprep.subr.bf16.mxu0 0
        %1320 = vmatpush1.bf16.msra.mxu0 0
        %1321 = vmatprep.subr.bf16.mxu0 0
        %1322 = vmatpush1.bf16.msra.mxu0 0
        %1323 = vmatprep.subr.bf16.mxu0 0
        %1324 = vmatpush1.bf16.msra.mxu0 0
        %1325 = vmatprep.subr.bf16.mxu0 0
        %1326 = vmatpush1.bf16.msra.mxu0 0
        %1327 = vmatprep.subr.bf16.mxu0 0
        %1328 = vmatpush1.bf16.msra.mxu0 0
        %1329 = vmatprep.subr.bf16.mxu0 0
        %1330 = vmatpush1.bf16.msra.mxu0 0
        %1331 = vmatprep.subr.bf16.mxu0 0
        %1332 = vmatpush1.bf16.msra.mxu0 0
        %1333 = vmatprep.subr.bf16.mxu0 0
        %1334 = vmatpush1.bf16.msra.mxu0 0
        %1335 = vmatprep.subr.bf16.mxu0 0
        %1336 = vmatpush1.bf16.msra.mxu0 0
        %1337 = vmatprep.subr.bf16.mxu0 0
        %1338 = vmatpush1.bf16.msra.mxu0 0
        %1339 = vmatprep.mubr.bf16.mxu0 0
        %1340 = vmatmul.mubr.bf16.gmra.mrb[0].mxu0 %v1242
        %v1341 = vpop.f32.mrb[0].mxu0
        %v1342 = vadd.f32 %v1136, %v1341
        %v1343 = vpop.f32.mrb[0].mxu0
        %v1344 = vpop.f32.mrb[0].mxu0
        %v1345 = vadd.f32 %v1136, %v1344
        %v1346 = vpop.f32.mrb[0].mxu0
        %1347 = vmatprep.mubr.bf16.mxu0 0
        %1348 = vmatmul.mubr.bf16.gmra.mrb[0].mxu0 %v1245
        %v1349 = vpop.f32.mrb[0].mxu0
        %v1350 = vadd.f32 %v1136, %v1349
        %v1351 = vpop.f32.mrb[0].mxu0
        %v1352 = vpop.f32.mrb[0].mxu0
        %v1353 = vadd.f32 %v1136, %v1352
        %v1354 = vpop.f32.mrb[0].mxu0
        %1355 = vmatprep.mubr.bf16.mxu0 0
        %1356 = vmatmul.mubr.bf16.gmra.mrb[0].mxu0 %v1248
        %v1357 = vpop.f32.mrb[0].mxu0
        %v1358 = vadd.f32 %v1136, %v1357
        %v1359 = vpop.f32.mrb[0].mxu0
        %v1360 = vpop.f32.mrb[0].mxu0
        %v1361 = vadd.f32 %v1136, %v1360
        %v1362 = vpop.f32.mrb[0].mxu0
        %1363 = vmatprep.mubr.bf16.mxu0 0
        %1364 = vmatmul.mubr.bf16.gmra.mrb[0].mxu0 %v1251
        %v1365 = vpop.f32.mrb[0].mxu0
        %v1366 = vadd.f32 %v1136, %v1365
        %v1367 = vpop.f32.mrb[0].mxu0
        %v1368 = vpop.f32.mrb[0].mxu0
        %v1369 = vadd.f32 %v1136, %v1368
        %v1370 = vpop.f32.mrb[0].mxu0
        %1371 = vmatprep.mubr.bf16.mxu0 0
        %1372 = vmatmul.mubr.bf16.gmra.mrb[0].mxu0 %v1254
        %v1373 = vpop.f32.mrb[0].mxu0
        %v1374 = vadd.f32 %v1136, %v1373
        %v1375 = vpop.f32.mrb[0].mxu0
        %v1376 = vpop.f32.mrb[0].mxu0
        %v1377 = vadd.f32 %v1136, %v1376
        %v1378 = vpop.f32.mrb[0].mxu0
        %1379 = vmatprep.mubr.bf16.mxu0 0
        %1380 = vmatmul.mubr.bf16.gmra.mrb[0].mxu0 %v1257
        %v1381 = vpop.f32.mrb[0].mxu0
        %v1382 = vadd.f32 %v1136, %v1381
        %v1383 = vpop.f32.mrb[0].mxu0
        %v1384 = vpop.f32.mrb[0].mxu0
        %v1385 = vadd.f32 %v1136, %v1384
        %v1386 = vpop.f32.mrb[0].mxu0
        %1387 = vmatprep.mubr.bf16.mxu0 0
        %1388 = vmatmul.mubr.bf16.gmra.mrb[0].mxu0 %v1260
        %v1389 = vpop.f32.mrb[0].mxu0
        %v1390 = vadd.f32 %v1136, %v1389
        %v1391 = vpop.f32.mrb[0].mxu0
        %v1392 = vpop.f32.mrb[0].mxu0
        %v1393 = vadd.f32 %v1136, %v1392
        %v1394 = vpop.f32.mrb[0].mxu0
        %1395 = vmatprep.mubr.bf16.mxu0 0
        %1396 = vmatmul.mubr.bf16.gmra.mrb[0].mxu0 %v1263
        %v1397 = vpop.f32.mrb[0].mxu0
        %v1398 = vadd.f32 %v1136, %v1397
        %v1399 = vpop.f32.mrb[0].mxu0
        %v1400 = vpop.f32.mrb[0].mxu0
        %v1401 = vadd.f32 %v1136, %v1400
        %v1402 = vpop.f32.mrb[0].mxu0
        %1403 = vmatprep.mubr.bf16.mxu0 0
        %1404 = vmatmul.mubr.bf16.gmra.mrb[0].mxu0 %v1266
        %v1405 = vpop.f32.mrb[0].mxu0
        %v1406 = vadd.f32 %v1136, %v1405
        %v1407 = vpop.f32.mrb[0].mxu0
        %v1408 = vpop.f32.mrb[0].mxu0
        %v1409 = vadd.f32 %v1136, %v1408
        %v1410 = vpop.f32.mrb[0].mxu0
        %1411 = vmatprep.mubr.bf16.mxu0 0
        %1412 = vmatmul.mubr.bf16.gmra.mrb[0].mxu0 %v1269
        %v1413 = vpop.f32.mrb[0].mxu0
        %v1414 = vadd.f32 %v1136, %v1413
        %v1415 = vpop.f32.mrb[0].mxu0
        %v1416 = vpop.f32.mrb[0].mxu0
        %v1417 = vadd.f32 %v1136, %v1416
        %v1418 = vpop.f32.mrb[0].mxu0
        %1419 = vmatprep.mubr.bf16.mxu0 0
        %1420 = vmatmul.mubr.bf16.gmra.mrb[0].mxu0 %v1272
        %v1421 = vpop.f32.mrb[0].mxu0
        %v1422 = vadd.f32 %v1136, %v1421
        %v1423 = vpop.f32.mrb[0].mxu0
        %v1424 = vpop.f32.mrb[0].mxu0
        %v1425 = vadd.f32 %v1136, %v1424
        %v1426 = vpop.f32.mrb[0].mxu0
        %1427 = vmatprep.mubr.bf16.mxu0 0
        %1428 = vmatmul.mubr.bf16.gmra.mrb[0].mxu0 %v1275
        %v1429 = vpop.f32.mrb[0].mxu0
        %v1430 = vadd.f32 %v1136, %v1429
        %v1431 = vpop.f32.mrb[0].mxu0
        %v1432 = vpop.f32.mrb[0].mxu0
        %v1433 = vadd.f32 %v1136, %v1432
        %v1434 = vpop.f32.mrb[0].mxu0
        %1435 = vmatprep.mubr.bf16.mxu0 0
        %1436 = vmatmul.mubr.bf16.gmra.mrb[0].mxu0 %v1278
        %v1437 = vpop.f32.mrb[0].mxu0
        %v1438 = vadd.f32 %v1136, %v1437
        %v1439 = vpop.f32.mrb[0].mxu0
        %v1440 = vpop.f32.mrb[0].mxu0
        %v1441 = vadd.f32 %v1136, %v1440
        %v1442 = vpop.f32.mrb[0].mxu0
        %1443 = vmatprep.mubr.bf16.mxu0 0
        %1444 = vmatmul.mubr.bf16.gmra.mrb[0].mxu0 %v1281
        %v1445 = vpop.f32.mrb[0].mxu0
        %v1446 = vadd.f32 %v1136, %v1445
        %v1447 = vpop.f32.mrb[0].mxu0
        %v1448 = vpop.f32.mrb[0].mxu0
        %v1449 = vadd.f32 %v1136, %v1448
        %v1450 = vpop.f32.mrb[0].mxu0
        %1451 = vmatprep.mubr.bf16.mxu0 0
        %1452 = vmatmul.mubr.bf16.gmra.mrb[0].mxu0 %v1284
        %v1453 = vpop.f32.mrb[0].mxu0
        %v1454 = vadd.f32 %v1136, %v1453
        %v1455 = vpop.f32.mrb[0].mxu0
        %v1456 = vpop.f32.mrb[0].mxu0
        %v1457 = vadd.f32 %v1136, %v1456
        %v1458 = vpop.f32.mrb[0].mxu0
        %1459 = vmatprep.mubr.bf16.mxu0 0
        %1460 = vmatmul.mubr.bf16.gmra.mrb[0].mxu0 %v1287
        %v1461 = vpop.f32.mrb[0].mxu0
        %v1462 = vadd.f32 %v1136, %v1461
        %v1463 = vpop.f32.mrb[0].mxu0
        %v1464 = vpop.f32.mrb[0].mxu0
        %v1465 = vadd.f32 %v1136, %v1464
        %v1466 = vpop.f32.mrb[0].mxu0
        %1467 = vmatprep.mubr.bf16.mxu0 0
        %1468 = vmatmul.mubr.bf16.gmra.mrb[0].mxu0 %v1290
        %v1469 = vpop.f32.mrb[0].mxu0
        %v1470 = vadd.f32 %v1136, %v1469
        %v1471 = vpop.f32.mrb[0].mxu0
        %v1472 = vpop.f32.mrb[0].mxu0
        %v1473 = vadd.f32 %v1136, %v1472
        %v1474 = vpop.f32.mrb[0].mxu0
        %1475 = vmatprep.mubr.bf16.mxu0 0
        %1476 = vmatmul.mubr.bf16.gmra.mrb[0].mxu0 %v1293
        %v1477 = vpop.f32.mrb[0].mxu0
        %v1478 = vadd.f32 %v1136, %v1477
        %v1479 = vpop.f32.mrb[0].mxu0
        %v1480 = vpop.f32.mrb[0].mxu0
        %v1481 = vadd.f32 %v1136, %v1480
        %v1482 = vpop.f32.mrb[0].mxu0
        %1483 = vmatprep.mubr.bf16.mxu0 0
        %1484 = vmatmul.mubr.bf16.gmra.mrb[0].mxu0 %v1296
        %v1485 = vpop.f32.mrb[0].mxu0
        %v1486 = vadd.f32 %v1136, %v1485
        %v1487 = vpop.f32.mrb[0].mxu0
        %v1488 = vpop.f32.mrb[0].mxu0
        %v1489 = vadd.f32 %v1136, %v1488
        %v1490 = vpop.f32.mrb[0].mxu0
        %1491 = vmatprep.mubr.bf16.mxu0 0
        %1492 = vmatmul.mubr.bf16.gmra.mrb[0].mxu0 %v1299
        %v1493 = vpop.f32.mrb[0].mxu0
        %v1494 = vadd.f32 %v1136, %v1493
        %v1495 = vpop.f32.mrb[0].mxu0
        %v1496 = vpop.f32.mrb[0].mxu0
        %v1497 = vadd.f32 %v1136, %v1496
        %v1498 = vpop.f32.mrb[0].mxu0
        %1499 = vmatprep.mubr.bf16.mxu0 0
        %1500 = vmatmul.mubr.bf16.gmra.mrb[0].mxu0 %v1302
        %v1501 = vpop.f32.mrb[0].mxu0
        %v1502 = vadd.f32 %v1136, %v1501
        %v1503 = vpop.f32.mrb[0].mxu0
        %v1504 = vpop.f32.mrb[0].mxu0
        %v1505 = vpop.f32.mrb[0].mxu0
        %1506 = vdwg.mxu0
        %v1507 = vmax.f32 %v1342, 0.0
        %v1508 = vmax.f32 %v1345, 0.0
        %v1509 = vmax.f32 %v1350, 0.0
        %v1510 = vmax.f32 %v1353, 0.0
        %v1511 = vmax.f32 %v1358, 0.0
        %v1512 = vmax.f32 %v1361, 0.0
        %v1513 = vmax.f32 %v1366, 0.0
        %v1514 = vmax.f32 %v1369, 0.0
        %v1515 = vmax.f32 %v1374, 0.0
        %v1516 = vmax.f32 %v1377, 0.0
        %v1517 = vmax.f32 %v1382, 0.0
        %v1518 = vmax.f32 %v1385, 0.0
        %v1519 = vmax.f32 %v1390, 0.0
        %v1520 = vmax.f32 %v1393, 0.0
        %v1521 = vmax.f32 %v1398, 0.0
        %v1522 = vmax.f32 %v1401, 0.0
        %v1523 = vmax.f32 %v1406, 0.0
        %v1524 = vmax.f32 %v1409, 0.0
        %v1525 = vmax.f32 %v1414, 0.0
        %v1526 = vmax.f32 %v1417, 0.0
        %v1527 = vmax.f32 %v1422, 0.0
        %v1528 = vmax.f32 %v1425, 0.0
        %v1529 = vmax.f32 %v1430, 0.0
        %v1530 = vmax.f32 %v1433, 0.0
        %v1531 = vmax.f32 %v1438, 0.0
        %v1532 = vmax.f32 %v1441, 0.0
        %v1533 = vmax.f32 %v1446, 0.0
        %v1534 = vmax.f32 %v1449, 0.0
        %v1535 = vmax.f32 %v1454, 0.0
        %v1536 = vmax.f32 %v1457, 0.0
        %v1537 = vmax.f32 %v1462, 0.0
        %v1538 = vmax.f32 %v1465, 0.0
        %v1539 = vmax.f32 %v1470, 0.0
        %v1540 = vmax.f32 %v1473, 0.0
        %v1541 = vmax.f32 %v1478, 0.0
        %v1542 = vmax.f32 %v1481, 0.0
        %v1543 = vmax.f32 %v1486, 0.0
        %v1544 = vmax.f32 %v1489, 0.0
        %v1545 = vmax.f32 %v1494, 0.0
        %v1546 = vmax.f32 %v1497, 0.0
        %v1547 = vmax.f32 %v1502, 0.0
        %1548 = vst.msk [vmem:[#allocation2 + $0x148] sm:$0xff] %vm1047, %v1507
        %1549 = vst.msk [vmem:[#allocation2 + $0x150] sm:$0xff] %vm1047, %v1508
        %1550 = vst.msk [vmem:[#allocation2 + $0x158] sm:$0xff] %vm1047, %v1509
        %1551 = vst.msk [vmem:[#allocation2 + $0x160] sm:$0xff] %vm1047, %v1510
        %1552 = vst.msk [vmem:[#allocation2 + $0x168] sm:$0xff] %vm1047, %v1511
        %1553 = vst.msk [vmem:[#allocation2 + $0x170] sm:$0xff] %vm1047, %v1512
        %1554 = vst.msk [vmem:[#allocation2 + $0x178] sm:$0xff] %vm1047, %v1513
        %1555 = vst.msk [vmem:[#allocation2 + $0x180] sm:$0xff] %vm1047, %v1514
        %1556 = vst.msk [vmem:[#allocation2 + $0x188] sm:$0xff] %vm1047, %v1515
        %1557 = vst.msk [vmem:[#allocation2 + $0x190] sm:$0xff] %vm1047, %v1516
        %1558 = vst.msk [vmem:[#allocation2 + $0x198] sm:$0xff] %vm1047, %v1517
        %1559 = vst.msk [vmem:[#allocation2 + $0x1a0] sm:$0xff] %vm1047, %v1518
        %1560 = vst.msk [vmem:[#allocation2 + $0x1a8] sm:$0xff] %vm1047, %v1519
        %1561 = vst.msk [vmem:[#allocation2 + $0x1b0] sm:$0xff] %vm1047, %v1520
        %1562 = vst.msk [vmem:[#allocation2 + $0x1b8] sm:$0xff] %vm1047, %v1521
        %1563 = vst.msk [vmem:[#allocation2 + $0x1c0] sm:$0xff] %vm1047, %v1522
        %1564 = vst.msk [vmem:[#allocation2 + $0x1c8] sm:$0xff] %vm1047, %v1523
        %1565 = vst.msk [vmem:[#allocation2 + $0x1d0] sm:$0xff] %vm1047, %v1524
        %1566 = vst.msk [vmem:[#allocation2 + $0x1d8] sm:$0xff] %vm1047, %v1525
        %1567 = vst.msk [vmem:[#allocation2 + $0x1e0] sm:$0xff] %vm1047, %v1526
        %1568 = vst.msk [vmem:[#allocation2 + $0x1e8] sm:$0xff] %vm1047, %v1527
        %1569 = vst.msk [vmem:[#allocation2 + $0x1f0] sm:$0xff] %vm1047, %v1528
        %1570 = vst.msk [vmem:[#allocation2 + $0x1f8] sm:$0xff] %vm1047, %v1529
        %1571 = vst.msk [vmem:[#allocation2 + $0x200] sm:$0xff] %vm1047, %v1530
        %1572 = vst.msk [vmem:[#allocation2 + $0x208] sm:$0xff] %vm1047, %v1531
        %1573 = vst.msk [vmem:[#allocation2 + $0x210] sm:$0xff] %vm1047, %v1532
        %1574 = vst.msk [vmem:[#allocation2 + $0x218] sm:$0xff] %vm1047, %v1533
        %1575 = vst.msk [vmem:[#allocation2 + $0x220] sm:$0xff] %vm1047, %v1534
        %1576 = vst.msk [vmem:[#allocation2 + $0x228] sm:$0xff] %vm1047, %v1535
        %1577 = vst.msk [vmem:[#allocation2 + $0x230] sm:$0xff] %vm1047, %v1536
        %1578 = vst.msk [vmem:[#allocation2 + $0x238] sm:$0xff] %vm1047, %v1537
        %1579 = vst.msk [vmem:[#allocation2 + $0x240] sm:$0xff] %vm1047, %v1538
        %1580 = vst.msk [vmem:[#allocation2 + $0x248] sm:$0xff] %vm1047, %v1539
        %1581 = vst.msk [vmem:[#allocation2 + $0x250] sm:$0xff] %vm1047, %v1540
        %1582 = vst.msk [vmem:[#allocation2 + $0x258] sm:$0xff] %vm1047, %v1541
        %1583 = vst.msk [vmem:[#allocation2 + $0x260] sm:$0xff] %vm1047, %v1542
        %1584 = vst.msk [vmem:[#allocation2 + $0x268] sm:$0xff] %vm1047, %v1543
        %1585 = vst.msk [vmem:[#allocation2 + $0x270] sm:$0xff] %vm1047, %v1544
        %1586 = vst.msk [vmem:[#allocation2 + $0x278] sm:$0xff] %vm1047, %v1545
        %1587 = vst.msk [vmem:[#allocation2 + $0x280] sm:$0xff] %vm1047, %v1546
        %1588 = vst.msk [vmem:[#allocation2 + $0x288] sm:$0xff] %vm1047, %v1547
        %vm1589 = vcmask 519168
        %1590 = vst.msk [vmem:[#allocation3] sm:$0xf] %vm1589, 0
        %1591 = vst.msk [vmem:[#allocation3 + $0xa8] sm:$0xf] %vm1589, 0
        %1592 = vst [vmem:[#allocation5] sm:$0xf] 0
        %1593 = vst [vmem:[#allocation5 + $0x50] sm:$0xf0] 0
        %v1594 = vld [vmem:[#allocation2] sm:$0xff]
        %v1595 = vld [vmem:[#allocation2 + $0x8] sm:$0xff]
        %v1596 = vmax.f32 %v1594, %v1595
        %v1597 = vpack.c.bf16 %v1596, %v1596
        %1598 = vst.msk [vmem:[#allocation3 + $0x4] sm:$0xf] %vm1589, %v1597
        %v1599 = vld [vmem:[#allocation2 + $0x10] sm:$0xff]
        %v1600 = vld [vmem:[#allocation2 + $0x18] sm:$0xff]
        %v1601 = vmax.f32 %v1599, %v1600
        %v1602 = vpack.c.bf16 %v1601, %v1601
        %1603 = vst.msk [vmem:[#allocation3 + $0x8] sm:$0xf] %vm1589, %v1602
        %v1604 = vld [vmem:[#allocation2 + $0x20] sm:$0xff]
        %v1605 = vld [vmem:[#allocation2 + $0x28] sm:$0xff]
        %v1606 = vmax.f32 %v1604, %v1605
        %v1607 = vpack.c.bf16 %v1606, %v1606
        %1608 = vst.msk [vmem:[#allocation3 + $0xc] sm:$0xf] %vm1589, %v1607
        %v1609 = vld [vmem:[#allocation2 + $0x30] sm:$0xff]
        %v1610 = vld [vmem:[#allocation2 + $0x38] sm:$0xff]
        %v1611 = vmax.f32 %v1609, %v1610
        %v1612 = vpack.c.bf16 %v1611, %v1611
        %1613 = vst.msk [vmem:[#allocation3 + $0x10] sm:$0xf] %vm1589, %v1612
        %v1614 = vld [vmem:[#allocation2 + $0x40] sm:$0xff]
        %v1615 = vld [vmem:[#allocation2 + $0x48] sm:$0xff]
        %v1616 = vmax.f32 %v1614, %v1615
        %v1617 = vpack.c.bf16 %v1616, %v1616
        %1618 = vst.msk [vmem:[#allocation3 + $0x14] sm:$0xf] %vm1589, %v1617
        %v1619 = vld [vmem:[#allocation2 + $0x50] sm:$0xff]
        %v1620 = vld [vmem:[#allocation2 + $0x58] sm:$0xff]
        %v1621 = vmax.f32 %v1619, %v1620
        %v1622 = vpack.c.bf16 %v1621, %v1621
        %1623 = vst.msk [vmem:[#allocation3 + $0x18] sm:$0xf] %vm1589, %v1622
        %v1624 = vld [vmem:[#allocation2 + $0x60] sm:$0xff]
        %v1625 = vld [vmem:[#allocation2 + $0x68] sm:$0xff]
        %v1626 = vmax.f32 %v1624, %v1625
        %v1627 = vpack.c.bf16 %v1626, %v1626
        %1628 = vst.msk [vmem:[#allocation3 + $0x1c] sm:$0xf] %vm1589, %v1627
        %v1629 = vld [vmem:[#allocation2 + $0x70] sm:$0xff]
        %v1630 = vld [vmem:[#allocation2 + $0x78] sm:$0xff]
        %v1631 = vmax.f32 %v1629, %v1630
        %v1632 = vpack.c.bf16 %v1631, %v1631
        %1633 = vst.msk [vmem:[#allocation3 + $0x20] sm:$0xf] %vm1589, %v1632
        %v1634 = vld [vmem:[#allocation2 + $0x80] sm:$0xff]
        %v1635 = vld [vmem:[#allocation2 + $0x88] sm:$0xff]
        %v1636 = vmax.f32 %v1634, %v1635
        %v1637 = vpack.c.bf16 %v1636, %v1636
        %1638 = vst.msk [vmem:[#allocation3 + $0x24] sm:$0xf] %vm1589, %v1637
        %v1639 = vld [vmem:[#allocation2 + $0x90] sm:$0xff]
        %v1640 = vld [vmem:[#allocation2 + $0x98] sm:$0xff]
        %v1641 = vmax.f32 %v1639, %v1640
        %v1642 = vpack.c.bf16 %v1641, %v1641
        %1643 = vst.msk [vmem:[#allocation3 + $0x28] sm:$0xf] %vm1589, %v1642
        %v1644 = vld [vmem:[#allocation2 + $0xa0] sm:$0xff]
        %v1645 = vld [vmem:[#allocation2 + $0xa8] sm:$0xff]
        %v1646 = vmax.f32 %v1644, %v1645
        %v1647 = vpack.c.bf16 %v1646, %v1646
        %1648 = vst.msk [vmem:[#allocation3 + $0x2c] sm:$0xf] %vm1589, %v1647
        %v1649 = vld [vmem:[#allocation2 + $0xb0] sm:$0xff]
        %v1650 = vld [vmem:[#allocation2 + $0xb8] sm:$0xff]
        %v1651 = vmax.f32 %v1649, %v1650
        %v1652 = vpack.c.bf16 %v1651, %v1651
        %1653 = vst.msk [vmem:[#allocation3 + $0x30] sm:$0xf] %vm1589, %v1652
        %v1654 = vld [vmem:[#allocation2 + $0xc0] sm:$0xff]
        %v1655 = vld [vmem:[#allocation2 + $0xc8] sm:$0xff]
        %v1656 = vmax.f32 %v1654, %v1655
        %v1657 = vpack.c.bf16 %v1656, %v1656
        %1658 = vst.msk [vmem:[#allocation3 + $0x34] sm:$0xf] %vm1589, %v1657
        %v1659 = vld [vmem:[#allocation2 + $0xd0] sm:$0xff]
        %v1660 = vld [vmem:[#allocation2 + $0xd8] sm:$0xff]
        %v1661 = vmax.f32 %v1659, %v1660
        %v1662 = vpack.c.bf16 %v1661, %v1661
        %1663 = vst.msk [vmem:[#allocation3 + $0x38] sm:$0xf] %vm1589, %v1662
        %v1664 = vld [vmem:[#allocation2 + $0xe0] sm:$0xff]
        %v1665 = vld [vmem:[#allocation2 + $0xe8] sm:$0xff]
        %v1666 = vmax.f32 %v1664, %v1665
        %v1667 = vpack.c.bf16 %v1666, %v1666
        %1668 = vst.msk [vmem:[#allocation3 + $0x3c] sm:$0xf] %vm1589, %v1667
        %v1669 = vld [vmem:[#allocation2 + $0xf0] sm:$0xff]
        %v1670 = vld [vmem:[#allocation2 + $0xf8] sm:$0xff]
        %v1671 = vmax.f32 %v1669, %v1670
        %v1672 = vpack.c.bf16 %v1671, %v1671
        %1673 = vst.msk [vmem:[#allocation3 + $0x40] sm:$0xf] %vm1589, %v1672
        %v1674 = vld [vmem:[#allocation2 + $0x100] sm:$0xff]
        %v1675 = vld [vmem:[#allocation2 + $0x108] sm:$0xff]
        %v1676 = vmax.f32 %v1674, %v1675
        %v1677 = vpack.c.bf16 %v1676, %v1676
        %1678 = vst.msk [vmem:[#allocation3 + $0x44] sm:$0xf] %vm1589, %v1677
        %v1679 = vld [vmem:[#allocation2 + $0x110] sm:$0xff]
        %v1680 = vld [vmem:[#allocation2 + $0x118] sm:$0xff]
        %v1681 = vmax.f32 %v1679, %v1680
        %v1682 = vpack.c.bf16 %v1681, %v1681
        %1683 = vst.msk [vmem:[#allocation3 + $0x48] sm:$0xf] %vm1589, %v1682
        %v1684 = vld [vmem:[#allocation2 + $0x120] sm:$0xff]
        %v1685 = vld [vmem:[#allocation2 + $0x128] sm:$0xff]
        %v1686 = vmax.f32 %v1684, %v1685
        %v1687 = vpack.c.bf16 %v1686, %v1686
        %1688 = vst.msk [vmem:[#allocation3 + $0x4c] sm:$0xf] %vm1589, %v1687
        %v1689 = vld [vmem:[#allocation2 + $0x130] sm:$0xff]
        %v1690 = vld [vmem:[#allocation2 + $0x138] sm:$0xff]
        %v1691 = vmax.f32 %v1689, %v1690
        %v1692 = vpack.c.bf16 %v1691, %v1691
        %1693 = vst.msk [vmem:[#allocation3 + $0x50] sm:$0xf] %vm1589, %v1692
        %v1694 = vld [vmem:[#allocation2 + $0x140] sm:$0xff]
        %v1695 = vld [vmem:[#allocation2 + $0x148] sm:$0xff]
        %v1696 = vmax.f32 %v1694, %v1695
        %v1697 = vpack.c.bf16 %v1696, %v1696
        %1698 = vst.msk [vmem:[#allocation3 + $0x54] sm:$0xf] %vm1589, %v1697
        %v1699 = vld [vmem:[#allocation2 + $0x150] sm:$0xff]
        %v1700 = vld [vmem:[#allocation2 + $0x158] sm:$0xff]
        %v1701 = vmax.f32 %v1699, %v1700
        %v1702 = vpack.c.bf16 %v1701, %v1701
        %1703 = vst.msk [vmem:[#allocation3 + $0x58] sm:$0xf] %vm1589, %v1702
        %v1704 = vld [vmem:[#allocation2 + $0x160] sm:$0xff]
        %v1705 = vld [vmem:[#allocation2 + $0x168] sm:$0xff]
        %v1706 = vmax.f32 %v1704, %v1705
        %v1707 = vpack.c.bf16 %v1706, %v1706
        %1708 = vst.msk [vmem:[#allocation3 + $0x5c] sm:$0xf] %vm1589, %v1707
        %v1709 = vld [vmem:[#allocation2 + $0x170] sm:$0xff]
        %v1710 = vld [vmem:[#allocation2 + $0x178] sm:$0xff]
        %v1711 = vmax.f32 %v1709, %v1710
        %v1712 = vpack.c.bf16 %v1711, %v1711
        %1713 = vst.msk [vmem:[#allocation3 + $0x60] sm:$0xf] %vm1589, %v1712
        %v1714 = vld [vmem:[#allocation2 + $0x180] sm:$0xff]
        %v1715 = vld [vmem:[#allocation2 + $0x188] sm:$0xff]
        %v1716 = vmax.f32 %v1714, %v1715
        %v1717 = vpack.c.bf16 %v1716, %v1716
        %1718 = vst.msk [vmem:[#allocation3 + $0x64] sm:$0xf] %vm1589, %v1717
        %v1719 = vld [vmem:[#allocation2 + $0x190] sm:$0xff]
        %v1720 = vld [vmem:[#allocation2 + $0x198] sm:$0xff]
        %v1721 = vmax.f32 %v1719, %v1720
        %v1722 = vpack.c.bf16 %v1721, %v1721
        %1723 = vst.msk [vmem:[#allocation3 + $0x68] sm:$0xf] %vm1589, %v1722
        %v1724 = vld [vmem:[#allocation2 + $0x1a0] sm:$0xff]
        %v1725 = vld [vmem:[#allocation2 + $0x1a8] sm:$0xff]
        %v1726 = vmax.f32 %v1724, %v1725
        %v1727 = vpack.c.bf16 %v1726, %v1726
        %1728 = vst.msk [vmem:[#allocation3 + $0x6c] sm:$0xf] %vm1589, %v1727
        %v1729 = vld [vmem:[#allocation2 + $0x1b0] sm:$0xff]
        %v1730 = vld [vmem:[#allocation2 + $0x1b8] sm:$0xff]
        %v1731 = vmax.f32 %v1729, %v1730
        %v1732 = vpack.c.bf16 %v1731, %v1731
        %1733 = vst.msk [vmem:[#allocation3 + $0x70] sm:$0xf] %vm1589, %v1732
        %v1734 = vld [vmem:[#allocation2 + $0x1c0] sm:$0xff]
        %v1735 = vld [vmem:[#allocation2 + $0x1c8] sm:$0xff]
        %v1736 = vmax.f32 %v1734, %v1735
        %v1737 = vpack.c.bf16 %v1736, %v1736
        %1738 = vst.msk [vmem:[#allocation3 + $0x74] sm:$0xf] %vm1589, %v1737
        %v1739 = vld [vmem:[#allocation2 + $0x1d0] sm:$0xff]
        %v1740 = vld [vmem:[#allocation2 + $0x1d8] sm:$0xff]
        %v1741 = vmax.f32 %v1739, %v1740
        %v1742 = vpack.c.bf16 %v1741, %v1741
        %1743 = vst.msk [vmem:[#allocation3 + $0x78] sm:$0xf] %vm1589, %v1742
        %v1744 = vld [vmem:[#allocation2 + $0x1e0] sm:$0xff]
        %v1745 = vld [vmem:[#allocation2 + $0x1e8] sm:$0xff]
        %v1746 = vmax.f32 %v1744, %v1745
        %v1747 = vpack.c.bf16 %v1746, %v1746
        %1748 = vst.msk [vmem:[#allocation3 + $0x7c] sm:$0xf] %vm1589, %v1747
        %v1749 = vld [vmem:[#allocation2 + $0x1f0] sm:$0xff]
        %v1750 = vld [vmem:[#allocation2 + $0x1f8] sm:$0xff]
        %v1751 = vmax.f32 %v1749, %v1750
        %v1752 = vpack.c.bf16 %v1751, %v1751
        %1753 = vst.msk [vmem:[#allocation3 + $0x80] sm:$0xf] %vm1589, %v1752
        %v1754 = vld [vmem:[#allocation2 + $0x200] sm:$0xff]
        %v1755 = vld [vmem:[#allocation2 + $0x208] sm:$0xff]
        %v1756 = vmax.f32 %v1754, %v1755
        %v1757 = vpack.c.bf16 %v1756, %v1756
        %1758 = vst.msk [vmem:[#allocation3 + $0x84] sm:$0xf] %vm1589, %v1757
        %v1759 = vld [vmem:[#allocation2 + $0x210] sm:$0xff]
        %v1760 = vld [vmem:[#allocation2 + $0x218] sm:$0xff]
        %v1761 = vmax.f32 %v1759, %v1760
        %v1762 = vpack.c.bf16 %v1761, %v1761
        %1763 = vst.msk [vmem:[#allocation3 + $0x88] sm:$0xf] %vm1589, %v1762
        %v1764 = vld [vmem:[#allocation2 + $0x220] sm:$0xff]
        %v1765 = vld [vmem:[#allocation2 + $0x228] sm:$0xff]
        %v1766 = vmax.f32 %v1764, %v1765
        %v1767 = vpack.c.bf16 %v1766, %v1766
        %1768 = vst.msk [vmem:[#allocation3 + $0x8c] sm:$0xf] %vm1589, %v1767
        %v1769 = vld [vmem:[#allocation2 + $0x230] sm:$0xff]
        %v1770 = vld [vmem:[#allocation2 + $0x238] sm:$0xff]
        %v1771 = vmax.f32 %v1769, %v1770
        %v1772 = vpack.c.bf16 %v1771, %v1771
        %1773 = vst.msk [vmem:[#allocation3 + $0x90] sm:$0xf] %vm1589, %v1772
        %v1774 = vld [vmem:[#allocation2 + $0x240] sm:$0xff]
        %v1775 = vld [vmem:[#allocation2 + $0x248] sm:$0xff]
        %v1776 = vmax.f32 %v1774, %v1775
        %v1777 = vpack.c.bf16 %v1776, %v1776
        %1778 = vst.msk [vmem:[#allocation3 + $0x94] sm:$0xf] %vm1589, %v1777
        %v1779 = vld [vmem:[#allocation2 + $0x250] sm:$0xff]
        %v1780 = vld [vmem:[#allocation2 + $0x258] sm:$0xff]
        %v1781 = vmax.f32 %v1779, %v1780
        %v1782 = vpack.c.bf16 %v1781, %v1781
        %1783 = vst.msk [vmem:[#allocation3 + $0x98] sm:$0xf] %vm1589, %v1782
        %v1784 = vld [vmem:[#allocation2 + $0x260] sm:$0xff]
        %v1785 = vld [vmem:[#allocation2 + $0x268] sm:$0xff]
        %v1786 = vmax.f32 %v1784, %v1785
        %v1787 = vpack.c.bf16 %v1786, %v1786
        %1788 = vst.msk [vmem:[#allocation3 + $0x9c] sm:$0xf] %vm1589, %v1787
        %v1789 = vld [vmem:[#allocation2 + $0x270] sm:$0xff]
        %v1790 = vld [vmem:[#allocation2 + $0x278] sm:$0xff]
        %v1791 = vmax.f32 %v1789, %v1790
        %v1792 = vpack.c.bf16 %v1791, %v1791
        %1793 = vst.msk [vmem:[#allocation3 + $0xa0] sm:$0xf] %vm1589, %v1792
        %v1794 = vld [vmem:[#allocation2 + $0x280] sm:$0xff]
        %v1795 = vld [vmem:[#allocation2 + $0x288] sm:$0xff]
        %v1796 = vmax.f32 %v1794, %v1795
        %v1797 = vpack.c.bf16 %v1796, %v1796
        %1798 = vst.msk [vmem:[#allocation3 + $0xa4] sm:$0xf] %vm1589, %v1797
        %v1799 = vld [vmem:[#allocation3] sm:$0xf]
        %v1800 = vld [vmem:[#allocation3 + $0x4] sm:$0xf]
        %v1801 = vld [vmem:[#allocation3 + $0x8] sm:$0xf]
        %v1802 = vld [vmem:[#allocation3 + $0xc] sm:$0xf]
        %v1803 = vld [vmem:[#allocation3 + $0x10] sm:$0xf]
        %v1804 = vld [vmem:[#allocation3 + $0x14] sm:$0xf]
        %v1805 = vld [vmem:[#allocation3 + $0x18] sm:$0xf]
        %v1806 = vld [vmem:[#allocation3 + $0x1c] sm:$0xf]
        %v1807 = vld [vmem:[#allocation3 + $0x20] sm:$0xf]
        %v1808 = vld [vmem:[#allocation3 + $0x24] sm:$0xf]
        %v1809 = vld [vmem:[#allocation3 + $0x28] sm:$0xf]
        %v1810 = vld [vmem:[#allocation3 + $0x2c] sm:$0xf]
        %v1811 = vld [vmem:[#allocation3 + $0x30] sm:$0xf]
        %v1812 = vld [vmem:[#allocation3 + $0x34] sm:$0xf]
        %v1813 = vld [vmem:[#allocation3 + $0x38] sm:$0xf]
        %v1814 = vld [vmem:[#allocation3 + $0x3c] sm:$0xf]
        %v1815 = vld [vmem:[#allocation3 + $0x40] sm:$0xf]
        %v1816 = vld [vmem:[#allocation3 + $0x44] sm:$0xf]
        %v1817 = vld [vmem:[#allocation3 + $0x48] sm:$0xf]
        %v1818 = vld [vmem:[#allocation3 + $0x4c] sm:$0xf]
        %v1819 = vld [vmem:[#allocation3 + $0x50] sm:$0xf]
        %v1820 = vld [vmem:[#allocation3 + $0x54] sm:$0xf]
        %v1821 = vld [vmem:[#allocation3 + $0x58] sm:$0xf]
        %v1822 = vld [vmem:[#allocation3 + $0x5c] sm:$0xf]
        %v1823 = vld [vmem:[#allocation3 + $0x60] sm:$0xf]
        %v1824 = vld [vmem:[#allocation3 + $0x64] sm:$0xf]
        %v1825 = vld [vmem:[#allocation3 + $0x68] sm:$0xf]
        %v1826 = vld [vmem:[#allocation3 + $0x6c] sm:$0xf]
        %v1827 = vld [vmem:[#allocation3 + $0x70] sm:$0xf]
        %v1828 = vld [vmem:[#allocation3 + $0x74] sm:$0xf]
        %v1829 = vld [vmem:[#allocation3 + $0x78] sm:$0xf]
        %v1830 = vld [vmem:[#allocation3 + $0x7c] sm:$0xf]
        %v1831 = vld [vmem:[#allocation3 + $0x80] sm:$0xf]
        %v1832 = vld [vmem:[#allocation3 + $0x84] sm:$0xf]
        %v1833 = vld [vmem:[#allocation3 + $0x88] sm:$0xf]
        %v1834 = vld [vmem:[#allocation3 + $0x8c] sm:$0xf]
        %v1835 = vld [vmem:[#allocation3 + $0x90] sm:$0xf]
        %v1836 = vld [vmem:[#allocation3 + $0x94] sm:$0xf]
        %v1837 = vld [vmem:[#allocation3 + $0x98] sm:$0xf]
        %v1838 = vld [vmem:[#allocation3 + $0x9c] sm:$0xf]
        %v1839 = vld [vmem:[#allocation3 + $0xa0] sm:$0xf]
        %v1840 = vld [vmem:[#allocation13] sm:$0xf]
        %v1841 = vld [vmem:[#allocation13 + $0x4] sm:$0xf]
        %v1842 = vld [vmem:[#allocation13 + $0x8] sm:$0xf]
        %v1843 = vld [vmem:[#allocation13 + $0xc] sm:$0xf]
        %v1844 = vld [vmem:[#allocation13 + $0x10] sm:$0xf]
        %v1845 = vld [vmem:[#allocation13 + $0x14] sm:$0xf]
        %v1846 = vld [vmem:[#allocation13 + $0x18] sm:$0xf]
        %v1847 = vld [vmem:[#allocation13 + $0x1c] sm:$0xf]
        %v1848 = vld [vmem:[#allocation3 + $0xa4] sm:$0xf]
        %v1849 = vld [vmem:[#allocation13 + $0x20] sm:$0xf]
        %v1850 = vld [vmem:[#allocation13 + $0x24] sm:$0xf]
        %v1851 = vld [vmem:[#allocation13 + $0x28] sm:$0xf]
        %v1852 = vld [vmem:[#allocation13 + $0x2c] sm:$0xf]
        %v1853 = vld [vmem:[#allocation13 + $0x30] sm:$0xf]
        %v1854 = vld [vmem:[#allocation13 + $0x34] sm:$0xf]
        %v1855 = vld [vmem:[#allocation13 + $0x38] sm:$0xf]
        %v1856 = vld [vmem:[#allocation13 + $0x3c] sm:$0xf]
        %v1898 = vunpack.c.l.b16 %v1800
        %v1899 = vunpack.c.l.b16 %v1801
        %v1900 = vunpack.c.l.b16 %v1802
        %v1901 = vunpack.c.l.b16 %v1803
        %v1902 = vunpack.c.l.b16 %v1804
        %v1903 = vunpack.c.l.b16 %v1805
        %v1904 = vunpack.c.l.b16 %v1806
        %v1905 = vunpack.c.l.b16 %v1807
        %v1906 = vunpack.c.l.b16 %v1808
        %v1907 = vunpack.c.l.b16 %v1809
        %v1908 = vunpack.c.l.b16 %v1810
        %v1909 = vunpack.c.l.b16 %v1811
        %v1910 = vunpack.c.l.b16 %v1812
        %v1911 = vunpack.c.l.b16 %v1813
        %v1912 = vunpack.c.l.b16 %v1814
        %v1913 = vunpack.c.l.b16 %v1815
        %v1914 = vunpack.c.l.b16 %v1816
        %v1915 = vunpack.c.l.b16 %v1817
        %v1916 = vunpack.c.l.b16 %v1818
        %v1917 = vunpack.c.l.b16 %v1819
        %v1918 = vunpack.c.l.b16 %v1820
        %v1919 = vunpack.c.l.b16 %v1821
        %v1920 = vunpack.c.l.b16 %v1822
        %v1921 = vunpack.c.l.b16 %v1823
        %v1922 = vunpack.c.l.b16 %v1824
        %v1923 = vunpack.c.l.b16 %v1825
        %v1924 = vunpack.c.l.b16 %v1826
        %v1925 = vunpack.c.l.b16 %v1827
        %v1926 = vunpack.c.l.b16 %v1828
        %v1927 = vunpack.c.l.b16 %v1829
        %v1928 = vunpack.c.l.b16 %v1830
        %v1929 = vunpack.c.l.b16 %v1831
        %v1930 = vunpack.c.l.b16 %v1832
        %v1931 = vunpack.c.l.b16 %v1833
        %v1932 = vunpack.c.l.b16 %v1834
        %v1933 = vunpack.c.l.b16 %v1835
        %v1934 = vunpack.c.l.b16 %v1836
        %v1935 = vunpack.c.l.b16 %v1837
        %v1936 = vunpack.c.l.b16 %v1838
        %v1937 = vunpack.c.l.b16 %v1839
        %v1938 = vunpack.c.l.b16 %v1848
        %v1939 = vpack.c.b16 %v1899, %v1898
        %v1940 = vpack.c.b16 %v1901, %v1900
        %v1941 = vpack.c.b16 %v1903, %v1902
        %v1942 = vpack.c.b16 %v1905, %v1904
        %v1943 = vpack.c.b16 %v1907, %v1906
        %v1944 = vpack.c.b16 %v1909, %v1908
        %v1945 = vpack.c.b16 %v1911, %v1910
        %v1946 = vpack.c.b16 %v1913, %v1912
        %v1947 = vpack.c.b16 %v1915, %v1914
        %v1948 = vpack.c.b16 %v1917, %v1916
        %v1949 = vpack.c.b16 %v1919, %v1918
        %v1950 = vpack.c.b16 %v1921, %v1920
        %v1951 = vpack.c.b16 %v1923, %v1922
        %v1952 = vpack.c.b16 %v1925, %v1924
        %v1953 = vpack.c.b16 %v1927, %v1926
        %v1954 = vpack.c.b16 %v1929, %v1928
        %v1955 = vpack.c.b16 %v1931, %v1930
        %v1956 = vpack.c.b16 %v1933, %v1932
        %v1957 = vpack.c.b16 %v1935, %v1934
        %v1958 = vpack.c.b16 %v1937, %v1936
        %v1959 = vpack.c.b16 %v1938, %v1938
        %v1968 = vunpack.c.l.b16 %v1849
        %v1969 = vunpack.c.l.b16 %v1850
        %v1970 = vunpack.c.l.b16 %v1851
        %v1971 = vunpack.c.l.b16 %v1852
        %v1972 = vunpack.c.l.b16 %v1853
        %v1973 = vunpack.c.l.b16 %v1854
        %v1974 = vunpack.c.l.b16 %v1855
        %v1975 = vunpack.c.l.b16 %v1856
        %v1976 = vpack.c.b16 %v1969, %v1968
        %v1977 = vpack.c.b16 %v1971, %v1970
        %v1978 = vpack.c.b16 %v1973, %v1972
        %v1979 = vpack.c.b16 %v1975, %v1974
        %v1985 = vsel %vm1047, %v1939, 0
        %v1988 = vsel %vm1047, %v1940, 0
        %v1991 = vsel %vm1047, %v1941, 0
        %v1994 = vsel %vm1047, %v1942, 0
        %v1997 = vsel %vm1047, %v1943, 0
        %v2000 = vsel %vm1047, %v1944, 0
        %v2003 = vsel %vm1047, %v1945, 0
        %v2006 = vsel %vm1047, %v1946, 0
        %v2009 = vsel %vm1047, %v1947, 0
        %v2012 = vsel %vm1047, %v1948, 0
        %v2015 = vsel %vm1047, %v1949, 0
        %v2018 = vsel %vm1047, %v1950, 0
        %v2021 = vsel %vm1047, %v1951, 0
        %v2024 = vsel %vm1047, %v1952, 0
        %v2027 = vsel %vm1047, %v1953, 0
        %v2030 = vsel %vm1047, %v1954, 0
        %v2033 = vsel %vm1047, %v1955, 0
        %v2036 = vsel %vm1047, %v1956, 0
        %v2039 = vsel %vm1047, %v1957, 0
        %v2042 = vsel %vm1047, %v1958, 0
        %v2045 = vsel %vm1047, %v1959, 0
        %2047 = vmatprep.subr.bf16.mxu0 0
        %2048 = vmatpush1.bf16.msra.mxu0 %v1976
        %2049 = vmatprep.subr.bf16.mxu0 0
        %2050 = vmatpush1.bf16.msra.mxu0 %v1977
        %2051 = vmatprep.subr.bf16.mxu0 0
        %2052 = vmatpush1.bf16.msra.mxu0 %v1978
        %2053 = vmatprep.subr.bf16.mxu0 0
        %2054 = vmatpush1.bf16.msra.mxu0 %v1979
        %2055 = vmatprep.subr.bf16.mxu0 0
        %2056 = vmatpush1.bf16.msra.mxu0 0
        %2057 = vmatprep.subr.bf16.mxu0 0
        %2058 = vmatpush1.bf16.msra.mxu0 0
        %2059 = vmatprep.subr.bf16.mxu0 0
        %2060 = vmatpush1.bf16.msra.mxu0 0
        %2061 = vmatprep.subr.bf16.mxu0 0
        %2062 = vmatpush1.bf16.msra.mxu0 0
        %2063 = vmatprep.subr.bf16.mxu0 0
        %2064 = vmatpush1.bf16.msra.mxu0 0
        %2065 = vmatprep.subr.bf16.mxu0 0
        %2066 = vmatpush1.bf16.msra.mxu0 0
        %2067 = vmatprep.subr.bf16.mxu0 0
        %2068 = vmatpush1.bf16.msra.mxu0 0
        %2069 = vmatprep.subr.bf16.mxu0 0
        %2070 = vmatpush1.bf16.msra.mxu0 0
        %2071 = vmatprep.subr.bf16.mxu0 0
        %2072 = vmatpush1.bf16.msra.mxu0 0
        %2073 = vmatprep.subr.bf16.mxu0 0
        %2074 = vmatpush1.bf16.msra.mxu0 0
        %2075 = vmatprep.subr.bf16.mxu0 0
        %2076 = vmatpush1.bf16.msra.mxu0 0
        %2077 = vmatprep.subr.bf16.mxu0 0
        %2078 = vmatpush1.bf16.msra.mxu0 0
        %2079 = vmatprep.mubr.bf16.mxu0 0
        %2080 = vmatmul.mubr.bf16.gmra.mrb[0].mxu0 %v1985
        %v2081 = vpop.f32.mrb[0].mxu0
        %v2082 = vadd.f32 0.0, %v2081
        %v2083 = vpop.f32.mrb[0].mxu0
        %v2084 = vpop.f32.mrb[0].mxu0
        %v2085 = vadd.f32 0.0, %v2084
        %v2086 = vpop.f32.mrb[0].mxu0
        %2087 = vmatprep.mubr.bf16.mxu0 0
        %2088 = vmatmul.mubr.bf16.gmra.mrb[0].mxu0 %v1988
        %v2089 = vpop.f32.mrb[0].mxu0
        %v2090 = vadd.f32 0.0, %v2089
        %v2091 = vpop.f32.mrb[0].mxu0
        %v2092 = vpop.f32.mrb[0].mxu0
        %v2093 = vadd.f32 0.0, %v2092
        %v2094 = vpop.f32.mrb[0].mxu0
        %2095 = vmatprep.mubr.bf16.mxu0 0
        %2096 = vmatmul.mubr.bf16.gmra.mrb[0].mxu0 %v1991
        %v2097 = vpop.f32.mrb[0].mxu0
        %v2098 = vadd.f32 0.0, %v2097
        %v2099 = vpop.f32.mrb[0].mxu0
        %v2100 = vpop.f32.mrb[0].mxu0
        %v2101 = vadd.f32 0.0, %v2100
        %v2102 = vpop.f32.mrb[0].mxu0
        %2103 = vmatprep.mubr.bf16.mxu0 0
        %2104 = vmatmul.mubr.bf16.gmra.mrb[0].mxu0 %v1994
        %v2105 = vpop.f32.mrb[0].mxu0
        %v2106 = vadd.f32 0.0, %v2105
        %v2107 = vpop.f32.mrb[0].mxu0
        %v2108 = vpop.f32.mrb[0].mxu0
        %v2109 = vadd.f32 0.0, %v2108
        %v2110 = vpop.f32.mrb[0].mxu0
        %2111 = vmatprep.mubr.bf16.mxu0 0
        %2112 = vmatmul.mubr.bf16.gmra.mrb[0].mxu0 %v1997
        %v2113 = vpop.f32.mrb[0].mxu0
        %v2114 = vadd.f32 0.0, %v2113
        %v2115 = vpop.f32.mrb[0].mxu0
        %v2116 = vpop.f32.mrb[0].mxu0
        %v2117 = vadd.f32 0.0, %v2116
        %v2118 = vpop.f32.mrb[0].mxu0
        %2119 = vmatprep.mubr.bf16.mxu0 0
        %2120 = vmatmul.mubr.bf16.gmra.mrb[0].mxu0 %v2000
        %v2121 = vpop.f32.mrb[0].mxu0
        %v2122 = vadd.f32 0.0, %v2121
        %v2123 = vpop.f32.mrb[0].mxu0
        %v2124 = vpop.f32.mrb[0].mxu0
        %v2125 = vadd.f32 0.0, %v2124
        %v2126 = vpop.f32.mrb[0].mxu0
        %2127 = vmatprep.mubr.bf16.mxu0 0
        %2128 = vmatmul.mubr.bf16.gmra.mrb[0].mxu0 %v2003
        %v2129 = vpop.f32.mrb[0].mxu0
        %v2130 = vadd.f32 0.0, %v2129
        %v2131 = vpop.f32.mrb[0].mxu0
        %v2132 = vpop.f32.mrb[0].mxu0
        %v2133 = vadd.f32 0.0, %v2132
        %v2134 = vpop.f32.mrb[0].mxu0
        %2135 = vmatprep.mubr.bf16.mxu0 0
        %2136 = vmatmul.mubr.bf16.gmra.mrb[0].mxu0 %v2006
        %v2137 = vpop.f32.mrb[0].mxu0
        %v2138 = vadd.f32 0.0, %v2137
        %v2139 = vpop.f32.mrb[0].mxu0
        %v2140 = vpop.f32.mrb[0].mxu0
        %v2141 = vadd.f32 0.0, %v2140
        %v2142 = vpop.f32.mrb[0].mxu0
        %2143 = vmatprep.mubr.bf16.mxu0 0
        %2144 = vmatmul.mubr.bf16.gmra.mrb[0].mxu0 %v2009
        %v2145 = vpop.f32.mrb[0].mxu0
        %v2146 = vadd.f32 0.0, %v2145
        %v2147 = vpop.f32.mrb[0].mxu0
        %v2148 = vpop.f32.mrb[0].mxu0
        %v2149 = vadd.f32 0.0, %v2148
        %v2150 = vpop.f32.mrb[0].mxu0
        %2151 = vmatprep.mubr.bf16.mxu0 0
        %2152 = vmatmul.mubr.bf16.gmra.mrb[0].mxu0 %v2012
        %v2153 = vpop.f32.mrb[0].mxu0
        %v2154 = vadd.f32 0.0, %v2153
        %v2155 = vpop.f32.mrb[0].mxu0
        %v2156 = vpop.f32.mrb[0].mxu0
        %v2157 = vadd.f32 0.0, %v2156
        %v2158 = vpop.f32.mrb[0].mxu0
        %2159 = vmatprep.mubr.bf16.mxu0 0
        %2160 = vmatmul.mubr.bf16.gmra.mrb[0].mxu0 %v2015
        %v2161 = vpop.f32.mrb[0].mxu0
        %v2162 = vadd.f32 0.0, %v2161
        %v2163 = vpop.f32.mrb[0].mxu0
        %v2164 = vpop.f32.mrb[0].mxu0
        %v2165 = vadd.f32 0.0, %v2164
        %v2166 = vpop.f32.mrb[0].mxu0
        %2167 = vmatprep.mubr.bf16.mxu0 0
        %2168 = vmatmul.mubr.bf16.gmra.mrb[0].mxu0 %v2018
        %v2169 = vpop.f32.mrb[0].mxu0
        %v2170 = vadd.f32 0.0, %v2169
        %v2171 = vpop.f32.mrb[0].mxu0
        %v2172 = vpop.f32.mrb[0].mxu0
        %v2173 = vadd.f32 0.0, %v2172
        %v2174 = vpop.f32.mrb[0].mxu0
        %2175 = vmatprep.mubr.bf16.mxu0 0
        %2176 = vmatmul.mubr.bf16.gmra.mrb[0].mxu0 %v2021
        %v2177 = vpop.f32.mrb[0].mxu0
        %v2178 = vadd.f32 0.0, %v2177
        %v2179 = vpop.f32.mrb[0].mxu0
        %v2180 = vpop.f32.mrb[0].mxu0
        %v2181 = vadd.f32 0.0, %v2180
        %v2182 = vpop.f32.mrb[0].mxu0
        %2183 = vmatprep.mubr.bf16.mxu0 0
        %2184 = vmatmul.mubr.bf16.gmra.mrb[0].mxu0 %v2024
        %v2185 = vpop.f32.mrb[0].mxu0
        %v2186 = vadd.f32 0.0, %v2185
        %v2187 = vpop.f32.mrb[0].mxu0
        %v2188 = vpop.f32.mrb[0].mxu0
        %v2189 = vadd.f32 0.0, %v2188
        %v2190 = vpop.f32.mrb[0].mxu0
        %2191 = vmatprep.mubr.bf16.mxu0 0
        %2192 = vmatmul.mubr.bf16.gmra.mrb[0].mxu0 %v2027
        %v2193 = vpop.f32.mrb[0].mxu0
        %v2194 = vadd.f32 0.0, %v2193
        %v2195 = vpop.f32.mrb[0].mxu0
        %v2196 = vpop.f32.mrb[0].mxu0
        %v2197 = vadd.f32 0.0, %v2196
        %v2198 = vpop.f32.mrb[0].mxu0
        %2199 = vmatprep.mubr.bf16.mxu0 0
        %2200 = vmatmul.mubr.bf16.gmra.mrb[0].mxu0 %v2030
        %v2201 = vpop.f32.mrb[0].mxu0
        %v2202 = vadd.f32 0.0, %v2201
        %v2203 = vpop.f32.mrb[0].mxu0
        %v2204 = vpop.f32.mrb[0].mxu0
        %v2205 = vadd.f32 0.0, %v2204
        %v2206 = vpop.f32.mrb[0].mxu0
        %2207 = vmatprep.mubr.bf16.mxu0 0
        %2208 = vmatmul.mubr.bf16.gmra.mrb[0].mxu0 %v2033
        %v2209 = vpop.f32.mrb[0].mxu0
        %v2210 = vadd.f32 0.0, %v2209
        %v2211 = vpop.f32.mrb[0].mxu0
        %v2212 = vpop.f32.mrb[0].mxu0
        %v2213 = vadd.f32 0.0, %v2212
        %v2214 = vpop.f32.mrb[0].mxu0
        %2215 = vmatprep.mubr.bf16.mxu0 0
        %2216 = vmatmul.mubr.bf16.gmra.mrb[0].mxu0 %v2036
        %v2217 = vpop.f32.mrb[0].mxu0
        %v2218 = vadd.f32 0.0, %v2217
        %v2219 = vpop.f32.mrb[0].mxu0
        %v2220 = vpop.f32.mrb[0].mxu0
        %v2221 = vadd.f32 0.0, %v2220
        %v2222 = vpop.f32.mrb[0].mxu0
        %2223 = vmatprep.mubr.bf16.mxu0 0
        %2224 = vmatmul.mubr.bf16.gmra.mrb[0].mxu0 %v2039
        %v2225 = vpop.f32.mrb[0].mxu0
        %v2226 = vadd.f32 0.0, %v2225
        %v2227 = vpop.f32.mrb[0].mxu0
        %v2228 = vpop.f32.mrb[0].mxu0
        %v2229 = vadd.f32 0.0, %v2228
        %v2230 = vpop.f32.mrb[0].mxu0
        %2231 = vmatprep.mubr.bf16.mxu0 0
        %2232 = vmatmul.mubr.bf16.gmra.mrb[0].mxu0 %v2042
        %v2233 = vpop.f32.mrb[0].mxu0
        %v2234 = vadd.f32 0.0, %v2233
        %v2235 = vpop.f32.mrb[0].mxu0
        %v2236 = vpop.f32.mrb[0].mxu0
        %v2237 = vadd.f32 0.0, %v2236
        %v2238 = vpop.f32.mrb[0].mxu0
        %2239 = vmatprep.mubr.bf16.mxu0 0
        %2240 = vmatmul.mubr.bf16.gmra.mrb[0].mxu0 %v2045
        %v2241 = vpop.f32.mrb[0].mxu0
        %v2242 = vadd.f32 0.0, %v2241
        %v2243 = vpop.f32.mrb[0].mxu0
        %v2244 = vpop.f32.mrb[0].mxu0
        %v2245 = vpop.f32.mrb[0].mxu0
        %2246 = vdwg.mxu0
        %v2248 = vunpack.c.l.b16 %v1799
        %v2249 = vpack.c.b16 %v1898, %v2248
        %v2250 = vpack.c.b16 %v1900, %v1899
        %v2251 = vpack.c.b16 %v1902, %v1901
        %v2252 = vpack.c.b16 %v1904, %v1903
        %v2253 = vpack.c.b16 %v1906, %v1905
        %v2254 = vpack.c.b16 %v1908, %v1907
        %v2255 = vpack.c.b16 %v1910, %v1909
        %v2256 = vpack.c.b16 %v1912, %v1911
        %v2257 = vpack.c.b16 %v1914, %v1913
        %v2258 = vpack.c.b16 %v1916, %v1915
        %v2259 = vpack.c.b16 %v1918, %v1917
        %v2260 = vpack.c.b16 %v1920, %v1919
        %v2261 = vpack.c.b16 %v1922, %v1921
        %v2262 = vpack.c.b16 %v1924, %v1923
        %v2263 = vpack.c.b16 %v1926, %v1925
        %v2264 = vpack.c.b16 %v1928, %v1927
        %v2265 = vpack.c.b16 %v1930, %v1929
        %v2266 = vpack.c.b16 %v1932, %v1931
        %v2267 = vpack.c.b16 %v1934, %v1933
        %v2268 = vpack.c.b16 %v1936, %v1935
        %v2269 = vpack.c.b16 %v1937, %v1937
        %v2278 = vunpack.c.l.b16 %v1840
        %v2279 = vunpack.c.l.b16 %v1841
        %v2280 = vunpack.c.l.b16 %v1842
        %v2281 = vunpack.c.l.b16 %v1843
        %v2282 = vunpack.c.l.b16 %v1844
        %v2283 = vunpack.c.l.b16 %v1845
        %v2284 = vunpack.c.l.b16 %v1846
        %v2285 = vunpack.c.l.b16 %v1847
        %v2286 = vpack.c.b16 %v2279, %v2278
        %v2287 = vpack.c.b16 %v2281, %v2280
        %v2288 = vpack.c.b16 %v2283, %v2282
        %v2289 = vpack.c.b16 %v2285, %v2284
        %v2295 = vsel %vm1047, %v2249, 0
        %v2298 = vsel %vm1047, %v2250, 0
        %v2301 = vsel %vm1047, %v2251, 0
        %v2304 = vsel %vm1047, %v2252, 0
        %v2307 = vsel %vm1047, %v2253, 0
        %v2310 = vsel %vm1047, %v2254, 0
        %v2313 = vsel %vm1047, %v2255, 0
        %v2316 = vsel %vm1047, %v2256, 0
        %v2319 = vsel %vm1047, %v2257, 0
        %v2322 = vsel %vm1047, %v2258, 0
        %v2325 = vsel %vm1047, %v2259, 0
        %v2328 = vsel %vm1047, %v2260, 0
        %v2331 = vsel %vm1047, %v2261, 0
        %v2334 = vsel %vm1047, %v2262, 0
        %v2337 = vsel %vm1047, %v2263, 0
        %v2340 = vsel %vm1047, %v2264, 0
        %v2343 = vsel %vm1047, %v2265, 0
        %v2346 = vsel %vm1047, %v2266, 0
        %v2349 = vsel %vm1047, %v2267, 0
        %v2352 = vsel %vm1047, %v2268, 0
        %v2355 = vsel %vm1047, %v2269, 0
        %2357 = vmatprep.subr.bf16.mxu0 0
        %2358 = vmatpush1.bf16.msra.mxu0 %v2286
        %2359 = vmatprep.subr.bf16.mxu0 0
        %2360 = vmatpush1.bf16.msra.mxu0 %v2287
        %2361 = vmatprep.subr.bf16.mxu0 0
        %2362 = vmatpush1.bf16.msra.mxu0 %v2288
        %2363 = vmatprep.subr.bf16.mxu0 0
        %2364 = vmatpush1.bf16.msra.mxu0 %v2289
        %2365 = vmatprep.subr.bf16.mxu0 0
        %2366 = vmatpush1.bf16.msra.mxu0 0
        %2367 = vmatprep.subr.bf16.mxu0 0
        %2368 = vmatpush1.bf16.msra.mxu0 0
        %2369 = vmatprep.subr.bf16.mxu0 0
        %2370 = vmatpush1.bf16.msra.mxu0 0
        %2371 = vmatprep.subr.bf16.mxu0 0
        %2372 = vmatpush1.bf16.msra.mxu0 0
        %2373 = vmatprep.subr.bf16.mxu0 0
        %2374 = vmatpush1.bf16.msra.mxu0 0
        %2375 = vmatprep.subr.bf16.mxu0 0
        %2376 = vmatpush1.bf16.msra.mxu0 0
        %2377 = vmatprep.subr.bf16.mxu0 0
        %2378 = vmatpush1.bf16.msra.mxu0 0
        %2379 = vmatprep.subr.bf16.mxu0 0
        %2380 = vmatpush1.bf16.msra.mxu0 0
        %2381 = vmatprep.subr.bf16.mxu0 0
        %2382 = vmatpush1.bf16.msra.mxu0 0
        %2383 = vmatprep.subr.bf16.mxu0 0
        %2384 = vmatpush1.bf16.msra.mxu0 0
        %2385 = vmatprep.subr.bf16.mxu0 0
        %2386 = vmatpush1.bf16.msra.mxu0 0
        %2387 = vmatprep.subr.bf16.mxu0 0
        %2388 = vmatpush1.bf16.msra.mxu0 0
        %2389 = vmatprep.mubr.bf16.mxu0 0
        %2390 = vmatmul.mubr.bf16.gmra.mrb[0].mxu0 %v2295
        %v2391 = vpop.f32.mrb[0].mxu0
        %v2392 = vadd.f32 %v2082, %v2391
        %v2393 = vpop.f32.mrb[0].mxu0
        %v2394 = vpop.f32.mrb[0].mxu0
        %v2395 = vadd.f32 %v2085, %v2394
        %v2396 = vpop.f32.mrb[0].mxu0
        %2397 = vmatprep.mubr.bf16.mxu0 0
        %2398 = vmatmul.mubr.bf16.gmra.mrb[0].mxu0 %v2298
        %v2399 = vpop.f32.mrb[0].mxu0
        %v2400 = vadd.f32 %v2090, %v2399
        %v2401 = vpop.f32.mrb[0].mxu0
        %v2402 = vpop.f32.mrb[0].mxu0
        %v2403 = vadd.f32 %v2093, %v2402
        %v2404 = vpop.f32.mrb[0].mxu0
        %2405 = vmatprep.mubr.bf16.mxu0 0
        %2406 = vmatmul.mubr.bf16.gmra.mrb[0].mxu0 %v2301
        %v2407 = vpop.f32.mrb[0].mxu0
        %v2408 = vadd.f32 %v2098, %v2407
        %v2409 = vpop.f32.mrb[0].mxu0
        %v2410 = vpop.f32.mrb[0].mxu0
        %v2411 = vadd.f32 %v2101, %v2410
        %v2412 = vpop.f32.mrb[0].mxu0
        %2413 = vmatprep.mubr.bf16.mxu0 0
        %2414 = vmatmul.mubr.bf16.gmra.mrb[0].mxu0 %v2304
        %v2415 = vpop.f32.mrb[0].mxu0
        %v2416 = vadd.f32 %v2106, %v2415
        %v2417 = vpop.f32.mrb[0].mxu0
        %v2418 = vpop.f32.mrb[0].mxu0
        %v2419 = vadd.f32 %v2109, %v2418
        %v2420 = vpop.f32.mrb[0].mxu0
        %2421 = vmatprep.mubr.bf16.mxu0 0
        %2422 = vmatmul.mubr.bf16.gmra.mrb[0].mxu0 %v2307
        %v2423 = vpop.f32.mrb[0].mxu0
        %v2424 = vadd.f32 %v2114, %v2423
        %v2425 = vpop.f32.mrb[0].mxu0
        %v2426 = vpop.f32.mrb[0].mxu0
        %v2427 = vadd.f32 %v2117, %v2426
        %v2428 = vpop.f32.mrb[0].mxu0
        %2429 = vmatprep.mubr.bf16.mxu0 0
        %2430 = vmatmul.mubr.bf16.gmra.mrb[0].mxu0 %v2310
        %v2431 = vpop.f32.mrb[0].mxu0
        %v2432 = vadd.f32 %v2122, %v2431
        %v2433 = vpop.f32.mrb[0].mxu0
        %v2434 = vpop.f32.mrb[0].mxu0
        %v2435 = vadd.f32 %v2125, %v2434
        %v2436 = vpop.f32.mrb[0].mxu0
        %2437 = vmatprep.mubr.bf16.mxu0 0
        %2438 = vmatmul.mubr.bf16.gmra.mrb[0].mxu0 %v2313
        %v2439 = vpop.f32.mrb[0].mxu0
        %v2440 = vadd.f32 %v2130, %v2439
        %v2441 = vpop.f32.mrb[0].mxu0
        %v2442 = vpop.f32.mrb[0].mxu0
        %v2443 = vadd.f32 %v2133, %v2442
        %v2444 = vpop.f32.mrb[0].mxu0
        %2445 = vmatprep.mubr.bf16.mxu0 0
        %2446 = vmatmul.mubr.bf16.gmra.mrb[0].mxu0 %v2316
        %v2447 = vpop.f32.mrb[0].mxu0
        %v2448 = vadd.f32 %v2138, %v2447
        %v2449 = vpop.f32.mrb[0].mxu0
        %v2450 = vpop.f32.mrb[0].mxu0
        %v2451 = vadd.f32 %v2141, %v2450
        %v2452 = vpop.f32.mrb[0].mxu0
        %2453 = vmatprep.mubr.bf16.mxu0 0
        %2454 = vmatmul.mubr.bf16.gmra.mrb[0].mxu0 %v2319
        %v2455 = vpop.f32.mrb[0].mxu0
        %v2456 = vadd.f32 %v2146, %v2455
        %v2457 = vpop.f32.mrb[0].mxu0
        %v2458 = vpop.f32.mrb[0].mxu0
        %v2459 = vadd.f32 %v2149, %v2458
        %v2460 = vpop.f32.mrb[0].mxu0
        %2461 = vmatprep.mubr.bf16.mxu0 0
        %2462 = vmatmul.mubr.bf16.gmra.mrb[0].mxu0 %v2322
        %v2463 = vpop.f32.mrb[0].mxu0
        %v2464 = vadd.f32 %v2154, %v2463
        %v2465 = vpop.f32.mrb[0].mxu0
        %v2466 = vpop.f32.mrb[0].mxu0
        %v2467 = vadd.f32 %v2157, %v2466
        %v2468 = vpop.f32.mrb[0].mxu0
        %2469 = vmatprep.mubr.bf16.mxu0 0
        %2470 = vmatmul.mubr.bf16.gmra.mrb[0].mxu0 %v2325
        %v2471 = vpop.f32.mrb[0].mxu0
        %v2472 = vadd.f32 %v2162, %v2471
        %v2473 = vpop.f32.mrb[0].mxu0
        %v2474 = vpop.f32.mrb[0].mxu0
        %v2475 = vadd.f32 %v2165, %v2474
        %v2476 = vpop.f32.mrb[0].mxu0
        %2477 = vmatprep.mubr.bf16.mxu0 0
        %2478 = vmatmul.mubr.bf16.gmra.mrb[0].mxu0 %v2328
        %v2479 = vpop.f32.mrb[0].mxu0
        %v2480 = vadd.f32 %v2170, %v2479
        %v2481 = vpop.f32.mrb[0].mxu0
        %v2482 = vpop.f32.mrb[0].mxu0
        %v2483 = vadd.f32 %v2173, %v2482
        %v2484 = vpop.f32.mrb[0].mxu0
        %2485 = vmatprep.mubr.bf16.mxu0 0
        %2486 = vmatmul.mubr.bf16.gmra.mrb[0].mxu0 %v2331
        %v2487 = vpop.f32.mrb[0].mxu0
        %v2488 = vadd.f32 %v2178, %v2487
        %v2489 = vpop.f32.mrb[0].mxu0
        %v2490 = vpop.f32.mrb[0].mxu0
        %v2491 = vadd.f32 %v2181, %v2490
        %v2492 = vpop.f32.mrb[0].mxu0
        %2493 = vmatprep.mubr.bf16.mxu0 0
        %2494 = vmatmul.mubr.bf16.gmra.mrb[0].mxu0 %v2334
        %v2495 = vpop.f32.mrb[0].mxu0
        %v2496 = vadd.f32 %v2186, %v2495
        %v2497 = vpop.f32.mrb[0].mxu0
        %v2498 = vpop.f32.mrb[0].mxu0
        %v2499 = vadd.f32 %v2189, %v2498
        %v2500 = vpop.f32.mrb[0].mxu0
        %2501 = vmatprep.mubr.bf16.mxu0 0
        %2502 = vmatmul.mubr.bf16.gmra.mrb[0].mxu0 %v2337
        %v2503 = vpop.f32.mrb[0].mxu0
        %v2504 = vadd.f32 %v2194, %v2503
        %v2505 = vpop.f32.mrb[0].mxu0
        %v2506 = vpop.f32.mrb[0].mxu0
        %v2507 = vadd.f32 %v2197, %v2506
        %v2508 = vpop.f32.mrb[0].mxu0
        %2509 = vmatprep.mubr.bf16.mxu0 0
        %2510 = vmatmul.mubr.bf16.gmra.mrb[0].mxu0 %v2340
        %v2511 = vpop.f32.mrb[0].mxu0
        %v2512 = vadd.f32 %v2202, %v2511
        %v2513 = vpop.f32.mrb[0].mxu0
        %v2514 = vpop.f32.mrb[0].mxu0
        %v2515 = vadd.f32 %v2205, %v2514
        %v2516 = vpop.f32.mrb[0].mxu0
        %2517 = vmatprep.mubr.bf16.mxu0 0
        %2518 = vmatmul.mubr.bf16.gmra.mrb[0].mxu0 %v2343
        %v2519 = vpop.f32.mrb[0].mxu0
        %v2520 = vadd.f32 %v2210, %v2519
        %v2521 = vpop.f32.mrb[0].mxu0
        %v2522 = vpop.f32.mrb[0].mxu0
        %v2523 = vadd.f32 %v2213, %v2522
        %v2524 = vpop.f32.mrb[0].mxu0
        %2525 = vmatprep.mubr.bf16.mxu0 0
        %2526 = vmatmul.mubr.bf16.gmra.mrb[0].mxu0 %v2346
        %v2527 = vpop.f32.mrb[0].mxu0
        %v2528 = vadd.f32 %v2218, %v2527
        %v2529 = vpop.f32.mrb[0].mxu0
        %v2530 = vpop.f32.mrb[0].mxu0
        %v2531 = vadd.f32 %v2221, %v2530
        %v2532 = vpop.f32.mrb[0].mxu0
        %2533 = vmatprep.mubr.bf16.mxu0 0
        %2534 = vmatmul.mubr.bf16.gmra.mrb[0].mxu0 %v2349
        %v2535 = vpop.f32.mrb[0].mxu0
        %v2536 = vadd.f32 %v2226, %v2535
        %v2537 = vpop.f32.mrb[0].mxu0
        %v2538 = vpop.f32.mrb[0].mxu0
        %v2539 = vadd.f32 %v2229, %v2538
        %v2540 = vpop.f32.mrb[0].mxu0
        %2541 = vmatprep.mubr.bf16.mxu0 0
        %2542 = vmatmul.mubr.bf16.gmra.mrb[0].mxu0 %v2352
        %v2543 = vpop.f32.mrb[0].mxu0
        %v2544 = vadd.f32 %v2234, %v2543
        %v2545 = vpop.f32.mrb[0].mxu0
        %v2546 = vpop.f32.mrb[0].mxu0
        %v2547 = vadd.f32 %v2237, %v2546
        %v2548 = vpop.f32.mrb[0].mxu0
        %2549 = vmatprep.mubr.bf16.mxu0 0
        %2550 = vmatmul.mubr.bf16.gmra.mrb[0].mxu0 %v2355
        %v2551 = vpop.f32.mrb[0].mxu0
        %v2552 = vadd.f32 %v2242, %v2551
        %v2553 = vpop.f32.mrb[0].mxu0
        %v2554 = vpop.f32.mrb[0].mxu0
        %v2555 = vpop.f32.mrb[0].mxu0
        %2556 = vdwg.mxu0
        %v2557 = vld [vmem:[#allocation3 + $0x8] sm:$0xf]
        %v2558 = vld [vmem:[#allocation3 + $0xc] sm:$0xf]
        %v2559 = vld [vmem:[#allocation3 + $0x10] sm:$0xf]
        %v2560 = vld [vmem:[#allocation3 + $0x14] sm:$0xf]
        %v2561 = vld [vmem:[#allocation3 + $0x18] sm:$0xf]
        %v2562 = vld [vmem:[#allocation3 + $0x1c] sm:$0xf]
        %v2563 = vld [vmem:[#allocation3 + $0x20] sm:$0xf]
        %v2564 = vld [vmem:[#allocation3 + $0x24] sm:$0xf]
        %v2565 = vld [vmem:[#allocation3 + $0x28] sm:$0xf]
        %v2566 = vld [vmem:[#allocation3 + $0x2c] sm:$0xf]
        %v2567 = vld [vmem:[#allocation3 + $0x30] sm:$0xf]
        %v2568 = vld [vmem:[#allocation3 + $0x34] sm:$0xf]
        %v2569 = vld [vmem:[#allocation3 + $0x38] sm:$0xf]
        %v2570 = vld [vmem:[#allocation3 + $0x3c] sm:$0xf]
        %v2571 = vld [vmem:[#allocation3 + $0x40] sm:$0xf]
        %v2572 = vld [vmem:[#allocation3 + $0x44] sm:$0xf]
        %v2573 = vld [vmem:[#allocation3 + $0x48] sm:$0xf]
        %v2574 = vld [vmem:[#allocation3 + $0x4c] sm:$0xf]
        %v2575 = vld [vmem:[#allocation3 + $0x50] sm:$0xf]
        %v2576 = vld [vmem:[#allocation3 + $0x54] sm:$0xf]
        %v2577 = vld [vmem:[#allocation3 + $0x58] sm:$0xf]
        %v2578 = vld [vmem:[#allocation3 + $0x5c] sm:$0xf]
        %v2579 = vld [vmem:[#allocation3 + $0x60] sm:$0xf]
        %v2580 = vld [vmem:[#allocation3 + $0x64] sm:$0xf]
        %v2581 = vld [vmem:[#allocation3 + $0x68] sm:$0xf]
        %v2582 = vld [vmem:[#allocation3 + $0x6c] sm:$0xf]
        %v2583 = vld [vmem:[#allocation3 + $0x70] sm:$0xf]
        %v2584 = vld [vmem:[#allocation3 + $0x74] sm:$0xf]
        %v2585 = vld [vmem:[#allocation3 + $0x78] sm:$0xf]
        %v2586 = vld [vmem:[#allocation3 + $0x7c] sm:$0xf]
        %v2587 = vld [vmem:[#allocation3 + $0x80] sm:$0xf]
        %v2588 = vld [vmem:[#allocation3 + $0x84] sm:$0xf]
        %v2589 = vld [vmem:[#allocation3 + $0x88] sm:$0xf]
        %v2590 = vld [vmem:[#allocation3 + $0x8c] sm:$0xf]
        %v2591 = vld [vmem:[#allocation3 + $0x90] sm:$0xf]
        %v2592 = vld [vmem:[#allocation3 + $0x94] sm:$0xf]
        %v2593 = vld [vmem:[#allocation3 + $0x98] sm:$0xf]
        %v2594 = vld [vmem:[#allocation3 + $0x9c] sm:$0xf]
        %v2595 = vld [vmem:[#allocation3 + $0xa0] sm:$0xf]
        %v2596 = vld [vmem:[#allocation3 + $0xa4] sm:$0xf]
        %v2597 = vld [vmem:[#allocation3 + $0xa8] sm:$0xf]
        %v2598 = vld [vmem:[#allocation13 + $0x40] sm:$0xf]
        %v2599 = vld [vmem:[#allocation13 + $0x44] sm:$0xf]
        %v2600 = vld [vmem:[#allocation13 + $0x48] sm:$0xf]
        %v2601 = vld [vmem:[#allocation13 + $0x4c] sm:$0xf]
        %v2602 = vld [vmem:[#allocation13 + $0x50] sm:$0xf]
        %v2603 = vld [vmem:[#allocation13 + $0x54] sm:$0xf]
        %v2604 = vld [vmem:[#allocation13 + $0x58] sm:$0xf]
        %v2605 = vld [vmem:[#allocation13 + $0x5c] sm:$0xf]
        %v2647 = vunpack.c.l.b16 %v2557
        %v2648 = vunpack.c.l.b16 %v2558
        %v2649 = vunpack.c.l.b16 %v2559
        %v2650 = vunpack.c.l.b16 %v2560
        %v2651 = vunpack.c.l.b16 %v2561
        %v2652 = vunpack.c.l.b16 %v2562
        %v2653 = vunpack.c.l.b16 %v2563
        %v2654 = vunpack.c.l.b16 %v2564
        %v2655 = vunpack.c.l.b16 %v2565
        %v2656 = vunpack.c.l.b16 %v2566
        %v2657 = vunpack.c.l.b16 %v2567
        %v2658 = vunpack.c.l.b16 %v2568
        %v2659 = vunpack.c.l.b16 %v2569
        %v2660 = vunpack.c.l.b16 %v2570
        %v2661 = vunpack.c.l.b16 %v2571
        %v2662 = vunpack.c.l.b16 %v2572
        %v2663 = vunpack.c.l.b16 %v2573
        %v2664 = vunpack.c.l.b16 %v2574
        %v2665 = vunpack.c.l.b16 %v2575
        %v2666 = vunpack.c.l.b16 %v2576
        %v2667 = vunpack.c.l.b16 %v2577
        %v2668 = vunpack.c.l.b16 %v2578
        %v2669 = vunpack.c.l.b16 %v2579
        %v2670 = vunpack.c.l.b16 %v2580
        %v2671 = vunpack.c.l.b16 %v2581
        %v2672 = vunpack.c.l.b16 %v2582
        %v2673 = vunpack.c.l.b16 %v2583
        %v2674 = vunpack.c.l.b16 %v2584
        %v2675 = vunpack.c.l.b16 %v2585
        %v2676 = vunpack.c.l.b16 %v2586
        %v2677 = vunpack.c.l.b16 %v2587
        %v2678 = vunpack.c.l.b16 %v2588
        %v2679 = vunpack.c.l.b16 %v2589
        %v2680 = vunpack.c.l.b16 %v2590
        %v2681 = vunpack.c.l.b16 %v2591
        %v2682 = vunpack.c.l.b16 %v2592
        %v2683 = vunpack.c.l.b16 %v2593
        %v2684 = vunpack.c.l.b16 %v2594
        %v2685 = vunpack.c.l.b16 %v2595
        %v2686 = vunpack.c.l.b16 %v2596
        %v2687 = vunpack.c.l.b16 %v2597
        %v2688 = vpack.c.b16 %v2648, %v2647
        %v2689 = vpack.c.b16 %v2650, %v2649
        %v2690 = vpack.c.b16 %v2652, %v2651
        %v2691 = vpack.c.b16 %v2654, %v2653
        %v2692 = vpack.c.b16 %v2656, %v2655
        %v2693 = vpack.c.b16 %v2658, %v2657
        %v2694 = vpack.c.b16 %v2660, %v2659
        %v2695 = vpack.c.b16 %v2662, %v2661
        %v2696 = vpack.c.b16 %v2664, %v2663
        %v2697 = vpack.c.b16 %v2666, %v2665
        %v2698 = vpack.c.b16 %v2668, %v2667
        %v2699 = vpack.c.b16 %v2670, %v2669
        %v2700 = vpack.c.b16 %v2672, %v2671
        %v2701 = vpack.c.b16 %v2674, %v2673
        %v2702 = vpack.c.b16 %v2676, %v2675
        %v2703 = vpack.c.b16 %v2678, %v2677
        %v2704 = vpack.c.b16 %v2680, %v2679
        %v2705 = vpack.c.b16 %v2682, %v2681
        %v2706 = vpack.c.b16 %v2684, %v2683
        %v2707 = vpack.c.b16 %v2686, %v2685
        %v2708 = vpack.c.b16 %v2687, %v2687
        %v2717 = vunpack.c.l.b16 %v2598
        %v2718 = vunpack.c.l.b16 %v2599
        %v2719 = vunpack.c.l.b16 %v2600
        %v2720 = vunpack.c.l.b16 %v2601
        %v2721 = vunpack.c.l.b16 %v2602
        %v2722 = vunpack.c.l.b16 %v2603
        %v2723 = vunpack.c.l.b16 %v2604
        %v2724 = vunpack.c.l.b16 %v2605
        %v2725 = vpack.c.b16 %v2718, %v2717
        %v2726 = vpack.c.b16 %v2720, %v2719
        %v2727 = vpack.c.b16 %v2722, %v2721
        %v2728 = vpack.c.b16 %v2724, %v2723
        %v2734 = vsel %vm1047, %v2688, 0
        %v2737 = vsel %vm1047, %v2689, 0
        %v2740 = vsel %vm1047, %v2690, 0
        %v2743 = vsel %vm1047, %v2691, 0
        %v2746 = vsel %vm1047, %v2692, 0
        %v2749 = vsel %vm1047, %v2693, 0
        %v2752 = vsel %vm1047, %v2694, 0
        %v2755 = vsel %vm1047, %v2695, 0
        %v2758 = vsel %vm1047, %v2696, 0
        %v2761 = vsel %vm1047, %v2697, 0
        %v2764 = vsel %vm1047, %v2698, 0
        %v2767 = vsel %vm1047, %v2699, 0
        %v2770 = vsel %vm1047, %v2700, 0
        %v2773 = vsel %vm1047, %v2701, 0
        %v2776 = vsel %vm1047, %v2702, 0
        %v2779 = vsel %vm1047, %v2703, 0
        %v2782 = vsel %vm1047, %v2704, 0
        %v2785 = vsel %vm1047, %v2705, 0
        %v2788 = vsel %vm1047, %v2706, 0
        %v2791 = vsel %vm1047, %v2707, 0
        %v2794 = vsel %vm1047, %v2708, 0
        %2796 = vmatprep.subr.bf16.mxu0 0
        %2797 = vmatpush1.bf16.msra.mxu0 %v2725
        %2798 = vmatprep.subr.bf16.mxu0 0
        %2799 = vmatpush1.bf16.msra.mxu0 %v2726
        %2800 = vmatprep.subr.bf16.mxu0 0
        %2801 = vmatpush1.bf16.msra.mxu0 %v2727
        %2802 = vmatprep.subr.bf16.mxu0 0
        %2803 = vmatpush1.bf16.msra.mxu0 %v2728
        %2804 = vmatprep.subr.bf16.mxu0 0
        %2805 = vmatpush1.bf16.msra.mxu0 0
        %2806 = vmatprep.subr.bf16.mxu0 0
        %2807 = vmatpush1.bf16.msra.mxu0 0
        %2808 = vmatprep.subr.bf16.mxu0 0
        %2809 = vmatpush1.bf16.msra.mxu0 0
        %2810 = vmatprep.subr.bf16.mxu0 0
        %2811 = vmatpush1.bf16.msra.mxu0 0
        %2812 = vmatprep.subr.bf16.mxu0 0
        %2813 = vmatpush1.bf16.msra.mxu0 0
        %2814 = vmatprep.subr.bf16.mxu0 0
        %2815 = vmatpush1.bf16.msra.mxu0 0
        %2816 = vmatprep.subr.bf16.mxu0 0
        %2817 = vmatpush1.bf16.msra.mxu0 0
        %2818 = vmatprep.subr.bf16.mxu0 0
        %2819 = vmatpush1.bf16.msra.mxu0 0
        %2820 = vmatprep.subr.bf16.mxu0 0
        %2821 = vmatpush1.bf16.msra.mxu0 0
        %2822 = vmatprep.subr.bf16.mxu0 0
        %2823 = vmatpush1.bf16.msra.mxu0 0
        %2824 = vmatprep.subr.bf16.mxu0 0
        %2825 = vmatpush1.bf16.msra.mxu0 0
        %2826 = vmatprep.subr.bf16.mxu0 0
        %2827 = vmatpush1.bf16.msra.mxu0 0
        %2828 = vmatprep.mubr.bf16.mxu0 0
        %2829 = vmatmul.mubr.bf16.gmra.mrb[0].mxu0 %v2734
        %v2830 = vpop.f32.mrb[0].mxu0
        %v2831 = vadd.f32 0.0, %v2830
        %v2832 = vpop.f32.mrb[0].mxu0
        %v2833 = vpop.f32.mrb[0].mxu0
        %v2834 = vadd.f32 0.0, %v2833
        %v2835 = vpop.f32.mrb[0].mxu0
        %2836 = vmatprep.mubr.bf16.mxu0 0
        %2837 = vmatmul.mubr.bf16.gmra.mrb[0].mxu0 %v2737
        %v2838 = vpop.f32.mrb[0].mxu0
        %v2839 = vadd.f32 0.0, %v2838
        %v2840 = vpop.f32.mrb[0].mxu0
        %v2841 = vpop.f32.mrb[0].mxu0
        %v2842 = vadd.f32 0.0, %v2841
        %v2843 = vpop.f32.mrb[0].mxu0
        %2844 = vmatprep.mubr.bf16.mxu0 0
        %2845 = vmatmul.mubr.bf16.gmra.mrb[0].mxu0 %v2740
        %v2846 = vpop.f32.mrb[0].mxu0
        %v2847 = vadd.f32 0.0, %v2846
        %v2848 = vpop.f32.mrb[0].mxu0
        %v2849 = vpop.f32.mrb[0].mxu0
        %v2850 = vadd.f32 0.0, %v2849
        %v2851 = vpop.f32.mrb[0].mxu0
        %2852 = vmatprep.mubr.bf16.mxu0 0
        %2853 = vmatmul.mubr.bf16.gmra.mrb[0].mxu0 %v2743
        %v2854 = vpop.f32.mrb[0].mxu0
        %v2855 = vadd.f32 0.0, %v2854
        %v2856 = vpop.f32.mrb[0].mxu0
        %v2857 = vpop.f32.mrb[0].mxu0
        %v2858 = vadd.f32 0.0, %v2857
        %v2859 = vpop.f32.mrb[0].mxu0
        %2860 = vmatprep.mubr.bf16.mxu0 0
        %2861 = vmatmul.mubr.bf16.gmra.mrb[0].mxu0 %v2746
        %v2862 = vpop.f32.mrb[0].mxu0
        %v2863 = vadd.f32 0.0, %v2862
        %v2864 = vpop.f32.mrb[0].mxu0
        %v2865 = vpop.f32.mrb[0].mxu0
        %v2866 = vadd.f32 0.0, %v2865
        %v2867 = vpop.f32.mrb[0].mxu0
        %2868 = vmatprep.mubr.bf16.mxu0 0
        %2869 = vmatmul.mubr.bf16.gmra.mrb[0].mxu0 %v2749
        %v2870 = vpop.f32.mrb[0].mxu0
        %v2871 = vadd.f32 0.0, %v2870
        %v2872 = vpop.f32.mrb[0].mxu0
        %v2873 = vpop.f32.mrb[0].mxu0
        %v2874 = vadd.f32 0.0, %v2873
        %v2875 = vpop.f32.mrb[0].mxu0
        %2876 = vmatprep.mubr.bf16.mxu0 0
        %2877 = vmatmul.mubr.bf16.gmra.mrb[0].mxu0 %v2752
        %v2878 = vpop.f32.mrb[0].mxu0
        %v2879 = vadd.f32 0.0, %v2878
        %v2880 = vpop.f32.mrb[0].mxu0
        %v2881 = vpop.f32.mrb[0].mxu0
        %v2882 = vadd.f32 0.0, %v2881
        %v2883 = vpop.f32.mrb[0].mxu0
        %2884 = vmatprep.mubr.bf16.mxu0 0
        %2885 = vmatmul.mubr.bf16.gmra.mrb[0].mxu0 %v2755
        %v2886 = vpop.f32.mrb[0].mxu0
        %v2887 = vadd.f32 0.0, %v2886
        %v2888 = vpop.f32.mrb[0].mxu0
        %v2889 = vpop.f32.mrb[0].mxu0
        %v2890 = vadd.f32 0.0, %v2889
        %v2891 = vpop.f32.mrb[0].mxu0
        %2892 = vmatprep.mubr.bf16.mxu0 0
        %2893 = vmatmul.mubr.bf16.gmra.mrb[0].mxu0 %v2758
        %v2894 = vpop.f32.mrb[0].mxu0
        %v2895 = vadd.f32 0.0, %v2894
        %v2896 = vpop.f32.mrb[0].mxu0
        %v2897 = vpop.f32.mrb[0].mxu0
        %v2898 = vadd.f32 0.0, %v2897
        %v2899 = vpop.f32.mrb[0].mxu0
        %2900 = vmatprep.mubr.bf16.mxu0 0
        %2901 = vmatmul.mubr.bf16.gmra.mrb[0].mxu0 %v2761
        %v2902 = vpop.f32.mrb[0].mxu0
        %v2903 = vadd.f32 0.0, %v2902
        %v2904 = vpop.f32.mrb[0].mxu0
        %v2905 = vpop.f32.mrb[0].mxu0
        %v2906 = vadd.f32 0.0, %v2905
        %v2907 = vpop.f32.mrb[0].mxu0
        %2908 = vmatprep.mubr.bf16.mxu0 0
        %2909 = vmatmul.mubr.bf16.gmra.mrb[0].mxu0 %v2764
        %v2910 = vpop.f32.mrb[0].mxu0
        %v2911 = vadd.f32 0.0, %v2910
        %v2912 = vpop.f32.mrb[0].mxu0
        %v2913 = vpop.f32.mrb[0].mxu0
        %v2914 = vadd.f32 0.0, %v2913
        %v2915 = vpop.f32.mrb[0].mxu0
        %2916 = vmatprep.mubr.bf16.mxu0 0
        %2917 = vmatmul.mubr.bf16.gmra.mrb[0].mxu0 %v2767
        %v2918 = vpop.f32.mrb[0].mxu0
        %v2919 = vadd.f32 0.0, %v2918
        %v2920 = vpop.f32.mrb[0].mxu0
        %v2921 = vpop.f32.mrb[0].mxu0
        %v2922 = vadd.f32 0.0, %v2921
        %v2923 = vpop.f32.mrb[0].mxu0
        %2924 = vmatprep.mubr.bf16.mxu0 0
        %2925 = vmatmul.mubr.bf16.gmra.mrb[0].mxu0 %v2770
        %v2926 = vpop.f32.mrb[0].mxu0
        %v2927 = vadd.f32 0.0, %v2926
        %v2928 = vpop.f32.mrb[0].mxu0
        %v2929 = vpop.f32.mrb[0].mxu0
        %v2930 = vadd.f32 0.0, %v2929
        %v2931 = vpop.f32.mrb[0].mxu0
        %2932 = vmatprep.mubr.bf16.mxu0 0
        %2933 = vmatmul.mubr.bf16.gmra.mrb[0].mxu0 %v2773
        %v2934 = vpop.f32.mrb[0].mxu0
        %v2935 = vadd.f32 0.0, %v2934
        %v2936 = vpop.f32.mrb[0].mxu0
        %v2937 = vpop.f32.mrb[0].mxu0
        %v2938 = vadd.f32 0.0, %v2937
        %v2939 = vpop.f32.mrb[0].mxu0
        %2940 = vmatprep.mubr.bf16.mxu0 0
        %2941 = vmatmul.mubr.bf16.gmra.mrb[0].mxu0 %v2776
        %v2942 = vpop.f32.mrb[0].mxu0
        %v2943 = vadd.f32 0.0, %v2942
        %v2944 = vpop.f32.mrb[0].mxu0
        %v2945 = vpop.f32.mrb[0].mxu0
        %v2946 = vadd.f32 0.0, %v2945
        %v2947 = vpop.f32.mrb[0].mxu0
        %2948 = vmatprep.mubr.bf16.mxu0 0
        %2949 = vmatmul.mubr.bf16.gmra.mrb[0].mxu0 %v2779
        %v2950 = vpop.f32.mrb[0].mxu0
        %v2951 = vadd.f32 0.0, %v2950
        %v2952 = vpop.f32.mrb[0].mxu0
        %v2953 = vpop.f32.mrb[0].mxu0
        %v2954 = vadd.f32 0.0, %v2953
        %v2955 = vpop.f32.mrb[0].mxu0
        %2956 = vmatprep.mubr.bf16.mxu0 0
        %2957 = vmatmul.mubr.bf16.gmra.mrb[0].mxu0 %v2782
        %v2958 = vpop.f32.mrb[0].mxu0
        %v2959 = vadd.f32 0.0, %v2958
        %v2960 = vpop.f32.mrb[0].mxu0
        %v2961 = vpop.f32.mrb[0].mxu0
        %v2962 = vadd.f32 0.0, %v2961
        %v2963 = vpop.f32.mrb[0].mxu0
        %2964 = vmatprep.mubr.bf16.mxu0 0
        %2965 = vmatmul.mubr.bf16.gmra.mrb[0].mxu0 %v2785
        %v2966 = vpop.f32.mrb[0].mxu0
        %v2967 = vadd.f32 0.0, %v2966
        %v2968 = vpop.f32.mrb[0].mxu0
        %v2969 = vpop.f32.mrb[0].mxu0
        %v2970 = vadd.f32 0.0, %v2969
        %v2971 = vpop.f32.mrb[0].mxu0
        %2972 = vmatprep.mubr.bf16.mxu0 0
        %2973 = vmatmul.mubr.bf16.gmra.mrb[0].mxu0 %v2788
        %v2974 = vpop.f32.mrb[0].mxu0
        %v2975 = vadd.f32 0.0, %v2974
        %v2976 = vpop.f32.mrb[0].mxu0
        %v2977 = vpop.f32.mrb[0].mxu0
        %v2978 = vadd.f32 0.0, %v2977
        %v2979 = vpop.f32.mrb[0].mxu0
        %2980 = vmatprep.mubr.bf16.mxu0 0
        %2981 = vmatmul.mubr.bf16.gmra.mrb[0].mxu0 %v2791
        %v2982 = vpop.f32.mrb[0].mxu0
        %v2983 = vadd.f32 0.0, %v2982
        %v2984 = vpop.f32.mrb[0].mxu0
        %v2985 = vpop.f32.mrb[0].mxu0
        %v2986 = vadd.f32 0.0, %v2985
        %v2987 = vpop.f32.mrb[0].mxu0
        %2988 = vmatprep.mubr.bf16.mxu0 0
        %2989 = vmatmul.mubr.bf16.gmra.mrb[0].mxu0 %v2794
        %v2990 = vpop.f32.mrb[0].mxu0
        %v2991 = vadd.f32 0.0, %v2990
        %v2992 = vpop.f32.mrb[0].mxu0
        %v2993 = vpop.f32.mrb[0].mxu0
        %v2994 = vpop.f32.mrb[0].mxu0
        %2995 = vdwg.mxu0
        %v2996 = vadd.f32 %v2392, %v2831
        %v2997 = vadd.f32 %v2395, %v2834
        %v2998 = vadd.f32 %v2400, %v2839
        %v2999 = vadd.f32 %v2403, %v2842
        %v3000 = vadd.f32 %v2408, %v2847
        %v3001 = vadd.f32 %v2411, %v2850
        %v3002 = vadd.f32 %v2416, %v2855
        %v3003 = vadd.f32 %v2419, %v2858
        %v3004 = vadd.f32 %v2424, %v2863
        %v3005 = vadd.f32 %v2427, %v2866
        %v3006 = vadd.f32 %v2432, %v2871
        %v3007 = vadd.f32 %v2435, %v2874
        %v3008 = vadd.f32 %v2440, %v2879
        %v3009 = vadd.f32 %v2443, %v2882
        %v3010 = vadd.f32 %v2448, %v2887
        %v3011 = vadd.f32 %v2451, %v2890
        %v3012 = vadd.f32 %v2456, %v2895
        %v3013 = vadd.f32 %v2459, %v2898
        %v3014 = vadd.f32 %v2464, %v2903
        %v3015 = vadd.f32 %v2467, %v2906
        %v3016 = vadd.f32 %v2472, %v2911
        %v3017 = vadd.f32 %v2475, %v2914
        %v3018 = vadd.f32 %v2480, %v2919
        %v3019 = vadd.f32 %v2483, %v2922
        %v3020 = vadd.f32 %v2488, %v2927
        %v3021 = vadd.f32 %v2491, %v2930
        %v3022 = vadd.f32 %v2496, %v2935
        %v3023 = vadd.f32 %v2499, %v2938
        %v3024 = vadd.f32 %v2504, %v2943
        %v3025 = vadd.f32 %v2507, %v2946
        %v3026 = vadd.f32 %v2512, %v2951
        %v3027 = vadd.f32 %v2515, %v2954
        %v3028 = vadd.f32 %v2520, %v2959
        %v3029 = vadd.f32 %v2523, %v2962
        %v3030 = vadd.f32 %v2528, %v2967
        %v3031 = vadd.f32 %v2531, %v2970
        %v3032 = vadd.f32 %v2536, %v2975
        %v3033 = vadd.f32 %v2539, %v2978
        %v3034 = vadd.f32 %v2544, %v2983
        %v3035 = vadd.f32 %v2547, %v2986
        %v3036 = vadd.f32 %v2552, %v2991
        %v3037 = vld [vmem:[#allocation14] sm:$0x1]
        %v3039 = vlaneseq
        %v3040 = vshrl.u32 %v3039, 7
        %v3041 = vsub.s32 0, %v3040
        %v3042 = vrot.slane %v3037, %v3041
        %v3044 = vadd.f32 %v2996, %v3042
        %v3045 = vadd.f32 %v2997, %v3042
        %v3046 = vadd.f32 %v2998, %v3042
        %v3047 = vadd.f32 %v2999, %v3042
        %v3048 = vadd.f32 %v3000, %v3042
        %v3049 = vadd.f32 %v3001, %v3042
        %v3050 = vadd.f32 %v3002, %v3042
        %v3051 = vadd.f32 %v3003, %v3042
        %v3052 = vadd.f32 %v3004, %v3042
        %v3053 = vadd.f32 %v3005, %v3042
        %v3054 = vadd.f32 %v3006, %v3042
        %v3055 = vadd.f32 %v3007, %v3042
        %v3056 = vadd.f32 %v3008, %v3042
        %v3057 = vadd.f32 %v3009, %v3042
        %v3058 = vadd.f32 %v3010, %v3042
        %v3059 = vadd.f32 %v3011, %v3042
        %v3060 = vadd.f32 %v3012, %v3042
        %v3061 = vadd.f32 %v3013, %v3042
        %v3062 = vadd.f32 %v3014, %v3042
        %v3063 = vadd.f32 %v3015, %v3042
        %v3064 = vadd.f32 %v3016, %v3042
        %v3065 = vadd.f32 %v3017, %v3042
        %v3066 = vadd.f32 %v3018, %v3042
        %v3067 = vadd.f32 %v3019, %v3042
        %v3068 = vadd.f32 %v3020, %v3042
        %v3069 = vadd.f32 %v3021, %v3042
        %v3070 = vadd.f32 %v3022, %v3042
        %v3071 = vadd.f32 %v3023, %v3042
        %v3072 = vadd.f32 %v3024, %v3042
        %v3073 = vadd.f32 %v3025, %v3042
        %v3074 = vadd.f32 %v3026, %v3042
        %v3075 = vadd.f32 %v3027, %v3042
        %v3076 = vadd.f32 %v3028, %v3042
        %v3077 = vadd.f32 %v3029, %v3042
        %v3078 = vadd.f32 %v3030, %v3042
        %v3079 = vadd.f32 %v3031, %v3042
        %v3080 = vadd.f32 %v3032, %v3042
        %v3081 = vadd.f32 %v3033, %v3042
        %v3082 = vadd.f32 %v3034, %v3042
        %v3083 = vadd.f32 %v3035, %v3042
        %v3084 = vadd.f32 %v3036, %v3042
        %v3085 = vmax.f32 %v3044, 0.0
        %v3086 = vmax.f32 %v3045, 0.0
        %v3087 = vmax.f32 %v3046, 0.0
        %v3088 = vmax.f32 %v3047, 0.0
        %v3089 = vmax.f32 %v3048, 0.0
        %v3090 = vmax.f32 %v3049, 0.0
        %v3091 = vmax.f32 %v3050, 0.0
        %v3092 = vmax.f32 %v3051, 0.0
        %v3093 = vmax.f32 %v3052, 0.0
        %v3094 = vmax.f32 %v3053, 0.0
        %v3095 = vmax.f32 %v3054, 0.0
        %v3096 = vmax.f32 %v3055, 0.0
        %v3097 = vmax.f32 %v3056, 0.0
        %v3098 = vmax.f32 %v3057, 0.0
        %v3099 = vmax.f32 %v3058, 0.0
        %v3100 = vmax.f32 %v3059, 0.0
        %v3101 = vmax.f32 %v3060, 0.0
        %v3102 = vmax.f32 %v3061, 0.0
        %v3103 = vmax.f32 %v3062, 0.0
        %v3104 = vmax.f32 %v3063, 0.0
        %v3105 = vmax.f32 %v3064, 0.0
        %v3106 = vmax.f32 %v3065, 0.0
        %v3107 = vmax.f32 %v3066, 0.0
        %v3108 = vmax.f32 %v3067, 0.0
        %v3109 = vmax.f32 %v3068, 0.0
        %v3110 = vmax.f32 %v3069, 0.0
        %v3111 = vmax.f32 %v3070, 0.0
        %v3112 = vmax.f32 %v3071, 0.0
        %v3113 = vmax.f32 %v3072, 0.0
        %v3114 = vmax.f32 %v3073, 0.0
        %v3115 = vmax.f32 %v3074, 0.0
        %v3116 = vmax.f32 %v3075, 0.0
        %v3117 = vmax.f32 %v3076, 0.0
        %v3118 = vmax.f32 %v3077, 0.0
        %v3119 = vmax.f32 %v3078, 0.0
        %v3120 = vmax.f32 %v3079, 0.0
        %v3121 = vmax.f32 %v3080, 0.0
        %v3122 = vmax.f32 %v3081, 0.0
        %v3123 = vmax.f32 %v3082, 0.0
        %v3124 = vmax.f32 %v3083, 0.0
        %v3125 = vmax.f32 %v3084, 0.0
        %3126 = vst [vmem:[#allocation4] sm:$0xff] %v3085
        %3127 = vst [vmem:[#allocation4 + $0x8] sm:$0xff] %v3086
        %3128 = vst [vmem:[#allocation4 + $0x10] sm:$0xff] %v3087
        %3129 = vst [vmem:[#allocation4 + $0x18] sm:$0xff] %v3088
        %3130 = vst [vmem:[#allocation4 + $0x20] sm:$0xff] %v3089
        %3131 = vst [vmem:[#allocation4 + $0x28] sm:$0xff] %v3090
        %3132 = vst [vmem:[#allocation4 + $0x30] sm:$0xff] %v3091
        %3133 = vst [vmem:[#allocation4 + $0x38] sm:$0xff] %v3092
        %3134 = vst [vmem:[#allocation4 + $0x40] sm:$0xff] %v3093
        %3135 = vst [vmem:[#allocation4 + $0x48] sm:$0xff] %v3094
        %3136 = vst [vmem:[#allocation4 + $0x50] sm:$0xff] %v3095
        %3137 = vst [vmem:[#allocation4 + $0x58] sm:$0xff] %v3096
        %3138 = vst [vmem:[#allocation4 + $0x60] sm:$0xff] %v3097
        %3139 = vst [vmem:[#allocation4 + $0x68] sm:$0xff] %v3098
        %3140 = vst [vmem:[#allocation4 + $0x70] sm:$0xff] %v3099
        %3141 = vst [vmem:[#allocation4 + $0x78] sm:$0xff] %v3100
        %3142 = vst [vmem:[#allocation4 + $0x80] sm:$0xff] %v3101
        %3143 = vst [vmem:[#allocation4 + $0x88] sm:$0xff] %v3102
        %3144 = vst [vmem:[#allocation4 + $0x90] sm:$0xff] %v3103
        %3145 = vst [vmem:[#allocation4 + $0x98] sm:$0xff] %v3104
        %3146 = vst [vmem:[#allocation4 + $0xa0] sm:$0xff] %v3105
        %3147 = vst [vmem:[#allocation4 + $0xa8] sm:$0xff] %v3106
        %3148 = vst [vmem:[#allocation4 + $0xb0] sm:$0xff] %v3107
        %3149 = vst [vmem:[#allocation4 + $0xb8] sm:$0xff] %v3108
        %3150 = vst [vmem:[#allocation4 + $0xc0] sm:$0xff] %v3109
        %3151 = vst [vmem:[#allocation4 + $0xc8] sm:$0xff] %v3110
        %3152 = vst [vmem:[#allocation4 + $0xd0] sm:$0xff] %v3111
        %3153 = vst [vmem:[#allocation4 + $0xd8] sm:$0xff] %v3112
        %3154 = vst [vmem:[#allocation4 + $0xe0] sm:$0xff] %v3113
        %3155 = vst [vmem:[#allocation4 + $0xe8] sm:$0xff] %v3114
        %3156 = vst [vmem:[#allocation4 + $0xf0] sm:$0xff] %v3115
        %3157 = vst [vmem:[#allocation4 + $0xf8] sm:$0xff] %v3116
        %3158 = vst [vmem:[#allocation4 + $0x100] sm:$0xff] %v3117
        %3159 = vst [vmem:[#allocation4 + $0x108] sm:$0xff] %v3118
        %3160 = vst [vmem:[#allocation4 + $0x110] sm:$0xff] %v3119
        %3161 = vst [vmem:[#allocation4 + $0x118] sm:$0xff] %v3120
        %3162 = vst [vmem:[#allocation4 + $0x120] sm:$0xff] %v3121
        %3163 = vst [vmem:[#allocation4 + $0x128] sm:$0xff] %v3122
        %3164 = vst [vmem:[#allocation4 + $0x130] sm:$0xff] %v3123
        %3165 = vst [vmem:[#allocation4 + $0x138] sm:$0xff] %v3124
        %3166 = vst [vmem:[#allocation4 + $0x140] sm:$0xff] %v3125
        %v3167 = vld [vmem:[#allocation4] sm:$0xff]
        %v3168 = vld [vmem:[#allocation4 + $0x8] sm:$0xff]
        %v3169 = vmax.f32 %v3167, %v3168
        %v3170 = vpack.c.bf16 %v3169, %v3169
        %v3172 = vrot.slane %v3170, 4
        %3174 = vst [vmem:[#allocation5] sm:$0xf0] %v3172
        %v3175 = vld [vmem:[#allocation4 + $0x10] sm:$0xff]
        %v3176 = vld [vmem:[#allocation4 + $0x18] sm:$0xff]
        %v3177 = vmax.f32 %v3175, %v3176
        %v3178 = vpack.c.bf16 %v3177, %v3177
        %3179 = vst [vmem:[#allocation5 + $0x8] sm:$0xf] %v3178
        %v3180 = vld [vmem:[#allocation4 + $0x20] sm:$0xff]
        %v3181 = vld [vmem:[#allocation4 + $0x28] sm:$0xff]
        %v3182 = vmax.f32 %v3180, %v3181
        %v3183 = vpack.c.bf16 %v3182, %v3182
        %v3185 = vrot.slane %v3183, 4
        %3187 = vst [vmem:[#allocation5 + $0x8] sm:$0xf0] %v3185
        %v3188 = vld [vmem:[#allocation4 + $0x30] sm:$0xff]
        %v3189 = vld [vmem:[#allocation4 + $0x38] sm:$0xff]
        %v3190 = vmax.f32 %v3188, %v3189
        %v3191 = vpack.c.bf16 %v3190, %v3190
        %3192 = vst [vmem:[#allocation5 + $0x10] sm:$0xf] %v3191
        %v3193 = vld [vmem:[#allocation4 + $0x40] sm:$0xff]
        %v3194 = vld [vmem:[#allocation4 + $0x48] sm:$0xff]
        %v3195 = vmax.f32 %v3193, %v3194
        %v3196 = vpack.c.bf16 %v3195, %v3195
        %v3198 = vrot.slane %v3196, 4
        %3200 = vst [vmem:[#allocation5 + $0x10] sm:$0xf0] %v3198
        %v3201 = vld [vmem:[#allocation4 + $0x50] sm:$0xff]
        %v3202 = vld [vmem:[#allocation4 + $0x58] sm:$0xff]
        %v3203 = vmax.f32 %v3201, %v3202
        %v3204 = vpack.c.bf16 %v3203, %v3203
        %3205 = vst [vmem:[#allocation5 + $0x18] sm:$0xf] %v3204
        %v3206 = vld [vmem:[#allocation4 + $0x60] sm:$0xff]
        %v3207 = vld [vmem:[#allocation4 + $0x68] sm:$0xff]
        %v3208 = vmax.f32 %v3206, %v3207
        %v3209 = vpack.c.bf16 %v3208, %v3208
        %v3211 = vrot.slane %v3209, 4
        %3213 = vst [vmem:[#allocation5 + $0x18] sm:$0xf0] %v3211
        %v3214 = vld [vmem:[#allocation4 + $0x70] sm:$0xff]
        %v3215 = vld [vmem:[#allocation4 + $0x78] sm:$0xff]
        %v3216 = vmax.f32 %v3214, %v3215
        %v3217 = vpack.c.bf16 %v3216, %v3216
        %3218 = vst [vmem:[#allocation5 + $0x20] sm:$0xf] %v3217
        %v3219 = vld [vmem:[#allocation4 + $0x80] sm:$0xff]
        %v3220 = vld [vmem:[#allocation4 + $0x88] sm:$0xff]
        %v3221 = vmax.f32 %v3219, %v3220
        %v3222 = vpack.c.bf16 %v3221, %v3221
        %v3224 = vrot.slane %v3222, 4
        %3226 = vst [vmem:[#allocation5 + $0x20] sm:$0xf0] %v3224
        %v3227 = vld [vmem:[#allocation4 + $0x90] sm:$0xff]
        %v3228 = vld [vmem:[#allocation4 + $0x98] sm:$0xff]
        %v3229 = vmax.f32 %v3227, %v3228
        %v3230 = vpack.c.bf16 %v3229, %v3229
        %3231 = vst [vmem:[#allocation5 + $0x28] sm:$0xf] %v3230
        %v3232 = vld [vmem:[#allocation4 + $0xa0] sm:$0xff]
        %v3233 = vld [vmem:[#allocation4 + $0xa8] sm:$0xff]
        %v3234 = vmax.f32 %v3232, %v3233
        %v3235 = vpack.c.bf16 %v3234, %v3234
        %v3237 = vrot.slane %v3235, 4
        %3239 = vst [vmem:[#allocation5 + $0x28] sm:$0xf0] %v3237
        %v3240 = vld [vmem:[#allocation4 + $0xb0] sm:$0xff]
        %v3241 = vld [vmem:[#allocation4 + $0xb8] sm:$0xff]
        %v3242 = vmax.f32 %v3240, %v3241
        %v3243 = vpack.c.bf16 %v3242, %v3242
        %3244 = vst [vmem:[#allocation5 + $0x30] sm:$0xf] %v3243
        %v3245 = vld [vmem:[#allocation4 + $0xc0] sm:$0xff]
        %v3246 = vld [vmem:[#allocation4 + $0xc8] sm:$0xff]
        %v3247 = vmax.f32 %v3245, %v3246
        %v3248 = vpack.c.bf16 %v3247, %v3247
        %v3250 = vrot.slane %v3248, 4
        %3252 = vst [vmem:[#allocation5 + $0x30] sm:$0xf0] %v3250
        %v3253 = vld [vmem:[#allocation4 + $0xd0] sm:$0xff]
        %v3254 = vld [vmem:[#allocation4 + $0xd8] sm:$0xff]
        %v3255 = vmax.f32 %v3253, %v3254
        %v3256 = vpack.c.bf16 %v3255, %v3255
        %3257 = vst [vmem:[#allocation5 + $0x38] sm:$0xf] %v3256
        %v3258 = vld [vmem:[#allocation4 + $0xe0] sm:$0xff]
        %v3259 = vld [vmem:[#allocation4 + $0xe8] sm:$0xff]
        %v3260 = vmax.f32 %v3258, %v3259
        %v3261 = vpack.c.bf16 %v3260, %v3260
        %v3263 = vrot.slane %v3261, 4
        %3265 = vst [vmem:[#allocation5 + $0x38] sm:$0xf0] %v3263
        %v3266 = vld [vmem:[#allocation4 + $0xf0] sm:$0xff]
        %v3267 = vld [vmem:[#allocation4 + $0xf8] sm:$0xff]
        %v3268 = vmax.f32 %v3266, %v3267
        %v3269 = vpack.c.bf16 %v3268, %v3268
        %3270 = vst [vmem:[#allocation5 + $0x40] sm:$0xf] %v3269
        %v3271 = vld [vmem:[#allocation4 + $0x100] sm:$0xff]
        %v3272 = vld [vmem:[#allocation4 + $0x108] sm:$0xff]
        %v3273 = vmax.f32 %v3271, %v3272
        %v3274 = vpack.c.bf16 %v3273, %v3273
        %v3276 = vrot.slane %v3274, 4
        %3278 = vst [vmem:[#allocation5 + $0x40] sm:$0xf0] %v3276
        %v3279 = vld [vmem:[#allocation4 + $0x110] sm:$0xff]
        %v3280 = vld [vmem:[#allocation4 + $0x118] sm:$0xff]
        %v3281 = vmax.f32 %v3279, %v3280
        %v3282 = vpack.c.bf16 %v3281, %v3281
        %3283 = vst [vmem:[#allocation5 + $0x48] sm:$0xf] %v3282
        %v3284 = vld [vmem:[#allocation4 + $0x120] sm:$0xff]
        %v3285 = vld [vmem:[#allocation4 + $0x128] sm:$0xff]
        %v3286 = vmax.f32 %v3284, %v3285
        %v3287 = vpack.c.bf16 %v3286, %v3286
        %v3289 = vrot.slane %v3287, 4
        %3291 = vst [vmem:[#allocation5 + $0x48] sm:$0xf0] %v3289
        %v3292 = vld [vmem:[#allocation4 + $0x130] sm:$0xff]
        %v3293 = vld [vmem:[#allocation4 + $0x138] sm:$0xff]
        %v3294 = vmax.f32 %v3292, %v3293
        %v3295 = vpack.c.bf16 %v3294, %v3294
        %3296 = vst [vmem:[#allocation5 + $0x50] sm:$0xf] %v3295
        %v3297 = vld [vmem:[#allocation5] sm:$0xff]
        %v3298 = vld [vmem:[#allocation5 + $0x8] sm:$0xff]
        %v3299 = vld [vmem:[#allocation5 + $0x10] sm:$0xff]
        %v3300 = vld [vmem:[#allocation5 + $0x18] sm:$0xff]
        %v3301 = vld [vmem:[#allocation5 + $0x20] sm:$0xff]
        %v3302 = vld [vmem:[#allocation5 + $0x28] sm:$0xff]
        %v3303 = vld [vmem:[#allocation5 + $0x30] sm:$0xff]
        %v3304 = vld [vmem:[#allocation5 + $0x38] sm:$0xff]
        %v3305 = vld [vmem:[#allocation5 + $0x40] sm:$0xff]
        %v3306 = vld [vmem:[#allocation5 + $0x48] sm:$0xff]
        %v3307 = vld [vmem:[#allocation16] sm:$0xff]
        %v3308 = vld [vmem:[#allocation16 + $0x8] sm:$0xff]
        %v3309 = vld [vmem:[#allocation16 + $0x10] sm:$0xff]
        %v3310 = vld [vmem:[#allocation16 + $0x18] sm:$0xff]
        %v3311 = vld [vmem:[#allocation16 + $0x20] sm:$0xff]
        %v3312 = vld [vmem:[#allocation16 + $0x28] sm:$0xff]
        %v3313 = vld [vmem:[#allocation16 + $0x30] sm:$0xff]
        %v3314 = vld [vmem:[#allocation16 + $0x38] sm:$0xff]
        %v3315 = vld [vmem:[#allocation16 + $0x40] sm:$0xff]
        %v3316 = vld [vmem:[#allocation16 + $0x48] sm:$0xff]
        %v3317 = vld [vmem:[#allocation16 + $0x50] sm:$0xff]
        %v3318 = vld [vmem:[#allocation16 + $0x58] sm:$0xff]
        %v3319 = vld [vmem:[#allocation16 + $0x60] sm:$0xff]
        %v3320 = vld [vmem:[#allocation16 + $0x68] sm:$0xff]
        %v3321 = vld [vmem:[#allocation16 + $0x70] sm:$0xff]
        %v3322 = vld [vmem:[#allocation16 + $0x78] sm:$0xff]
        %v3323 = vld [vmem:[#allocation5] sm:$0xf0]
        %v3324 = vld [vmem:[#allocation5 + $0x8] sm:$0xff]
        %v3325 = vld [vmem:[#allocation5 + $0x10] sm:$0xff]
        %v3326 = vld [vmem:[#allocation5 + $0x18] sm:$0xff]
        %v3327 = vld [vmem:[#allocation5 + $0x20] sm:$0xff]
        %v3328 = vld [vmem:[#allocation5 + $0x28] sm:$0xff]
        %v3329 = vld [vmem:[#allocation5 + $0x30] sm:$0xff]
        %v3330 = vld [vmem:[#allocation5 + $0x38] sm:$0xff]
        %v3331 = vld [vmem:[#allocation5 + $0x40] sm:$0xff]
        %v3332 = vld [vmem:[#allocation5 + $0x48] sm:$0xff]
        %v3333 = vld [vmem:[#allocation5 + $0x50] sm:$0xf]
        %v3334 = vld [vmem:[#allocation16 + $0x80] sm:$0xff]
        %v3335 = vld [vmem:[#allocation16 + $0x88] sm:$0xff]
        %v3336 = vld [vmem:[#allocation16 + $0x90] sm:$0xff]
        %v3337 = vld [vmem:[#allocation16 + $0x98] sm:$0xff]
        %v3338 = vld [vmem:[#allocation16 + $0xa0] sm:$0xff]
        %v3339 = vld [vmem:[#allocation16 + $0xa8] sm:$0xff]
        %v3340 = vld [vmem:[#allocation16 + $0xb0] sm:$0xff]
        %v3341 = vld [vmem:[#allocation16 + $0xb8] sm:$0xff]
        %v3342 = vld [vmem:[#allocation16 + $0xc0] sm:$0xff]
        %v3343 = vld [vmem:[#allocation16 + $0xc8] sm:$0xff]
        %v3344 = vld [vmem:[#allocation16 + $0xd0] sm:$0xff]
        %v3345 = vld [vmem:[#allocation16 + $0xd8] sm:$0xff]
        %v3346 = vld [vmem:[#allocation16 + $0xe0] sm:$0xff]
        %v3347 = vld [vmem:[#allocation16 + $0xe8] sm:$0xff]
        %v3348 = vld [vmem:[#allocation16 + $0xf0] sm:$0xff]
        %v3349 = vld [vmem:[#allocation16 + $0xf8] sm:$0xff]
        %vm3361 = vcmask 1043456
        %v3362 = vrot.slane %v3323, 4
        %v3363 = vrot.slane %v3324, 4
        %v3364 = vsel %vm3361, %v3362, %v3363
        %v3365 = vrot.slane %v3325, 4
        %v3366 = vsel %vm3361, %v3363, %v3365
        %v3367 = vrot.slane %v3326, 4
        %v3368 = vsel %vm3361, %v3365, %v3367
        %v3369 = vrot.slane %v3327, 4
        %v3370 = vsel %vm3361, %v3367, %v3369
        %v3371 = vrot.slane %v3328, 4
        %v3372 = vsel %vm3361, %v3369, %v3371
        %v3373 = vrot.slane %v3329, 4
        %v3374 = vsel %vm3361, %v3371, %v3373
        %v3375 = vrot.slane %v3330, 4
        %v3376 = vsel %vm3361, %v3373, %v3375
        %v3377 = vrot.slane %v3331, 4
        %v3378 = vsel %vm3361, %v3375, %v3377
        %v3379 = vrot.slane %v3332, 4
        %v3380 = vsel %vm3361, %v3377, %v3379
        %v3381 = vrot.slane %v3333, 4
        %v3382 = vsel %vm3361, %v3379, %v3381
        %v3409 = vunpack.c.l.b16 %v3334
        %v3410 = vunpack.c.h.b16 %v3334
        %v3411 = vunpack.c.l.b16 %v3335
        %v3412 = vunpack.c.h.b16 %v3335
        %v3413 = vunpack.c.l.b16 %v3336
        %v3414 = vunpack.c.h.b16 %v3336
        %v3415 = vunpack.c.l.b16 %v3337
        %v3416 = vunpack.c.h.b16 %v3337
        %v3417 = vunpack.c.l.b16 %v3338
        %v3418 = vunpack.c.h.b16 %v3338
        %v3419 = vunpack.c.l.b16 %v3339
        %v3420 = vunpack.c.h.b16 %v3339
        %v3421 = vunpack.c.l.b16 %v3340
        %v3422 = vunpack.c.h.b16 %v3340
        %v3423 = vunpack.c.l.b16 %v3341
        %v3424 = vunpack.c.h.b16 %v3341
        %v3425 = vunpack.c.l.b16 %v3342
        %v3426 = vunpack.c.h.b16 %v3342
        %v3427 = vunpack.c.l.b16 %v3343
        %v3428 = vunpack.c.h.b16 %v3343
        %v3429 = vunpack.c.l.b16 %v3344
        %v3430 = vunpack.c.h.b16 %v3344
        %v3431 = vunpack.c.l.b16 %v3345
        %v3432 = vunpack.c.h.b16 %v3345
        %v3433 = vunpack.c.l.b16 %v3346
        %v3434 = vunpack.c.h.b16 %v3346
        %v3435 = vunpack.c.l.b16 %v3347
        %v3436 = vunpack.c.h.b16 %v3347
        %v3437 = vunpack.c.l.b16 %v3348
        %v3438 = vunpack.c.h.b16 %v3348
        %v3439 = vunpack.c.l.b16 %v3349
        %v3440 = vunpack.c.h.b16 %v3349
        %v3441 = vpack.c.b16 %v3411, %v3409
        %v3442 = vpack.c.b16 %v3412, %v3410
        %v3443 = vpack.c.b16 %v3415, %v3413
        %v3444 = vpack.c.b16 %v3416, %v3414
        %v3445 = vpack.c.b16 %v3419, %v3417
        %v3446 = vpack.c.b16 %v3420, %v3418
        %v3447 = vpack.c.b16 %v3423, %v3421
        %v3448 = vpack.c.b16 %v3424, %v3422
        %v3449 = vpack.c.b16 %v3427, %v3425
        %v3450 = vpack.c.b16 %v3428, %v3426
        %v3451 = vpack.c.b16 %v3431, %v3429
        %v3452 = vpack.c.b16 %v3432, %v3430
        %v3453 = vpack.c.b16 %v3435, %v3433
        %v3454 = vpack.c.b16 %v3436, %v3434
        %v3455 = vpack.c.b16 %v3439, %v3437
        %v3456 = vpack.c.b16 %v3440, %v3438
        %3473 = vmatprep.subr.bf16.mxu0 %v3442
        %3474 = vmatpush1.bf16.msra.mxu0 %v3441
        %3475 = vmatprep.subr.bf16.mxu0 %v3444
        %3476 = vmatpush1.bf16.msra.mxu0 %v3443
        %3477 = vmatprep.subr.bf16.mxu0 %v3446
        %3478 = vmatpush1.bf16.msra.mxu0 %v3445
        %3479 = vmatprep.subr.bf16.mxu0 %v3448
        %3480 = vmatpush1.bf16.msra.mxu0 %v3447
        %3481 = vmatprep.subr.bf16.mxu0 %v3450
        %3482 = vmatpush1.bf16.msra.mxu0 %v3449
        %3483 = vmatprep.subr.bf16.mxu0 %v3452
        %3484 = vmatpush1.bf16.msra.mxu0 %v3451
        %3485 = vmatprep.subr.bf16.mxu0 %v3454
        %3486 = vmatpush1.bf16.msra.mxu0 %v3453
        %3487 = vmatprep.subr.bf16.mxu0 %v3456
        %3488 = vmatpush1.bf16.msra.mxu0 %v3455
        %3489 = vmatprep.subr.bf16.mxu0 0
        %3490 = vmatpush1.bf16.msra.mxu0 0
        %3491 = vmatprep.subr.bf16.mxu0 0
        %3492 = vmatpush1.bf16.msra.mxu0 0
        %3493 = vmatprep.subr.bf16.mxu0 0
        %3494 = vmatpush1.bf16.msra.mxu0 0
        %3495 = vmatprep.subr.bf16.mxu0 0
        %3496 = vmatpush1.bf16.msra.mxu0 0
        %3497 = vmatprep.subr.bf16.mxu0 0
        %3498 = vmatpush1.bf16.msra.mxu0 0
        %3499 = vmatprep.subr.bf16.mxu0 0
        %3500 = vmatpush1.bf16.msra.mxu0 0
        %3501 = vmatprep.subr.bf16.mxu0 0
        %3502 = vmatpush1.bf16.msra.mxu0 0
        %3503 = vmatprep.subr.bf16.mxu0 0
        %3504 = vmatpush1.bf16.msra.mxu0 0
        %3505 = vmatprep.mubr.bf16.mxu0 0
        %3506 = vmatmul.mubr.bf16.gmra.mrb[0].mxu0 %v3364
        %v3507 = vpop.f32.mrb[0].mxu0
        %v3508 = vadd.f32 0.0, %v3507
        %v3509 = vpop.f32.mrb[0].mxu0
        %v3510 = vadd.f32 0.0, %v3509
        %v3511 = vpop.f32.mrb[0].mxu0
        %v3512 = vadd.f32 0.0, %v3511
        %v3513 = vpop.f32.mrb[0].mxu0
        %v3514 = vadd.f32 0.0, %v3513
        %3515 = vmatprep.mubr.bf16.mxu0 0
        %3516 = vmatmul.mubr.bf16.gmra.mrb[0].mxu0 %v3366
        %v3517 = vpop.f32.mrb[0].mxu0
        %v3518 = vadd.f32 0.0, %v3517
        %v3519 = vpop.f32.mrb[0].mxu0
        %v3520 = vadd.f32 0.0, %v3519
        %v3521 = vpop.f32.mrb[0].mxu0
        %v3522 = vadd.f32 0.0, %v3521
        %v3523 = vpop.f32.mrb[0].mxu0
        %v3524 = vadd.f32 0.0, %v3523
        %3525 = vmatprep.mubr.bf16.mxu0 0
        %3526 = vmatmul.mubr.bf16.gmra.mrb[0].mxu0 %v3368
        %v3527 = vpop.f32.mrb[0].mxu0
        %v3528 = vadd.f32 0.0, %v3527
        %v3529 = vpop.f32.mrb[0].mxu0
        %v3530 = vadd.f32 0.0, %v3529
        %v3531 = vpop.f32.mrb[0].mxu0
        %v3532 = vadd.f32 0.0, %v3531
        %v3533 = vpop.f32.mrb[0].mxu0
        %v3534 = vadd.f32 0.0, %v3533
        %3535 = vmatprep.mubr.bf16.mxu0 0
        %3536 = vmatmul.mubr.bf16.gmra.mrb[0].mxu0 %v3370
        %v3537 = vpop.f32.mrb[0].mxu0
        %v3538 = vadd.f32 0.0, %v3537
        %v3539 = vpop.f32.mrb[0].mxu0
        %v3540 = vadd.f32 0.0, %v3539
        %v3541 = vpop.f32.mrb[0].mxu0
        %v3542 = vadd.f32 0.0, %v3541
        %v3543 = vpop.f32.mrb[0].mxu0
        %v3544 = vadd.f32 0.0, %v3543
        %3545 = vmatprep.mubr.bf16.mxu0 0
        %3546 = vmatmul.mubr.bf16.gmra.mrb[0].mxu0 %v3372
        %v3547 = vpop.f32.mrb[0].mxu0
        %v3548 = vadd.f32 0.0, %v3547
        %v3549 = vpop.f32.mrb[0].mxu0
        %v3550 = vadd.f32 0.0, %v3549
        %v3551 = vpop.f32.mrb[0].mxu0
        %v3552 = vadd.f32 0.0, %v3551
        %v3553 = vpop.f32.mrb[0].mxu0
        %v3554 = vadd.f32 0.0, %v3553
        %3555 = vmatprep.mubr.bf16.mxu0 0
        %3556 = vmatmul.mubr.bf16.gmra.mrb[0].mxu0 %v3374
        %v3557 = vpop.f32.mrb[0].mxu0
        %v3558 = vadd.f32 0.0, %v3557
        %v3559 = vpop.f32.mrb[0].mxu0
        %v3560 = vadd.f32 0.0, %v3559
        %v3561 = vpop.f32.mrb[0].mxu0
        %v3562 = vadd.f32 0.0, %v3561
        %v3563 = vpop.f32.mrb[0].mxu0
        %v3564 = vadd.f32 0.0, %v3563
        %3565 = vmatprep.mubr.bf16.mxu0 0
        %3566 = vmatmul.mubr.bf16.gmra.mrb[0].mxu0 %v3376
        %v3567 = vpop.f32.mrb[0].mxu0
        %v3568 = vadd.f32 0.0, %v3567
        %v3569 = vpop.f32.mrb[0].mxu0
        %v3570 = vadd.f32 0.0, %v3569
        %v3571 = vpop.f32.mrb[0].mxu0
        %v3572 = vadd.f32 0.0, %v3571
        %v3573 = vpop.f32.mrb[0].mxu0
        %v3574 = vadd.f32 0.0, %v3573
        %3575 = vmatprep.mubr.bf16.mxu0 0
        %3576 = vmatmul.mubr.bf16.gmra.mrb[0].mxu0 %v3378
        %v3577 = vpop.f32.mrb[0].mxu0
        %v3578 = vadd.f32 0.0, %v3577
        %v3579 = vpop.f32.mrb[0].mxu0
        %v3580 = vadd.f32 0.0, %v3579
        %v3581 = vpop.f32.mrb[0].mxu0
        %v3582 = vadd.f32 0.0, %v3581
        %v3583 = vpop.f32.mrb[0].mxu0
        %v3584 = vadd.f32 0.0, %v3583
        %3585 = vmatprep.mubr.bf16.mxu0 0
        %3586 = vmatmul.mubr.bf16.gmra.mrb[0].mxu0 %v3380
        %v3587 = vpop.f32.mrb[0].mxu0
        %v3588 = vadd.f32 0.0, %v3587
        %v3589 = vpop.f32.mrb[0].mxu0
        %v3590 = vadd.f32 0.0, %v3589
        %v3591 = vpop.f32.mrb[0].mxu0
        %v3592 = vadd.f32 0.0, %v3591
        %v3593 = vpop.f32.mrb[0].mxu0
        %v3594 = vadd.f32 0.0, %v3593
        %3595 = vmatprep.mubr.bf16.mxu0 0
        %3596 = vmatmul.mubr.bf16.gmra.mrb[0].mxu0 %v3382
        %v3597 = vpop.f32.mrb[0].mxu0
        %v3598 = vadd.f32 0.0, %v3597
        %v3599 = vpop.f32.mrb[0].mxu0
        %v3600 = vadd.f32 0.0, %v3599
        %v3601 = vpop.f32.mrb[0].mxu0
        %v3602 = vadd.f32 0.0, %v3601
        %v3603 = vpop.f32.mrb[0].mxu0
        %v3604 = vadd.f32 0.0, %v3603
        %3605 = vdwg.mxu0
        %v3622 = vunpack.c.l.b16 %v3307
        %v3623 = vunpack.c.h.b16 %v3307
        %v3624 = vunpack.c.l.b16 %v3308
        %v3625 = vunpack.c.h.b16 %v3308
        %v3626 = vunpack.c.l.b16 %v3309
        %v3627 = vunpack.c.h.b16 %v3309
        %v3628 = vunpack.c.l.b16 %v3310
        %v3629 = vunpack.c.h.b16 %v3310
        %v3630 = vunpack.c.l.b16 %v3311
        %v3631 = vunpack.c.h.b16 %v3311
        %v3632 = vunpack.c.l.b16 %v3312
        %v3633 = vunpack.c.h.b16 %v3312
        %v3634 = vunpack.c.l.b16 %v3313
        %v3635 = vunpack.c.h.b16 %v3313
        %v3636 = vunpack.c.l.b16 %v3314
        %v3637 = vunpack.c.h.b16 %v3314
        %v3638 = vunpack.c.l.b16 %v3315
        %v3639 = vunpack.c.h.b16 %v3315
        %v3640 = vunpack.c.l.b16 %v3316
        %v3641 = vunpack.c.h.b16 %v3316
        %v3642 = vunpack.c.l.b16 %v3317
        %v3643 = vunpack.c.h.b16 %v3317
        %v3644 = vunpack.c.l.b16 %v3318
        %v3645 = vunpack.c.h.b16 %v3318
        %v3646 = vunpack.c.l.b16 %v3319
        %v3647 = vunpack.c.h.b16 %v3319
        %v3648 = vunpack.c.l.b16 %v3320
        %v3649 = vunpack.c.h.b16 %v3320
        %v3650 = vunpack.c.l.b16 %v3321
        %v3651 = vunpack.c.h.b16 %v3321
        %v3652 = vunpack.c.l.b16 %v3322
        %v3653 = vunpack.c.h.b16 %v3322
        %v3654 = vpack.c.b16 %v3624, %v3622
        %v3655 = vpack.c.b16 %v3625, %v3623
        %v3656 = vpack.c.b16 %v3628, %v3626
        %v3657 = vpack.c.b16 %v3629, %v3627
        %v3658 = vpack.c.b16 %v3632, %v3630
        %v3659 = vpack.c.b16 %v3633, %v3631
        %v3660 = vpack.c.b16 %v3636, %v3634
        %v3661 = vpack.c.b16 %v3637, %v3635
        %v3662 = vpack.c.b16 %v3640, %v3638
        %v3663 = vpack.c.b16 %v3641, %v3639
        %v3664 = vpack.c.b16 %v3644, %v3642
        %v3665 = vpack.c.b16 %v3645, %v3643
        %v3666 = vpack.c.b16 %v3648, %v3646
        %v3667 = vpack.c.b16 %v3649, %v3647
        %v3668 = vpack.c.b16 %v3652, %v3650
        %v3669 = vpack.c.b16 %v3653, %v3651
        %3686 = vmatprep.subr.bf16.mxu0 %v3655
        %3687 = vmatpush1.bf16.msra.mxu0 %v3654
        %3688 = vmatprep.subr.bf16.mxu0 %v3657
        %3689 = vmatpush1.bf16.msra.mxu0 %v3656
        %3690 = vmatprep.subr.bf16.mxu0 %v3659
        %3691 = vmatpush1.bf16.msra.mxu0 %v3658
        %3692 = vmatprep.subr.bf16.mxu0 %v3661
        %3693 = vmatpush1.bf16.msra.mxu0 %v3660
        %3694 = vmatprep.subr.bf16.mxu0 %v3663
        %3695 = vmatpush1.bf16.msra.mxu0 %v3662
        %3696 = vmatprep.subr.bf16.mxu0 %v3665
        %3697 = vmatpush1.bf16.msra.mxu0 %v3664
        %3698 = vmatprep.subr.bf16.mxu0 %v3667
        %3699 = vmatpush1.bf16.msra.mxu0 %v3666
        %3700 = vmatprep.subr.bf16.mxu0 %v3669
        %3701 = vmatpush1.bf16.msra.mxu0 %v3668
        %3702 = vmatprep.subr.bf16.mxu0 0
        %3703 = vmatpush1.bf16.msra.mxu0 0
        %3704 = vmatprep.subr.bf16.mxu0 0
        %3705 = vmatpush1.bf16.msra.mxu0 0
        %3706 = vmatprep.subr.bf16.mxu0 0
        %3707 = vmatpush1.bf16.msra.mxu0 0
        %3708 = vmatprep.subr.bf16.mxu0 0
        %3709 = vmatpush1.bf16.msra.mxu0 0
        %3710 = vmatprep.subr.bf16.mxu0 0
        %3711 = vmatpush1.bf16.msra.mxu0 0
        %3712 = vmatprep.subr.bf16.mxu0 0
        %3713 = vmatpush1.bf16.msra.mxu0 0
        %3714 = vmatprep.subr.bf16.mxu0 0
        %3715 = vmatpush1.bf16.msra.mxu0 0
        %3716 = vmatprep.subr.bf16.mxu0 0
        %3717 = vmatpush1.bf16.msra.mxu0 0
        %3718 = vmatprep.mubr.bf16.mxu0 0
        %3719 = vmatmul.mubr.bf16.gmra.mrb[0].mxu0 %v3297
        %v3720 = vpop.f32.mrb[0].mxu0
        %v3721 = vadd.f32 %v3508, %v3720
        %v3722 = vpop.f32.mrb[0].mxu0
        %v3723 = vadd.f32 %v3510, %v3722
        %v3724 = vpop.f32.mrb[0].mxu0
        %v3725 = vadd.f32 %v3512, %v3724
        %v3726 = vpop.f32.mrb[0].mxu0
        %v3727 = vadd.f32 %v3514, %v3726
        %3728 = vmatprep.mubr.bf16.mxu0 0
        %3729 = vmatmul.mubr.bf16.gmra.mrb[0].mxu0 %v3298
        %v3730 = vpop.f32.mrb[0].mxu0
        %v3731 = vadd.f32 %v3518, %v3730
        %v3732 = vpop.f32.mrb[0].mxu0
        %v3733 = vadd.f32 %v3520, %v3732
        %v3734 = vpop.f32.mrb[0].mxu0
        %v3735 = vadd.f32 %v3522, %v3734
        %v3736 = vpop.f32.mrb[0].mxu0
        %v3737 = vadd.f32 %v3524, %v3736
        %3738 = vmatprep.mubr.bf16.mxu0 0
        %3739 = vmatmul.mubr.bf16.gmra.mrb[0].mxu0 %v3299
        %v3740 = vpop.f32.mrb[0].mxu0
        %v3741 = vadd.f32 %v3528, %v3740
        %v3742 = vpop.f32.mrb[0].mxu0
        %v3743 = vadd.f32 %v3530, %v3742
        %v3744 = vpop.f32.mrb[0].mxu0
        %v3745 = vadd.f32 %v3532, %v3744
        %v3746 = vpop.f32.mrb[0].mxu0
        %v3747 = vadd.f32 %v3534, %v3746
        %3748 = vmatprep.mubr.bf16.mxu0 0
        %3749 = vmatmul.mubr.bf16.gmra.mrb[0].mxu0 %v3300
        %v3750 = vpop.f32.mrb[0].mxu0
        %v3751 = vadd.f32 %v3538, %v3750
        %v3752 = vpop.f32.mrb[0].mxu0
        %v3753 = vadd.f32 %v3540, %v3752
        %v3754 = vpop.f32.mrb[0].mxu0
        %v3755 = vadd.f32 %v3542, %v3754
        %v3756 = vpop.f32.mrb[0].mxu0
        %v3757 = vadd.f32 %v3544, %v3756
        %3758 = vmatprep.mubr.bf16.mxu0 0
        %3759 = vmatmul.mubr.bf16.gmra.mrb[0].mxu0 %v3301
        %v3760 = vpop.f32.mrb[0].mxu0
        %v3761 = vadd.f32 %v3548, %v3760
        %v3762 = vpop.f32.mrb[0].mxu0
        %v3763 = vadd.f32 %v3550, %v3762
        %v3764 = vpop.f32.mrb[0].mxu0
        %v3765 = vadd.f32 %v3552, %v3764
        %v3766 = vpop.f32.mrb[0].mxu0
        %v3767 = vadd.f32 %v3554, %v3766
        %3768 = vmatprep.mubr.bf16.mxu0 0
        %3769 = vmatmul.mubr.bf16.gmra.mrb[0].mxu0 %v3302
        %v3770 = vpop.f32.mrb[0].mxu0
        %v3771 = vadd.f32 %v3558, %v3770
        %v3772 = vpop.f32.mrb[0].mxu0
        %v3773 = vadd.f32 %v3560, %v3772
        %v3774 = vpop.f32.mrb[0].mxu0
        %v3775 = vadd.f32 %v3562, %v3774
        %v3776 = vpop.f32.mrb[0].mxu0
        %v3777 = vadd.f32 %v3564, %v3776
        %3778 = vmatprep.mubr.bf16.mxu0 0
        %3779 = vmatmul.mubr.bf16.gmra.mrb[0].mxu0 %v3303
        %v3780 = vpop.f32.mrb[0].mxu0
        %v3781 = vadd.f32 %v3568, %v3780
        %v3782 = vpop.f32.mrb[0].mxu0
        %v3783 = vadd.f32 %v3570, %v3782
        %v3784 = vpop.f32.mrb[0].mxu0
        %v3785 = vadd.f32 %v3572, %v3784
        %v3786 = vpop.f32.mrb[0].mxu0
        %v3787 = vadd.f32 %v3574, %v3786
        %3788 = vmatprep.mubr.bf16.mxu0 0
        %3789 = vmatmul.mubr.bf16.gmra.mrb[0].mxu0 %v3304
        %v3790 = vpop.f32.mrb[0].mxu0
        %v3791 = vadd.f32 %v3578, %v3790
        %v3792 = vpop.f32.mrb[0].mxu0
        %v3793 = vadd.f32 %v3580, %v3792
        %v3794 = vpop.f32.mrb[0].mxu0
        %v3795 = vadd.f32 %v3582, %v3794
        %v3796 = vpop.f32.mrb[0].mxu0
        %v3797 = vadd.f32 %v3584, %v3796
        %3798 = vmatprep.mubr.bf16.mxu0 0
        %3799 = vmatmul.mubr.bf16.gmra.mrb[0].mxu0 %v3305
        %v3800 = vpop.f32.mrb[0].mxu0
        %v3801 = vadd.f32 %v3588, %v3800
        %v3802 = vpop.f32.mrb[0].mxu0
        %v3803 = vadd.f32 %v3590, %v3802
        %v3804 = vpop.f32.mrb[0].mxu0
        %v3805 = vadd.f32 %v3592, %v3804
        %v3806 = vpop.f32.mrb[0].mxu0
        %v3807 = vadd.f32 %v3594, %v3806
        %3808 = vmatprep.mubr.bf16.mxu0 0
        %3809 = vmatmul.mubr.bf16.gmra.mrb[0].mxu0 %v3306
        %v3810 = vpop.f32.mrb[0].mxu0
        %v3811 = vadd.f32 %v3598, %v3810
        %v3812 = vpop.f32.mrb[0].mxu0
        %v3813 = vadd.f32 %v3600, %v3812
        %v3814 = vpop.f32.mrb[0].mxu0
        %v3815 = vadd.f32 %v3602, %v3814
        %v3816 = vpop.f32.mrb[0].mxu0
        %v3817 = vadd.f32 %v3604, %v3816
        %3818 = vdwg.mxu0
        %v3819 = vld [vmem:[#allocation5 + $0x50] sm:$0xff]
        %v3820 = vld [vmem:[#allocation16 + $0x100] sm:$0xff]
        %v3821 = vld [vmem:[#allocation16 + $0x108] sm:$0xff]
        %v3822 = vld [vmem:[#allocation16 + $0x110] sm:$0xff]
        %v3823 = vld [vmem:[#allocation16 + $0x118] sm:$0xff]
        %v3824 = vld [vmem:[#allocation16 + $0x120] sm:$0xff]
        %v3825 = vld [vmem:[#allocation16 + $0x128] sm:$0xff]
        %v3826 = vld [vmem:[#allocation16 + $0x130] sm:$0xff]
        %v3827 = vld [vmem:[#allocation16 + $0x138] sm:$0xff]
        %v3828 = vld [vmem:[#allocation16 + $0x140] sm:$0xff]
        %v3829 = vld [vmem:[#allocation16 + $0x148] sm:$0xff]
        %v3830 = vld [vmem:[#allocation16 + $0x150] sm:$0xff]
        %v3831 = vld [vmem:[#allocation16 + $0x158] sm:$0xff]
        %v3832 = vld [vmem:[#allocation16 + $0x160] sm:$0xff]
        %v3833 = vld [vmem:[#allocation16 + $0x168] sm:$0xff]
        %v3834 = vld [vmem:[#allocation16 + $0x170] sm:$0xff]
        %v3835 = vld [vmem:[#allocation16 + $0x178] sm:$0xff]
        %v3852 = vunpack.c.l.b16 %v3820
        %v3853 = vunpack.c.h.b16 %v3820
        %v3854 = vunpack.c.l.b16 %v3821
        %v3855 = vunpack.c.h.b16 %v3821
        %v3856 = vunpack.c.l.b16 %v3822
        %v3857 = vunpack.c.h.b16 %v3822
        %v3858 = vunpack.c.l.b16 %v3823
        %v3859 = vunpack.c.h.b16 %v3823
        %v3860 = vunpack.c.l.b16 %v3824
        %v3861 = vunpack.c.h.b16 %v3824
        %v3862 = vunpack.c.l.b16 %v3825
        %v3863 = vunpack.c.h.b16 %v3825
        %v3864 = vunpack.c.l.b16 %v3826
        %v3865 = vunpack.c.h.b16 %v3826
        %v3866 = vunpack.c.l.b16 %v3827
        %v3867 = vunpack.c.h.b16 %v3827
        %v3868 = vunpack.c.l.b16 %v3828
        %v3869 = vunpack.c.h.b16 %v3828
        %v3870 = vunpack.c.l.b16 %v3829
        %v3871 = vunpack.c.h.b16 %v3829
        %v3872 = vunpack.c.l.b16 %v3830
        %v3873 = vunpack.c.h.b16 %v3830
        %v3874 = vunpack.c.l.b16 %v3831
        %v3875 = vunpack.c.h.b16 %v3831
        %v3876 = vunpack.c.l.b16 %v3832
        %v3877 = vunpack.c.h.b16 %v3832
        %v3878 = vunpack.c.l.b16 %v3833
        %v3879 = vunpack.c.h.b16 %v3833
        %v3880 = vunpack.c.l.b16 %v3834
        %v3881 = vunpack.c.h.b16 %v3834
        %v3882 = vunpack.c.l.b16 %v3835
        %v3883 = vunpack.c.h.b16 %v3835
        %v3884 = vpack.c.b16 %v3854, %v3852
        %v3885 = vpack.c.b16 %v3855, %v3853
        %v3886 = vpack.c.b16 %v3858, %v3856
        %v3887 = vpack.c.b16 %v3859, %v3857
        %v3888 = vpack.c.b16 %v3862, %v3860
        %v3889 = vpack.c.b16 %v3863, %v3861
        %v3890 = vpack.c.b16 %v3866, %v3864
        %v3891 = vpack.c.b16 %v3867, %v3865
        %v3892 = vpack.c.b16 %v3870, %v3868
        %v3893 = vpack.c.b16 %v3871, %v3869
        %v3894 = vpack.c.b16 %v3874, %v3872
        %v3895 = vpack.c.b16 %v3875, %v3873
        %v3896 = vpack.c.b16 %v3878, %v3876
        %v3897 = vpack.c.b16 %v3879, %v3877
        %v3898 = vpack.c.b16 %v3882, %v3880
        %v3899 = vpack.c.b16 %v3883, %v3881
        %3916 = vmatprep.subr.bf16.mxu0 %v3885
        %3917 = vmatpush1.bf16.msra.mxu0 %v3884
        %3918 = vmatprep.subr.bf16.mxu0 %v3887
        %3919 = vmatpush1.bf16.msra.mxu0 %v3886
        %3920 = vmatprep.subr.bf16.mxu0 %v3889
        %3921 = vmatpush1.bf16.msra.mxu0 %v3888
        %3922 = vmatprep.subr.bf16.mxu0 %v3891
        %3923 = vmatpush1.bf16.msra.mxu0 %v3890
        %3924 = vmatprep.subr.bf16.mxu0 %v3893
        %3925 = vmatpush1.bf16.msra.mxu0 %v3892
        %3926 = vmatprep.subr.bf16.mxu0 %v3895
        %3927 = vmatpush1.bf16.msra.mxu0 %v3894
        %3928 = vmatprep.subr.bf16.mxu0 %v3897
        %3929 = vmatpush1.bf16.msra.mxu0 %v3896
        %3930 = vmatprep.subr.bf16.mxu0 %v3899
        %3931 = vmatpush1.bf16.msra.mxu0 %v3898
        %3932 = vmatprep.subr.bf16.mxu0 0
        %3933 = vmatpush1.bf16.msra.mxu0 0
        %3934 = vmatprep.subr.bf16.mxu0 0
        %3935 = vmatpush1.bf16.msra.mxu0 0
        %3936 = vmatprep.subr.bf16.mxu0 0
        %3937 = vmatpush1.bf16.msra.mxu0 0
        %3938 = vmatprep.subr.bf16.mxu0 0
        %3939 = vmatpush1.bf16.msra.mxu0 0
        %3940 = vmatprep.subr.bf16.mxu0 0
        %3941 = vmatpush1.bf16.msra.mxu0 0
        %3942 = vmatprep.subr.bf16.mxu0 0
        %3943 = vmatpush1.bf16.msra.mxu0 0
        %3944 = vmatprep.subr.bf16.mxu0 0
        %3945 = vmatpush1.bf16.msra.mxu0 0
        %3946 = vmatprep.subr.bf16.mxu0 0
        %3947 = vmatpush1.bf16.msra.mxu0 0
        %3948 = vmatprep.mubr.bf16.mxu0 0
        %3949 = vmatmul.mubr.bf16.gmra.mrb[0].mxu0 %v3324
        %v3950 = vpop.f32.mrb[0].mxu0
        %v3951 = vadd.f32 0.0, %v3950
        %v3952 = vpop.f32.mrb[0].mxu0
        %v3953 = vadd.f32 0.0, %v3952
        %v3954 = vpop.f32.mrb[0].mxu0
        %v3955 = vadd.f32 0.0, %v3954
        %v3956 = vpop.f32.mrb[0].mxu0
        %v3957 = vadd.f32 0.0, %v3956
        %3958 = vmatprep.mubr.bf16.mxu0 0
        %3959 = vmatmul.mubr.bf16.gmra.mrb[0].mxu0 %v3325
        %v3960 = vpop.f32.mrb[0].mxu0
        %v3961 = vadd.f32 0.0, %v3960
        %v3962 = vpop.f32.mrb[0].mxu0
        %v3963 = vadd.f32 0.0, %v3962
        %v3964 = vpop.f32.mrb[0].mxu0
        %v3965 = vadd.f32 0.0, %v3964
        %v3966 = vpop.f32.mrb[0].mxu0
        %v3967 = vadd.f32 0.0, %v3966
        %3968 = vmatprep.mubr.bf16.mxu0 0
        %3969 = vmatmul.mubr.bf16.gmra.mrb[0].mxu0 %v3326
        %v3970 = vpop.f32.mrb[0].mxu0
        %v3971 = vadd.f32 0.0, %v3970
        %v3972 = vpop.f32.mrb[0].mxu0
        %v3973 = vadd.f32 0.0, %v3972
        %v3974 = vpop.f32.mrb[0].mxu0
        %v3975 = vadd.f32 0.0, %v3974
        %v3976 = vpop.f32.mrb[0].mxu0
        %v3977 = vadd.f32 0.0, %v3976
        %3978 = vmatprep.mubr.bf16.mxu0 0
        %3979 = vmatmul.mubr.bf16.gmra.mrb[0].mxu0 %v3327
        %v3980 = vpop.f32.mrb[0].mxu0
        %v3981 = vadd.f32 0.0, %v3980
        %v3982 = vpop.f32.mrb[0].mxu0
        %v3983 = vadd.f32 0.0, %v3982
        %v3984 = vpop.f32.mrb[0].mxu0
        %v3985 = vadd.f32 0.0, %v3984
        %v3986 = vpop.f32.mrb[0].mxu0
        %v3987 = vadd.f32 0.0, %v3986
        %3988 = vmatprep.mubr.bf16.mxu0 0
        %3989 = vmatmul.mubr.bf16.gmra.mrb[0].mxu0 %v3328
        %v3990 = vpop.f32.mrb[0].mxu0
        %v3991 = vadd.f32 0.0, %v3990
        %v3992 = vpop.f32.mrb[0].mxu0
        %v3993 = vadd.f32 0.0, %v3992
        %v3994 = vpop.f32.mrb[0].mxu0
        %v3995 = vadd.f32 0.0, %v3994
        %v3996 = vpop.f32.mrb[0].mxu0
        %v3997 = vadd.f32 0.0, %v3996
        %3998 = vmatprep.mubr.bf16.mxu0 0
        %3999 = vmatmul.mubr.bf16.gmra.mrb[0].mxu0 %v3329
        %v4000 = vpop.f32.mrb[0].mxu0
        %v4001 = vadd.f32 0.0, %v4000
        %v4002 = vpop.f32.mrb[0].mxu0
        %v4003 = vadd.f32 0.0, %v4002
        %v4004 = vpop.f32.mrb[0].mxu0
        %v4005 = vadd.f32 0.0, %v4004
        %v4006 = vpop.f32.mrb[0].mxu0
        %v4007 = vadd.f32 0.0, %v4006
        %4008 = vmatprep.mubr.bf16.mxu0 0
        %4009 = vmatmul.mubr.bf16.gmra.mrb[0].mxu0 %v3330
        %v4010 = vpop.f32.mrb[0].mxu0
        %v4011 = vadd.f32 0.0, %v4010
        %v4012 = vpop.f32.mrb[0].mxu0
        %v4013 = vadd.f32 0.0, %v4012
        %v4014 = vpop.f32.mrb[0].mxu0
        %v4015 = vadd.f32 0.0, %v4014
        %v4016 = vpop.f32.mrb[0].mxu0
        %v4017 = vadd.f32 0.0, %v4016
        %4018 = vmatprep.mubr.bf16.mxu0 0
        %4019 = vmatmul.mubr.bf16.gmra.mrb[0].mxu0 %v3331
        %v4020 = vpop.f32.mrb[0].mxu0
        %v4021 = vadd.f32 0.0, %v4020
        %v4022 = vpop.f32.mrb[0].mxu0
        %v4023 = vadd.f32 0.0, %v4022
        %v4024 = vpop.f32.mrb[0].mxu0
        %v4025 = vadd.f32 0.0, %v4024
        %v4026 = vpop.f32.mrb[0].mxu0
        %v4027 = vadd.f32 0.0, %v4026
        %4028 = vmatprep.mubr.bf16.mxu0 0
        %4029 = vmatmul.mubr.bf16.gmra.mrb[0].mxu0 %v3332
        %v4030 = vpop.f32.mrb[0].mxu0
        %v4031 = vadd.f32 0.0, %v4030
        %v4032 = vpop.f32.mrb[0].mxu0
        %v4033 = vadd.f32 0.0, %v4032
        %v4034 = vpop.f32.mrb[0].mxu0
        %v4035 = vadd.f32 0.0, %v4034
        %v4036 = vpop.f32.mrb[0].mxu0
        %v4037 = vadd.f32 0.0, %v4036
        %4038 = vmatprep.mubr.bf16.mxu0 0
        %4039 = vmatmul.mubr.bf16.gmra.mrb[0].mxu0 %v3819
        %v4040 = vpop.f32.mrb[0].mxu0
        %v4041 = vadd.f32 0.0, %v4040
        %v4042 = vpop.f32.mrb[0].mxu0
        %v4043 = vadd.f32 0.0, %v4042
        %v4044 = vpop.f32.mrb[0].mxu0
        %v4045 = vadd.f32 0.0, %v4044
        %v4046 = vpop.f32.mrb[0].mxu0
        %v4047 = vadd.f32 0.0, %v4046
        %4048 = vdwg.mxu0
        %v4049 = vadd.f32 %v3721, %v3951
        %v4050 = vadd.f32 %v3723, %v3953
        %v4051 = vadd.f32 %v3725, %v3955
        %v4052 = vadd.f32 %v3727, %v3957
        %v4053 = vadd.f32 %v3731, %v3961
        %v4054 = vadd.f32 %v3733, %v3963
        %v4055 = vadd.f32 %v3735, %v3965
        %v4056 = vadd.f32 %v3737, %v3967
        %v4057 = vadd.f32 %v3741, %v3971
        %v4058 = vadd.f32 %v3743, %v3973
        %v4059 = vadd.f32 %v3745, %v3975
        %v4060 = vadd.f32 %v3747, %v3977
        %v4061 = vadd.f32 %v3751, %v3981
        %v4062 = vadd.f32 %v3753, %v3983
        %v4063 = vadd.f32 %v3755, %v3985
        %v4064 = vadd.f32 %v3757, %v3987
        %v4065 = vadd.f32 %v3761, %v3991
        %v4066 = vadd.f32 %v3763, %v3993
        %v4067 = vadd.f32 %v3765, %v3995
        %v4068 = vadd.f32 %v3767, %v3997
        %v4069 = vadd.f32 %v3771, %v4001
        %v4070 = vadd.f32 %v3773, %v4003
        %v4071 = vadd.f32 %v3775, %v4005
        %v4072 = vadd.f32 %v3777, %v4007
        %v4073 = vadd.f32 %v3781, %v4011
        %v4074 = vadd.f32 %v3783, %v4013
        %v4075 = vadd.f32 %v3785, %v4015
        %v4076 = vadd.f32 %v3787, %v4017
        %v4077 = vadd.f32 %v3791, %v4021
        %v4078 = vadd.f32 %v3793, %v4023
        %v4079 = vadd.f32 %v3795, %v4025
        %v4080 = vadd.f32 %v3797, %v4027
        %v4081 = vadd.f32 %v3801, %v4031
        %v4082 = vadd.f32 %v3803, %v4033
        %v4083 = vadd.f32 %v3805, %v4035
        %v4084 = vadd.f32 %v3807, %v4037
        %v4085 = vadd.f32 %v3811, %v4041
        %v4086 = vadd.f32 %v3813, %v4043
        %v4087 = vadd.f32 %v3815, %v4045
        %v4088 = vadd.f32 %v3817, %v4047
        %v4089 = vld [vmem:[#allocation17] sm:$0x3]
        %v4091 = vlaneseq
        %v4092 = vshrl.u32 %v4091, 7
        %v4093 = vsub.s32 0, %v4092
        %v4094 = vrot.slane %v4089, %v4093
        %v4095 = vlaneseq
        %v4096 = vshrl.u32 %v4095, 7
        %v4097 = vsub.s32 1, %v4096
        %v4098 = vrot.slane %v4089, %v4097
        %v4101 = vadd.f32 %v4049, %v4094
        %v4102 = vadd.f32 %v4050, %v4098
        %v4103 = vadd.f32 %v4051, %v4094
        %v4104 = vadd.f32 %v4052, %v4098
        %v4105 = vadd.f32 %v4053, %v4094
        %v4106 = vadd.f32 %v4054, %v4098
        %v4107 = vadd.f32 %v4055, %v4094
        %v4108 = vadd.f32 %v4056, %v4098
        %v4109 = vadd.f32 %v4057, %v4094
        %v4110 = vadd.f32 %v4058, %v4098
        %v4111 = vadd.f32 %v4059, %v4094
        %v4112 = vadd.f32 %v4060, %v4098
        %v4113 = vadd.f32 %v4061, %v4094
        %v4114 = vadd.f32 %v4062, %v4098
        %v4115 = vadd.f32 %v4063, %v4094
        %v4116 = vadd.f32 %v4064, %v4098
        %v4117 = vadd.f32 %v4065, %v4094
        %v4118 = vadd.f32 %v4066, %v4098
        %v4119 = vadd.f32 %v4067, %v4094
        %v4120 = vadd.f32 %v4068, %v4098
        %v4121 = vadd.f32 %v4069, %v4094
        %v4122 = vadd.f32 %v4070, %v4098
        %v4123 = vadd.f32 %v4071, %v4094
        %v4124 = vadd.f32 %v4072, %v4098
        %v4125 = vadd.f32 %v4073, %v4094
        %v4126 = vadd.f32 %v4074, %v4098
        %v4127 = vadd.f32 %v4075, %v4094
        %v4128 = vadd.f32 %v4076, %v4098
        %v4129 = vadd.f32 %v4077, %v4094
        %v4130 = vadd.f32 %v4078, %v4098
        %v4131 = vadd.f32 %v4079, %v4094
        %v4132 = vadd.f32 %v4080, %v4098
        %v4133 = vadd.f32 %v4081, %v4094
        %v4134 = vadd.f32 %v4082, %v4098
        %v4135 = vadd.f32 %v4083, %v4094
        %v4136 = vadd.f32 %v4084, %v4098
        %v4137 = vadd.f32 %v4085, %v4094
        %v4138 = vadd.f32 %v4086, %v4098
        %v4139 = vadd.f32 %v4087, %v4094
        %v4140 = vadd.f32 %v4088, %v4098
        %v4141 = vmax.f32 %v4101, 0.0
        %v4142 = vmax.f32 %v4102, 0.0
        %v4143 = vmax.f32 %v4103, 0.0
        %v4144 = vmax.f32 %v4104, 0.0
        %v4145 = vmax.f32 %v4105, 0.0
        %v4146 = vmax.f32 %v4106, 0.0
        %v4147 = vmax.f32 %v4107, 0.0
        %v4148 = vmax.f32 %v4108, 0.0
        %v4149 = vmax.f32 %v4109, 0.0
        %v4150 = vmax.f32 %v4110, 0.0
        %v4151 = vmax.f32 %v4111, 0.0
        %v4152 = vmax.f32 %v4112, 0.0
        %v4153 = vmax.f32 %v4113, 0.0
        %v4154 = vmax.f32 %v4114, 0.0
        %v4155 = vmax.f32 %v4115, 0.0
        %v4156 = vmax.f32 %v4116, 0.0
        %v4157 = vmax.f32 %v4117, 0.0
        %v4158 = vmax.f32 %v4118, 0.0
        %v4159 = vmax.f32 %v4119, 0.0
        %v4160 = vmax.f32 %v4120, 0.0
        %v4161 = vmax.f32 %v4121, 0.0
        %v4162 = vmax.f32 %v4122, 0.0
        %v4163 = vmax.f32 %v4123, 0.0
        %v4164 = vmax.f32 %v4124, 0.0
        %v4165 = vmax.f32 %v4125, 0.0
        %v4166 = vmax.f32 %v4126, 0.0
        %v4167 = vmax.f32 %v4127, 0.0
        %v4168 = vmax.f32 %v4128, 0.0
        %v4169 = vmax.f32 %v4129, 0.0
        %v4170 = vmax.f32 %v4130, 0.0
        %v4171 = vmax.f32 %v4131, 0.0
        %v4172 = vmax.f32 %v4132, 0.0
        %v4173 = vmax.f32 %v4133, 0.0
        %v4174 = vmax.f32 %v4134, 0.0
        %v4175 = vmax.f32 %v4135, 0.0
        %v4176 = vmax.f32 %v4136, 0.0
        %v4177 = vmax.f32 %v4137, 0.0
        %v4178 = vmax.f32 %v4138, 0.0
        %v4179 = vmax.f32 %v4139, 0.0
        %v4180 = vmax.f32 %v4140, 0.0
        %4181 = vst [vmem:[#allocation6] sm:$0xff] %v4141
        %4182 = vst [vmem:[#allocation6 + $0x8] sm:$0xff] %v4142
        %4183 = vst [vmem:[#allocation6 + $0x10] sm:$0xff] %v4143
        %4184 = vst [vmem:[#allocation6 + $0x18] sm:$0xff] %v4144
        %4185 = vst [vmem:[#allocation6 + $0x20] sm:$0xff] %v4145
        %4186 = vst [vmem:[#allocation6 + $0x28] sm:$0xff] %v4146
        %4187 = vst [vmem:[#allocation6 + $0x30] sm:$0xff] %v4147
        %4188 = vst [vmem:[#allocation6 + $0x38] sm:$0xff] %v4148
        %4189 = vst [vmem:[#allocation6 + $0x40] sm:$0xff] %v4149
        %4190 = vst [vmem:[#allocation6 + $0x48] sm:$0xff] %v4150
        %4191 = vst [vmem:[#allocation6 + $0x50] sm:$0xff] %v4151
        %4192 = vst [vmem:[#allocation6 + $0x58] sm:$0xff] %v4152
        %4193 = vst [vmem:[#allocation6 + $0x60] sm:$0xff] %v4153
        %4194 = vst [vmem:[#allocation6 + $0x68] sm:$0xff] %v4154
        %4195 = vst [vmem:[#allocation6 + $0x70] sm:$0xff] %v4155
        %4196 = vst [vmem:[#allocation6 + $0x78] sm:$0xff] %v4156
        %4197 = vst [vmem:[#allocation6 + $0x80] sm:$0xff] %v4157
        %4198 = vst [vmem:[#allocation6 + $0x88] sm:$0xff] %v4158
        %4199 = vst [vmem:[#allocation6 + $0x90] sm:$0xff] %v4159
        %4200 = vst [vmem:[#allocation6 + $0x98] sm:$0xff] %v4160
        %4201 = vst [vmem:[#allocation6 + $0xa0] sm:$0xff] %v4161
        %4202 = vst [vmem:[#allocation6 + $0xa8] sm:$0xff] %v4162
        %4203 = vst [vmem:[#allocation6 + $0xb0] sm:$0xff] %v4163
        %4204 = vst [vmem:[#allocation6 + $0xb8] sm:$0xff] %v4164
        %4205 = vst [vmem:[#allocation6 + $0xc0] sm:$0xff] %v4165
        %4206 = vst [vmem:[#allocation6 + $0xc8] sm:$0xff] %v4166
        %4207 = vst [vmem:[#allocation6 + $0xd0] sm:$0xff] %v4167
        %4208 = vst [vmem:[#allocation6 + $0xd8] sm:$0xff] %v4168
        %4209 = vst [vmem:[#allocation6 + $0xe0] sm:$0xff] %v4169
        %4210 = vst [vmem:[#allocation6 + $0xe8] sm:$0xff] %v4170
        %4211 = vst [vmem:[#allocation6 + $0xf0] sm:$0xff] %v4171
        %4212 = vst [vmem:[#allocation6 + $0xf8] sm:$0xff] %v4172
        %4213 = vst [vmem:[#allocation6 + $0x100] sm:$0xff] %v4173
        %4214 = vst [vmem:[#allocation6 + $0x108] sm:$0xff] %v4174
        %4215 = vst [vmem:[#allocation6 + $0x110] sm:$0xff] %v4175
        %4216 = vst [vmem:[#allocation6 + $0x118] sm:$0xff] %v4176
        %4217 = vst [vmem:[#allocation6 + $0x120] sm:$0xff] %v4177
        %4218 = vst [vmem:[#allocation6 + $0x128] sm:$0xff] %v4178
        %4219 = vst [vmem:[#allocation6 + $0x130] sm:$0xff] %v4179
        %4220 = vst [vmem:[#allocation6 + $0x138] sm:$0xff] %v4180
        %v4221 = vld [vmem:[#allocation6] sm:$0xff]
        %v4222 = vld [vmem:[#allocation6 + $0x8] sm:$0xff]
        %v4223 = vld [vmem:[#allocation6 + $0x10] sm:$0xff]
        %v4224 = vld [vmem:[#allocation6 + $0x18] sm:$0xff]
        %v4225 = vmax.f32 %v4221, %v4223
        %v4226 = vmax.f32 %v4222, %v4224
        %v4227 = vpack.c.bf16 %v4225, %v4225
        %v4228 = vpack.c.bf16 %v4226, %v4226
        %v4231 = vunpack.c.l.b16 %v4227
        %v4232 = vunpack.c.l.b16 %v4228
        %v4233 = vpack.c.b16 %v4232, %v4231
        %4235 = vst [vmem:[#allocation7] sm:$0xff] %v4233
        %v4236 = vld [vmem:[#allocation6 + $0x20] sm:$0xff]
        %v4237 = vld [vmem:[#allocation6 + $0x28] sm:$0xff]
        %v4238 = vld [vmem:[#allocation6 + $0x30] sm:$0xff]
        %v4239 = vld [vmem:[#allocation6 + $0x38] sm:$0xff]
        %v4240 = vmax.f32 %v4236, %v4238
        %v4241 = vmax.f32 %v4237, %v4239
        %v4242 = vpack.c.bf16 %v4240, %v4240
        %v4243 = vpack.c.bf16 %v4241, %v4241
        %v4246 = vunpack.c.l.b16 %v4242
        %v4247 = vunpack.c.l.b16 %v4243
        %v4248 = vpack.c.b16 %v4247, %v4246
        %4250 = vst [vmem:[#allocation7 + $0x8] sm:$0xff] %v4248
        %v4251 = vld [vmem:[#allocation6 + $0x40] sm:$0xff]
        %v4252 = vld [vmem:[#allocation6 + $0x48] sm:$0xff]
        %v4253 = vld [vmem:[#allocation6 + $0x50] sm:$0xff]
        %v4254 = vld [vmem:[#allocation6 + $0x58] sm:$0xff]
        %v4255 = vmax.f32 %v4251, %v4253
        %v4256 = vmax.f32 %v4252, %v4254
        %v4257 = vpack.c.bf16 %v4255, %v4255
        %v4258 = vpack.c.bf16 %v4256, %v4256
        %v4261 = vunpack.c.l.b16 %v4257
        %v4262 = vunpack.c.l.b16 %v4258
        %v4263 = vpack.c.b16 %v4262, %v4261
        %4265 = vst [vmem:[#allocation7 + $0x10] sm:$0xff] %v4263
        %v4266 = vld [vmem:[#allocation6 + $0x60] sm:$0xff]
        %v4267 = vld [vmem:[#allocation6 + $0x68] sm:$0xff]
        %v4268 = vld [vmem:[#allocation6 + $0x70] sm:$0xff]
        %v4269 = vld [vmem:[#allocation6 + $0x78] sm:$0xff]
        %v4270 = vmax.f32 %v4266, %v4268
        %v4271 = vmax.f32 %v4267, %v4269
        %v4272 = vpack.c.bf16 %v4270, %v4270
        %v4273 = vpack.c.bf16 %v4271, %v4271
        %v4276 = vunpack.c.l.b16 %v4272
        %v4277 = vunpack.c.l.b16 %v4273
        %v4278 = vpack.c.b16 %v4277, %v4276
        %4280 = vst [vmem:[#allocation7 + $0x18] sm:$0xff] %v4278
        %v4281 = vld [vmem:[#allocation6 + $0x80] sm:$0xff]
        %v4282 = vld [vmem:[#allocation6 + $0x88] sm:$0xff]
        %v4283 = vld [vmem:[#allocation6 + $0x90] sm:$0xff]
        %v4284 = vld [vmem:[#allocation6 + $0x98] sm:$0xff]
        %v4285 = vmax.f32 %v4281, %v4283
        %v4286 = vmax.f32 %v4282, %v4284
        %v4287 = vpack.c.bf16 %v4285, %v4285
        %v4288 = vpack.c.bf16 %v4286, %v4286
        %v4291 = vunpack.c.l.b16 %v4287
        %v4292 = vunpack.c.l.b16 %v4288
        %v4293 = vpack.c.b16 %v4292, %v4291
        %4295 = vst [vmem:[#allocation7 + $0x20] sm:$0xff] %v4293
        %v4296 = vld [vmem:[#allocation6 + $0xa0] sm:$0xff]
        %v4297 = vld [vmem:[#allocation6 + $0xa8] sm:$0xff]
        %v4298 = vld [vmem:[#allocation6 + $0xb0] sm:$0xff]
        %v4299 = vld [vmem:[#allocation6 + $0xb8] sm:$0xff]
        %v4300 = vmax.f32 %v4296, %v4298
        %v4301 = vmax.f32 %v4297, %v4299
        %v4302 = vpack.c.bf16 %v4300, %v4300
        %v4303 = vpack.c.bf16 %v4301, %v4301
        %v4306 = vunpack.c.l.b16 %v4302
        %v4307 = vunpack.c.l.b16 %v4303
        %v4308 = vpack.c.b16 %v4307, %v4306
        %4310 = vst [vmem:[#allocation7 + $0x28] sm:$0xff] %v4308
        %v4311 = vld [vmem:[#allocation6 + $0xc0] sm:$0xff]
        %v4312 = vld [vmem:[#allocation6 + $0xc8] sm:$0xff]
        %v4313 = vld [vmem:[#allocation6 + $0xd0] sm:$0xff]
        %v4314 = vld [vmem:[#allocation6 + $0xd8] sm:$0xff]
        %v4315 = vmax.f32 %v4311, %v4313
        %v4316 = vmax.f32 %v4312, %v4314
        %v4317 = vpack.c.bf16 %v4315, %v4315
        %v4318 = vpack.c.bf16 %v4316, %v4316
        %v4321 = vunpack.c.l.b16 %v4317
        %v4322 = vunpack.c.l.b16 %v4318
        %v4323 = vpack.c.b16 %v4322, %v4321
        %4325 = vst [vmem:[#allocation7 + $0x30] sm:$0xff] %v4323
        %v4326 = vld [vmem:[#allocation6 + $0xe0] sm:$0xff]
        %v4327 = vld [vmem:[#allocation6 + $0xe8] sm:$0xff]
        %v4328 = vld [vmem:[#allocation6 + $0xf0] sm:$0xff]
        %v4329 = vld [vmem:[#allocation6 + $0xf8] sm:$0xff]
        %v4330 = vmax.f32 %v4326, %v4328
        %v4331 = vmax.f32 %v4327, %v4329
        %v4332 = vpack.c.bf16 %v4330, %v4330
        %v4333 = vpack.c.bf16 %v4331, %v4331
        %v4336 = vunpack.c.l.b16 %v4332
        %v4337 = vunpack.c.l.b16 %v4333
        %v4338 = vpack.c.b16 %v4337, %v4336
        %4340 = vst [vmem:[#allocation7 + $0x38] sm:$0xff] %v4338
        %v4341 = vld [vmem:[#allocation6 + $0x100] sm:$0xff]
        %v4342 = vld [vmem:[#allocation6 + $0x108] sm:$0xff]
        %v4343 = vld [vmem:[#allocation6 + $0x110] sm:$0xff]
        %v4344 = vld [vmem:[#allocation6 + $0x118] sm:$0xff]
        %v4345 = vmax.f32 %v4341, %v4343
        %v4346 = vmax.f32 %v4342, %v4344
        %v4347 = vpack.c.bf16 %v4345, %v4345
        %v4348 = vpack.c.bf16 %v4346, %v4346
        %v4351 = vunpack.c.l.b16 %v4347
        %v4352 = vunpack.c.l.b16 %v4348
        %v4353 = vpack.c.b16 %v4352, %v4351
        %4355 = vst [vmem:[#allocation7 + $0x40] sm:$0xff] %v4353
        %v4356 = vld [vmem:[#allocation6 + $0x120] sm:$0xff]
        %v4357 = vld [vmem:[#allocation6 + $0x128] sm:$0xff]
        %v4358 = vld [vmem:[#allocation6 + $0x130] sm:$0xff]
        %v4359 = vld [vmem:[#allocation6 + $0x138] sm:$0xff]
        %v4360 = vmax.f32 %v4356, %v4358
        %v4361 = vmax.f32 %v4357, %v4359
        %v4362 = vpack.c.bf16 %v4360, %v4360
        %v4363 = vpack.c.bf16 %v4361, %v4361
        %v4366 = vunpack.c.l.b16 %v4362
        %v4367 = vunpack.c.l.b16 %v4363
        %v4368 = vpack.c.b16 %v4367, %v4366
        %4370 = vst [vmem:[#allocation7 + $0x48] sm:$0xff] %v4368
        %v4371 = vld [vmem:[#allocation7] sm:$0xff]
        %v4372 = vld [vmem:[#allocation7 + $0x8] sm:$0xff]
        %v4373 = vld [vmem:[#allocation7 + $0x10] sm:$0xff]
        %v4374 = vld [vmem:[#allocation7 + $0x18] sm:$0xff]
        %v4375 = vld [vmem:[#allocation7 + $0x20] sm:$0xff]
        %v4376 = vld [vmem:[#allocation7 + $0x28] sm:$0xff]
        %v4377 = vld [vmem:[#allocation7 + $0x30] sm:$0xff]
        %v4378 = vld [vmem:[#allocation7 + $0x38] sm:$0xff]
        %v4379 = vld [vmem:[#allocation7 + $0x40] sm:$0xff]
        %v4380 = vld [vmem:[#allocation7 + $0x48] sm:$0xff]
        %v4381 = vld [vmem:[#allocation19] sm:$0xff]
        %v4382 = vld [vmem:[#allocation19 + $0x8] sm:$0xff]
        %v4383 = vld [vmem:[#allocation19 + $0x10] sm:$0xff]
        %v4384 = vld [vmem:[#allocation19 + $0x18] sm:$0xff]
        %v4385 = vld [vmem:[#allocation19 + $0x20] sm:$0xff]
        %v4386 = vld [vmem:[#allocation19 + $0x28] sm:$0xff]
        %v4387 = vld [vmem:[#allocation19 + $0x30] sm:$0xff]
        %v4388 = vld [vmem:[#allocation19 + $0x38] sm:$0xff]
        %v4389 = vld [vmem:[#allocation19 + $0x40] sm:$0xff]
        %v4390 = vld [vmem:[#allocation19 + $0x48] sm:$0xff]
        %v4391 = vld [vmem:[#allocation19 + $0x50] sm:$0xff]
        %v4392 = vld [vmem:[#allocation19 + $0x58] sm:$0xff]
        %v4393 = vld [vmem:[#allocation19 + $0x60] sm:$0xff]
        %v4394 = vld [vmem:[#allocation19 + $0x68] sm:$0xff]
        %v4395 = vld [vmem:[#allocation19 + $0x70] sm:$0xff]
        %v4396 = vld [vmem:[#allocation19 + $0x78] sm:$0xff]
        %v4397 = vld [vmem:[#allocation19 + $0x80] sm:$0xff]
        %v4398 = vld [vmem:[#allocation19 + $0x88] sm:$0xff]
        %v4399 = vld [vmem:[#allocation19 + $0x90] sm:$0xff]
        %v4400 = vld [vmem:[#allocation19 + $0x98] sm:$0xff]
        %v4401 = vld [vmem:[#allocation19 + $0xa0] sm:$0xff]
        %v4402 = vld [vmem:[#allocation19 + $0xa8] sm:$0xff]
        %v4403 = vld [vmem:[#allocation19 + $0xb0] sm:$0xff]
        %v4404 = vld [vmem:[#allocation19 + $0xb8] sm:$0xff]
        %v4405 = vld [vmem:[#allocation19 + $0xc0] sm:$0xff]
        %v4406 = vld [vmem:[#allocation19 + $0xc8] sm:$0xff]
        %v4407 = vld [vmem:[#allocation19 + $0xd0] sm:$0xff]
        %v4408 = vld [vmem:[#allocation19 + $0xd8] sm:$0xff]
        %v4409 = vld [vmem:[#allocation19 + $0xe0] sm:$0xff]
        %v4410 = vld [vmem:[#allocation19 + $0xe8] sm:$0xff]
        %v4411 = vld [vmem:[#allocation19 + $0xf0] sm:$0xff]
        %v4412 = vld [vmem:[#allocation19 + $0xf8] sm:$0xff]
        %v4413 = vld [vmem:[#allocation19 + $0x100] sm:$0xff]
        %v4414 = vld [vmem:[#allocation19 + $0x108] sm:$0xff]
        %v4415 = vld [vmem:[#allocation19 + $0x110] sm:$0xff]
        %v4416 = vld [vmem:[#allocation19 + $0x118] sm:$0xff]
        %v4417 = vld [vmem:[#allocation19 + $0x120] sm:$0xff]
        %v4418 = vld [vmem:[#allocation19 + $0x128] sm:$0xff]
        %v4419 = vld [vmem:[#allocation19 + $0x130] sm:$0xff]
        %v4420 = vld [vmem:[#allocation19 + $0x138] sm:$0xff]
        %v4421 = vld [vmem:[#allocation19 + $0x140] sm:$0xff]
        %v4422 = vld [vmem:[#allocation19 + $0x148] sm:$0xff]
        %v4423 = vld [vmem:[#allocation19 + $0x150] sm:$0xff]
        %v4424 = vld [vmem:[#allocation19 + $0x158] sm:$0xff]
        %v4425 = vld [vmem:[#allocation19 + $0x160] sm:$0xff]
        %v4426 = vld [vmem:[#allocation19 + $0x168] sm:$0xff]
        %v4427 = vld [vmem:[#allocation19 + $0x170] sm:$0xff]
        %v4428 = vld [vmem:[#allocation19 + $0x178] sm:$0xff]
        %v4429 = vld [vmem:[#allocation19 + $0x180] sm:$0xff]
        %v4430 = vld [vmem:[#allocation19 + $0x188] sm:$0xff]
        %v4431 = vld [vmem:[#allocation19 + $0x190] sm:$0xff]
        %v4432 = vld [vmem:[#allocation19 + $0x198] sm:$0xff]
        %v4433 = vld [vmem:[#allocation19 + $0x1a0] sm:$0xff]
        %v4434 = vld [vmem:[#allocation19 + $0x1a8] sm:$0xff]
        %v4435 = vld [vmem:[#allocation19 + $0x1b0] sm:$0xff]
        %v4436 = vld [vmem:[#allocation19 + $0x1b8] sm:$0xff]
        %v4437 = vld [vmem:[#allocation19 + $0x1c0] sm:$0xff]
        %v4438 = vld [vmem:[#allocation19 + $0x1c8] sm:$0xff]
        %v4439 = vld [vmem:[#allocation19 + $0x1d0] sm:$0xff]
        %v4440 = vld [vmem:[#allocation19 + $0x1d8] sm:$0xff]
        %v4441 = vld [vmem:[#allocation19 + $0x1e0] sm:$0xff]
        %v4442 = vld [vmem:[#allocation19 + $0x1e8] sm:$0xff]
        %v4443 = vld [vmem:[#allocation19 + $0x1f0] sm:$0xff]
        %v4444 = vld [vmem:[#allocation19 + $0x1f8] sm:$0xff]
        %v4445 = vld [vmem:[#allocation19 + $0x200] sm:$0xff]
        %v4446 = vld [vmem:[#allocation19 + $0x208] sm:$0xff]
        %v4447 = vld [vmem:[#allocation19 + $0x210] sm:$0xff]
        %v4448 = vld [vmem:[#allocation19 + $0x218] sm:$0xff]
        %v4449 = vld [vmem:[#allocation19 + $0x220] sm:$0xff]
        %v4450 = vld [vmem:[#allocation19 + $0x228] sm:$0xff]
        %v4451 = vld [vmem:[#allocation19 + $0x230] sm:$0xff]
        %v4452 = vld [vmem:[#allocation19 + $0x238] sm:$0xff]
        %v4453 = vld [vmem:[#allocation19 + $0x240] sm:$0xff]
        %v4454 = vld [vmem:[#allocation19 + $0x248] sm:$0xff]
        %v4455 = vld [vmem:[#allocation19 + $0x250] sm:$0xff]
        %v4456 = vld [vmem:[#allocation19 + $0x258] sm:$0xff]
        %v4457 = vld [vmem:[#allocation19 + $0x260] sm:$0xff]
        %v4458 = vld [vmem:[#allocation19 + $0x268] sm:$0xff]
        %v4459 = vld [vmem:[#allocation19 + $0x270] sm:$0xff]
        %v4460 = vld [vmem:[#allocation19 + $0x278] sm:$0xff]
        %v4461 = vld [vmem:[#allocation19 + $0x280] sm:$0xff]
        %v4462 = vld [vmem:[#allocation19 + $0x288] sm:$0xff]
        %v4463 = vld [vmem:[#allocation19 + $0x290] sm:$0xff]
        %v4464 = vld [vmem:[#allocation19 + $0x298] sm:$0xff]
        %v4465 = vld [vmem:[#allocation19 + $0x2a0] sm:$0xff]
        %v4466 = vld [vmem:[#allocation19 + $0x2a8] sm:$0xff]
        %v4467 = vld [vmem:[#allocation19 + $0x2b0] sm:$0xff]
        %v4468 = vld [vmem:[#allocation19 + $0x2b8] sm:$0xff]
        %v4469 = vld [vmem:[#allocation19 + $0x2c0] sm:$0xff]
        %v4470 = vld [vmem:[#allocation19 + $0x2c8] sm:$0xff]
        %v4471 = vld [vmem:[#allocation19 + $0x2d0] sm:$0xff]
        %v4472 = vld [vmem:[#allocation19 + $0x2d8] sm:$0xff]
        %v4473 = vld [vmem:[#allocation19 + $0x2e0] sm:$0xff]
        %v4474 = vld [vmem:[#allocation19 + $0x2e8] sm:$0xff]
        %v4475 = vld [vmem:[#allocation19 + $0x2f0] sm:$0xff]
        %v4476 = vld [vmem:[#allocation19 + $0x2f8] sm:$0xff]
        %v4477 = vld [vmem:[#allocation19 + $0x300] sm:$0xff]
        %v4478 = vld [vmem:[#allocation19 + $0x308] sm:$0xff]
        %v4479 = vld [vmem:[#allocation19 + $0x310] sm:$0xff]
        %v4480 = vld [vmem:[#allocation19 + $0x318] sm:$0xff]
        %v4481 = vld [vmem:[#allocation19 + $0x320] sm:$0xff]
        %v4482 = vld [vmem:[#allocation19 + $0x328] sm:$0xff]
        %v4483 = vld [vmem:[#allocation19 + $0x330] sm:$0xff]
        %v4484 = vld [vmem:[#allocation19 + $0x338] sm:$0xff]
        %v4485 = vld [vmem:[#allocation19 + $0x340] sm:$0xff]
        %v4486 = vld [vmem:[#allocation19 + $0x348] sm:$0xff]
        %v4487 = vld [vmem:[#allocation19 + $0x350] sm:$0xff]
        %v4488 = vld [vmem:[#allocation19 + $0x358] sm:$0xff]
        %v4489 = vld [vmem:[#allocation19 + $0x360] sm:$0xff]
        %v4490 = vld [vmem:[#allocation19 + $0x368] sm:$0xff]
        %v4491 = vld [vmem:[#allocation19 + $0x370] sm:$0xff]
        %v4492 = vld [vmem:[#allocation19 + $0x378] sm:$0xff]
        %v4493 = vld [vmem:[#allocation19 + $0x380] sm:$0xff]
        %v4494 = vld [vmem:[#allocation19 + $0x388] sm:$0xff]
        %v4495 = vld [vmem:[#allocation19 + $0x390] sm:$0xff]
        %v4496 = vld [vmem:[#allocation19 + $0x398] sm:$0xff]
        %v4497 = vld [vmem:[#allocation19 + $0x3a0] sm:$0xff]
        %v4498 = vld [vmem:[#allocation19 + $0x3a8] sm:$0xff]
        %v4499 = vld [vmem:[#allocation19 + $0x3b0] sm:$0xff]
        %v4500 = vld [vmem:[#allocation19 + $0x3b8] sm:$0xff]
        %v4501 = vld [vmem:[#allocation19 + $0x3c0] sm:$0xff]
        %v4502 = vld [vmem:[#allocation19 + $0x3c8] sm:$0xff]
        %v4503 = vld [vmem:[#allocation19 + $0x3d0] sm:$0xff]
        %v4504 = vld [vmem:[#allocation19 + $0x3d8] sm:$0xff]
        %v4505 = vld [vmem:[#allocation19 + $0x3e0] sm:$0xff]
        %v4506 = vld [vmem:[#allocation19 + $0x3e8] sm:$0xff]
        %v4507 = vld [vmem:[#allocation19 + $0x3f0] sm:$0xff]
        %v4508 = vld [vmem:[#allocation19 + $0x3f8] sm:$0xff]
        %v4509 = vld [vmem:[#allocation19 + $0x400] sm:$0xff]
        %v4510 = vld [vmem:[#allocation19 + $0x408] sm:$0xff]
        %v4511 = vld [vmem:[#allocation19 + $0x410] sm:$0xff]
        %v4512 = vld [vmem:[#allocation19 + $0x418] sm:$0xff]
        %v4513 = vld [vmem:[#allocation19 + $0x420] sm:$0xff]
        %v4514 = vld [vmem:[#allocation19 + $0x428] sm:$0xff]
        %v4515 = vld [vmem:[#allocation19 + $0x430] sm:$0xff]
        %v4516 = vld [vmem:[#allocation19 + $0x438] sm:$0xff]
        %v4517 = vld [vmem:[#allocation19 + $0x440] sm:$0xff]
        %v4518 = vld [vmem:[#allocation19 + $0x448] sm:$0xff]
        %v4519 = vld [vmem:[#allocation19 + $0x450] sm:$0xff]
        %v4520 = vld [vmem:[#allocation19 + $0x458] sm:$0xff]
        %v4521 = vld [vmem:[#allocation19 + $0x460] sm:$0xff]
        %v4522 = vld [vmem:[#allocation19 + $0x468] sm:$0xff]
        %v4523 = vld [vmem:[#allocation19 + $0x470] sm:$0xff]
        %v4524 = vld [vmem:[#allocation19 + $0x478] sm:$0xff]
        %v4525 = vld [vmem:[#allocation19 + $0x480] sm:$0xff]
        %v4526 = vld [vmem:[#allocation19 + $0x488] sm:$0xff]
        %v4527 = vld [vmem:[#allocation19 + $0x490] sm:$0xff]
        %v4528 = vld [vmem:[#allocation19 + $0x498] sm:$0xff]
        %v4529 = vld [vmem:[#allocation19 + $0x4a0] sm:$0xff]
        %v4530 = vld [vmem:[#allocation19 + $0x4a8] sm:$0xff]
        %v4531 = vld [vmem:[#allocation19 + $0x4b0] sm:$0xff]
        %v4532 = vld [vmem:[#allocation19 + $0x4b8] sm:$0xff]
        %v4533 = vld [vmem:[#allocation19 + $0x4c0] sm:$0xff]
        %v4534 = vld [vmem:[#allocation19 + $0x4c8] sm:$0xff]
        %v4535 = vld [vmem:[#allocation19 + $0x4d0] sm:$0xff]
        %v4536 = vld [vmem:[#allocation19 + $0x4d8] sm:$0xff]
        %v4537 = vld [vmem:[#allocation19 + $0x4e0] sm:$0xff]
        %v4538 = vld [vmem:[#allocation19 + $0x4e8] sm:$0xff]
        %v4539 = vld [vmem:[#allocation19 + $0x4f0] sm:$0xff]
        %v4540 = vld [vmem:[#allocation19 + $0x4f8] sm:$0xff]
        %v4541 = vld [vmem:[#allocation19 + $0x500] sm:$0xff]
        %v4542 = vld [vmem:[#allocation19 + $0x508] sm:$0xff]
        %v4543 = vld [vmem:[#allocation19 + $0x510] sm:$0xff]
        %v4544 = vld [vmem:[#allocation19 + $0x518] sm:$0xff]
        %v4545 = vld [vmem:[#allocation19 + $0x520] sm:$0xff]
        %v4546 = vld [vmem:[#allocation19 + $0x528] sm:$0xff]
        %v4547 = vld [vmem:[#allocation19 + $0x530] sm:$0xff]
        %v4548 = vld [vmem:[#allocation19 + $0x538] sm:$0xff]
        %v4549 = vld [vmem:[#allocation19 + $0x540] sm:$0xff]
        %v4550 = vld [vmem:[#allocation19 + $0x548] sm:$0xff]
        %v4551 = vld [vmem:[#allocation19 + $0x550] sm:$0xff]
        %v4552 = vld [vmem:[#allocation19 + $0x558] sm:$0xff]
        %v4553 = vld [vmem:[#allocation19 + $0x560] sm:$0xff]
        %v4554 = vld [vmem:[#allocation19 + $0x568] sm:$0xff]
        %v4555 = vld [vmem:[#allocation19 + $0x570] sm:$0xff]
        %v4556 = vld [vmem:[#allocation19 + $0x578] sm:$0xff]
        %v4557 = vld [vmem:[#allocation19 + $0x580] sm:$0xff]
        %v4558 = vld [vmem:[#allocation19 + $0x588] sm:$0xff]
        %v4559 = vld [vmem:[#allocation19 + $0x590] sm:$0xff]
        %v4560 = vld [vmem:[#allocation19 + $0x598] sm:$0xff]
        %v4561 = vld [vmem:[#allocation19 + $0x5a0] sm:$0xff]
        %v4562 = vld [vmem:[#allocation19 + $0x5a8] sm:$0xff]
        %v4563 = vld [vmem:[#allocation19 + $0x5b0] sm:$0xff]
        %v4564 = vld [vmem:[#allocation19 + $0x5b8] sm:$0xff]
        %v4565 = vld [vmem:[#allocation19 + $0x5c0] sm:$0xff]
        %v4566 = vld [vmem:[#allocation19 + $0x5c8] sm:$0xff]
        %v4567 = vld [vmem:[#allocation19 + $0x5d0] sm:$0xff]
        %v4568 = vld [vmem:[#allocation19 + $0x5d8] sm:$0xff]
        %v4569 = vld [vmem:[#allocation19 + $0x5e0] sm:$0xff]
        %v4570 = vld [vmem:[#allocation19 + $0x5e8] sm:$0xff]
        %v4571 = vld [vmem:[#allocation19 + $0x5f0] sm:$0xff]
        %v4572 = vld [vmem:[#allocation19 + $0x5f8] sm:$0xff]
        %v4573 = vld [vmem:[#allocation19 + $0x600] sm:$0xff]
        %v4574 = vld [vmem:[#allocation19 + $0x608] sm:$0xff]
        %v4575 = vld [vmem:[#allocation19 + $0x610] sm:$0xff]
        %v4576 = vld [vmem:[#allocation19 + $0x618] sm:$0xff]
        %v4577 = vld [vmem:[#allocation19 + $0x620] sm:$0xff]
        %v4578 = vld [vmem:[#allocation19 + $0x628] sm:$0xff]
        %v4579 = vld [vmem:[#allocation19 + $0x630] sm:$0xff]
        %v4580 = vld [vmem:[#allocation19 + $0x638] sm:$0xff]
        %v4581 = vld [vmem:[#allocation19 + $0x640] sm:$0xff]
        %v4582 = vld [vmem:[#allocation19 + $0x648] sm:$0xff]
        %v4583 = vld [vmem:[#allocation19 + $0x650] sm:$0xff]
        %v4584 = vld [vmem:[#allocation19 + $0x658] sm:$0xff]
        %v4585 = vld [vmem:[#allocation19 + $0x660] sm:$0xff]
        %v4586 = vld [vmem:[#allocation19 + $0x668] sm:$0xff]
        %v4587 = vld [vmem:[#allocation19 + $0x670] sm:$0xff]
        %v4588 = vld [vmem:[#allocation19 + $0x678] sm:$0xff]
        %v4589 = vld [vmem:[#allocation19 + $0x680] sm:$0xff]
        %v4590 = vld [vmem:[#allocation19 + $0x688] sm:$0xff]
        %v4591 = vld [vmem:[#allocation19 + $0x690] sm:$0xff]
        %v4592 = vld [vmem:[#allocation19 + $0x698] sm:$0xff]
        %v4593 = vld [vmem:[#allocation19 + $0x6a0] sm:$0xff]
        %v4594 = vld [vmem:[#allocation19 + $0x6a8] sm:$0xff]
        %v4595 = vld [vmem:[#allocation19 + $0x6b0] sm:$0xff]
        %v4596 = vld [vmem:[#allocation19 + $0x6b8] sm:$0xff]
        %v4597 = vld [vmem:[#allocation19 + $0x6c0] sm:$0xff]
        %v4598 = vld [vmem:[#allocation19 + $0x6c8] sm:$0xff]
        %v4599 = vld [vmem:[#allocation19 + $0x6d0] sm:$0xff]
        %v4600 = vld [vmem:[#allocation19 + $0x6d8] sm:$0xff]
        %v4601 = vld [vmem:[#allocation19 + $0x6e0] sm:$0xff]
        %v4602 = vld [vmem:[#allocation19 + $0x6e8] sm:$0xff]
        %v4603 = vld [vmem:[#allocation19 + $0x6f0] sm:$0xff]
        %v4604 = vld [vmem:[#allocation19 + $0x6f8] sm:$0xff]
        %v4605 = vld [vmem:[#allocation19 + $0x700] sm:$0xff]
        %v4606 = vld [vmem:[#allocation19 + $0x708] sm:$0xff]
        %v4607 = vld [vmem:[#allocation19 + $0x710] sm:$0xff]
        %v4608 = vld [vmem:[#allocation19 + $0x718] sm:$0xff]
        %v4609 = vld [vmem:[#allocation19 + $0x720] sm:$0xff]
        %v4610 = vld [vmem:[#allocation19 + $0x728] sm:$0xff]
        %v4611 = vld [vmem:[#allocation19 + $0x730] sm:$0xff]
        %v4612 = vld [vmem:[#allocation19 + $0x738] sm:$0xff]
        %v4613 = vld [vmem:[#allocation19 + $0x740] sm:$0xff]
        %v4614 = vld [vmem:[#allocation19 + $0x748] sm:$0xff]
        %v4615 = vld [vmem:[#allocation19 + $0x750] sm:$0xff]
        %v4616 = vld [vmem:[#allocation19 + $0x758] sm:$0xff]
        %v4617 = vld [vmem:[#allocation19 + $0x760] sm:$0xff]
        %v4618 = vld [vmem:[#allocation19 + $0x768] sm:$0xff]
        %v4619 = vld [vmem:[#allocation19 + $0x770] sm:$0xff]
        %v4620 = vld [vmem:[#allocation19 + $0x778] sm:$0xff]
        %v4621 = vld [vmem:[#allocation19 + $0x780] sm:$0xff]
        %v4622 = vld [vmem:[#allocation19 + $0x788] sm:$0xff]
        %v4623 = vld [vmem:[#allocation19 + $0x790] sm:$0xff]
        %v4624 = vld [vmem:[#allocation19 + $0x798] sm:$0xff]
        %v4625 = vld [vmem:[#allocation19 + $0x7a0] sm:$0xff]
        %v4626 = vld [vmem:[#allocation19 + $0x7a8] sm:$0xff]
        %v4627 = vld [vmem:[#allocation19 + $0x7b0] sm:$0xff]
        %v4628 = vld [vmem:[#allocation19 + $0x7b8] sm:$0xff]
        %v4629 = vld [vmem:[#allocation19 + $0x7c0] sm:$0xff]
        %v4630 = vld [vmem:[#allocation19 + $0x7c8] sm:$0xff]
        %v4631 = vld [vmem:[#allocation19 + $0x7d0] sm:$0xff]
        %v4632 = vld [vmem:[#allocation19 + $0x7d8] sm:$0xff]
        %v4633 = vld [vmem:[#allocation19 + $0x7e0] sm:$0xff]
        %v4634 = vld [vmem:[#allocation19 + $0x7e8] sm:$0xff]
        %v4635 = vld [vmem:[#allocation19 + $0x7f0] sm:$0xff]
        %v4636 = vld [vmem:[#allocation19 + $0x7f8] sm:$0xff]
        %v4637 = vld [vmem:[#allocation19 + $0x800] sm:$0xff]
        %v4638 = vld [vmem:[#allocation19 + $0x808] sm:$0xff]
        %v4639 = vld [vmem:[#allocation19 + $0x810] sm:$0xff]
        %v4640 = vld [vmem:[#allocation19 + $0x818] sm:$0xff]
        %v4641 = vld [vmem:[#allocation19 + $0x820] sm:$0xff]
        %v4642 = vld [vmem:[#allocation19 + $0x828] sm:$0xff]
        %v4643 = vld [vmem:[#allocation19 + $0x830] sm:$0xff]
        %v4644 = vld [vmem:[#allocation19 + $0x838] sm:$0xff]
        %v4645 = vld [vmem:[#allocation19 + $0x840] sm:$0xff]
        %v4646 = vld [vmem:[#allocation19 + $0x848] sm:$0xff]
        %v4647 = vld [vmem:[#allocation19 + $0x850] sm:$0xff]
        %v4648 = vld [vmem:[#allocation19 + $0x858] sm:$0xff]
        %v4649 = vld [vmem:[#allocation19 + $0x860] sm:$0xff]
        %v4650 = vld [vmem:[#allocation19 + $0x868] sm:$0xff]
        %v4651 = vld [vmem:[#allocation19 + $0x870] sm:$0xff]
        %v4652 = vld [vmem:[#allocation19 + $0x878] sm:$0xff]
        %v4653 = vld [vmem:[#allocation19 + $0x880] sm:$0xff]
        %v4654 = vld [vmem:[#allocation19 + $0x888] sm:$0xff]
        %v4655 = vld [vmem:[#allocation19 + $0x890] sm:$0xff]
        %v4656 = vld [vmem:[#allocation19 + $0x898] sm:$0xff]
        %v4657 = vld [vmem:[#allocation19 + $0x8a0] sm:$0xff]
        %v4658 = vld [vmem:[#allocation19 + $0x8a8] sm:$0xff]
        %v4659 = vld [vmem:[#allocation19 + $0x8b0] sm:$0xff]
        %v4660 = vld [vmem:[#allocation19 + $0x8b8] sm:$0xff]
        %v4661 = vld [vmem:[#allocation19 + $0x8c0] sm:$0xff]
        %v4662 = vld [vmem:[#allocation19 + $0x8c8] sm:$0xff]
        %v4663 = vld [vmem:[#allocation19 + $0x8d0] sm:$0xff]
        %v4664 = vld [vmem:[#allocation19 + $0x8d8] sm:$0xff]
        %v4665 = vld [vmem:[#allocation19 + $0x8e0] sm:$0xff]
        %v4666 = vld [vmem:[#allocation19 + $0x8e8] sm:$0xff]
        %v4667 = vld [vmem:[#allocation19 + $0x8f0] sm:$0xff]
        %v4668 = vld [vmem:[#allocation19 + $0x8f8] sm:$0xff]
        %v4669 = vld [vmem:[#allocation19 + $0x900] sm:$0xff]
        %v4670 = vld [vmem:[#allocation19 + $0x908] sm:$0xff]
        %v4671 = vld [vmem:[#allocation19 + $0x910] sm:$0xff]
        %v4672 = vld [vmem:[#allocation19 + $0x918] sm:$0xff]
        %v4673 = vld [vmem:[#allocation19 + $0x920] sm:$0xff]
        %v4674 = vld [vmem:[#allocation19 + $0x928] sm:$0xff]
        %v4675 = vld [vmem:[#allocation19 + $0x930] sm:$0xff]
        %v4676 = vld [vmem:[#allocation19 + $0x938] sm:$0xff]
        %v4677 = vld [vmem:[#allocation19 + $0x940] sm:$0xff]
        %v4678 = vld [vmem:[#allocation19 + $0x948] sm:$0xff]
        %v4679 = vld [vmem:[#allocation19 + $0x950] sm:$0xff]
        %v4680 = vld [vmem:[#allocation19 + $0x958] sm:$0xff]
        %v4681 = vld [vmem:[#allocation19 + $0x960] sm:$0xff]
        %v4682 = vld [vmem:[#allocation19 + $0x968] sm:$0xff]
        %v4683 = vld [vmem:[#allocation19 + $0x970] sm:$0xff]
        %v4684 = vld [vmem:[#allocation19 + $0x978] sm:$0xff]
        %v4685 = vld [vmem:[#allocation19 + $0x980] sm:$0xff]
        %v4686 = vld [vmem:[#allocation19 + $0x988] sm:$0xff]
        %v4687 = vld [vmem:[#allocation19 + $0x990] sm:$0xff]
        %v4688 = vld [vmem:[#allocation19 + $0x998] sm:$0xff]
        %v4689 = vld [vmem:[#allocation19 + $0x9a0] sm:$0xff]
        %v4690 = vld [vmem:[#allocation19 + $0x9a8] sm:$0xff]
        %v4691 = vld [vmem:[#allocation19 + $0x9b0] sm:$0xff]
        %v4692 = vld [vmem:[#allocation19 + $0x9b8] sm:$0xff]
        %v4693 = vld [vmem:[#allocation19 + $0x9c0] sm:$0xff]
        %v4694 = vld [vmem:[#allocation19 + $0x9c8] sm:$0xff]
        %v4695 = vld [vmem:[#allocation19 + $0x9d0] sm:$0xff]
        %v4696 = vld [vmem:[#allocation19 + $0x9d8] sm:$0xff]
        %v4697 = vld [vmem:[#allocation19 + $0x9e0] sm:$0xff]
        %v4698 = vld [vmem:[#allocation19 + $0x9e8] sm:$0xff]
        %v4699 = vld [vmem:[#allocation19 + $0x9f0] sm:$0xff]
        %v4700 = vld [vmem:[#allocation19 + $0x9f8] sm:$0xff]
        %v4701 = vld [vmem:[#allocation20] sm:$0x3]
        %v4703 = vlaneseq
        %v4704 = vshrl.u32 %v4703, 7
        %v4705 = vsub.s32 0, %v4704
        %v4706 = vrot.slane %v4701, %v4705
        %v4707 = vlaneseq
        %v4708 = vshrl.u32 %v4707, 7
        %v4709 = vsub.s32 1, %v4708
        %v4710 = vrot.slane %v4701, %v4709
        %v4723 = vunpack.c.l.b16 %v4371
        %v4724 = vunpack.c.h.b16 %v4371
        %v4725 = vunpack.c.l.b16 %v4372
        %v4726 = vunpack.c.h.b16 %v4372
        %v4727 = vunpack.c.l.b16 %v4373
        %v4728 = vunpack.c.h.b16 %v4373
        %v4729 = vunpack.c.l.b16 %v4374
        %v4730 = vunpack.c.h.b16 %v4374
        %v4731 = vunpack.c.l.b16 %v4375
        %v4732 = vunpack.c.h.b16 %v4375
        %v4733 = vunpack.c.l.b16 %v4376
        %v4734 = vunpack.c.h.b16 %v4376
        %v4735 = vunpack.c.l.b16 %v4377
        %v4736 = vunpack.c.h.b16 %v4377
        %v4737 = vunpack.c.l.b16 %v4378
        %v4738 = vunpack.c.h.b16 %v4378
        %v4739 = vunpack.c.l.b16 %v4379
        %v4740 = vunpack.c.h.b16 %v4379
        %v4741 = vunpack.c.l.b16 %v4380
        %v4742 = vunpack.c.h.b16 %v4380
        %v4743 = vpack.c.b16 %v4723, %v4723
        %v4744 = vpack.c.b16 %v4724, %v4724
        %v4745 = vpack.c.b16 %v4725, %v4725
        %v4746 = vpack.c.b16 %v4726, %v4726
        %v4747 = vpack.c.b16 %v4727, %v4727
        %v4748 = vpack.c.b16 %v4728, %v4728
        %v4749 = vpack.c.b16 %v4729, %v4729
        %v4750 = vpack.c.b16 %v4730, %v4730
        %v4751 = vpack.c.b16 %v4731, %v4731
        %v4752 = vpack.c.b16 %v4732, %v4732
        %v4753 = vpack.c.b16 %v4733, %v4733
        %v4754 = vpack.c.b16 %v4734, %v4734
        %v4755 = vpack.c.b16 %v4735, %v4735
        %v4756 = vpack.c.b16 %v4736, %v4736
        %v4757 = vpack.c.b16 %v4737, %v4737
        %v4758 = vpack.c.b16 %v4738, %v4738
        %v4759 = vpack.c.b16 %v4739, %v4739
        %v4760 = vpack.c.b16 %v4740, %v4740
        %v4761 = vpack.c.b16 %v4741, %v4741
        %v4762 = vpack.c.b16 %v4742, %v4742
        %v5103 = vunpack.c.l.b16 %v4381
        %v5104 = vunpack.c.h.b16 %v4381
        %v5105 = vunpack.c.l.b16 %v4382
        %v5106 = vunpack.c.h.b16 %v4382
        %v5107 = vunpack.c.l.b16 %v4383
        %v5108 = vunpack.c.h.b16 %v4383
        %v5109 = vunpack.c.l.b16 %v4384
        %v5110 = vunpack.c.h.b16 %v4384
        %v5111 = vunpack.c.l.b16 %v4385
        %v5112 = vunpack.c.h.b16 %v4385
        %v5113 = vunpack.c.l.b16 %v4386
        %v5114 = vunpack.c.h.b16 %v4386
        %v5115 = vunpack.c.l.b16 %v4387
        %v5116 = vunpack.c.h.b16 %v4387
        %v5117 = vunpack.c.l.b16 %v4388
        %v5118 = vunpack.c.h.b16 %v4388
        %v5119 = vunpack.c.l.b16 %v4389
        %v5120 = vunpack.c.h.b16 %v4389
        %v5121 = vunpack.c.l.b16 %v4390
        %v5122 = vunpack.c.h.b16 %v4390
        %v5123 = vunpack.c.l.b16 %v4391
        %v5124 = vunpack.c.h.b16 %v4391
        %v5125 = vunpack.c.l.b16 %v4392
        %v5126 = vunpack.c.h.b16 %v4392
        %v5127 = vunpack.c.l.b16 %v4393
        %v5128 = vunpack.c.h.b16 %v4393
        %v5129 = vunpack.c.l.b16 %v4394
        %v5130 = vunpack.c.h.b16 %v4394
        %v5131 = vunpack.c.l.b16 %v4395
        %v5132 = vunpack.c.h.b16 %v4395
        %v5133 = vunpack.c.l.b16 %v4396
        %v5134 = vunpack.c.h.b16 %v4396
        %v5135 = vunpack.c.l.b16 %v4397
        %v5136 = vunpack.c.h.b16 %v4397
        %v5137 = vunpack.c.l.b16 %v4398
        %v5138 = vunpack.c.h.b16 %v4398
        %v5139 = vunpack.c.l.b16 %v4399
        %v5140 = vunpack.c.h.b16 %v4399
        %v5141 = vunpack.c.l.b16 %v4400
        %v5142 = vunpack.c.h.b16 %v4400
        %v5143 = vunpack.c.l.b16 %v4401
        %v5144 = vunpack.c.h.b16 %v4401
        %v5145 = vunpack.c.l.b16 %v4402
        %v5146 = vunpack.c.h.b16 %v4402
        %v5147 = vunpack.c.l.b16 %v4403
        %v5148 = vunpack.c.h.b16 %v4403
        %v5149 = vunpack.c.l.b16 %v4404
        %v5150 = vunpack.c.h.b16 %v4404
        %v5151 = vunpack.c.l.b16 %v4405
        %v5152 = vunpack.c.h.b16 %v4405
        %v5153 = vunpack.c.l.b16 %v4406
        %v5154 = vunpack.c.h.b16 %v4406
        %v5155 = vunpack.c.l.b16 %v4407
        %v5156 = vunpack.c.h.b16 %v4407
        %v5157 = vunpack.c.l.b16 %v4408
        %v5158 = vunpack.c.h.b16 %v4408
        %v5159 = vunpack.c.l.b16 %v4409
        %v5160 = vunpack.c.h.b16 %v4409
        %v5161 = vunpack.c.l.b16 %v4410
        %v5162 = vunpack.c.h.b16 %v4410
        %v5163 = vunpack.c.l.b16 %v4411
        %v5164 = vunpack.c.h.b16 %v4411
        %v5165 = vunpack.c.l.b16 %v4412
        %v5166 = vunpack.c.h.b16 %v4412
        %v5167 = vunpack.c.l.b16 %v4413
        %v5168 = vunpack.c.h.b16 %v4413
        %v5169 = vunpack.c.l.b16 %v4414
        %v5170 = vunpack.c.h.b16 %v4414
        %v5171 = vunpack.c.l.b16 %v4415
        %v5172 = vunpack.c.h.b16 %v4415
        %v5173 = vunpack.c.l.b16 %v4416
        %v5174 = vunpack.c.h.b16 %v4416
        %v5175 = vunpack.c.l.b16 %v4417
        %v5176 = vunpack.c.h.b16 %v4417
        %v5177 = vunpack.c.l.b16 %v4418
        %v5178 = vunpack.c.h.b16 %v4418
        %v5179 = vunpack.c.l.b16 %v4419
        %v5180 = vunpack.c.h.b16 %v4419
        %v5181 = vunpack.c.l.b16 %v4420
        %v5182 = vunpack.c.h.b16 %v4420
        %v5183 = vunpack.c.l.b16 %v4421
        %v5184 = vunpack.c.h.b16 %v4421
        %v5185 = vunpack.c.l.b16 %v4422
        %v5186 = vunpack.c.h.b16 %v4422
        %v5187 = vunpack.c.l.b16 %v4423
        %v5188 = vunpack.c.h.b16 %v4423
        %v5189 = vunpack.c.l.b16 %v4424
        %v5190 = vunpack.c.h.b16 %v4424
        %v5191 = vunpack.c.l.b16 %v4425
        %v5192 = vunpack.c.h.b16 %v4425
        %v5193 = vunpack.c.l.b16 %v4426
        %v5194 = vunpack.c.h.b16 %v4426
        %v5195 = vunpack.c.l.b16 %v4427
        %v5196 = vunpack.c.h.b16 %v4427
        %v5197 = vunpack.c.l.b16 %v4428
        %v5198 = vunpack.c.h.b16 %v4428
        %v5199 = vunpack.c.l.b16 %v4429
        %v5200 = vunpack.c.h.b16 %v4429
        %v5201 = vunpack.c.l.b16 %v4430
        %v5202 = vunpack.c.h.b16 %v4430
        %v5203 = vunpack.c.l.b16 %v4431
        %v5204 = vunpack.c.h.b16 %v4431
        %v5205 = vunpack.c.l.b16 %v4432
        %v5206 = vunpack.c.h.b16 %v4432
        %v5207 = vunpack.c.l.b16 %v4433
        %v5208 = vunpack.c.h.b16 %v4433
        %v5209 = vunpack.c.l.b16 %v4434
        %v5210 = vunpack.c.h.b16 %v4434
        %v5211 = vunpack.c.l.b16 %v4435
        %v5212 = vunpack.c.h.b16 %v4435
        %v5213 = vunpack.c.l.b16 %v4436
        %v5214 = vunpack.c.h.b16 %v4436
        %v5215 = vunpack.c.l.b16 %v4437
        %v5216 = vunpack.c.h.b16 %v4437
        %v5217 = vunpack.c.l.b16 %v4438
        %v5218 = vunpack.c.h.b16 %v4438
        %v5219 = vunpack.c.l.b16 %v4439
        %v5220 = vunpack.c.h.b16 %v4439
        %v5221 = vunpack.c.l.b16 %v4440
        %v5222 = vunpack.c.h.b16 %v4440
        %v5223 = vunpack.c.l.b16 %v4441
        %v5224 = vunpack.c.h.b16 %v4441
        %v5225 = vunpack.c.l.b16 %v4442
        %v5226 = vunpack.c.h.b16 %v4442
        %v5227 = vunpack.c.l.b16 %v4443
        %v5228 = vunpack.c.h.b16 %v4443
        %v5229 = vunpack.c.l.b16 %v4444
        %v5230 = vunpack.c.h.b16 %v4444
        %v5231 = vunpack.c.l.b16 %v4445
        %v5232 = vunpack.c.h.b16 %v4445
        %v5233 = vunpack.c.l.b16 %v4446
        %v5234 = vunpack.c.h.b16 %v4446
        %v5235 = vunpack.c.l.b16 %v4447
        %v5236 = vunpack.c.h.b16 %v4447
        %v5237 = vunpack.c.l.b16 %v4448
        %v5238 = vunpack.c.h.b16 %v4448
        %v5239 = vunpack.c.l.b16 %v4449
        %v5240 = vunpack.c.h.b16 %v4449
        %v5241 = vunpack.c.l.b16 %v4450
        %v5242 = vunpack.c.h.b16 %v4450
        %v5243 = vunpack.c.l.b16 %v4451
        %v5244 = vunpack.c.h.b16 %v4451
        %v5245 = vunpack.c.l.b16 %v4452
        %v5246 = vunpack.c.h.b16 %v4452
        %v5247 = vunpack.c.l.b16 %v4453
        %v5248 = vunpack.c.h.b16 %v4453
        %v5249 = vunpack.c.l.b16 %v4454
        %v5250 = vunpack.c.h.b16 %v4454
        %v5251 = vunpack.c.l.b16 %v4455
        %v5252 = vunpack.c.h.b16 %v4455
        %v5253 = vunpack.c.l.b16 %v4456
        %v5254 = vunpack.c.h.b16 %v4456
        %v5255 = vunpack.c.l.b16 %v4457
        %v5256 = vunpack.c.h.b16 %v4457
        %v5257 = vunpack.c.l.b16 %v4458
        %v5258 = vunpack.c.h.b16 %v4458
        %v5259 = vunpack.c.l.b16 %v4459
        %v5260 = vunpack.c.h.b16 %v4459
        %v5261 = vunpack.c.l.b16 %v4460
        %v5262 = vunpack.c.h.b16 %v4460
        %v5263 = vunpack.c.l.b16 %v4461
        %v5264 = vunpack.c.h.b16 %v4461
        %v5265 = vunpack.c.l.b16 %v4462
        %v5266 = vunpack.c.h.b16 %v4462
        %v5267 = vunpack.c.l.b16 %v4463
        %v5268 = vunpack.c.h.b16 %v4463
        %v5269 = vunpack.c.l.b16 %v4464
        %v5270 = vunpack.c.h.b16 %v4464
        %v5271 = vunpack.c.l.b16 %v4465
        %v5272 = vunpack.c.h.b16 %v4465
        %v5273 = vunpack.c.l.b16 %v4466
        %v5274 = vunpack.c.h.b16 %v4466
        %v5275 = vunpack.c.l.b16 %v4467
        %v5276 = vunpack.c.h.b16 %v4467
        %v5277 = vunpack.c.l.b16 %v4468
        %v5278 = vunpack.c.h.b16 %v4468
        %v5279 = vunpack.c.l.b16 %v4469
        %v5280 = vunpack.c.h.b16 %v4469
        %v5281 = vunpack.c.l.b16 %v4470
        %v5282 = vunpack.c.h.b16 %v4470
        %v5283 = vunpack.c.l.b16 %v4471
        %v5284 = vunpack.c.h.b16 %v4471
        %v5285 = vunpack.c.l.b16 %v4472
        %v5286 = vunpack.c.h.b16 %v4472
        %v5287 = vunpack.c.l.b16 %v4473
        %v5288 = vunpack.c.h.b16 %v4473
        %v5289 = vunpack.c.l.b16 %v4474
        %v5290 = vunpack.c.h.b16 %v4474
        %v5291 = vunpack.c.l.b16 %v4475
        %v5292 = vunpack.c.h.b16 %v4475
        %v5293 = vunpack.c.l.b16 %v4476
        %v5294 = vunpack.c.h.b16 %v4476
        %v5295 = vunpack.c.l.b16 %v4477
        %v5296 = vunpack.c.h.b16 %v4477
        %v5297 = vunpack.c.l.b16 %v4478
        %v5298 = vunpack.c.h.b16 %v4478
        %v5299 = vunpack.c.l.b16 %v4479
        %v5300 = vunpack.c.h.b16 %v4479
        %v5301 = vunpack.c.l.b16 %v4480
        %v5302 = vunpack.c.h.b16 %v4480
        %v5303 = vunpack.c.l.b16 %v4481
        %v5304 = vunpack.c.h.b16 %v4481
        %v5305 = vunpack.c.l.b16 %v4482
        %v5306 = vunpack.c.h.b16 %v4482
        %v5307 = vunpack.c.l.b16 %v4483
        %v5308 = vunpack.c.h.b16 %v4483
        %v5309 = vunpack.c.l.b16 %v4484
        %v5310 = vunpack.c.h.b16 %v4484
        %v5311 = vunpack.c.l.b16 %v4485
        %v5312 = vunpack.c.h.b16 %v4485
        %v5313 = vunpack.c.l.b16 %v4486
        %v5314 = vunpack.c.h.b16 %v4486
        %v5315 = vunpack.c.l.b16 %v4487
        %v5316 = vunpack.c.h.b16 %v4487
        %v5317 = vunpack.c.l.b16 %v4488
        %v5318 = vunpack.c.h.b16 %v4488
        %v5319 = vunpack.c.l.b16 %v4489
        %v5320 = vunpack.c.h.b16 %v4489
        %v5321 = vunpack.c.l.b16 %v4490
        %v5322 = vunpack.c.h.b16 %v4490
        %v5323 = vunpack.c.l.b16 %v4491
        %v5324 = vunpack.c.h.b16 %v4491
        %v5325 = vunpack.c.l.b16 %v4492
        %v5326 = vunpack.c.h.b16 %v4492
        %v5327 = vunpack.c.l.b16 %v4493
        %v5328 = vunpack.c.h.b16 %v4493
        %v5329 = vunpack.c.l.b16 %v4494
        %v5330 = vunpack.c.h.b16 %v4494
        %v5331 = vunpack.c.l.b16 %v4495
        %v5332 = vunpack.c.h.b16 %v4495
        %v5333 = vunpack.c.l.b16 %v4496
        %v5334 = vunpack.c.h.b16 %v4496
        %v5335 = vunpack.c.l.b16 %v4497
        %v5336 = vunpack.c.h.b16 %v4497
        %v5337 = vunpack.c.l.b16 %v4498
        %v5338 = vunpack.c.h.b16 %v4498
        %v5339 = vunpack.c.l.b16 %v4499
        %v5340 = vunpack.c.h.b16 %v4499
        %v5341 = vunpack.c.l.b16 %v4500
        %v5342 = vunpack.c.h.b16 %v4500
        %v5343 = vunpack.c.l.b16 %v4501
        %v5344 = vunpack.c.h.b16 %v4501
        %v5345 = vunpack.c.l.b16 %v4502
        %v5346 = vunpack.c.h.b16 %v4502
        %v5347 = vunpack.c.l.b16 %v4503
        %v5348 = vunpack.c.h.b16 %v4503
        %v5349 = vunpack.c.l.b16 %v4504
        %v5350 = vunpack.c.h.b16 %v4504
        %v5351 = vunpack.c.l.b16 %v4505
        %v5352 = vunpack.c.h.b16 %v4505
        %v5353 = vunpack.c.l.b16 %v4506
        %v5354 = vunpack.c.h.b16 %v4506
        %v5355 = vunpack.c.l.b16 %v4507
        %v5356 = vunpack.c.h.b16 %v4507
        %v5357 = vunpack.c.l.b16 %v4508
        %v5358 = vunpack.c.h.b16 %v4508
        %v5359 = vunpack.c.l.b16 %v4509
        %v5360 = vunpack.c.h.b16 %v4509
        %v5361 = vunpack.c.l.b16 %v4510
        %v5362 = vunpack.c.h.b16 %v4510
        %v5363 = vunpack.c.l.b16 %v4511
        %v5364 = vunpack.c.h.b16 %v4511
        %v5365 = vunpack.c.l.b16 %v4512
        %v5366 = vunpack.c.h.b16 %v4512
        %v5367 = vunpack.c.l.b16 %v4513
        %v5368 = vunpack.c.h.b16 %v4513
        %v5369 = vunpack.c.l.b16 %v4514
        %v5370 = vunpack.c.h.b16 %v4514
        %v5371 = vunpack.c.l.b16 %v4515
        %v5372 = vunpack.c.h.b16 %v4515
        %v5373 = vunpack.c.l.b16 %v4516
        %v5374 = vunpack.c.h.b16 %v4516
        %v5375 = vunpack.c.l.b16 %v4517
        %v5376 = vunpack.c.h.b16 %v4517
        %v5377 = vunpack.c.l.b16 %v4518
        %v5378 = vunpack.c.h.b16 %v4518
        %v5379 = vunpack.c.l.b16 %v4519
        %v5380 = vunpack.c.h.b16 %v4519
        %v5381 = vunpack.c.l.b16 %v4520
        %v5382 = vunpack.c.h.b16 %v4520
        %v5383 = vunpack.c.l.b16 %v4521
        %v5384 = vunpack.c.h.b16 %v4521
        %v5385 = vunpack.c.l.b16 %v4522
        %v5386 = vunpack.c.h.b16 %v4522
        %v5387 = vunpack.c.l.b16 %v4523
        %v5388 = vunpack.c.h.b16 %v4523
        %v5389 = vunpack.c.l.b16 %v4524
        %v5390 = vunpack.c.h.b16 %v4524
        %v5391 = vunpack.c.l.b16 %v4525
        %v5392 = vunpack.c.h.b16 %v4525
        %v5393 = vunpack.c.l.b16 %v4526
        %v5394 = vunpack.c.h.b16 %v4526
        %v5395 = vunpack.c.l.b16 %v4527
        %v5396 = vunpack.c.h.b16 %v4527
        %v5397 = vunpack.c.l.b16 %v4528
        %v5398 = vunpack.c.h.b16 %v4528
        %v5399 = vunpack.c.l.b16 %v4529
        %v5400 = vunpack.c.h.b16 %v4529
        %v5401 = vunpack.c.l.b16 %v4530
        %v5402 = vunpack.c.h.b16 %v4530
        %v5403 = vunpack.c.l.b16 %v4531
        %v5404 = vunpack.c.h.b16 %v4531
        %v5405 = vunpack.c.l.b16 %v4532
        %v5406 = vunpack.c.h.b16 %v4532
        %v5407 = vunpack.c.l.b16 %v4533
        %v5408 = vunpack.c.h.b16 %v4533
        %v5409 = vunpack.c.l.b16 %v4534
        %v5410 = vunpack.c.h.b16 %v4534
        %v5411 = vunpack.c.l.b16 %v4535
        %v5412 = vunpack.c.h.b16 %v4535
        %v5413 = vunpack.c.l.b16 %v4536
        %v5414 = vunpack.c.h.b16 %v4536
        %v5415 = vunpack.c.l.b16 %v4537
        %v5416 = vunpack.c.h.b16 %v4537
        %v5417 = vunpack.c.l.b16 %v4538
        %v5418 = vunpack.c.h.b16 %v4538
        %v5419 = vunpack.c.l.b16 %v4539
        %v5420 = vunpack.c.h.b16 %v4539
        %v5421 = vunpack.c.l.b16 %v4540
        %v5422 = vunpack.c.h.b16 %v4540
        %v5423 = vunpack.c.l.b16 %v4541
        %v5424 = vunpack.c.h.b16 %v4541
        %v5425 = vunpack.c.l.b16 %v4542
        %v5426 = vunpack.c.h.b16 %v4542
        %v5427 = vunpack.c.l.b16 %v4543
        %v5428 = vunpack.c.h.b16 %v4543
        %v5429 = vunpack.c.l.b16 %v4544
        %v5430 = vunpack.c.h.b16 %v4544
        %v5431 = vunpack.c.l.b16 %v4545
        %v5432 = vunpack.c.h.b16 %v4545
        %v5433 = vunpack.c.l.b16 %v4546
        %v5434 = vunpack.c.h.b16 %v4546
        %v5435 = vunpack.c.l.b16 %v4547
        %v5436 = vunpack.c.h.b16 %v4547
        %v5437 = vunpack.c.l.b16 %v4548
        %v5438 = vunpack.c.h.b16 %v4548
        %v5439 = vunpack.c.l.b16 %v4549
        %v5440 = vunpack.c.h.b16 %v4549
        %v5441 = vunpack.c.l.b16 %v4550
        %v5442 = vunpack.c.h.b16 %v4550
        %v5443 = vunpack.c.l.b16 %v4551
        %v5444 = vunpack.c.h.b16 %v4551
        %v5445 = vunpack.c.l.b16 %v4552
        %v5446 = vunpack.c.h.b16 %v4552
        %v5447 = vunpack.c.l.b16 %v4553
        %v5448 = vunpack.c.h.b16 %v4553
        %v5449 = vunpack.c.l.b16 %v4554
        %v5450 = vunpack.c.h.b16 %v4554
        %v5451 = vunpack.c.l.b16 %v4555
        %v5452 = vunpack.c.h.b16 %v4555
        %v5453 = vunpack.c.l.b16 %v4556
        %v5454 = vunpack.c.h.b16 %v4556
        %v5455 = vunpack.c.l.b16 %v4557
        %v5456 = vunpack.c.h.b16 %v4557
        %v5457 = vunpack.c.l.b16 %v4558
        %v5458 = vunpack.c.h.b16 %v4558
        %v5459 = vunpack.c.l.b16 %v4559
        %v5460 = vunpack.c.h.b16 %v4559
        %v5461 = vunpack.c.l.b16 %v4560
        %v5462 = vunpack.c.h.b16 %v4560
        %v5463 = vunpack.c.l.b16 %v4561
        %v5464 = vunpack.c.h.b16 %v4561
        %v5465 = vunpack.c.l.b16 %v4562
        %v5466 = vunpack.c.h.b16 %v4562
        %v5467 = vunpack.c.l.b16 %v4563
        %v5468 = vunpack.c.h.b16 %v4563
        %v5469 = vunpack.c.l.b16 %v4564
        %v5470 = vunpack.c.h.b16 %v4564
        %v5471 = vunpack.c.l.b16 %v4565
        %v5472 = vunpack.c.h.b16 %v4565
        %v5473 = vunpack.c.l.b16 %v4566
        %v5474 = vunpack.c.h.b16 %v4566
        %v5475 = vunpack.c.l.b16 %v4567
        %v5476 = vunpack.c.h.b16 %v4567
        %v5477 = vunpack.c.l.b16 %v4568
        %v5478 = vunpack.c.h.b16 %v4568
        %v5479 = vunpack.c.l.b16 %v4569
        %v5480 = vunpack.c.h.b16 %v4569
        %v5481 = vunpack.c.l.b16 %v4570
        %v5482 = vunpack.c.h.b16 %v4570
        %v5483 = vunpack.c.l.b16 %v4571
        %v5484 = vunpack.c.h.b16 %v4571
        %v5485 = vunpack.c.l.b16 %v4572
        %v5486 = vunpack.c.h.b16 %v4572
        %v5487 = vunpack.c.l.b16 %v4573
        %v5488 = vunpack.c.h.b16 %v4573
        %v5489 = vunpack.c.l.b16 %v4574
        %v5490 = vunpack.c.h.b16 %v4574
        %v5491 = vunpack.c.l.b16 %v4575
        %v5492 = vunpack.c.h.b16 %v4575
        %v5493 = vunpack.c.l.b16 %v4576
        %v5494 = vunpack.c.h.b16 %v4576
        %v5495 = vunpack.c.l.b16 %v4577
        %v5496 = vunpack.c.h.b16 %v4577
        %v5497 = vunpack.c.l.b16 %v4578
        %v5498 = vunpack.c.h.b16 %v4578
        %v5499 = vunpack.c.l.b16 %v4579
        %v5500 = vunpack.c.h.b16 %v4579
        %v5501 = vunpack.c.l.b16 %v4580
        %v5502 = vunpack.c.h.b16 %v4580
        %v5503 = vunpack.c.l.b16 %v4581
        %v5504 = vunpack.c.h.b16 %v4581
        %v5505 = vunpack.c.l.b16 %v4582
        %v5506 = vunpack.c.h.b16 %v4582
        %v5507 = vunpack.c.l.b16 %v4583
        %v5508 = vunpack.c.h.b16 %v4583
        %v5509 = vunpack.c.l.b16 %v4584
        %v5510 = vunpack.c.h.b16 %v4584
        %v5511 = vunpack.c.l.b16 %v4585
        %v5512 = vunpack.c.h.b16 %v4585
        %v5513 = vunpack.c.l.b16 %v4586
        %v5514 = vunpack.c.h.b16 %v4586
        %v5515 = vunpack.c.l.b16 %v4587
        %v5516 = vunpack.c.h.b16 %v4587
        %v5517 = vunpack.c.l.b16 %v4588
        %v5518 = vunpack.c.h.b16 %v4588
        %v5519 = vunpack.c.l.b16 %v4589
        %v5520 = vunpack.c.h.b16 %v4589
        %v5521 = vunpack.c.l.b16 %v4590
        %v5522 = vunpack.c.h.b16 %v4590
        %v5523 = vunpack.c.l.b16 %v4591
        %v5524 = vunpack.c.h.b16 %v4591
        %v5525 = vunpack.c.l.b16 %v4592
        %v5526 = vunpack.c.h.b16 %v4592
        %v5527 = vunpack.c.l.b16 %v4593
        %v5528 = vunpack.c.h.b16 %v4593
        %v5529 = vunpack.c.l.b16 %v4594
        %v5530 = vunpack.c.h.b16 %v4594
        %v5531 = vunpack.c.l.b16 %v4595
        %v5532 = vunpack.c.h.b16 %v4595
        %v5533 = vunpack.c.l.b16 %v4596
        %v5534 = vunpack.c.h.b16 %v4596
        %v5535 = vunpack.c.l.b16 %v4597
        %v5536 = vunpack.c.h.b16 %v4597
        %v5537 = vunpack.c.l.b16 %v4598
        %v5538 = vunpack.c.h.b16 %v4598
        %v5539 = vunpack.c.l.b16 %v4599
        %v5540 = vunpack.c.h.b16 %v4599
        %v5541 = vunpack.c.l.b16 %v4600
        %v5542 = vunpack.c.h.b16 %v4600
        %v5543 = vunpack.c.l.b16 %v4601
        %v5544 = vunpack.c.h.b16 %v4601
        %v5545 = vunpack.c.l.b16 %v4602
        %v5546 = vunpack.c.h.b16 %v4602
        %v5547 = vunpack.c.l.b16 %v4603
        %v5548 = vunpack.c.h.b16 %v4603
        %v5549 = vunpack.c.l.b16 %v4604
        %v5550 = vunpack.c.h.b16 %v4604
        %v5551 = vunpack.c.l.b16 %v4605
        %v5552 = vunpack.c.h.b16 %v4605
        %v5553 = vunpack.c.l.b16 %v4606
        %v5554 = vunpack.c.h.b16 %v4606
        %v5555 = vunpack.c.l.b16 %v4607
        %v5556 = vunpack.c.h.b16 %v4607
        %v5557 = vunpack.c.l.b16 %v4608
        %v5558 = vunpack.c.h.b16 %v4608
        %v5559 = vunpack.c.l.b16 %v4609
        %v5560 = vunpack.c.h.b16 %v4609
        %v5561 = vunpack.c.l.b16 %v4610
        %v5562 = vunpack.c.h.b16 %v4610
        %v5563 = vunpack.c.l.b16 %v4611
        %v5564 = vunpack.c.h.b16 %v4611
        %v5565 = vunpack.c.l.b16 %v4612
        %v5566 = vunpack.c.h.b16 %v4612
        %v5567 = vunpack.c.l.b16 %v4613
        %v5568 = vunpack.c.h.b16 %v4613
        %v5569 = vunpack.c.l.b16 %v4614
        %v5570 = vunpack.c.h.b16 %v4614
        %v5571 = vunpack.c.l.b16 %v4615
        %v5572 = vunpack.c.h.b16 %v4615
        %v5573 = vunpack.c.l.b16 %v4616
        %v5574 = vunpack.c.h.b16 %v4616
        %v5575 = vunpack.c.l.b16 %v4617
        %v5576 = vunpack.c.h.b16 %v4617
        %v5577 = vunpack.c.l.b16 %v4618
        %v5578 = vunpack.c.h.b16 %v4618
        %v5579 = vunpack.c.l.b16 %v4619
        %v5580 = vunpack.c.h.b16 %v4619
        %v5581 = vunpack.c.l.b16 %v4620
        %v5582 = vunpack.c.h.b16 %v4620
        %v5583 = vunpack.c.l.b16 %v4621
        %v5584 = vunpack.c.h.b16 %v4621
        %v5585 = vunpack.c.l.b16 %v4622
        %v5586 = vunpack.c.h.b16 %v4622
        %v5587 = vunpack.c.l.b16 %v4623
        %v5588 = vunpack.c.h.b16 %v4623
        %v5589 = vunpack.c.l.b16 %v4624
        %v5590 = vunpack.c.h.b16 %v4624
        %v5591 = vunpack.c.l.b16 %v4625
        %v5592 = vunpack.c.h.b16 %v4625
        %v5593 = vunpack.c.l.b16 %v4626
        %v5594 = vunpack.c.h.b16 %v4626
        %v5595 = vunpack.c.l.b16 %v4627
        %v5596 = vunpack.c.h.b16 %v4627
        %v5597 = vunpack.c.l.b16 %v4628
        %v5598 = vunpack.c.h.b16 %v4628
        %v5599 = vunpack.c.l.b16 %v4629
        %v5600 = vunpack.c.h.b16 %v4629
        %v5601 = vunpack.c.l.b16 %v4630
        %v5602 = vunpack.c.h.b16 %v4630
        %v5603 = vunpack.c.l.b16 %v4631
        %v5604 = vunpack.c.h.b16 %v4631
        %v5605 = vunpack.c.l.b16 %v4632
        %v5606 = vunpack.c.h.b16 %v4632
        %v5607 = vunpack.c.l.b16 %v4633
        %v5608 = vunpack.c.h.b16 %v4633
        %v5609 = vunpack.c.l.b16 %v4634
        %v5610 = vunpack.c.h.b16 %v4634
        %v5611 = vunpack.c.l.b16 %v4635
        %v5612 = vunpack.c.h.b16 %v4635
        %v5613 = vunpack.c.l.b16 %v4636
        %v5614 = vunpack.c.h.b16 %v4636
        %v5615 = vunpack.c.l.b16 %v4637
        %v5616 = vunpack.c.h.b16 %v4637
        %v5617 = vunpack.c.l.b16 %v4638
        %v5618 = vunpack.c.h.b16 %v4638
        %v5619 = vunpack.c.l.b16 %v4639
        %v5620 = vunpack.c.h.b16 %v4639
        %v5621 = vunpack.c.l.b16 %v4640
        %v5622 = vunpack.c.h.b16 %v4640
        %v5623 = vunpack.c.l.b16 %v4641
        %v5624 = vunpack.c.h.b16 %v4641
        %v5625 = vunpack.c.l.b16 %v4642
        %v5626 = vunpack.c.h.b16 %v4642
        %v5627 = vunpack.c.l.b16 %v4643
        %v5628 = vunpack.c.h.b16 %v4643
        %v5629 = vunpack.c.l.b16 %v4644
        %v5630 = vunpack.c.h.b16 %v4644
        %v5631 = vunpack.c.l.b16 %v4645
        %v5632 = vunpack.c.h.b16 %v4645
        %v5633 = vunpack.c.l.b16 %v4646
        %v5634 = vunpack.c.h.b16 %v4646
        %v5635 = vunpack.c.l.b16 %v4647
        %v5636 = vunpack.c.h.b16 %v4647
        %v5637 = vunpack.c.l.b16 %v4648
        %v5638 = vunpack.c.h.b16 %v4648
        %v5639 = vunpack.c.l.b16 %v4649
        %v5640 = vunpack.c.h.b16 %v4649
        %v5641 = vunpack.c.l.b16 %v4650
        %v5642 = vunpack.c.h.b16 %v4650
        %v5643 = vunpack.c.l.b16 %v4651
        %v5644 = vunpack.c.h.b16 %v4651
        %v5645 = vunpack.c.l.b16 %v4652
        %v5646 = vunpack.c.h.b16 %v4652
        %v5647 = vunpack.c.l.b16 %v4653
        %v5648 = vunpack.c.h.b16 %v4653
        %v5649 = vunpack.c.l.b16 %v4654
        %v5650 = vunpack.c.h.b16 %v4654
        %v5651 = vunpack.c.l.b16 %v4655
        %v5652 = vunpack.c.h.b16 %v4655
        %v5653 = vunpack.c.l.b16 %v4656
        %v5654 = vunpack.c.h.b16 %v4656
        %v5655 = vunpack.c.l.b16 %v4657
        %v5656 = vunpack.c.h.b16 %v4657
        %v5657 = vunpack.c.l.b16 %v4658
        %v5658 = vunpack.c.h.b16 %v4658
        %v5659 = vunpack.c.l.b16 %v4659
        %v5660 = vunpack.c.h.b16 %v4659
        %v5661 = vunpack.c.l.b16 %v4660
        %v5662 = vunpack.c.h.b16 %v4660
        %v5663 = vunpack.c.l.b16 %v4661
        %v5664 = vunpack.c.h.b16 %v4661
        %v5665 = vunpack.c.l.b16 %v4662
        %v5666 = vunpack.c.h.b16 %v4662
        %v5667 = vunpack.c.l.b16 %v4663
        %v5668 = vunpack.c.h.b16 %v4663
        %v5669 = vunpack.c.l.b16 %v4664
        %v5670 = vunpack.c.h.b16 %v4664
        %v5671 = vunpack.c.l.b16 %v4665
        %v5672 = vunpack.c.h.b16 %v4665
        %v5673 = vunpack.c.l.b16 %v4666
        %v5674 = vunpack.c.h.b16 %v4666
        %v5675 = vunpack.c.l.b16 %v4667
        %v5676 = vunpack.c.h.b16 %v4667
        %v5677 = vunpack.c.l.b16 %v4668
        %v5678 = vunpack.c.h.b16 %v4668
        %v5679 = vunpack.c.l.b16 %v4669
        %v5680 = vunpack.c.h.b16 %v4669
        %v5681 = vunpack.c.l.b16 %v4670
        %v5682 = vunpack.c.h.b16 %v4670
        %v5683 = vunpack.c.l.b16 %v4671
        %v5684 = vunpack.c.h.b16 %v4671
        %v5685 = vunpack.c.l.b16 %v4672
        %v5686 = vunpack.c.h.b16 %v4672
        %v5687 = vunpack.c.l.b16 %v4673
        %v5688 = vunpack.c.h.b16 %v4673
        %v5689 = vunpack.c.l.b16 %v4674
        %v5690 = vunpack.c.h.b16 %v4674
        %v5691 = vunpack.c.l.b16 %v4675
        %v5692 = vunpack.c.h.b16 %v4675
        %v5693 = vunpack.c.l.b16 %v4676
        %v5694 = vunpack.c.h.b16 %v4676
        %v5695 = vunpack.c.l.b16 %v4677
        %v5696 = vunpack.c.h.b16 %v4677
        %v5697 = vunpack.c.l.b16 %v4678
        %v5698 = vunpack.c.h.b16 %v4678
        %v5699 = vunpack.c.l.b16 %v4679
        %v5700 = vunpack.c.h.b16 %v4679
        %v5701 = vunpack.c.l.b16 %v4680
        %v5702 = vunpack.c.h.b16 %v4680
        %v5703 = vunpack.c.l.b16 %v4681
        %v5704 = vunpack.c.h.b16 %v4681
        %v5705 = vunpack.c.l.b16 %v4682
        %v5706 = vunpack.c.h.b16 %v4682
        %v5707 = vunpack.c.l.b16 %v4683
        %v5708 = vunpack.c.h.b16 %v4683
        %v5709 = vunpack.c.l.b16 %v4684
        %v5710 = vunpack.c.h.b16 %v4684
        %v5711 = vunpack.c.l.b16 %v4685
        %v5712 = vunpack.c.h.b16 %v4685
        %v5713 = vunpack.c.l.b16 %v4686
        %v5714 = vunpack.c.h.b16 %v4686
        %v5715 = vunpack.c.l.b16 %v4687
        %v5716 = vunpack.c.h.b16 %v4687
        %v5717 = vunpack.c.l.b16 %v4688
        %v5718 = vunpack.c.h.b16 %v4688
        %v5719 = vunpack.c.l.b16 %v4689
        %v5720 = vunpack.c.h.b16 %v4689
        %v5721 = vunpack.c.l.b16 %v4690
        %v5722 = vunpack.c.h.b16 %v4690
        %v5723 = vunpack.c.l.b16 %v4691
        %v5724 = vunpack.c.h.b16 %v4691
        %v5725 = vunpack.c.l.b16 %v4692
        %v5726 = vunpack.c.h.b16 %v4692
        %v5727 = vunpack.c.l.b16 %v4693
        %v5728 = vunpack.c.h.b16 %v4693
        %v5729 = vunpack.c.l.b16 %v4694
        %v5730 = vunpack.c.h.b16 %v4694
        %v5731 = vunpack.c.l.b16 %v4695
        %v5732 = vunpack.c.h.b16 %v4695
        %v5733 = vunpack.c.l.b16 %v4696
        %v5734 = vunpack.c.h.b16 %v4696
        %v5735 = vunpack.c.l.b16 %v4697
        %v5736 = vunpack.c.h.b16 %v4697
        %v5737 = vunpack.c.l.b16 %v4698
        %v5738 = vunpack.c.h.b16 %v4698
        %v5739 = vunpack.c.l.b16 %v4699
        %v5740 = vunpack.c.h.b16 %v4699
        %v5741 = vunpack.c.l.b16 %v4700
        %v5742 = vunpack.c.h.b16 %v4700
        %v5743 = vpack.c.b16 %v5105, %v5103
        %v5744 = vpack.c.b16 %v5106, %v5104
        %v5745 = vpack.c.b16 %v5109, %v5107
        %v5746 = vpack.c.b16 %v5110, %v5108
        %v5747 = vpack.c.b16 %v5113, %v5111
        %v5748 = vpack.c.b16 %v5114, %v5112
        %v5749 = vpack.c.b16 %v5117, %v5115
        %v5750 = vpack.c.b16 %v5118, %v5116
        %v5751 = vpack.c.b16 %v5121, %v5119
        %v5752 = vpack.c.b16 %v5122, %v5120
        %v5753 = vpack.c.b16 %v5125, %v5123
        %v5754 = vpack.c.b16 %v5126, %v5124
        %v5755 = vpack.c.b16 %v5129, %v5127
        %v5756 = vpack.c.b16 %v5130, %v5128
        %v5757 = vpack.c.b16 %v5133, %v5131
        %v5758 = vpack.c.b16 %v5134, %v5132
        %v5759 = vpack.c.b16 %v5137, %v5135
        %v5760 = vpack.c.b16 %v5138, %v5136
        %v5761 = vpack.c.b16 %v5141, %v5139
        %v5762 = vpack.c.b16 %v5142, %v5140
        %v5763 = vpack.c.b16 %v5145, %v5143
        %v5764 = vpack.c.b16 %v5146, %v5144
        %v5765 = vpack.c.b16 %v5149, %v5147
        %v5766 = vpack.c.b16 %v5150, %v5148
        %v5767 = vpack.c.b16 %v5153, %v5151
        %v5768 = vpack.c.b16 %v5154, %v5152
        %v5769 = vpack.c.b16 %v5157, %v5155
        %v5770 = vpack.c.b16 %v5158, %v5156
        %v5771 = vpack.c.b16 %v5161, %v5159
        %v5772 = vpack.c.b16 %v5162, %v5160
        %v5773 = vpack.c.b16 %v5165, %v5163
        %v5774 = vpack.c.b16 %v5166, %v5164
        %v5775 = vpack.c.b16 %v5169, %v5167
        %v5776 = vpack.c.b16 %v5170, %v5168
        %v5777 = vpack.c.b16 %v5173, %v5171
        %v5778 = vpack.c.b16 %v5174, %v5172
        %v5779 = vpack.c.b16 %v5177, %v5175
        %v5780 = vpack.c.b16 %v5178, %v5176
        %v5781 = vpack.c.b16 %v5181, %v5179
        %v5782 = vpack.c.b16 %v5182, %v5180
        %v5783 = vpack.c.b16 %v5185, %v5183
        %v5784 = vpack.c.b16 %v5186, %v5184
        %v5785 = vpack.c.b16 %v5189, %v5187
        %v5786 = vpack.c.b16 %v5190, %v5188
        %v5787 = vpack.c.b16 %v5193, %v5191
        %v5788 = vpack.c.b16 %v5194, %v5192
        %v5789 = vpack.c.b16 %v5197, %v5195
        %v5790 = vpack.c.b16 %v5198, %v5196
        %v5791 = vpack.c.b16 %v5201, %v5199
        %v5792 = vpack.c.b16 %v5202, %v5200
        %v5793 = vpack.c.b16 %v5205, %v5203
        %v5794 = vpack.c.b16 %v5206, %v5204
        %v5795 = vpack.c.b16 %v5209, %v5207
        %v5796 = vpack.c.b16 %v5210, %v5208
        %v5797 = vpack.c.b16 %v5213, %v5211
        %v5798 = vpack.c.b16 %v5214, %v5212
        %v5799 = vpack.c.b16 %v5217, %v5215
        %v5800 = vpack.c.b16 %v5218, %v5216
        %v5801 = vpack.c.b16 %v5221, %v5219
        %v5802 = vpack.c.b16 %v5222, %v5220
        %v5803 = vpack.c.b16 %v5225, %v5223
        %v5804 = vpack.c.b16 %v5226, %v5224
        %v5805 = vpack.c.b16 %v5229, %v5227
        %v5806 = vpack.c.b16 %v5230, %v5228
        %v5807 = vpack.c.b16 %v5233, %v5231
        %v5808 = vpack.c.b16 %v5234, %v5232
        %v5809 = vpack.c.b16 %v5237, %v5235
        %v5810 = vpack.c.b16 %v5238, %v5236
        %v5811 = vpack.c.b16 %v5241, %v5239
        %v5812 = vpack.c.b16 %v5242, %v5240
        %v5813 = vpack.c.b16 %v5245, %v5243
        %v5814 = vpack.c.b16 %v5246, %v5244
        %v5815 = vpack.c.b16 %v5249, %v5247
        %v5816 = vpack.c.b16 %v5250, %v5248
        %v5817 = vpack.c.b16 %v5253, %v5251
        %v5818 = vpack.c.b16 %v5254, %v5252
        %v5819 = vpack.c.b16 %v5257, %v5255
        %v5820 = vpack.c.b16 %v5258, %v5256
        %v5821 = vpack.c.b16 %v5261, %v5259
        %v5822 = vpack.c.b16 %v5262, %v5260
        %v5823 = vpack.c.b16 %v5265, %v5263
        %v5824 = vpack.c.b16 %v5266, %v5264
        %v5825 = vpack.c.b16 %v5269, %v5267
        %v5826 = vpack.c.b16 %v5270, %v5268
        %v5827 = vpack.c.b16 %v5273, %v5271
        %v5828 = vpack.c.b16 %v5274, %v5272
        %v5829 = vpack.c.b16 %v5277, %v5275
        %v5830 = vpack.c.b16 %v5278, %v5276
        %v5831 = vpack.c.b16 %v5281, %v5279
        %v5832 = vpack.c.b16 %v5282, %v5280
        %v5833 = vpack.c.b16 %v5285, %v5283
        %v5834 = vpack.c.b16 %v5286, %v5284
        %v5835 = vpack.c.b16 %v5289, %v5287
        %v5836 = vpack.c.b16 %v5290, %v5288
        %v5837 = vpack.c.b16 %v5293, %v5291
        %v5838 = vpack.c.b16 %v5294, %v5292
        %v5839 = vpack.c.b16 %v5297, %v5295
        %v5840 = vpack.c.b16 %v5298, %v5296
        %v5841 = vpack.c.b16 %v5301, %v5299
        %v5842 = vpack.c.b16 %v5302, %v5300
        %v5843 = vpack.c.b16 %v5305, %v5303
        %v5844 = vpack.c.b16 %v5306, %v5304
        %v5845 = vpack.c.b16 %v5309, %v5307
        %v5846 = vpack.c.b16 %v5310, %v5308
        %v5847 = vpack.c.b16 %v5313, %v5311
        %v5848 = vpack.c.b16 %v5314, %v5312
        %v5849 = vpack.c.b16 %v5317, %v5315
        %v5850 = vpack.c.b16 %v5318, %v5316
        %v5851 = vpack.c.b16 %v5321, %v5319
        %v5852 = vpack.c.b16 %v5322, %v5320
        %v5853 = vpack.c.b16 %v5325, %v5323
        %v5854 = vpack.c.b16 %v5326, %v5324
        %v5855 = vpack.c.b16 %v5329, %v5327
        %v5856 = vpack.c.b16 %v5330, %v5328
        %v5857 = vpack.c.b16 %v5333, %v5331
        %v5858 = vpack.c.b16 %v5334, %v5332
        %v5859 = vpack.c.b16 %v5337, %v5335
        %v5860 = vpack.c.b16 %v5338, %v5336
        %v5861 = vpack.c.b16 %v5341, %v5339
        %v5862 = vpack.c.b16 %v5342, %v5340
        %v5863 = vpack.c.b16 %v5345, %v5343
        %v5864 = vpack.c.b16 %v5346, %v5344
        %v5865 = vpack.c.b16 %v5349, %v5347
        %v5866 = vpack.c.b16 %v5350, %v5348
        %v5867 = vpack.c.b16 %v5353, %v5351
        %v5868 = vpack.c.b16 %v5354, %v5352
        %v5869 = vpack.c.b16 %v5357, %v5355
        %v5870 = vpack.c.b16 %v5358, %v5356
        %v5871 = vpack.c.b16 %v5361, %v5359
        %v5872 = vpack.c.b16 %v5362, %v5360
        %v5873 = vpack.c.b16 %v5365, %v5363
        %v5874 = vpack.c.b16 %v5366, %v5364
        %v5875 = vpack.c.b16 %v5369, %v5367
        %v5876 = vpack.c.b16 %v5370, %v5368
        %v5877 = vpack.c.b16 %v5373, %v5371
        %v5878 = vpack.c.b16 %v5374, %v5372
        %v5879 = vpack.c.b16 %v5377, %v5375
        %v5880 = vpack.c.b16 %v5378, %v5376
        %v5881 = vpack.c.b16 %v5381, %v5379
        %v5882 = vpack.c.b16 %v5382, %v5380
        %v5883 = vpack.c.b16 %v5385, %v5383
        %v5884 = vpack.c.b16 %v5386, %v5384
        %v5885 = vpack.c.b16 %v5389, %v5387
        %v5886 = vpack.c.b16 %v5390, %v5388
        %v5887 = vpack.c.b16 %v5393, %v5391
        %v5888 = vpack.c.b16 %v5394, %v5392
        %v5889 = vpack.c.b16 %v5397, %v5395
        %v5890 = vpack.c.b16 %v5398, %v5396
        %v5891 = vpack.c.b16 %v5401, %v5399
        %v5892 = vpack.c.b16 %v5402, %v5400
        %v5893 = vpack.c.b16 %v5405, %v5403
        %v5894 = vpack.c.b16 %v5406, %v5404
        %v5895 = vpack.c.b16 %v5409, %v5407
        %v5896 = vpack.c.b16 %v5410, %v5408
        %v5897 = vpack.c.b16 %v5413, %v5411
        %v5898 = vpack.c.b16 %v5414, %v5412
        %v5899 = vpack.c.b16 %v5417, %v5415
        %v5900 = vpack.c.b16 %v5418, %v5416
        %v5901 = vpack.c.b16 %v5421, %v5419
        %v5902 = vpack.c.b16 %v5422, %v5420
        %v5903 = vpack.c.b16 %v5425, %v5423
        %v5904 = vpack.c.b16 %v5426, %v5424
        %v5905 = vpack.c.b16 %v5429, %v5427
        %v5906 = vpack.c.b16 %v5430, %v5428
        %v5907 = vpack.c.b16 %v5433, %v5431
        %v5908 = vpack.c.b16 %v5434, %v5432
        %v5909 = vpack.c.b16 %v5437, %v5435
        %v5910 = vpack.c.b16 %v5438, %v5436
        %v5911 = vpack.c.b16 %v5441, %v5439
        %v5912 = vpack.c.b16 %v5442, %v5440
        %v5913 = vpack.c.b16 %v5445, %v5443
        %v5914 = vpack.c.b16 %v5446, %v5444
        %v5915 = vpack.c.b16 %v5449, %v5447
        %v5916 = vpack.c.b16 %v5450, %v5448
        %v5917 = vpack.c.b16 %v5453, %v5451
        %v5918 = vpack.c.b16 %v5454, %v5452
        %v5919 = vpack.c.b16 %v5457, %v5455
        %v5920 = vpack.c.b16 %v5458, %v5456
        %v5921 = vpack.c.b16 %v5461, %v5459
        %v5922 = vpack.c.b16 %v5462, %v5460
        %v5923 = vpack.c.b16 %v5465, %v5463
        %v5924 = vpack.c.b16 %v5466, %v5464
        %v5925 = vpack.c.b16 %v5469, %v5467
        %v5926 = vpack.c.b16 %v5470, %v5468
        %v5927 = vpack.c.b16 %v5473, %v5471
        %v5928 = vpack.c.b16 %v5474, %v5472
        %v5929 = vpack.c.b16 %v5477, %v5475
        %v5930 = vpack.c.b16 %v5478, %v5476
        %v5931 = vpack.c.b16 %v5481, %v5479
        %v5932 = vpack.c.b16 %v5482, %v5480
        %v5933 = vpack.c.b16 %v5485, %v5483
        %v5934 = vpack.c.b16 %v5486, %v5484
        %v5935 = vpack.c.b16 %v5489, %v5487
        %v5936 = vpack.c.b16 %v5490, %v5488
        %v5937 = vpack.c.b16 %v5493, %v5491
        %v5938 = vpack.c.b16 %v5494, %v5492
        %v5939 = vpack.c.b16 %v5497, %v5495
        %v5940 = vpack.c.b16 %v5498, %v5496
        %v5941 = vpack.c.b16 %v5501, %v5499
        %v5942 = vpack.c.b16 %v5502, %v5500
        %v5943 = vpack.c.b16 %v5505, %v5503
        %v5944 = vpack.c.b16 %v5506, %v5504
        %v5945 = vpack.c.b16 %v5509, %v5507
        %v5946 = vpack.c.b16 %v5510, %v5508
        %v5947 = vpack.c.b16 %v5513, %v5511
        %v5948 = vpack.c.b16 %v5514, %v5512
        %v5949 = vpack.c.b16 %v5517, %v5515
        %v5950 = vpack.c.b16 %v5518, %v5516
        %v5951 = vpack.c.b16 %v5521, %v5519
        %v5952 = vpack.c.b16 %v5522, %v5520
        %v5953 = vpack.c.b16 %v5525, %v5523
        %v5954 = vpack.c.b16 %v5526, %v5524
        %v5955 = vpack.c.b16 %v5529, %v5527
        %v5956 = vpack.c.b16 %v5530, %v5528
        %v5957 = vpack.c.b16 %v5533, %v5531
        %v5958 = vpack.c.b16 %v5534, %v5532
        %v5959 = vpack.c.b16 %v5537, %v5535
        %v5960 = vpack.c.b16 %v5538, %v5536
        %v5961 = vpack.c.b16 %v5541, %v5539
        %v5962 = vpack.c.b16 %v5542, %v5540
        %v5963 = vpack.c.b16 %v5545, %v5543
        %v5964 = vpack.c.b16 %v5546, %v5544
        %v5965 = vpack.c.b16 %v5549, %v5547
        %v5966 = vpack.c.b16 %v5550, %v5548
        %v5967 = vpack.c.b16 %v5553, %v5551
        %v5968 = vpack.c.b16 %v5554, %v5552
        %v5969 = vpack.c.b16 %v5557, %v5555
        %v5970 = vpack.c.b16 %v5558, %v5556
        %v5971 = vpack.c.b16 %v5561, %v5559
        %v5972 = vpack.c.b16 %v5562, %v5560
        %v5973 = vpack.c.b16 %v5565, %v5563
        %v5974 = vpack.c.b16 %v5566, %v5564
        %v5975 = vpack.c.b16 %v5569, %v5567
        %v5976 = vpack.c.b16 %v5570, %v5568
        %v5977 = vpack.c.b16 %v5573, %v5571
        %v5978 = vpack.c.b16 %v5574, %v5572
        %v5979 = vpack.c.b16 %v5577, %v5575
        %v5980 = vpack.c.b16 %v5578, %v5576
        %v5981 = vpack.c.b16 %v5581, %v5579
        %v5982 = vpack.c.b16 %v5582, %v5580
        %v5983 = vpack.c.b16 %v5585, %v5583
        %v5984 = vpack.c.b16 %v5586, %v5584
        %v5985 = vpack.c.b16 %v5589, %v5587
        %v5986 = vpack.c.b16 %v5590, %v5588
        %v5987 = vpack.c.b16 %v5593, %v5591
        %v5988 = vpack.c.b16 %v5594, %v5592
        %v5989 = vpack.c.b16 %v5597, %v5595
        %v5990 = vpack.c.b16 %v5598, %v5596
        %v5991 = vpack.c.b16 %v5601, %v5599
        %v5992 = vpack.c.b16 %v5602, %v5600
        %v5993 = vpack.c.b16 %v5605, %v5603
        %v5994 = vpack.c.b16 %v5606, %v5604
        %v5995 = vpack.c.b16 %v5609, %v5607
        %v5996 = vpack.c.b16 %v5610, %v5608
        %v5997 = vpack.c.b16 %v5613, %v5611
        %v5998 = vpack.c.b16 %v5614, %v5612
        %v5999 = vpack.c.b16 %v5617, %v5615
        %v6000 = vpack.c.b16 %v5618, %v5616
        %v6001 = vpack.c.b16 %v5621, %v5619
        %v6002 = vpack.c.b16 %v5622, %v5620
        %v6003 = vpack.c.b16 %v5625, %v5623
        %v6004 = vpack.c.b16 %v5626, %v5624
        %v6005 = vpack.c.b16 %v5629, %v5627
        %v6006 = vpack.c.b16 %v5630, %v5628
        %v6007 = vpack.c.b16 %v5633, %v5631
        %v6008 = vpack.c.b16 %v5634, %v5632
        %v6009 = vpack.c.b16 %v5637, %v5635
        %v6010 = vpack.c.b16 %v5638, %v5636
        %v6011 = vpack.c.b16 %v5641, %v5639
        %v6012 = vpack.c.b16 %v5642, %v5640
        %v6013 = vpack.c.b16 %v5645, %v5643
        %v6014 = vpack.c.b16 %v5646, %v5644
        %v6015 = vpack.c.b16 %v5649, %v5647
        %v6016 = vpack.c.b16 %v5650, %v5648
        %v6017 = vpack.c.b16 %v5653, %v5651
        %v6018 = vpack.c.b16 %v5654, %v5652
        %v6019 = vpack.c.b16 %v5657, %v5655
        %v6020 = vpack.c.b16 %v5658, %v5656
        %v6021 = vpack.c.b16 %v5661, %v5659
        %v6022 = vpack.c.b16 %v5662, %v5660
        %v6023 = vpack.c.b16 %v5665, %v5663
        %v6024 = vpack.c.b16 %v5666, %v5664
        %v6025 = vpack.c.b16 %v5669, %v5667
        %v6026 = vpack.c.b16 %v5670, %v5668
        %v6027 = vpack.c.b16 %v5673, %v5671
        %v6028 = vpack.c.b16 %v5674, %v5672
        %v6029 = vpack.c.b16 %v5677, %v5675
        %v6030 = vpack.c.b16 %v5678, %v5676
        %v6031 = vpack.c.b16 %v5681, %v5679
        %v6032 = vpack.c.b16 %v5682, %v5680
        %v6033 = vpack.c.b16 %v5685, %v5683
        %v6034 = vpack.c.b16 %v5686, %v5684
        %v6035 = vpack.c.b16 %v5689, %v5687
        %v6036 = vpack.c.b16 %v5690, %v5688
        %v6037 = vpack.c.b16 %v5693, %v5691
        %v6038 = vpack.c.b16 %v5694, %v5692
        %v6039 = vpack.c.b16 %v5697, %v5695
        %v6040 = vpack.c.b16 %v5698, %v5696
        %v6041 = vpack.c.b16 %v5701, %v5699
        %v6042 = vpack.c.b16 %v5702, %v5700
        %v6043 = vpack.c.b16 %v5705, %v5703
        %v6044 = vpack.c.b16 %v5706, %v5704
        %v6045 = vpack.c.b16 %v5709, %v5707
        %v6046 = vpack.c.b16 %v5710, %v5708
        %v6047 = vpack.c.b16 %v5713, %v5711
        %v6048 = vpack.c.b16 %v5714, %v5712
        %v6049 = vpack.c.b16 %v5717, %v5715
        %v6050 = vpack.c.b16 %v5718, %v5716
        %v6051 = vpack.c.b16 %v5721, %v5719
        %v6052 = vpack.c.b16 %v5722, %v5720
        %v6053 = vpack.c.b16 %v5725, %v5723
        %v6054 = vpack.c.b16 %v5726, %v5724
        %v6055 = vpack.c.b16 %v5729, %v5727
        %v6056 = vpack.c.b16 %v5730, %v5728
        %v6057 = vpack.c.b16 %v5733, %v5731
        %v6058 = vpack.c.b16 %v5734, %v5732
        %v6059 = vpack.c.b16 %v5737, %v5735
        %v6060 = vpack.c.b16 %v5738, %v5736
        %v6061 = vpack.c.b16 %v5741, %v5739
        %v6062 = vpack.c.b16 %v5742, %v5740
        %6383 = vmatprep.subr.bf16.mxu0 %v5744
        %6384 = vmatpush1.bf16.msra.mxu0 %v5743
        %6385 = vmatprep.subr.bf16.mxu0 %v5746
        %6386 = vmatpush1.bf16.msra.mxu0 %v5745
        %6387 = vmatprep.subr.bf16.mxu0 %v5748
        %6388 = vmatpush1.bf16.msra.mxu0 %v5747
        %6389 = vmatprep.subr.bf16.mxu0 %v5750
        %6390 = vmatpush1.bf16.msra.mxu0 %v5749
        %6391 = vmatprep.subr.bf16.mxu0 %v5752
        %6392 = vmatpush1.bf16.msra.mxu0 %v5751
        %6393 = vmatprep.subr.bf16.mxu0 %v5754
        %6394 = vmatpush1.bf16.msra.mxu0 %v5753
        %6395 = vmatprep.subr.bf16.mxu0 %v5756
        %6396 = vmatpush1.bf16.msra.mxu0 %v5755
        %6397 = vmatprep.subr.bf16.mxu0 %v5758
        %6398 = vmatpush1.bf16.msra.mxu0 %v5757
        %6399 = vmatprep.subr.bf16.mxu0 %v5760
        %6400 = vmatpush1.bf16.msra.mxu0 %v5759
        %6401 = vmatprep.subr.bf16.mxu0 %v5762
        %6402 = vmatpush1.bf16.msra.mxu0 %v5761
        %6403 = vmatprep.subr.bf16.mxu0 %v5764
        %6404 = vmatpush1.bf16.msra.mxu0 %v5763
        %6405 = vmatprep.subr.bf16.mxu0 %v5766
        %6406 = vmatpush1.bf16.msra.mxu0 %v5765
        %6407 = vmatprep.subr.bf16.mxu0 %v5768
        %6408 = vmatpush1.bf16.msra.mxu0 %v5767
        %6409 = vmatprep.subr.bf16.mxu0 %v5770
        %6410 = vmatpush1.bf16.msra.mxu0 %v5769
        %6411 = vmatprep.subr.bf16.mxu0 %v5772
        %6412 = vmatpush1.bf16.msra.mxu0 %v5771
        %6413 = vmatprep.subr.bf16.mxu0 %v5774
        %6414 = vmatpush1.bf16.msra.mxu0 %v5773
        %6415 = vmatprep.mubr.bf16.mxu0 %v4744
        %6416 = vmatmul.mubr.bf16.gmra.mrb[0].mxu0 %v4743
        %v6417 = vpop.f32.mrb[0].mxu0
        %v6418 = vadd.f32 %v4706, %v6417
        %v6419 = vpop.f32.mrb[0].mxu0
        %v6420 = vadd.f32 %v4710, %v6419
        %v6421 = vpop.f32.mrb[0].mxu0
        %v6422 = vpop.f32.mrb[0].mxu0
        %6423 = vdwg.mxu0
        %6424 = vmatprep.subr.bf16.mxu0 %v5776
        %6425 = vmatpush1.bf16.msra.mxu0 %v5775
        %6426 = vmatprep.subr.bf16.mxu0 %v5778
        %6427 = vmatpush1.bf16.msra.mxu0 %v5777
        %6428 = vmatprep.subr.bf16.mxu0 %v5780
        %6429 = vmatpush1.bf16.msra.mxu0 %v5779
        %6430 = vmatprep.subr.bf16.mxu0 %v5782
        %6431 = vmatpush1.bf16.msra.mxu0 %v5781
        %6432 = vmatprep.subr.bf16.mxu0 %v5784
        %6433 = vmatpush1.bf16.msra.mxu0 %v5783
        %6434 = vmatprep.subr.bf16.mxu0 %v5786
        %6435 = vmatpush1.bf16.msra.mxu0 %v5785
        %6436 = vmatprep.subr.bf16.mxu0 %v5788
        %6437 = vmatpush1.bf16.msra.mxu0 %v5787
        %6438 = vmatprep.subr.bf16.mxu0 %v5790
        %6439 = vmatpush1.bf16.msra.mxu0 %v5789
        %6440 = vmatprep.subr.bf16.mxu0 %v5792
        %6441 = vmatpush1.bf16.msra.mxu0 %v5791
        %6442 = vmatprep.subr.bf16.mxu0 %v5794
        %6443 = vmatpush1.bf16.msra.mxu0 %v5793
        %6444 = vmatprep.subr.bf16.mxu0 %v5796
        %6445 = vmatpush1.bf16.msra.mxu0 %v5795
        %6446 = vmatprep.subr.bf16.mxu0 %v5798
        %6447 = vmatpush1.bf16.msra.mxu0 %v5797
        %6448 = vmatprep.subr.bf16.mxu0 %v5800
        %6449 = vmatpush1.bf16.msra.mxu0 %v5799
        %6450 = vmatprep.subr.bf16.mxu0 %v5802
        %6451 = vmatpush1.bf16.msra.mxu0 %v5801
        %6452 = vmatprep.subr.bf16.mxu0 %v5804
        %6453 = vmatpush1.bf16.msra.mxu0 %v5803
        %6454 = vmatprep.subr.bf16.mxu0 %v5806
        %6455 = vmatpush1.bf16.msra.mxu0 %v5805
        %6456 = vmatprep.mubr.bf16.mxu0 %v4746
        %6457 = vmatmul.mubr.bf16.gmra.mrb[0].mxu0 %v4745
        %v6458 = vpop.f32.mrb[0].mxu0
        %v6459 = vadd.f32 %v6418, %v6458
        %v6460 = vpop.f32.mrb[0].mxu0
        %v6461 = vadd.f32 %v6420, %v6460
        %v6462 = vpop.f32.mrb[0].mxu0
        %v6463 = vpop.f32.mrb[0].mxu0
        %6464 = vdwg.mxu0
        %6465 = vmatprep.subr.bf16.mxu0 %v5808
        %6466 = vmatpush1.bf16.msra.mxu0 %v5807
        %6467 = vmatprep.subr.bf16.mxu0 %v5810
        %6468 = vmatpush1.bf16.msra.mxu0 %v5809
        %6469 = vmatprep.subr.bf16.mxu0 %v5812
        %6470 = vmatpush1.bf16.msra.mxu0 %v5811
        %6471 = vmatprep.subr.bf16.mxu0 %v5814
        %6472 = vmatpush1.bf16.msra.mxu0 %v5813
        %6473 = vmatprep.subr.bf16.mxu0 %v5816
        %6474 = vmatpush1.bf16.msra.mxu0 %v5815
        %6475 = vmatprep.subr.bf16.mxu0 %v5818
        %6476 = vmatpush1.bf16.msra.mxu0 %v5817
        %6477 = vmatprep.subr.bf16.mxu0 %v5820
        %6478 = vmatpush1.bf16.msra.mxu0 %v5819
        %6479 = vmatprep.subr.bf16.mxu0 %v5822
        %6480 = vmatpush1.bf16.msra.mxu0 %v5821
        %6481 = vmatprep.subr.bf16.mxu0 %v5824
        %6482 = vmatpush1.bf16.msra.mxu0 %v5823
        %6483 = vmatprep.subr.bf16.mxu0 %v5826
        %6484 = vmatpush1.bf16.msra.mxu0 %v5825
        %6485 = vmatprep.subr.bf16.mxu0 %v5828
        %6486 = vmatpush1.bf16.msra.mxu0 %v5827
        %6487 = vmatprep.subr.bf16.mxu0 %v5830
        %6488 = vmatpush1.bf16.msra.mxu0 %v5829
        %6489 = vmatprep.subr.bf16.mxu0 %v5832
        %6490 = vmatpush1.bf16.msra.mxu0 %v5831
        %6491 = vmatprep.subr.bf16.mxu0 %v5834
        %6492 = vmatpush1.bf16.msra.mxu0 %v5833
        %6493 = vmatprep.subr.bf16.mxu0 %v5836
        %6494 = vmatpush1.bf16.msra.mxu0 %v5835
        %6495 = vmatprep.subr.bf16.mxu0 %v5838
        %6496 = vmatpush1.bf16.msra.mxu0 %v5837
        %6497 = vmatprep.mubr.bf16.mxu0 %v4748
        %6498 = vmatmul.mubr.bf16.gmra.mrb[0].mxu0 %v4747
        %v6499 = vpop.f32.mrb[0].mxu0
        %v6500 = vadd.f32 %v6459, %v6499
        %v6501 = vpop.f32.mrb[0].mxu0
        %v6502 = vadd.f32 %v6461, %v6501
        %v6503 = vpop.f32.mrb[0].mxu0
        %v6504 = vpop.f32.mrb[0].mxu0
        %6505 = vdwg.mxu0
        %6506 = vmatprep.subr.bf16.mxu0 %v5840
        %6507 = vmatpush1.bf16.msra.mxu0 %v5839
        %6508 = vmatprep.subr.bf16.mxu0 %v5842
        %6509 = vmatpush1.bf16.msra.mxu0 %v5841
        %6510 = vmatprep.subr.bf16.mxu0 %v5844
        %6511 = vmatpush1.bf16.msra.mxu0 %v5843
        %6512 = vmatprep.subr.bf16.mxu0 %v5846
        %6513 = vmatpush1.bf16.msra.mxu0 %v5845
        %6514 = vmatprep.subr.bf16.mxu0 %v5848
        %6515 = vmatpush1.bf16.msra.mxu0 %v5847
        %6516 = vmatprep.subr.bf16.mxu0 %v5850
        %6517 = vmatpush1.bf16.msra.mxu0 %v5849
        %6518 = vmatprep.subr.bf16.mxu0 %v5852
        %6519 = vmatpush1.bf16.msra.mxu0 %v5851
        %6520 = vmatprep.subr.bf16.mxu0 %v5854
        %6521 = vmatpush1.bf16.msra.mxu0 %v5853
        %6522 = vmatprep.subr.bf16.mxu0 %v5856
        %6523 = vmatpush1.bf16.msra.mxu0 %v5855
        %6524 = vmatprep.subr.bf16.mxu0 %v5858
        %6525 = vmatpush1.bf16.msra.mxu0 %v5857
        %6526 = vmatprep.subr.bf16.mxu0 %v5860
        %6527 = vmatpush1.bf16.msra.mxu0 %v5859
        %6528 = vmatprep.subr.bf16.mxu0 %v5862
        %6529 = vmatpush1.bf16.msra.mxu0 %v5861
        %6530 = vmatprep.subr.bf16.mxu0 %v5864
        %6531 = vmatpush1.bf16.msra.mxu0 %v5863
        %6532 = vmatprep.subr.bf16.mxu0 %v5866
        %6533 = vmatpush1.bf16.msra.mxu0 %v5865
        %6534 = vmatprep.subr.bf16.mxu0 %v5868
        %6535 = vmatpush1.bf16.msra.mxu0 %v5867
        %6536 = vmatprep.subr.bf16.mxu0 %v5870
        %6537 = vmatpush1.bf16.msra.mxu0 %v5869
        %6538 = vmatprep.mubr.bf16.mxu0 %v4750
        %6539 = vmatmul.mubr.bf16.gmra.mrb[0].mxu0 %v4749
        %v6540 = vpop.f32.mrb[0].mxu0
        %v6541 = vadd.f32 %v6500, %v6540
        %v6542 = vpop.f32.mrb[0].mxu0
        %v6543 = vadd.f32 %v6502, %v6542
        %v6544 = vpop.f32.mrb[0].mxu0
        %v6545 = vpop.f32.mrb[0].mxu0
        %6546 = vdwg.mxu0
        %6547 = vmatprep.subr.bf16.mxu0 %v5872
        %6548 = vmatpush1.bf16.msra.mxu0 %v5871
        %6549 = vmatprep.subr.bf16.mxu0 %v5874
        %6550 = vmatpush1.bf16.msra.mxu0 %v5873
        %6551 = vmatprep.subr.bf16.mxu0 %v5876
        %6552 = vmatpush1.bf16.msra.mxu0 %v5875
        %6553 = vmatprep.subr.bf16.mxu0 %v5878
        %6554 = vmatpush1.bf16.msra.mxu0 %v5877
        %6555 = vmatprep.subr.bf16.mxu0 %v5880
        %6556 = vmatpush1.bf16.msra.mxu0 %v5879
        %6557 = vmatprep.subr.bf16.mxu0 %v5882
        %6558 = vmatpush1.bf16.msra.mxu0 %v5881
        %6559 = vmatprep.subr.bf16.mxu0 %v5884
        %6560 = vmatpush1.bf16.msra.mxu0 %v5883
        %6561 = vmatprep.subr.bf16.mxu0 %v5886
        %6562 = vmatpush1.bf16.msra.mxu0 %v5885
        %6563 = vmatprep.subr.bf16.mxu0 %v5888
        %6564 = vmatpush1.bf16.msra.mxu0 %v5887
        %6565 = vmatprep.subr.bf16.mxu0 %v5890
        %6566 = vmatpush1.bf16.msra.mxu0 %v5889
        %6567 = vmatprep.subr.bf16.mxu0 %v5892
        %6568 = vmatpush1.bf16.msra.mxu0 %v5891
        %6569 = vmatprep.subr.bf16.mxu0 %v5894
        %6570 = vmatpush1.bf16.msra.mxu0 %v5893
        %6571 = vmatprep.subr.bf16.mxu0 %v5896
        %6572 = vmatpush1.bf16.msra.mxu0 %v5895
        %6573 = vmatprep.subr.bf16.mxu0 %v5898
        %6574 = vmatpush1.bf16.msra.mxu0 %v5897
        %6575 = vmatprep.subr.bf16.mxu0 %v5900
        %6576 = vmatpush1.bf16.msra.mxu0 %v5899
        %6577 = vmatprep.subr.bf16.mxu0 %v5902
        %6578 = vmatpush1.bf16.msra.mxu0 %v5901
        %6579 = vmatprep.mubr.bf16.mxu0 %v4752
        %6580 = vmatmul.mubr.bf16.gmra.mrb[0].mxu0 %v4751
        %v6581 = vpop.f32.mrb[0].mxu0
        %v6582 = vadd.f32 %v6541, %v6581
        %v6583 = vpop.f32.mrb[0].mxu0
        %v6584 = vadd.f32 %v6543, %v6583
        %v6585 = vpop.f32.mrb[0].mxu0
        %v6586 = vpop.f32.mrb[0].mxu0
        %6587 = vdwg.mxu0
        %6588 = vmatprep.subr.bf16.mxu0 %v5904
        %6589 = vmatpush1.bf16.msra.mxu0 %v5903
        %6590 = vmatprep.subr.bf16.mxu0 %v5906
        %6591 = vmatpush1.bf16.msra.mxu0 %v5905
        %6592 = vmatprep.subr.bf16.mxu0 %v5908
        %6593 = vmatpush1.bf16.msra.mxu0 %v5907
        %6594 = vmatprep.subr.bf16.mxu0 %v5910
        %6595 = vmatpush1.bf16.msra.mxu0 %v5909
        %6596 = vmatprep.subr.bf16.mxu0 %v5912
        %6597 = vmatpush1.bf16.msra.mxu0 %v5911
        %6598 = vmatprep.subr.bf16.mxu0 %v5914
        %6599 = vmatpush1.bf16.msra.mxu0 %v5913
        %6600 = vmatprep.subr.bf16.mxu0 %v5916
        %6601 = vmatpush1.bf16.msra.mxu0 %v5915
        %6602 = vmatprep.subr.bf16.mxu0 %v5918
        %6603 = vmatpush1.bf16.msra.mxu0 %v5917
        %6604 = vmatprep.subr.bf16.mxu0 %v5920
        %6605 = vmatpush1.bf16.msra.mxu0 %v5919
        %6606 = vmatprep.subr.bf16.mxu0 %v5922
        %6607 = vmatpush1.bf16.msra.mxu0 %v5921
        %6608 = vmatprep.subr.bf16.mxu0 %v5924
        %6609 = vmatpush1.bf16.msra.mxu0 %v5923
        %6610 = vmatprep.subr.bf16.mxu0 %v5926
        %6611 = vmatpush1.bf16.msra.mxu0 %v5925
        %6612 = vmatprep.subr.bf16.mxu0 %v5928
        %6613 = vmatpush1.bf16.msra.mxu0 %v5927
        %6614 = vmatprep.subr.bf16.mxu0 %v5930
        %6615 = vmatpush1.bf16.msra.mxu0 %v5929
        %6616 = vmatprep.subr.bf16.mxu0 %v5932
        %6617 = vmatpush1.bf16.msra.mxu0 %v5931
        %6618 = vmatprep.subr.bf16.mxu0 %v5934
        %6619 = vmatpush1.bf16.msra.mxu0 %v5933
        %6620 = vmatprep.mubr.bf16.mxu0 %v4754
        %6621 = vmatmul.mubr.bf16.gmra.mrb[0].mxu0 %v4753
        %v6622 = vpop.f32.mrb[0].mxu0
        %v6623 = vadd.f32 %v6582, %v6622
        %v6624 = vpop.f32.mrb[0].mxu0
        %v6625 = vadd.f32 %v6584, %v6624
        %v6626 = vpop.f32.mrb[0].mxu0
        %v6627 = vpop.f32.mrb[0].mxu0
        %6628 = vdwg.mxu0
        %6629 = vmatprep.subr.bf16.mxu0 %v5936
        %6630 = vmatpush1.bf16.msra.mxu0 %v5935
        %6631 = vmatprep.subr.bf16.mxu0 %v5938
        %6632 = vmatpush1.bf16.msra.mxu0 %v5937
        %6633 = vmatprep.subr.bf16.mxu0 %v5940
        %6634 = vmatpush1.bf16.msra.mxu0 %v5939
        %6635 = vmatprep.subr.bf16.mxu0 %v5942
        %6636 = vmatpush1.bf16.msra.mxu0 %v5941
        %6637 = vmatprep.subr.bf16.mxu0 %v5944
        %6638 = vmatpush1.bf16.msra.mxu0 %v5943
        %6639 = vmatprep.subr.bf16.mxu0 %v5946
        %6640 = vmatpush1.bf16.msra.mxu0 %v5945
        %6641 = vmatprep.subr.bf16.mxu0 %v5948
        %6642 = vmatpush1.bf16.msra.mxu0 %v5947
        %6643 = vmatprep.subr.bf16.mxu0 %v5950
        %6644 = vmatpush1.bf16.msra.mxu0 %v5949
        %6645 = vmatprep.subr.bf16.mxu0 %v5952
        %6646 = vmatpush1.bf16.msra.mxu0 %v5951
        %6647 = vmatprep.subr.bf16.mxu0 %v5954
        %6648 = vmatpush1.bf16.msra.mxu0 %v5953
        %6649 = vmatprep.subr.bf16.mxu0 %v5956
        %6650 = vmatpush1.bf16.msra.mxu0 %v5955
        %6651 = vmatprep.subr.bf16.mxu0 %v5958
        %6652 = vmatpush1.bf16.msra.mxu0 %v5957
        %6653 = vmatprep.subr.bf16.mxu0 %v5960
        %6654 = vmatpush1.bf16.msra.mxu0 %v5959
        %6655 = vmatprep.subr.bf16.mxu0 %v5962
        %6656 = vmatpush1.bf16.msra.mxu0 %v5961
        %6657 = vmatprep.subr.bf16.mxu0 %v5964
        %6658 = vmatpush1.bf16.msra.mxu0 %v5963
        %6659 = vmatprep.subr.bf16.mxu0 %v5966
        %6660 = vmatpush1.bf16.msra.mxu0 %v5965
        %6661 = vmatprep.mubr.bf16.mxu0 %v4756
        %6662 = vmatmul.mubr.bf16.gmra.mrb[0].mxu0 %v4755
        %v6663 = vpop.f32.mrb[0].mxu0
        %v6664 = vadd.f32 %v6623, %v6663
        %v6665 = vpop.f32.mrb[0].mxu0
        %v6666 = vadd.f32 %v6625, %v6665
        %v6667 = vpop.f32.mrb[0].mxu0
        %v6668 = vpop.f32.mrb[0].mxu0
        %6669 = vdwg.mxu0
        %6670 = vmatprep.subr.bf16.mxu0 %v5968
        %6671 = vmatpush1.bf16.msra.mxu0 %v5967
        %6672 = vmatprep.subr.bf16.mxu0 %v5970
        %6673 = vmatpush1.bf16.msra.mxu0 %v5969
        %6674 = vmatprep.subr.bf16.mxu0 %v5972
        %6675 = vmatpush1.bf16.msra.mxu0 %v5971
        %6676 = vmatprep.subr.bf16.mxu0 %v5974
        %6677 = vmatpush1.bf16.msra.mxu0 %v5973
        %6678 = vmatprep.subr.bf16.mxu0 %v5976
        %6679 = vmatpush1.bf16.msra.mxu0 %v5975
        %6680 = vmatprep.subr.bf16.mxu0 %v5978
        %6681 = vmatpush1.bf16.msra.mxu0 %v5977
        %6682 = vmatprep.subr.bf16.mxu0 %v5980
        %6683 = vmatpush1.bf16.msra.mxu0 %v5979
        %6684 = vmatprep.subr.bf16.mxu0 %v5982
        %6685 = vmatpush1.bf16.msra.mxu0 %v5981
        %6686 = vmatprep.subr.bf16.mxu0 %v5984
        %6687 = vmatpush1.bf16.msra.mxu0 %v5983
        %6688 = vmatprep.subr.bf16.mxu0 %v5986
        %6689 = vmatpush1.bf16.msra.mxu0 %v5985
        %6690 = vmatprep.subr.bf16.mxu0 %v5988
        %6691 = vmatpush1.bf16.msra.mxu0 %v5987
        %6692 = vmatprep.subr.bf16.mxu0 %v5990
        %6693 = vmatpush1.bf16.msra.mxu0 %v5989
        %6694 = vmatprep.subr.bf16.mxu0 %v5992
        %6695 = vmatpush1.bf16.msra.mxu0 %v5991
        %6696 = vmatprep.subr.bf16.mxu0 %v5994
        %6697 = vmatpush1.bf16.msra.mxu0 %v5993
        %6698 = vmatprep.subr.bf16.mxu0 %v5996
        %6699 = vmatpush1.bf16.msra.mxu0 %v5995
        %6700 = vmatprep.subr.bf16.mxu0 %v5998
        %6701 = vmatpush1.bf16.msra.mxu0 %v5997
        %6702 = vmatprep.mubr.bf16.mxu0 %v4758
        %6703 = vmatmul.mubr.bf16.gmra.mrb[0].mxu0 %v4757
        %v6704 = vpop.f32.mrb[0].mxu0
        %v6705 = vadd.f32 %v6664, %v6704
        %v6706 = vpop.f32.mrb[0].mxu0
        %v6707 = vadd.f32 %v6666, %v6706
        %v6708 = vpop.f32.mrb[0].mxu0
        %v6709 = vpop.f32.mrb[0].mxu0
        %6710 = vdwg.mxu0
        %6711 = vmatprep.subr.bf16.mxu0 %v6000
        %6712 = vmatpush1.bf16.msra.mxu0 %v5999
        %6713 = vmatprep.subr.bf16.mxu0 %v6002
        %6714 = vmatpush1.bf16.msra.mxu0 %v6001
        %6715 = vmatprep.subr.bf16.mxu0 %v6004
        %6716 = vmatpush1.bf16.msra.mxu0 %v6003
        %6717 = vmatprep.subr.bf16.mxu0 %v6006
        %6718 = vmatpush1.bf16.msra.mxu0 %v6005
        %6719 = vmatprep.subr.bf16.mxu0 %v6008
        %6720 = vmatpush1.bf16.msra.mxu0 %v6007
        %6721 = vmatprep.subr.bf16.mxu0 %v6010
        %6722 = vmatpush1.bf16.msra.mxu0 %v6009
        %6723 = vmatprep.subr.bf16.mxu0 %v6012
        %6724 = vmatpush1.bf16.msra.mxu0 %v6011
        %6725 = vmatprep.subr.bf16.mxu0 %v6014
        %6726 = vmatpush1.bf16.msra.mxu0 %v6013
        %6727 = vmatprep.subr.bf16.mxu0 %v6016
        %6728 = vmatpush1.bf16.msra.mxu0 %v6015
        %6729 = vmatprep.subr.bf16.mxu0 %v6018
        %6730 = vmatpush1.bf16.msra.mxu0 %v6017
        %6731 = vmatprep.subr.bf16.mxu0 %v6020
        %6732 = vmatpush1.bf16.msra.mxu0 %v6019
        %6733 = vmatprep.subr.bf16.mxu0 %v6022
        %6734 = vmatpush1.bf16.msra.mxu0 %v6021
        %6735 = vmatprep.subr.bf16.mxu0 %v6024
        %6736 = vmatpush1.bf16.msra.mxu0 %v6023
        %6737 = vmatprep.subr.bf16.mxu0 %v6026
        %6738 = vmatpush1.bf16.msra.mxu0 %v6025
        %6739 = vmatprep.subr.bf16.mxu0 %v6028
        %6740 = vmatpush1.bf16.msra.mxu0 %v6027
        %6741 = vmatprep.subr.bf16.mxu0 %v6030
        %6742 = vmatpush1.bf16.msra.mxu0 %v6029
        %6743 = vmatprep.mubr.bf16.mxu0 %v4760
        %6744 = vmatmul.mubr.bf16.gmra.mrb[0].mxu0 %v4759
        %v6745 = vpop.f32.mrb[0].mxu0
        %v6746 = vadd.f32 %v6705, %v6745
        %v6747 = vpop.f32.mrb[0].mxu0
        %v6748 = vadd.f32 %v6707, %v6747
        %v6749 = vpop.f32.mrb[0].mxu0
        %v6750 = vpop.f32.mrb[0].mxu0
        %6751 = vdwg.mxu0
        %6752 = vmatprep.subr.bf16.mxu0 %v6032
        %6753 = vmatpush1.bf16.msra.mxu0 %v6031
        %6754 = vmatprep.subr.bf16.mxu0 %v6034
        %6755 = vmatpush1.bf16.msra.mxu0 %v6033
        %6756 = vmatprep.subr.bf16.mxu0 %v6036
        %6757 = vmatpush1.bf16.msra.mxu0 %v6035
        %6758 = vmatprep.subr.bf16.mxu0 %v6038
        %6759 = vmatpush1.bf16.msra.mxu0 %v6037
        %6760 = vmatprep.subr.bf16.mxu0 %v6040
        %6761 = vmatpush1.bf16.msra.mxu0 %v6039
        %6762 = vmatprep.subr.bf16.mxu0 %v6042
        %6763 = vmatpush1.bf16.msra.mxu0 %v6041
        %6764 = vmatprep.subr.bf16.mxu0 %v6044
        %6765 = vmatpush1.bf16.msra.mxu0 %v6043
        %6766 = vmatprep.subr.bf16.mxu0 %v6046
        %6767 = vmatpush1.bf16.msra.mxu0 %v6045
        %6768 = vmatprep.subr.bf16.mxu0 %v6048
        %6769 = vmatpush1.bf16.msra.mxu0 %v6047
        %6770 = vmatprep.subr.bf16.mxu0 %v6050
        %6771 = vmatpush1.bf16.msra.mxu0 %v6049
        %6772 = vmatprep.subr.bf16.mxu0 %v6052
        %6773 = vmatpush1.bf16.msra.mxu0 %v6051
        %6774 = vmatprep.subr.bf16.mxu0 %v6054
        %6775 = vmatpush1.bf16.msra.mxu0 %v6053
        %6776 = vmatprep.subr.bf16.mxu0 %v6056
        %6777 = vmatpush1.bf16.msra.mxu0 %v6055
        %6778 = vmatprep.subr.bf16.mxu0 %v6058
        %6779 = vmatpush1.bf16.msra.mxu0 %v6057
        %6780 = vmatprep.subr.bf16.mxu0 %v6060
        %6781 = vmatpush1.bf16.msra.mxu0 %v6059
        %6782 = vmatprep.subr.bf16.mxu0 %v6062
        %6783 = vmatpush1.bf16.msra.mxu0 %v6061
        %6784 = vmatprep.mubr.bf16.mxu0 %v4762
        %6785 = vmatmul.mubr.bf16.gmra.mrb[0].mxu0 %v4761
        %v6786 = vpop.f32.mrb[0].mxu0
        %v6787 = vadd.f32 %v6746, %v6786
        %v6788 = vpop.f32.mrb[0].mxu0
        %v6789 = vadd.f32 %v6748, %v6788
        %v6790 = vpop.f32.mrb[0].mxu0
        %v6791 = vpop.f32.mrb[0].mxu0
        %6792 = vdwg.mxu0
        %v6793 = vmax.f32 %v6787, 0.0
        %v6794 = vmax.f32 %v6789, 0.0
        %v6795 = vpack.c.bf16 %v6793, %v6793
        %v6796 = vpack.c.bf16 %v6794, %v6794
        %v6797 = vld [vmem:[#allocation22] sm:$0xf]
        %v6798 = vld [vmem:[#allocation22 + $0x4] sm:$0xf]
        %v6799 = vld [vmem:[#allocation22 + $0x8] sm:$0xf]
        %v6800 = vld [vmem:[#allocation22 + $0xc] sm:$0xf]
        %v6801 = vld [vmem:[#allocation22 + $0x10] sm:$0xf]
        %v6802 = vld [vmem:[#allocation22 + $0x14] sm:$0xf]
        %v6803 = vld [vmem:[#allocation22 + $0x18] sm:$0xf]
        %v6804 = vld [vmem:[#allocation22 + $0x1c] sm:$0xf]
        %v6805 = vld [vmem:[#allocation22 + $0x20] sm:$0xf]
        %v6806 = vld [vmem:[#allocation22 + $0x24] sm:$0xf]
        %v6807 = vld [vmem:[#allocation22 + $0x28] sm:$0xf]
        %v6808 = vld [vmem:[#allocation22 + $0x2c] sm:$0xf]
        %v6809 = vld [vmem:[#allocation22 + $0x30] sm:$0xf]
        %v6810 = vld [vmem:[#allocation22 + $0x34] sm:$0xf]
        %v6811 = vld [vmem:[#allocation22 + $0x38] sm:$0xf]
        %v6812 = vld [vmem:[#allocation22 + $0x3c] sm:$0xf]
        %v6813 = vld [vmem:[#allocation22 + $0x40] sm:$0xf]
        %v6814 = vld [vmem:[#allocation22 + $0x44] sm:$0xf]
        %v6815 = vld [vmem:[#allocation22 + $0x48] sm:$0xf]
        %v6816 = vld [vmem:[#allocation22 + $0x4c] sm:$0xf]
        %v6817 = vld [vmem:[#allocation22 + $0x50] sm:$0xf]
        %v6818 = vld [vmem:[#allocation22 + $0x54] sm:$0xf]
        %v6819 = vld [vmem:[#allocation22 + $0x58] sm:$0xf]
        %v6820 = vld [vmem:[#allocation22 + $0x5c] sm:$0xf]
        %v6821 = vld [vmem:[#allocation22 + $0x60] sm:$0xf]
        %v6822 = vld [vmem:[#allocation22 + $0x64] sm:$0xf]
        %v6823 = vld [vmem:[#allocation22 + $0x68] sm:$0xf]
        %v6824 = vld [vmem:[#allocation22 + $0x6c] sm:$0xf]
        %v6825 = vld [vmem:[#allocation22 + $0x70] sm:$0xf]
        %v6826 = vld [vmem:[#allocation22 + $0x74] sm:$0xf]
        %v6827 = vld [vmem:[#allocation22 + $0x78] sm:$0xf]
        %v6828 = vld [vmem:[#allocation22 + $0x7c] sm:$0xf]
        %v6829 = vld [vmem:[#allocation23] sm:$0x1]
        %v6831 = vlaneseq
        %v6832 = vshrl.u32 %v6831, 7
        %v6833 = vsub.s32 0, %v6832
        %v6834 = vrot.slane %v6829, %v6833
        %v6868 = vunpack.c.l.b16 %v6797
        %v6869 = vunpack.c.l.b16 %v6798
        %v6870 = vunpack.c.l.b16 %v6799
        %v6871 = vunpack.c.l.b16 %v6800
        %v6872 = vunpack.c.l.b16 %v6801
        %v6873 = vunpack.c.l.b16 %v6802
        %v6874 = vunpack.c.l.b16 %v6803
        %v6875 = vunpack.c.l.b16 %v6804
        %v6876 = vunpack.c.l.b16 %v6805
        %v6877 = vunpack.c.l.b16 %v6806
        %v6878 = vunpack.c.l.b16 %v6807
        %v6879 = vunpack.c.l.b16 %v6808
        %v6880 = vunpack.c.l.b16 %v6809
        %v6881 = vunpack.c.l.b16 %v6810
        %v6882 = vunpack.c.l.b16 %v6811
        %v6883 = vunpack.c.l.b16 %v6812
        %v6884 = vunpack.c.l.b16 %v6813
        %v6885 = vunpack.c.l.b16 %v6814
        %v6886 = vunpack.c.l.b16 %v6815
        %v6887 = vunpack.c.l.b16 %v6816
        %v6888 = vunpack.c.l.b16 %v6817
        %v6889 = vunpack.c.l.b16 %v6818
        %v6890 = vunpack.c.l.b16 %v6819
        %v6891 = vunpack.c.l.b16 %v6820
        %v6892 = vunpack.c.l.b16 %v6821
        %v6893 = vunpack.c.l.b16 %v6822
        %v6894 = vunpack.c.l.b16 %v6823
        %v6895 = vunpack.c.l.b16 %v6824
        %v6896 = vunpack.c.l.b16 %v6825
        %v6897 = vunpack.c.l.b16 %v6826
        %v6898 = vunpack.c.l.b16 %v6827
        %v6899 = vunpack.c.l.b16 %v6828
        %v6900 = vpack.c.b16 %v6869, %v6868
        %v6901 = vpack.c.b16 %v6871, %v6870
        %v6902 = vpack.c.b16 %v6873, %v6872
        %v6903 = vpack.c.b16 %v6875, %v6874
        %v6904 = vpack.c.b16 %v6877, %v6876
        %v6905 = vpack.c.b16 %v6879, %v6878
        %v6906 = vpack.c.b16 %v6881, %v6880
        %v6907 = vpack.c.b16 %v6883, %v6882
        %v6908 = vpack.c.b16 %v6885, %v6884
        %v6909 = vpack.c.b16 %v6887, %v6886
        %v6910 = vpack.c.b16 %v6889, %v6888
        %v6911 = vpack.c.b16 %v6891, %v6890
        %v6912 = vpack.c.b16 %v6893, %v6892
        %v6913 = vpack.c.b16 %v6895, %v6894
        %v6914 = vpack.c.b16 %v6897, %v6896
        %v6915 = vpack.c.b16 %v6899, %v6898
        %6932 = vmatprep.subr.bf16.mxu0 0
        %6933 = vmatpush1.bf16.msra.mxu0 %v6900
        %6934 = vmatprep.subr.bf16.mxu0 0
        %6935 = vmatpush1.bf16.msra.mxu0 %v6901
        %6936 = vmatprep.subr.bf16.mxu0 0
        %6937 = vmatpush1.bf16.msra.mxu0 %v6902
        %6938 = vmatprep.subr.bf16.mxu0 0
        %6939 = vmatpush1.bf16.msra.mxu0 %v6903
        %6940 = vmatprep.subr.bf16.mxu0 0
        %6941 = vmatpush1.bf16.msra.mxu0 %v6904
        %6942 = vmatprep.subr.bf16.mxu0 0
        %6943 = vmatpush1.bf16.msra.mxu0 %v6905
        %6944 = vmatprep.subr.bf16.mxu0 0
        %6945 = vmatpush1.bf16.msra.mxu0 %v6906
        %6946 = vmatprep.subr.bf16.mxu0 0
        %6947 = vmatpush1.bf16.msra.mxu0 %v6907
        %6948 = vmatprep.subr.bf16.mxu0 0
        %6949 = vmatpush1.bf16.msra.mxu0 %v6908
        %6950 = vmatprep.subr.bf16.mxu0 0
        %6951 = vmatpush1.bf16.msra.mxu0 %v6909
        %6952 = vmatprep.subr.bf16.mxu0 0
        %6953 = vmatpush1.bf16.msra.mxu0 %v6910
        %6954 = vmatprep.subr.bf16.mxu0 0
        %6955 = vmatpush1.bf16.msra.mxu0 %v6911
        %6956 = vmatprep.subr.bf16.mxu0 0
        %6957 = vmatpush1.bf16.msra.mxu0 %v6912
        %6958 = vmatprep.subr.bf16.mxu0 0
        %6959 = vmatpush1.bf16.msra.mxu0 %v6913
        %6960 = vmatprep.subr.bf16.mxu0 0
        %6961 = vmatpush1.bf16.msra.mxu0 %v6914
        %6962 = vmatprep.subr.bf16.mxu0 0
        %6963 = vmatpush1.bf16.msra.mxu0 %v6915
        %6964 = vmatprep.mubr.bf16.mxu0 %v6796
        %6965 = vmatmul.mubr.bf16.gmra.mrb[0].mxu0 %v6795
        %v6966 = vpop.f32.mrb[0].mxu0
        %v6967 = vadd.f32 %v6834, %v6966
        %v6968 = vpop.f32.mrb[0].mxu0
        %v6969 = vpop.f32.mrb[0].mxu0
        %v6970 = vpop.f32.mrb[0].mxu0
        %6971 = vdwg.mxu0
        %v6972 = vmax.f32 %v6967, 0.0
        %v6973 = vld [vmem:[#allocation25] sm:$0x1]
        %v6974 = vld [vmem:[#allocation8] sm:$0x1]
        %6976 = vset.pattern.permute.xlu0 0
        %6977 = vperm.xlu0 %6976, %v6974
        %v6978 = vpop.permute.xlu0 %6977
        %v6980 = vlaneseq
        %v6981 = vshrl.u32 %v6980, 7
        %v6982 = vsub.s32 0, %v6981
        %v6983 = vrot.slane %v6978, %v6982
        %6984 = vmatprep.subr.mxu0 0.0
        %6985 = vmatpush1.xpose.msra.mxu0 %v6972
        %6986 = vmatprep.subr.mxu0 0.0
        %6987 = vmatpush1.xpose.msra.mxu0 0.0
        %6988 = vmatprep.subr.mxu0 0.0
        %6989 = vmatpush1.xpose.msra.mxu0 0.0
        %6990 = vmatprep.subr.mxu0 0.0
        %6991 = vmatpush1.xpose.msra.mxu0 0.0
        %6992 = vmatprep.subr.mxu0 0.0
        %6993 = vmatpush1.xpose.msra.mxu0 0.0
        %6994 = vmatprep.subr.mxu0 0.0
        %6995 = vmatpush1.xpose.msra.mxu0 0.0
        %6996 = vmatprep.subr.mxu0 0.0
        %6997 = vmatpush1.xpose.msra.mxu0 0.0
        %6998 = vmatprep.subr.mxu0 0.0
        %6999 = vmatpush1.xpose.msra.mxu0 0.0
        %7000 = vmatprep.subr.mxu0 0.0
        %7001 = vmatpush1.xpose.msra.mxu0 0.0
        %7002 = vmatprep.subr.mxu0 0.0
        %7003 = vmatpush1.xpose.msra.mxu0 0.0
        %7004 = vmatprep.subr.mxu0 0.0
        %7005 = vmatpush1.xpose.msra.mxu0 0.0
        %7006 = vmatprep.subr.mxu0 0.0
        %7007 = vmatpush1.xpose.msra.mxu0 0.0
        %7008 = vmatprep.subr.mxu0 0.0
        %7009 = vmatpush1.xpose.msra.mxu0 0.0
        %7010 = vmatprep.subr.mxu0 0.0
        %7011 = vmatpush1.xpose.msra.mxu0 0.0
        %7012 = vmatprep.subr.mxu0 0.0
        %7013 = vmatpush1.xpose.msra.mxu0 0.0
        %7014 = vmatprep.subr.mxu0 0.0
        %7015 = vmatpush1.xpose.msra.mxu0 0.0
        %7016 = vmatprep.subr.mxu0 0.0
        %7017 = vmatpush1.xpose.msra.mxu0 0.0
        %7018 = vmatprep.subr.mxu0 0.0
        %7019 = vmatpush1.xpose.msra.mxu0 0.0
        %7020 = vmatprep.subr.mxu0 0.0
        %7021 = vmatpush1.xpose.msra.mxu0 0.0
        %7022 = vmatprep.subr.mxu0 0.0
        %7023 = vmatpush1.xpose.msra.mxu0 0.0
        %7024 = vmatprep.subr.mxu0 0.0
        %7025 = vmatpush1.xpose.msra.mxu0 0.0
        %7026 = vmatprep.subr.mxu0 0.0
        %7027 = vmatpush1.xpose.msra.mxu0 0.0
        %7028 = vmatprep.subr.mxu0 0.0
        %7029 = vmatpush1.xpose.msra.mxu0 0.0
        %7030 = vmatprep.subr.mxu0 0.0
        %7031 = vmatpush1.xpose.msra.mxu0 0.0
        %7032 = vmatprep.subr.mxu0 0.0
        %7033 = vmatpush1.xpose.msra.mxu0 0.0
        %7034 = vmatprep.subr.mxu0 0.0
        %7035 = vmatpush1.xpose.msra.mxu0 0.0
        %7036 = vmatprep.subr.mxu0 0.0
        %7037 = vmatpush1.xpose.msra.mxu0 0.0
        %7038 = vmatprep.subr.mxu0 0.0
        %7039 = vmatpush1.xpose.msra.mxu0 0.0
        %7040 = vmatprep.subr.mxu0 0.0
        %7041 = vmatpush1.xpose.msra.mxu0 0.0
        %7042 = vmatprep.subr.mxu0 0.0
        %7043 = vmatpush1.xpose.msra.mxu0 0.0
        %7044 = vmatprep.subr.mxu0 0.0
        %7045 = vmatpush1.xpose.msra.mxu0 0.0
        %7046 = vmatprep.subr.mxu0 0.0
        %7047 = vmatpush1.xpose.msra.mxu0 0.0
        %7048 = vmatprep.mubr.f32.mxu0 0.0
        %7049 = vmatmul.mubr.f32.gmra.mrb[0].mxu0 %v6973
        %v7050 = vpop.f32.mrb[0].mxu0
        %v7051 = vadd.f32 %v6983, %v7050
        %v7052 = vpop.f32.mrb[0].mxu0
        %7053 = vdwg.mxu0
        %v7054 = vxor.u32 %v7051, 2147483648
        %v7055 = vmul.f32 %v7054, 1.442695
        %v7056 = vpow.pop %v7055
        %v7057 = vadd.f32 %v7056, 1.0
        %v7058 = vrcp.pop %v7057
        %v7059 = vmul.f32 1.0, %v7058
        %vm7060 = vcmask 57344
        %7061 = vst.msk [vmem:[%s584] sm:$0x1] %vm7060, %v7059
        %p7062 = scmp.lt.s32.totalorder %s32, 1
        %s7063 = scalar_select %p7062, %s32, 1
        %s7064 = scalar_lea.vmem %s13, %s7063
        // Predicated region
        $region117: #{improved_cnn_forward.1} parent=71 // pred_check
          %p7065 = pneg %p328
        $region118: #{improved_cnn_forward.1} parent=71 // pred_check_branch
          %7067 = sbr.rel (%p7065) target = $region120
        $region119: #{improved_cnn_forward.1} parent=71 // pred_region
          _
        $region120: #{improved_cnn_forward.1} parent=71 // pred_fallthru
          _
      $region72: #{improved_cnn_forward.1} parent=5 // pred_fallthru
        _
      %p7068 = scmp.le.s32.totalorder 2, %s27
      // Predicated region
      $region121: #{improved_cnn_forward.1} parent=5 // pred_check
        %p7069 = pneg %p7068
      $region122: #{improved_cnn_forward.1} parent=5 // pred_check_branch
        %7071 = sbr.rel (%p7069) target = $region124
      $region123: #{improved_cnn_forward.1} parent=5 // pred_region
        %s7072 = ssub.s32 %s27, 2
        // Predicated region
        $region125: #{improved_cnn_forward.1} parent=123 // pred_check
          %p7073 = pneg %p334
        $region126: #{improved_cnn_forward.1} parent=123 // pred_check_branch
          %7075 = sbr.rel (%p7073) target = $region128
        $region127: #{improved_cnn_forward.1} parent=123 // pred_region
          %p7076 = scmp.lt.s32.totalorder %s33, 1
          %s7077 = scalar_select %p7076, %s33, 1
          %s7078 = scalar_lea.vmem %s13, %s7077
        $region128: #{improved_cnn_forward.1} parent=123 // pred_fallthru
          _
      $region124: #{improved_cnn_forward.1} parent=5 // pred_fallthru
        _
    $region6: #{improved_cnn_forward.1} parent=1 // loop_footer
      %s31 = sadd.s32 1, %s27
    $region7: #{improved_cnn_forward.1} parent=1 // loop_footer_branch
      %26 = sbr.rel target = $region3
    $region8: #{improved_cnn_forward.1} parent=1 // loop_exit
      _
    %7079 = vsyncpa [#allocation10], 1
    %s7080 = scalar_lea.sflag [#allocation10], 1
    %7081 = vsyncpa %s7080, 1
    %7082 = vsyncpa [#allocation12], 1
    %7083 = vsyncpa [#allocation15], 1
    %7084 = vsyncpa [#allocation18], 1
    %7085 = vsyncpa [#allocation21], 1
    %7086 = vsyncpa [#allocation24], 1

</llo_original>
